<compile_context>
chip_gen: v7x
topology: tpu7x:2x2x1
jax: 0.10.0
libtpu: 0.0.40
codegen_flags: <defaults>
</compile_context>

<pallas_src>
import functools
import math

import jax
import jax.numpy as jnp
from jax.experimental import pallas as pl
from jax.experimental.pallas import tpu as pltpu

ACT_DTYPE = jnp.bfloat16   # storage dtype for activations & big matmul weights
LANE = 128                 # lane-dense padding of the reconstruction head


# ----------------------------------------------------------------------------
# BlockSpec helpers (grid is always (batch,))
# ----------------------------------------------------------------------------
def _batch_spec(shape):
    """Array (B, ...) -> squeeze batch dim, full block over the rest."""
    rest = tuple(shape[1:])
    zeros = (0,) * len(rest)
    return pl.BlockSpec((None,) + rest, lambda b: (b,) + zeros)


def _const_spec(shape):
    """Batch-invariant array -> one full block, resident across grid steps."""
    zeros = (0,) * len(shape)
    return pl.BlockSpec(tuple(shape), lambda b: zeros)


_PARALLEL = pltpu.CompilerParams(dimension_semantics=("parallel",))


# ----------------------------------------------------------------------------
# Kernels
# ----------------------------------------------------------------------------
def _embed_kernel(x_ref, m_ref, w_ref, b_ref, pe_ref, o_ref):
    # fused: (x * mask) @ W_emb + b + positional_encoding
    xm = x_ref[...] * m_ref[...]                                   # (HW, 3) f32
    y = jnp.dot(xm, w_ref[...], preferred_element_type=jnp.float32)
    y = y + b_ref[...] + pe_ref[...]
    o_ref[...] = y.astype(o_ref.dtype)


def _mha_ln_kernel(xq_ref, xkv_ref, wq_ref, wk_ref, wv_ref,
                   bq_ref, bk_ref, bv_ref, wo_ref, bo_ref,
                   g_ref, be_ref, o_ref, *, nhead, scale):
    # fused: multi-head attention (all heads) + out-proj + residual + LayerNorm
    xq = xq_ref[...]                                               # (Sq, D) bf16
    xkv = xkv_ref[...]                                             # (Sk, D) bf16
    xq32 = xq.astype(jnp.float32)

    acc = jnp.zeros(xq32.shape, jnp.float32)                       # (Sq, D)
    for h in range(nhead):                                         # static unroll
        q = jnp.dot(xq, wq_ref[h], preferred_element_type=jnp.float32) + bq_ref[h]
        k = jnp.dot(xkv, wk_ref[h], preferred_element_type=jnp.float32) + bk_ref[h]
        v = jnp.dot(xkv, wv_ref[h], preferred_element_type=jnp.float32) + bv_ref[h]
        s = jnp.dot(q, k.T, preferred_element_type=jnp.float32) * scale   # (Sq, Sk)
        m = jnp.max(s, axis=-1, keepdims=True)
        p = jnp.exp(s - m)
        p = p * pl.reciprocal(jnp.sum(p, axis=-1, keepdims=True), approx=True)
        oh = jnp.dot(p, v, preferred_element_type=jnp.float32)            # (Sq, dh)
        acc = acc + jnp.dot(oh.astype(wo_ref.dtype), wo_ref[h],
                            preferred_element_type=jnp.float32)           # (Sq, D)

    y = xq32 + acc + bo_ref[...]                                    # residual
    mu = jnp.mean(y, axis=-1, keepdims=True)
    var = jnp.mean(jnp.square(y - mu), axis=-1, keepdims=True)
    y = (y - mu) * jax.lax.rsqrt(var + 1e-5)
    o_ref[...] = (y * g_ref[...] + be_ref[...]).astype(o_ref.dtype)


def _ffn_ln_kernel(x_ref, w1_ref, b1_ref, w2_ref, b2_ref, g_ref, be_ref, o_ref):
    # fused: Linear -> ReLU -> Linear -> residual add -> LayerNorm
    x = x_ref[...]                                                  # (S, D) bf16
    x32 = x.astype(jnp.float32)
    h = jnp.dot(x, w1_ref[...], preferred_element_type=jnp.float32) + b1_ref[...]
    h = jnp.maximum(h, 0.0)
    y = jnp.dot(h.astype(x.dtype), w2_ref[...],
                preferred_element_type=jnp.float32)
    y = x32 + y + b2_ref[...]
    mu = jnp.mean(y, axis=-1, keepdims=True)
    var = jnp.mean(jnp.square(y - mu), axis=-1, keepdims=True)
    y = (y - mu) * jax.lax.rsqrt(var + 1e-5)
    o_ref[...] = (y * g_ref[...] + be_ref[...]).astype(o_ref.dtype)


def _outproj_kernel(x_ref, w_ref, b_ref, o_ref):
    # reconstruction head; weight zero-padded to 128 cols -> lane-dense store
    x = x_ref[...].astype(jnp.float32)                              # (HW, D)
    y = jnp.dot(x, w_ref[...], preferred_element_type=jnp.float32) + b_ref[...]
    o_ref[...] = y.astype(o_ref.dtype)                              # (HW, 128)


# ----------------------------------------------------------------------------
# pallas_call wrappers
# ----------------------------------------------------------------------------
def embed_block(x_tok, m_tok, w, b, pe):
    bsz, hw, c = x_tok.shape
    d = w.shape[1]
    return pl.pallas_call(
        _embed_kernel,
        out_shape=jax.ShapeDtypeStruct((bsz, hw, d), ACT_DTYPE),
        grid=(bsz,),
        in_specs=[_batch_spec((bsz, hw, c)),
                  _batch_spec((bsz, hw, 1)),
                  _const_spec((c, d)),
                  _const_spec((1, d)),
                  _const_spec((hw, d))],
        out_specs=_batch_spec((bsz, hw, d)),
        compiler_params=_PARALLEL,
    )(x_tok, m_tok, w, b, pe)


def mha_ln_block(x_q, x_kv, p, gamma, beta, nhead):
    bsz, sq, d = x_q.shape
    sk = x_kv.shape[1]
    dh = d // nhead
    scale = 1.0 / math.sqrt(dh)
    kernel = functools.partial(_mha_ln_kernel, nhead=nhead, scale=scale)
    return pl.pallas_call(
        kernel,
        out_shape=jax.ShapeDtypeStruct((bsz, sq, d), ACT_DTYPE),
        grid=(bsz,),
        in_specs=[_batch_spec((bsz, sq, d)),
                  _batch_spec((bsz, sk, d)),
                  _const_spec((nhead, d, dh)),   # wq
                  _const_spec((nhead, d, dh)),   # wk
                  _const_spec((nhead, d, dh)),   # wv
                  _const_spec((nhead, 1, dh)),   # bq
                  _const_spec((nhead, 1, dh)),   # bk
                  _const_spec((nhead, 1, dh)),   # bv
                  _const_spec((nhead, dh, d)),   # wo
                  _const_spec((1, d)),           # bo
                  _const_spec((1, d)),           # gamma
                  _const_spec((1, d))],          # beta
        out_specs=_batch_spec((bsz, sq, d)),
        compiler_params=_PARALLEL,
    )(x_q, x_kv, p["wq"], p["wk"], p["wv"], p["bq"], p["bk"], p["bv"],
      p["wo"], p["bo"], gamma, beta)


def ffn_ln_block(x, w1, b1, w2, b2, gamma, beta):
    bsz, s, d = x.shape
    ff = w1.shape[1]
    return pl.pallas_call(
        _ffn_ln_kernel,
        out_shape=jax.ShapeDtypeStruct((bsz, s, d), ACT_DTYPE),
        grid=(bsz,),
        in_specs=[_batch_spec((bsz, s, d)),
                  _const_spec((d, ff)),
                  _const_spec((1, ff)),
                  _const_spec((ff, d)),
                  _const_spec((1, d)),
                  _const_spec((1, d)),
                  _const_spec((1, d))],
        out_specs=_batch_spec((bsz, s, d)),
        compiler_params=_PARALLEL,
    )(x, w1, b1, w2, b2, gamma, beta)


def output_head(x_tok, w_pad, b_pad):
    bsz, hw, d = x_tok.shape
    dout = w_pad.shape[1]
    return pl.pallas_call(
        _outproj_kernel,
        out_shape=jax.ShapeDtypeStruct((bsz, hw, dout), jnp.float32),
        grid=(bsz,),
        in_specs=[_batch_spec((bsz, hw, d)),
                  _const_spec((d, dout)),
                  _const_spec((1, dout))],
        out_specs=_batch_spec((bsz, hw, dout)),
        compiler_params=_PARALLEL,
    )(x_tok, w_pad, b_pad)


# ----------------------------------------------------------------------------
# Parameter init (shapes follow the PyTorch module's __init__)
# ----------------------------------------------------------------------------
def _ln_params(d):
    return jnp.ones((1, d), jnp.float32), jnp.zeros((1, d), jnp.float32)


def _attn_params(key, d, nhead):
    dh = d // nhead
    ks = jax.random.split(key, 4)

    def head_w(k):  # (d, d) -> (nhead, d, dh)
        w = jax.random.normal(k, (d, d), jnp.float32) * 0.02
        return w.reshape(d, nhead, dh).transpose(1, 0, 2).astype(ACT_DTYPE)

    wo = (jax.random.normal(ks[3], (d, d), jnp.float32) * 0.02
          ).reshape(nhead, dh, d).astype(ACT_DTYPE)
    zeros_h = jnp.zeros((nhead, 1, dh), jnp.float32)
    return {"wq": head_w(ks[0]), "wk": head_w(ks[1]), "wv": head_w(ks[2]),
            "bq": zeros_h, "bk": zeros_h, "bv": zeros_h,
            "wo": wo, "bo": jnp.zeros((1, d), jnp.float32)}


def init_params(key, hidden, nhead, num_layers, ff, seq_len):
    keys = jax.random.split(key, 2 + 3 * num_layers + 4 * num_layers)
    ki = iter(keys)
    params = {}

    # embedding (3 -> hidden), kept fp32 (tiny)
    params["emb_w"] = jax.random.normal(next(ki), (3, hidden), jnp.float32) * 0.02
    params["emb_b"] = jnp.zeros((1, hidden), jnp.float32)

    # output head (hidden -> 3), zero-padded to LANE columns for dense stores
    out_w = jax.random.normal(next(ki), (hidden, 3), jnp.float32) * 0.02
    params["out_w_pad"] = jnp.zeros((hidden, LANE), jnp.float32).at[:, :3].set(out_w)
    params["out_b_pad"] = jnp.zeros((1, LANE), jnp.float32)

    params["cls"] = jnp.zeros((hidden,), ACT_DTYPE)   # nn.Parameter(torch.zeros)

    # sinusoidal positional encoding (first seq_len rows)
    position = jnp.arange(seq_len, dtype=jnp.float32)[:, None]
    div_term = jnp.exp(jnp.arange(0, hidden, 2, dtype=jnp.float32)
                       * (-math.log(10000.0) / hidden))
    pe = jnp.zeros((seq_len, hidden), jnp.float32)
    pe = pe.at[:, 0::2].set(jnp.sin(position * div_term))
    pe = pe.at[:, 1::2].set(jnp.cos(position * div_term))
    params["pe"] = pe

    def ffn_params(lp):
        lp["w1"] = (jax.random.normal(next(ki), (hidden, ff), jnp.float32)
                    * 0.02).astype(ACT_DTYPE)
        lp["b1"] = jnp.zeros((1, ff), jnp.float32)
        lp["w2"] = (jax.random.normal(next(ki), (ff, hidden), jnp.float32)
                    * 0.02).astype(ACT_DTYPE)
        lp["b2"] = jnp.zeros((1, hidden), jnp.float32)

    enc_layers = []
    for _ in range(num_layers):
        lp = {"attn": _attn_params(next(ki), hidden, nhead)}
        ffn_params(lp)
        lp["ln1_g"], lp["ln1_b"] = _ln_params(hidden)
        lp["ln2_g"], lp["ln2_b"] = _ln_params(hidden)
        enc_layers.append(lp)
    params["enc_layers"] = enc_layers

    dec_layers = []
    for _ in range(num_layers):
        lp = {"self_attn": _attn_params(next(ki), hidden, nhead),
              "cross_attn": _attn_params(next(ki), hidden, nhead)}
        ffn_params(lp)
        lp["ln1_g"], lp["ln1_b"] = _ln_params(hidden)
        lp["ln2_g"], lp["ln2_b"] = _ln_params(hidden)
        lp["ln3_g"], lp["ln3_b"] = _ln_params(hidden)
        dec_layers.append(lp)
    params["dec_layers"] = dec_layers
    return params


# ----------------------------------------------------------------------------
# Forward pass (mirrors MaskedAutoEncoder.forward, post-norm transformer)
# ----------------------------------------------------------------------------
def masked_autoencoder_forward(params, x, mask_key, *, hidden, nhead,
                               mask_ratio=0.5):
    bsz, c, h, w = x.shape
    hw = h * w
    # random pixel mask: (rand < mask_ratio).float()
    mask = (jax.random.uniform(mask_key, (bsz, 1, h, w)) < mask_ratio
            ).astype(x.dtype)

    x_tok = jnp.transpose(x, (0, 2, 3, 1)).reshape(bsz, hw, c)       # (B, HW, 3)
    m_tok = jnp.transpose(mask, (0, 2, 3, 1)).reshape(bsz, hw, 1)    # (B, HW, 1)

    # fused: mask * x -> embedding -> + positional encoding
    emb = embed_block(x_tok, m_tok, params["emb_w"], params["emb_b"],
                      params["pe"])                                   # (B, HW, D)

    cls = jnp.broadcast_to(params["cls"][None, None, :],
                           (bsz, 1, hidden)).astype(emb.dtype)
    x_embedded = jnp.concatenate([cls, emb], axis=1)                  # (B, HW+1, D)

    # encoder
    memory = x_embedded
    for lp in params["enc_layers"]:
        a = mha_ln_block(memory, memory, lp["attn"], lp["ln1_g"], lp["ln1_b"], nhead)
        memory = ffn_ln_block(a, lp["w1"], lp["b1"], lp["w2"], lp["b2"],
                              lp["ln2_g"], lp["ln2_b"])

    # decoder
    decoded = x_embedded
    for lp in params["dec_layers"]:
        a = mha_ln_block(decoded, decoded, lp["self_attn"],
                         lp["ln1_g"], lp["ln1_b"], nhead)
        a = mha_ln_block(a, memory, lp["cross_attn"],
                         lp["ln2_g"], lp["ln2_b"], nhead)
        decoded = ffn_ln_block(a, lp["w1"], lp["b1"], lp["w2"], lp["b2"],
                               lp["ln3_g"], lp["ln3_b"])

    class_token_output = decoded[:, 0, :].astype(jnp.float32)
    rec_pad = output_head(decoded[:, 1:, :], params["out_w_pad"],
                          params["out_b_pad"])                        # (B, HW, 128)
    rec = rec_pad[:, :, :c].reshape(bsz, h, w, c)
    rec = jnp.transpose(rec, (0, 3, 1, 2))                            # NCHW
    return rec, mask, class_token_output


# ----------------------------------------------------------------------------
if __name__ == "__main__":
    B, C, H, W = 2, 3, 8, 8            # seq = H*W + 1 = 65
    HIDDEN, NHEAD, NUM_LAYERS = 32, 4, 2
    FF = 2048                          # PyTorch TransformerEncoderLayer default
    MASK_RATIO = 0.5

    root = jax.random.PRNGKey(0)
    k_x, k_mask, k_params = jax.random.split(root, 3)

    x = jax.random.normal(k_x, (B, C, H, W), jnp.float32)
    params = init_params(k_params, HIDDEN, NHEAD, NUM_LAYERS, FF, seq_len=H * W)

    fwd = jax.jit(functools.partial(masked_autoencoder_forward,
                                    hidden=HIDDEN, nhead=NHEAD,
                                    mask_ratio=MASK_RATIO))
    rec, mask, cls_out = fwd(params, x, k_mask)
    jax.block_until_ready((rec, mask, cls_out))

    assert rec.shape == (B, C, H, W)
    assert mask.shape == (B, 1, H, W)
    assert cls_out.shape == (B, HIDDEN)
    print("KERNEL_OK")
</pallas_src>

<mosaic_0001>
module attributes {stable_mosaic.version = 11 : i64} {
  func.func @_embed_kernel(%arg0: i32, %arg1: memref<1x64x3xf32, #tpu.memory_space<vmem>>, %arg2: memref<1x64x1xf32, #tpu.memory_space<vmem>>, %arg3: memref<3x32xf32, #tpu.memory_space<vmem>>, %arg4: memref<1x32xf32, #tpu.memory_space<vmem>>, %arg5: memref<64x32xf32, #tpu.memory_space<vmem>>, %arg6: memref<1x64x32xbf16, #tpu.memory_space<vmem>>) attributes {dimension_semantics = [#tpu.dimension_semantics<parallel>], iteration_bounds = array<i64: 2>, scalar_prefetch = 0 : i64, scratch_operands = 0 : i64, tpu.core_type = #tpu.core_type<tc>, window_params = [{transform_indices = @transform_0, window_bounds = array<i64: 1, 64, 3>}, {transform_indices = @transform_1, window_bounds = array<i64: 1, 64, 1>}, {pipeline_mode = #tpu.pipeline_mode<synchronous>, transform_indices = @transform_2, window_bounds = array<i64: 3, 32>}, {pipeline_mode = #tpu.pipeline_mode<synchronous>, transform_indices = @transform_3, window_bounds = array<i64: 1, 32>}, {pipeline_mode = #tpu.pipeline_mode<synchronous>, transform_indices = @transform_4, window_bounds = array<i64: 64, 32>}, {transform_indices = @transform_5, window_bounds = array<i64: 1, 64, 32>}]} {
    %c0 = arith.constant 0 : index
    %c0_0 = arith.constant 0 : index
    %c0_1 = arith.constant 0 : index
    %0 = vector.load %arg1[%c0, %c0_0, %c0_1] : memref<1x64x3xf32, #tpu.memory_space<vmem>>, vector<1x64x3xf32>
    %1 = vector.shape_cast %0 : vector<1x64x3xf32> to vector<64x3xf32>
    %c0_2 = arith.constant 0 : index
    %c0_3 = arith.constant 0 : index
    %c0_4 = arith.constant 0 : index
    %2 = vector.load %arg2[%c0_2, %c0_3, %c0_4] : memref<1x64x1xf32, #tpu.memory_space<vmem>>, vector<1x64x1xf32>
    %3 = vector.shape_cast %2 : vector<1x64x1xf32> to vector<64x1xf32>
    %4 = vector.broadcast %3 : vector<64x1xf32> to vector<64x3xf32>
    %5 = arith.mulf %1, %4 : vector<64x3xf32>
    %c0_5 = arith.constant 0 : index
    %c0_6 = arith.constant 0 : index
    %6 = vector.load %arg3[%c0_5, %c0_6] : memref<3x32xf32, #tpu.memory_space<vmem>>, vector<3x32xf32>
    %cst = arith.constant dense<0.000000e+00> : vector<64x32xf32>
    %7 = tpu.matmul %5, %6, %cst {dimension_numbers = #tpu.dot_dimension_numbers<[1], [0], [0], [1], [0, 0, 1, 1], [], []>} : vector<64x3xf32>, vector<3x32xf32>, vector<64x32xf32> -> vector<64x32xf32>
    %c0_7 = arith.constant 0 : index
    %c0_8 = arith.constant 0 : index
    %8 = vector.load %arg4[%c0_7, %c0_8] : memref<1x32xf32, #tpu.memory_space<vmem>>, vector<1x32xf32>
    %9 = vector.broadcast %8 : vector<1x32xf32> to vector<64x32xf32>
    %10 = arith.addf %7, %9 : vector<64x32xf32>
    %c0_9 = arith.constant 0 : index
    %c0_10 = arith.constant 0 : index
    %11 = vector.load %arg5[%c0_9, %c0_10] : memref<64x32xf32, #tpu.memory_space<vmem>>, vector<64x32xf32>
    %12 = arith.addf %10, %11 : vector<64x32xf32>
    %13 = arith.truncf %12 : vector<64x32xf32> to vector<64x32xbf16>
    %c0_11 = arith.constant 0 : index
    %c0_12 = arith.constant 0 : index
    %c0_13 = arith.constant 0 : index
    %14 = vector.load %arg6[%c0_11, %c0_12, %c0_13] : memref<1x64x32xbf16, #tpu.memory_space<vmem>>, vector<1x64x32xbf16>
    %15 = vector.shape_cast %14 : vector<1x64x32xbf16> to vector<64x32xbf16>
    %16 = vector.shape_cast %13 : vector<64x32xbf16> to vector<1x64x32xbf16>
    tpu.vector_store %arg6[%c0_11, %c0_12, %c0_13], %16 {strides = array<i32>} : memref<1x64x32xbf16, #tpu.memory_space<vmem>>, vector<1x64x32xbf16>,
    return
  }
  func.func @transform_0(%arg0: i32) -> (i32, i32, i32) {
    %c0_i32 = arith.constant 0 : i32
    %c0_i32_0 = arith.constant 0 : i32
    %c0_i32_1 = arith.constant 0 : i32
    return %arg0, %c0_i32, %c0_i32_0 : i32, i32, i32
  }
  func.func @transform_1(%arg0: i32) -> (i32, i32, i32) {
    %c0_i32 = arith.constant 0 : i32
    %c0_i32_0 = arith.constant 0 : i32
    %c0_i32_1 = arith.constant 0 : i32
    return %arg0, %c0_i32, %c0_i32_0 : i32, i32, i32
  }
  func.func @transform_2(%arg0: i32) -> (i32, i32) {
    %c0_i32 = arith.constant 0 : i32
    %c0_i32_0 = arith.constant 0 : i32
    %c0_i32_1 = arith.constant 0 : i32
    return %c0_i32, %c0_i32_0 : i32, i32
  }
  func.func @transform_3(%arg0: i32) -> (i32, i32) {
    %c0_i32 = arith.constant 0 : i32
    %c0_i32_0 = arith.constant 0 : i32
    %c0_i32_1 = arith.constant 0 : i32
    return %c0_i32, %c0_i32_0 : i32, i32
  }
  func.func @transform_4(%arg0: i32) -> (i32, i32) {
    %c0_i32 = arith.constant 0 : i32
    %c0_i32_0 = arith.constant 0 : i32
    %c0_i32_1 = arith.constant 0 : i32
    return %c0_i32, %c0_i32_0 : i32, i32
  }
  func.func @transform_5(%arg0: i32) -> (i32, i32, i32) {
    %c0_i32 = arith.constant 0 : i32
    %c0_i32_0 = arith.constant 0 : i32
    %c0_i32_1 = arith.constant 0 : i32
    return %arg0, %c0_i32, %c0_i32_0 : i32, i32, i32
  }
}

module attributes {stable_mosaic.version = 11 : i64} {
  func.func @_mha_ln_kernel(%arg0: i32, %arg1: memref<1x65x32xbf16, #tpu.memory_space<vmem>>, %arg2: memref<1x65x32xbf16, #tpu.memory_space<vmem>>, %arg3: memref<4x32x8xbf16, #tpu.memory_space<vmem>>, %arg4: memref<4x32x8xbf16, #tpu.memory_space<vmem>>, %arg5: memref<4x32x8xbf16, #tpu.memory_space<vmem>>, %arg6: memref<4x1x8xf32, #tpu.memory_space<vmem>>, %arg7: memref<4x1x8xf32, #tpu.memory_space<vmem>>, %arg8: memref<4x1x8xf32, #tpu.memory_space<vmem>>, %arg9: memref<4x8x32xbf16, #tpu.memory_space<vmem>>, %arg10: memref<1x32xf32, #tpu.memory_space<vmem>>, %arg11: memref<1x32xf32, #tpu.memory_space<vmem>>, %arg12: memref<1x32xf32, #tpu.memory_space<vmem>>, %arg13: memref<1x65x32xbf16, #tpu.memory_space<vmem>>) attributes {dimension_semantics = [#tpu.dimension_semantics<parallel>], iteration_bounds = array<i64: 2>, scalar_prefetch = 0 : i64, scratch_operands = 0 : i64, tpu.core_type = #tpu.core_type<tc>, window_params = [{transform_indices = @transform_0, window_bounds = array<i64: 1, 65, 32>}, {transform_indices = @transform_1, window_bounds = array<i64: 1, 65, 32>}, {pipeline_mode = #tpu.pipeline_mode<synchronous>, transform_indices = @transform_2, window_bounds = array<i64: 4, 32, 8>}, {pipeline_mode = #tpu.pipeline_mode<synchronous>, transform_indices = @transform_3, window_bounds = array<i64: 4, 32, 8>}, {pipeline_mode = #tpu.pipeline_mode<synchronous>, transform_indices = @transform_4, window_bounds = array<i64: 4, 32, 8>}, {pipeline_mode = #tpu.pipeline_mode<synchronous>, transform_indices = @transform_5, window_bounds = array<i64: 4, 1, 8>}, {pipeline_mode = #tpu.pipeline_mode<synchronous>, transform_indices = @transform_6, window_bounds = array<i64: 4, 1, 8>}, {pipeline_mode = #tpu.pipeline_mode<synchronous>, transform_indices = @transform_7, window_bounds = array<i64: 4, 1, 8>}, {pipeline_mode = #tpu.pipeline_mode<synchronous>, transform_indices = @transform_8, window_bounds = array<i64: 4, 8, 32>}, {pipeline_mode = #tpu.pipeline_mode<synchronous>, transform_indices = @transform_9, window_bounds = array<i64: 1, 32>}, {pipeline_mode = #tpu.pipeline_mode<synchronous>, transform_indices = @transform_10, window_bounds = array<i64: 1, 32>}, {pipeline_mode = #tpu.pipeline_mode<synchronous>, transform_indices = @transform_11, window_bounds = array<i64: 1, 32>}, {transform_indices = @transform_12, window_bounds = array<i64: 1, 65, 32>}]} {
    %c0 = arith.constant 0 : index
    %c0_0 = arith.constant 0 : index
    %c0_1 = arith.constant 0 : index
    %0 = vector.load %arg1[%c0, %c0_0, %c0_1] : memref<1x65x32xbf16, #tpu.memory_space<vmem>>, vector<1x65x32xbf16>
    %1 = vector.shape_cast %0 : vector<1x65x32xbf16> to vector<65x32xbf16>
    %c0_2 = arith.constant 0 : index
    %c0_3 = arith.constant 0 : index
    %c0_4 = arith.constant 0 : index
    %2 = vector.load %arg2[%c0_2, %c0_3, %c0_4] : memref<1x65x32xbf16, #tpu.memory_space<vmem>>, vector<1x65x32xbf16>
    %3 = vector.shape_cast %2 : vector<1x65x32xbf16> to vector<65x32xbf16>
    %4 = arith.extf %1 : vector<65x32xbf16> to vector<65x32xf32>
    %cst = arith.constant 0.000000e+00 : f32
    %5 = vector.broadcast %cst : f32 to vector<65x32xf32>
    %c0_5 = arith.constant 0 : index
    %c0_6 = arith.constant 0 : index
    %c0_7 = arith.constant 0 : index
    %6 = vector.load %arg3[%c0_5, %c0_6, %c0_7] : memref<4x32x8xbf16, #tpu.memory_space<vmem>>, vector<1x32x8xbf16>
    %7 = vector.shape_cast %6 : vector<1x32x8xbf16> to vector<32x8xbf16>
    %cst_8 = arith.constant dense<0.000000e+00> : vector<65x8xf32>
    %8 = tpu.matmul %1, %7, %cst_8 {dimension_numbers = #tpu.dot_dimension_numbers<[1], [0], [0], [1], [0, 0, 1, 1], [], []>} : vector<65x32xbf16>, vector<32x8xbf16>, vector<65x8xf32> -> vector<65x8xf32>
    %c0_9 = arith.constant 0 : index
    %c0_10 = arith.constant 0 : index
    %c0_11 = arith.constant 0 : index
    %9 = vector.load %arg6[%c0_9, %c0_10, %c0_11] : memref<4x1x8xf32, #tpu.memory_space<vmem>>, vector<1x1x8xf32>
    %10 = vector.shape_cast %9 : vector<1x1x8xf32> to vector<1x8xf32>
    %11 = vector.broadcast %10 : vector<1x8xf32> to vector<65x8xf32>
    %12 = arith.addf %8, %11 : vector<65x8xf32>
    %c0_12 = arith.constant 0 : index
    %c0_13 = arith.constant 0 : index
    %c0_14 = arith.constant 0 : index
    %13 = vector.load %arg4[%c0_12, %c0_13, %c0_14] : memref<4x32x8xbf16, #tpu.memory_space<vmem>>, vector<1x32x8xbf16>
    %14 = vector.shape_cast %13 : vector<1x32x8xbf16> to vector<32x8xbf16>
    %cst_15 = arith.constant dense<0.000000e+00> : vector<65x8xf32>
    %15 = tpu.matmul %3, %14, %cst_15 {dimension_numbers = #tpu.dot_dimension_numbers<[1], [0], [0], [1], [0, 0, 1, 1], [], []>} : vector<65x32xbf16>, vector<32x8xbf16>, vector<65x8xf32> -> vector<65x8xf32>
    %c0_16 = arith.constant 0 : index
    %c0_17 = arith.constant 0 : index
    %c0_18 = arith.constant 0 : index
    %16 = vector.load %arg7[%c0_16, %c0_17, %c0_18] : memref<4x1x8xf32, #tpu.memory_space<vmem>>, vector<1x1x8xf32>
    %17 = vector.shape_cast %16 : vector<1x1x8xf32> to vector<1x8xf32>
    %18 = vector.broadcast %17 : vector<1x8xf32> to vector<65x8xf32>
    %19 = arith.addf %15, %18 : vector<65x8xf32>
    %c0_19 = arith.constant 0 : index
    %c0_20 = arith.constant 0 : index
    %c0_21 = arith.constant 0 : index
    %20 = vector.load %arg5[%c0_19, %c0_20, %c0_21] : memref<4x32x8xbf16, #tpu.memory_space<vmem>>, vector<1x32x8xbf16>
    %21 = vector.shape_cast %20 : vector<1x32x8xbf16> to vector<32x8xbf16>
    %cst_22 = arith.constant dense<0.000000e+00> : vector<65x8xf32>
    %22 = tpu.matmul %3, %21, %cst_22 {dimension_numbers = #tpu.dot_dimension_numbers<[1], [0], [0], [1], [0, 0, 1, 1], [], []>} : vector<65x32xbf16>, vector<32x8xbf16>, vector<65x8xf32> -> vector<65x8xf32>
    %c0_23 = arith.constant 0 : index
    %c0_24 = arith.constant 0 : index
    %c0_25 = arith.constant 0 : index
    %23 = vector.load %arg8[%c0_23, %c0_24, %c0_25] : memref<4x1x8xf32, #tpu.memory_space<vmem>>, vector<1x1x8xf32>
    %24 = vector.shape_cast %23 : vector<1x1x8xf32> to vector<1x8xf32>
    %25 = vector.broadcast %24 : vector<1x8xf32> to vector<65x8xf32>
    %26 = arith.addf %22, %25 : vector<65x8xf32>
    %27 = tpu.transpose %19, [1, 0] : vector<65x8xf32> -> vector<8x65xf32>
    %cst_26 = arith.constant dense<0.000000e+00> : vector<65x65xf32>
    %28 = tpu.matmul %12, %27, %cst_26 {dimension_numbers = #tpu.dot_dimension_numbers<[1], [0], [0], [1], [0, 0, 1, 1], [], []>} : vector<65x8xf32>, vector<8x65xf32>, vector<65x65xf32> -> vector<65x65xf32>
    %cst_27 = arith.constant 0.353553385 : f32
    %29 = vector.broadcast %cst_27 : f32 to vector<65x65xf32>
    %30 = arith.mulf %28, %29 : vector<65x65xf32>
    %cst_28 = arith.constant dense<0xFF800000> : vector<65xf32>
    %31 = vector.multi_reduction <maximumf>, %30, %cst_28 [1] : vector<65x65xf32> to vector<65xf32>
    %32 = vector.shape_cast %31 : vector<65xf32> to vector<65x1xf32>
    %33 = vector.broadcast %32 : vector<65x1xf32> to vector<65x65xf32>
    %34 = arith.subf %30, %33 : vector<65x65xf32>
    %35 = math.exp %34 : vector<65x65xf32>
    %cst_29 = arith.constant dense<0.000000e+00> : vector<65xf32>
    %36 = vector.multi_reduction <add>, %35, %cst_29 [1] : vector<65x65xf32> to vector<65xf32>
    %37 = vector.shape_cast %36 : vector<65xf32> to vector<65x1xf32>
    %38 = tpu.reciprocal %37 {approx = true} : vector<65x1xf32> -> vector<65x1xf32>
    %39 = vector.broadcast %38 : vector<65x1xf32> to vector<65x65xf32>
    %40 = arith.mulf %35, %39 : vector<65x65xf32>
    %cst_30 = arith.constant dense<0.000000e+00> : vector<65x8xf32>
    %41 = tpu.matmul %40, %26, %cst_30 {dimension_numbers = #tpu.dot_dimension_numbers<[1], [0], [0], [1], [0, 0, 1, 1], [], []>} : vector<65x65xf32>, vector<65x8xf32>, vector<65x8xf32> -> vector<65x8xf32>
    %42 = arith.truncf %41 : vector<65x8xf32> to vector<65x8xbf16>
    %c0_31 = arith.constant 0 : index
    %c0_32 = arith.constant 0 : index
    %c0_33 = arith.constant 0 : index
    %43 = vector.load %arg9[%c0_31, %c0_32, %c0_33] : memref<4x8x32xbf16, #tpu.memory_space<vmem>>, vector<1x8x32xbf16>
    %44 = vector.shape_cast %43 : vector<1x8x32xbf16> to vector<8x32xbf16>
    %cst_34 = arith.constant dense<0.000000e+00> : vector<65x32xf32>
    %45 = tpu.matmul %42, %44, %cst_34 {dimension_numbers = #tpu.dot_dimension_numbers<[1], [0], [0], [1], [0, 0, 1, 1], [], []>} : vector<65x8xbf16>, vector<8x32xbf16>, vector<65x32xf32> -> vector<65x32xf32>
    %46 = arith.addf %5, %45 : vector<65x32xf32>
    %c1 = arith.constant 1 : index
    %c0_35 = arith.constant 0 : index
    %c0_36 = arith.constant 0 : index
    %47 = vector.load %arg3[%c1, %c0_35, %c0_36] : memref<4x32x8xbf16, #tpu.memory_space<vmem>>, vector<1x32x8xbf16>
    %48 = vector.shape_cast %47 : vector<1x32x8xbf16> to vector<32x8xbf16>
    %cst_37 = arith.constant dense<0.000000e+00> : vector<65x8xf32>
    %49 = tpu.matmul %1, %48, %cst_37 {dimension_numbers = #tpu.dot_dimension_numbers<[1], [0], [0], [1], [0, 0, 1, 1], [], []>} : vector<65x32xbf16>, vector<32x8xbf16>, vector<65x8xf32> -> vector<65x8xf32>
    %c1_38 = arith.constant 1 : index
    %c0_39 = arith.constant 0 : index
    %c0_40 = arith.constant 0 : index
    %50 = vector.load %arg6[%c1_38, %c0_39, %c0_40] : memref<4x1x8xf32, #tpu.memory_space<vmem>>, vector<1x1x8xf32>
    %51 = vector.shape_cast %50 : vector<1x1x8xf32> to vector<1x8xf32>
    %52 = vector.broadcast %51 : vector<1x8xf32> to vector<65x8xf32>
    %53 = arith.addf %49, %52 : vector<65x8xf32>
    %c1_41 = arith.constant 1 : index
    %c0_42 = arith.constant 0 : index
    %c0_43 = arith.constant 0 : index
    %54 = vector.load %arg4[%c1_41, %c0_42, %c0_43] : memref<4x32x8xbf16, #tpu.memory_space<vmem>>, vector<1x32x8xbf16>
    %55 = vector.shape_cast %54 : vector<1x32x8xbf16> to vector<32x8xbf16>
    %cst_44 = arith.constant dense<0.000000e+00> : vector<65x8xf32>
    %56 = tpu.matmul %3, %55, %cst_44 {dimension_numbers = #tpu.dot_dimension_numbers<[1], [0], [0], [1], [0, 0, 1, 1], [], []>} : vector<65x32xbf16>, vector<32x8xbf16>, vector<65x8xf32> -> vector<65x8xf32>
    %c1_45 = arith.constant 1 : index
    %c0_46 = arith.constant 0 : index
    %c0_47 = arith.constant 0 : index
    %57 = vector.load %arg7[%c1_45, %c0_46, %c0_47] : memref<4x1x8xf32, #tpu.memory_space<vmem>>, vector<1x1x8xf32>
    %58 = vector.shape_cast %57 : vector<1x1x8xf32> to vector<1x8xf32>
    %59 = vector.broadcast %58 : vector<1x8xf32> to vector<65x8xf32>
    %60 = arith.addf %56, %59 : vector<65x8xf32>
    %c1_48 = arith.constant 1 : index
    %c0_49 = arith.constant 0 : index
    %c0_50 = arith.constant 0 : index
    %61 = vector.load %arg5[%c1_48, %c0_49, %c0_50] : memref<4x32x8xbf16, #tpu.memory_space<vmem>>, vector<1x32x8xbf16>
    %62 = vector.shape_cast %61 : vector<1x32x8xbf16> to vector<32x8xbf16>
    %cst_51 = arith.constant dense<0.000000e+00> : vector<65x8xf32>
    %63 = tpu.matmul %3, %62, %cst_51 {dimension_numbers = #tpu.dot_dimension_numbers<[1], [0], [0], [1], [0, 0, 1, 1], [], []>} : vector<65x32xbf16>, vector<32x8xbf16>, vector<65x8xf32> -> vector<65x8xf32>
    %c1_52 = arith.constant 1 : index
    %c0_53 = arith.constant 0 : index
    %c0_54 = arith.constant 0 : index
    %64 = vector.load %arg8[%c1_52, %c0_53, %c0_54] : memref<4x1x8xf32, #tpu.memory_space<vmem>>, vector<1x1x8xf32>
    %65 = vector.shape_cast %64 : vector<1x1x8xf32> to vector<1x8xf32>
    %66 = vector.broadcast %65 : vector<1x8xf32> to vector<65x8xf32>
    %67 = arith.addf %63, %66 : vector<65x8xf32>
    %68 = tpu.transpose %60, [1, 0] : vector<65x8xf32> -> vector<8x65xf32>
    %cst_55 = arith.constant dense<0.000000e+00> : vector<65x65xf32>
    %69 = tpu.matmul %53, %68, %cst_55 {dimension_numbers = #tpu.dot_dimension_numbers<[1], [0], [0], [1], [0, 0, 1, 1], [], []>} : vector<65x8xf32>, vector<8x65xf32>, vector<65x65xf32> -> vector<65x65xf32>
    %cst_56 = arith.constant 0.353553385 : f32
    %70 = vector.broadcast %cst_56 : f32 to vector<65x65xf32>
    %71 = arith.mulf %69, %70 : vector<65x65xf32>
    %cst_57 = arith.constant dense<0xFF800000> : vector<65xf32>
    %72 = vector.multi_reduction <maximumf>, %71, %cst_57 [1] : vector<65x65xf32> to vector<65xf32>
    %73 = vector.shape_cast %72 : vector<65xf32> to vector<65x1xf32>
    %74 = vector.broadcast %73 : vector<65x1xf32> to vector<65x65xf32>
    %75 = arith.subf %71, %74 : vector<65x65xf32>
    %76 = math.exp %75 : vector<65x65xf32>
    %cst_58 = arith.constant dense<0.000000e+00> : vector<65xf32>
    %77 = vector.multi_reduction <add>, %76, %cst_58 [1] : vector<65x65xf32> to vector<65xf32>
    %78 = vector.shape_cast %77 : vector<65xf32> to vector<65x1xf32>
    %79 = tpu.reciprocal %78 {approx = true} : vector<65x1xf32> -> vector<65x1xf32>
    %80 = vector.broadcast %79 : vector<65x1xf32> to vector<65x65xf32>
    %81 = arith.mulf %76, %80 : vector<65x65xf32>
    %cst_59 = arith.constant dense<0.000000e+00> : vector<65x8xf32>
    %82 = tpu.matmul %81, %67, %cst_59 {dimension_numbers = #tpu.dot_dimension_numbers<[1], [0], [0], [1], [0, 0, 1, 1], [], []>} : vector<65x65xf32>, vector<65x8xf32>, vector<65x8xf32> -> vector<65x8xf32>
    %83 = arith.truncf %82 : vector<65x8xf32> to vector<65x8xbf16>
    %c1_60 = arith.constant 1 : index
    %c0_61 = arith.constant 0 : index
    %c0_62 = arith.constant 0 : index
    %84 = vector.load %arg9[%c1_60, %c0_61, %c0_62] : memref<4x8x32xbf16, #tpu.memory_space<vmem>>, vector<1x8x32xbf16>
    %85 = vector.shape_cast %84 : vector<1x8x32xbf16> to vector<8x32xbf16>
    %cst_63 = arith.constant dense<0.000000e+00> : vector<65x32xf32>
    %86 = tpu.matmul %83, %85, %cst_63 {dimension_numbers = #tpu.dot_dimension_numbers<[1], [0], [0], [1], [0, 0, 1, 1], [], []>} : vector<65x8xbf16>, vector<8x32xbf16>, vector<65x32xf32> -> vector<65x32xf32>
    %87 = arith.addf %46, %86 : vector<65x32xf32>
    %c2 = arith.constant 2 : index
    %c0_64 = arith.constant 0 : index
    %c0_65 = arith.constant 0 : index
    %88 = vector.load %arg3[%c2, %c0_64, %c0_65] : memref<4x32x8xbf16, #tpu.memory_space<vmem>>, vector<1x32x8xbf16>
    %89 = vector.shape_cast %88 : vector<1x32x8xbf16> to vector<32x8xbf16>
    %cst_66 = arith.constant dense<0.000000e+00> : vector<65x8xf32>
    %90 = tpu.matmul %1, %89, %cst_66 {dimension_numbers = #tpu.dot_dimension_numbers<[1], [0], [0], [1], [0, 0, 1, 1], [], []>} : vector<65x32xbf16>, vector<32x8xbf16>, vector<65x8xf32> -> vector<65x8xf32>
    %c2_67 = arith.constant 2 : index
    %c0_68 = arith.constant 0 : index
    %c0_69 = arith.constant 0 : index
    %91 = vector.load %arg6[%c2_67, %c0_68, %c0_69] : memref<4x1x8xf32, #tpu.memory_space<vmem>>, vector<1x1x8xf32>
    %92 = vector.shape_cast %91 : vector<1x1x8xf32> to vector<1x8xf32>
    %93 = vector.broadcast %92 : vector<1x8xf32> to vector<65x8xf32>
    %94 = arith.addf %90, %93 : vector<65x8xf32>
    %c2_70 = arith.constant 2 : index
    %c0_71 = arith.constant 0 : index
    %c0_72 = arith.constant 0 : index
    %95 = vector.load %arg4[%c2_70, %c0_71, %c0_72] : memref<4x32x8xbf16, #tpu.memory_space<vmem>>, vector<1x32x8xbf16>
    %96 = vector.shape_cast %95 : vector<1x32x8xbf16> to vector<32x8xbf16>
    %cst_73 = arith.constant dense<0.000000e+00> : vector<65x8xf32>
    %97 = tpu.matmul %3, %96, %cst_73 {dimension_numbers = #tpu.dot_dimension_numbers<[1], [0], [0], [1], [0, 0, 1, 1], [], []>} : vector<65x32xbf16>, vector<32x8xbf16>, vector<65x8xf32> -> vector<65x8xf32>
    %c2_74 = arith.constant 2 : index
    %c0_75 = arith.constant 0 : index
    %c0_76 = arith.constant 0 : index
    %98 = vector.load %arg7[%c2_74, %c0_75, %c0_76] : memref<4x1x8xf32, #tpu.memory_space<vmem>>, vector<1x1x8xf32>
    %99 = vector.shape_cast %98 : vector<1x1x8xf32> to vector<1x8xf32>
    %100 = vector.broadcast %99 : vector<1x8xf32> to vector<65x8xf32>
    %101 = arith.addf %97, %100 : vector<65x8xf32>
    %c2_77 = arith.constant 2 : index
    %c0_78 = arith.constant 0 : index
    %c0_79 = arith.constant 0 : index
    %102 = vector.load %arg5[%c2_77, %c0_78, %c0_79] : memref<4x32x8xbf16, #tpu.memory_space<vmem>>, vector<1x32x8xbf16>
    %103 = vector.shape_cast %102 : vector<1x32x8xbf16> to vector<32x8xbf16>
    %cst_80 = arith.constant dense<0.000000e+00> : vector<65x8xf32>
    %104 = tpu.matmul %3, %103, %cst_80 {dimension_numbers = #tpu.dot_dimension_numbers<[1], [0], [0], [1], [0, 0, 1, 1], [], []>} : vector<65x32xbf16>, vector<32x8xbf16>, vector<65x8xf32> -> vector<65x8xf32>
    %c2_81 = arith.constant 2 : index
    %c0_82 = arith.constant 0 : index
    %c0_83 = arith.constant 0 : index
    %105 = vector.load %arg8[%c2_81, %c0_82, %c0_83] : memref<4x1x8xf32, #tpu.memory_space<vmem>>, vector<1x1x8xf32>
    %106 = vector.shape_cast %105 : vector<1x1x8xf32> to vector<1x8xf32>
    %107 = vector.broadcast %106 : vector<1x8xf32> to vector<65x8xf32>
    %108 = arith.addf %104, %107 : vector<65x8xf32>
    %109 = tpu.transpose %101, [1, 0] : vector<65x8xf32> -> vector<8x65xf32>
    %cst_84 = arith.constant dense<0.000000e+00> : vector<65x65xf32>
    %110 = tpu.matmul %94, %109, %cst_84 {dimension_numbers = #tpu.dot_dimension_numbers<[1], [0], [0], [1], [0, 0, 1, 1], [], []>} : vector<65x8xf32>, vector<8x65xf32>, vector<65x65xf32> -> vector<65x65xf32>
    %cst_85 = arith.constant 0.353553385 : f32
    %111 = vector.broadcast %cst_85 : f32 to vector<65x65xf32>
    %112 = arith.mulf %110, %111 : vector<65x65xf32>
    %cst_86 = arith.constant dense<0xFF800000> : vector<65xf32>
    %113 = vector.multi_reduction <maximumf>, %112, %cst_86 [1] : vector<65x65xf32> to vector<65xf32>
    %114 = vector.shape_cast %113 : vector<65xf32> to vector<65x1xf32>
    %115 = vector.broadcast %114 : vector<65x1xf32> to vector<65x65xf32>
    %116 = arith.subf %112, %115 : vector<65x65xf32>
    %117 = math.exp %116 : vector<65x65xf32>
    %cst_87 = arith.constant dense<0.000000e+00> : vector<65xf32>
    %118 = vector.multi_reduction <add>, %117, %cst_87 [1] : vector<65x65xf32> to vector<65xf32>
    %119 = vector.shape_cast %118 : vector<65xf32> to vector<65x1xf32>
    %120 = tpu.reciprocal %119 {approx = true} : vector<65x1xf32> -> vector<65x1xf32>
    %121 = vector.broadcast %120 : vector<65x1xf32> to vector<65x65xf32>
    %122 = arith.mulf %117, %121 : vector<65x65xf32>
    %cst_88 = arith.constant dense<0.000000e+00> : vector<65x8xf32>
    %123 = tpu.matmul %122, %108, %cst_88 {dimension_numbers = #tpu.dot_dimension_numbers<[1], [0], [0], [1], [0, 0, 1, 1], [], []>} : vector<65x65xf32>, vector<65x8xf32>, vector<65x8xf32> -> vector<65x8xf32>
    %124 = arith.truncf %123 : vector<65x8xf32> to vector<65x8xbf16>
    %c2_89 = arith.constant 2 : index
    %c0_90 = arith.constant 0 : index
    %c0_91 = arith.constant 0 : index
    %125 = vector.load %arg9[%c2_89, %c0_90, %c0_91] : memref<4x8x32xbf16, #tpu.memory_space<vmem>>, vector<1x8x32xbf16>
    %126 = vector.shape_cast %125 : vector<1x8x32xbf16> to vector<8x32xbf16>
    %cst_92 = arith.constant dense<0.000000e+00> : vector<65x32xf32>
    %127 = tpu.matmul %124, %126, %cst_92 {dimension_numbers = #tpu.dot_dimension_numbers<[1], [0], [0], [1], [0, 0, 1, 1], [], []>} : vector<65x8xbf16>, vector<8x32xbf16>, vector<65x32xf32> -> vector<65x32xf32>
    %128 = arith.addf %87, %127 : vector<65x32xf32>
    %c3 = arith.constant 3 : index
    %c0_93 = arith.constant 0 : index
    %c0_94 = arith.constant 0 : index
    %129 = vector.load %arg3[%c3, %c0_93, %c0_94] : memref<4x32x8xbf16, #tpu.memory_space<vmem>>, vector<1x32x8xbf16>
    %130 = vector.shape_cast %129 : vector<1x32x8xbf16> to vector<32x8xbf16>
    %cst_95 = arith.constant dense<0.000000e+00> : vector<65x8xf32>
    %131 = tpu.matmul %1, %130, %cst_95 {dimension_numbers = #tpu.dot_dimension_numbers<[1], [0], [0], [1], [0, 0, 1, 1], [], []>} : vector<65x32xbf16>, vector<32x8xbf16>, vector<65x8xf32> -> vector<65x8xf32>
    %c3_96 = arith.constant 3 : index
    %c0_97 = arith.constant 0 : index
    %c0_98 = arith.constant 0 : index
    %132 = vector.load %arg6[%c3_96, %c0_97, %c0_98] : memref<4x1x8xf32, #tpu.memory_space<vmem>>, vector<1x1x8xf32>
    %133 = vector.shape_cast %132 : vector<1x1x8xf32> to vector<1x8xf32>
    %134 = vector.broadcast %133 : vector<1x8xf32> to vector<65x8xf32>
    %135 = arith.addf %131, %134 : vector<65x8xf32>
    %c3_99 = arith.constant 3 : index
    %c0_100 = arith.constant 0 : index
    %c0_101 = arith.constant 0 : index
    %136 = vector.load %arg4[%c3_99, %c0_100, %c0_101] : memref<4x32x8xbf16, #tpu.memory_space<vmem>>, vector<1x32x8xbf16>
    %137 = vector.shape_cast %136 : vector<1x32x8xbf16> to vector<32x8xbf16>
    %cst_102 = arith.constant dense<0.000000e+00> : vector<65x8xf32>
    %138 = tpu.matmul %3, %137, %cst_102 {dimension_numbers = #tpu.dot_dimension_numbers<[1], [0], [0], [1], [0, 0, 1, 1], [], []>} : vector<65x32xbf16>, vector<32x8xbf16>, vector<65x8xf32> -> vector<65x8xf32>
    %c3_103 = arith.constant 3 : index
    %c0_104 = arith.constant 0 : index
    %c0_105 = arith.constant 0 : index
    %139 = vector.load %arg7[%c3_103, %c0_104, %c0_105] : memref<4x1x8xf32, #tpu.memory_space<vmem>>, vector<1x1x8xf32>
    %140 = vector.shape_cast %139 : vector<1x1x8xf32> to vector<1x8xf32>
    %141 = vector.broadcast %140 : vector<1x8xf32> to vector<65x8xf32>
    %142 = arith.addf %138, %141 : vector<65x8xf32>
    %c3_106 = arith.constant 3 : index
    %c0_107 = arith.constant 0 : index
    %c0_108 = arith.constant 0 : index
    %143 = vector.load %arg5[%c3_106, %c0_107, %c0_108] : memref<4x32x8xbf16, #tpu.memory_space<vmem>>, vector<1x32x8xbf16>
    %144 = vector.shape_cast %143 : vector<1x32x8xbf16> to vector<32x8xbf16>
    %cst_109 = arith.constant dense<0.000000e+00> : vector<65x8xf32>
    %145 = tpu.matmul %3, %144, %cst_109 {dimension_numbers = #tpu.dot_dimension_numbers<[1], [0], [0], [1], [0, 0, 1, 1], [], []>} : vector<65x32xbf16>, vector<32x8xbf16>, vector<65x8xf32> -> vector<65x8xf32>
    %c3_110 = arith.constant 3 : index
    %c0_111 = arith.constant 0 : index
    %c0_112 = arith.constant 0 : index
    %146 = vector.load %arg8[%c3_110, %c0_111, %c0_112] : memref<4x1x8xf32, #tpu.memory_space<vmem>>, vector<1x1x8xf32>
    %147 = vector.shape_cast %146 : vector<1x1x8xf32> to vector<1x8xf32>
    %148 = vector.broadcast %147 : vector<1x8xf32> to vector<65x8xf32>
    %149 = arith.addf %145, %148 : vector<65x8xf32>
    %150 = tpu.transpose %142, [1, 0] : vector<65x8xf32> -> vector<8x65xf32>
    %cst_113 = arith.constant dense<0.000000e+00> : vector<65x65xf32>
    %151 = tpu.matmul %135, %150, %cst_113 {dimension_numbers = #tpu.dot_dimension_numbers<[1], [0], [0], [1], [0, 0, 1, 1], [], []>} : vector<65x8xf32>, vector<8x65xf32>, vector<65x65xf32> -> vector<65x65xf32>
    %cst_114 = arith.constant 0.353553385 : f32
    %152 = vector.broadcast %cst_114 : f32 to vector<65x65xf32>
    %153 = arith.mulf %151, %152 : vector<65x65xf32>
    %cst_115 = arith.constant dense<0xFF800000> : vector<65xf32>
    %154 = vector.multi_reduction <maximumf>, %153, %cst_115 [1] : vector<65x65xf32> to vector<65xf32>
    %155 = vector.shape_cast %154 : vector<65xf32> to vector<65x1xf32>
    %156 = vector.broadcast %155 : vector<65x1xf32> to vector<65x65xf32>
    %157 = arith.subf %153, %156 : vector<65x65xf32>
    %158 = math.exp %157 : vector<65x65xf32>
    %cst_116 = arith.constant dense<0.000000e+00> : vector<65xf32>
    %159 = vector.multi_reduction <add>, %158, %cst_116 [1] : vector<65x65xf32> to vector<65xf32>
    %160 = vector.shape_cast %159 : vector<65xf32> to vector<65x1xf32>
    %161 = tpu.reciprocal %160 {approx = true} : vector<65x1xf32> -> vector<65x1xf32>
    %162 = vector.broadcast %161 : vector<65x1xf32> to vector<65x65xf32>
    %163 = arith.mulf %158, %162 : vector<65x65xf32>
    %cst_117 = arith.constant dense<0.000000e+00> : vector<65x8xf32>
    %164 = tpu.matmul %163, %149, %cst_117 {dimension_numbers = #tpu.dot_dimension_numbers<[1], [0], [0], [1], [0, 0, 1, 1], [], []>} : vector<65x65xf32>, vector<65x8xf32>, vector<65x8xf32> -> vector<65x8xf32>
    %165 = arith.truncf %164 : vector<65x8xf32> to vector<65x8xbf16>
    %c3_118 = arith.constant 3 : index
    %c0_119 = arith.constant 0 : index
    %c0_120 = arith.constant 0 : index
    %166 = vector.load %arg9[%c3_118, %c0_119, %c0_120] : memref<4x8x32xbf16, #tpu.memory_space<vmem>>, vector<1x8x32xbf16>
    %167 = vector.shape_cast %166 : vector<1x8x32xbf16> to vector<8x32xbf16>
    %cst_121 = arith.constant dense<0.000000e+00> : vector<65x32xf32>
    %168 = tpu.matmul %165, %167, %cst_121 {dimension_numbers = #tpu.dot_dimension_numbers<[1], [0], [0], [1], [0, 0, 1, 1], [], []>} : vector<65x8xbf16>, vector<8x32xbf16>, vector<65x32xf32> -> vector<65x32xf32>
    %169 = arith.addf %128, %168 : vector<65x32xf32>
    %170 = arith.addf %4, %169 : vector<65x32xf32>
    %c0_122 = arith.constant 0 : index
    %c0_123 = arith.constant 0 : index
    %171 = vector.load %arg10[%c0_122, %c0_123] : memref<1x32xf32, #tpu.memory_space<vmem>>, vector<1x32xf32>
    %172 = vector.broadcast %171 : vector<1x32xf32> to vector<65x32xf32>
    %173 = arith.addf %170, %172 : vector<65x32xf32>
    %cst_124 = arith.constant dense<0.000000e+00> : vector<65xf32>
    %174 = vector.multi_reduction <add>, %173, %cst_124 [1] : vector<65x32xf32> to vector<65xf32>
    %175 = vector.shape_cast %174 : vector<65xf32> to vector<65x1xf32>
    %cst_125 = arith.constant 3.200000e+01 : f32
    %176 = vector.broadcast %cst_125 : f32 to vector<65x1xf32>
    %177 = arith.divf %175, %176 : vector<65x1xf32>
    %178 = vector.broadcast %177 : vector<65x1xf32> to vector<65x32xf32>
    %179 = arith.subf %173, %178 : vector<65x32xf32>
    %180 = arith.mulf %179, %179 : vector<65x32xf32>
    %cst_126 = arith.constant dense<0.000000e+00> : vector<65xf32>
    %181 = vector.multi_reduction <add>, %180, %cst_126 [1] : vector<65x32xf32> to vector<65xf32>
    %182 = vector.shape_cast %181 : vector<65xf32> to vector<65x1xf32>
    %cst_127 = arith.constant 3.200000e+01 : f32
    %183 = vector.broadcast %cst_127 : f32 to vector<65x1xf32>
    %184 = arith.divf %182, %183 : vector<65x1xf32>
    %185 = vector.broadcast %177 : vector<65x1xf32> to vector<65x32xf32>
    %186 = arith.subf %173, %185 : vector<65x32xf32>
    %cst_128 = arith.constant 9.99999974E-6 : f32
    %187 = vector.broadcast %cst_128 : f32 to vector<65x1xf32>
    %188 = arith.addf %184, %187 : vector<65x1xf32>
    %189 = math.rsqrt %188 : vector<65x1xf32>
    %190 = vector.broadcast %189 : vector<65x1xf32> to vector<65x32xf32>
    %191 = arith.mulf %186, %190 : vector<65x32xf32>
    %c0_129 = arith.constant 0 : index
    %c0_130 = arith.constant 0 : index
    %192 = vector.load %arg11[%c0_129, %c0_130] : memref<1x32xf32, #tpu.memory_space<vmem>>, vector<1x32xf32>
    %193 = vector.broadcast %192 : vector<1x32xf32> to vector<65x32xf32>
    %194 = arith.mulf %191, %193 : vector<65x32xf32>
    %c0_131 = arith.constant 0 : index
    %c0_132 = arith.constant 0 : index
    %195 = vector.load %arg12[%c0_131, %c0_132] : memref<1x32xf32, #tpu.memory_space<vmem>>, vector<1x32xf32>
    %196 = vector.broadcast %195 : vector<1x32xf32> to vector<65x32xf32>
    %197 = arith.addf %194, %196 : vector<65x32xf32>
    %198 = arith.truncf %197 : vector<65x32xf32> to vector<65x32xbf16>
    %c0_133 = arith.constant 0 : index
    %c0_134 = arith.constant 0 : index
    %c0_135 = arith.constant 0 : index
    %199 = vector.load %arg13[%c0_133, %c0_134, %c0_135] : memref<1x65x32xbf16, #tpu.memory_space<vmem>>, vector<1x65x32xbf16>
    %200 = vector.shape_cast %199 : vector<1x65x32xbf16> to vector<65x32xbf16>
    %201 = vector.shape_cast %198 : vector<65x32xbf16> to vector<1x65x32xbf16>
    tpu.vector_store %arg13[%c0_133, %c0_134, %c0_135], %201 {strides = array<i32>} : memref<1x65x32xbf16, #tpu.memory_space<vmem>>, vector<1x65x32xbf16>,
    return
  }
  func.func @transform_0(%arg0: i32) -> (i32, i32, i32) {
    %c0_i32 = arith.constant 0 : i32
    %c0_i32_0 = arith.constant 0 : i32
    %c0_i32_1 = arith.constant 0 : i32
    return %arg0, %c0_i32, %c0_i32_0 : i32, i32, i32
  }
  func.func @transform_1(%arg0: i32) -> (i32, i32, i32) {
    %c0_i32 = arith.constant 0 : i32
    %c0_i32_0 = arith.constant 0 : i32
    %c0_i32_1 = arith.constant 0 : i32
    return %arg0, %c0_i32, %c0_i32_0 : i32, i32, i32
  }
  func.func @transform_2(%arg0: i32) -> (i32, i32, i32) {
    %c0_i32 = arith.constant 0 : i32
    %c0_i32_0 = arith.constant 0 : i32
    %c0_i32_1 = arith.constant 0 : i32
    %c0_i32_2 = arith.constant 0 : i32
    return %c0_i32, %c0_i32_0, %c0_i32_1 : i32, i32, i32
  }
  func.func @transform_3(%arg0: i32) -> (i32, i32, i32) {
    %c0_i32 = arith.constant 0 : i32
    %c0_i32_0 = arith.constant 0 : i32
    %c0_i32_1 = arith.constant 0 : i32
    %c0_i32_2 = arith.constant 0 : i32
    return %c0_i32, %c0_i32_0, %c0_i32_1 : i32, i32, i32
  }
  func.func @transform_4(%arg0: i32) -> (i32, i32, i32) {
    %c0_i32 = arith.constant 0 : i32
    %c0_i32_0 = arith.constant 0 : i32
    %c0_i32_1 = arith.constant 0 : i32
    %c0_i32_2 = arith.constant 0 : i32
    return %c0_i32, %c0_i32_0, %c0_i32_1 : i32, i32, i32
  }
  func.func @transform_5(%arg0: i32) -> (i32, i32, i32) {
    %c0_i32 = arith.constant 0 : i32
    %c0_i32_0 = arith.constant 0 : i32
    %c0_i32_1 = arith.constant 0 : i32
    %c0_i32_2 = arith.constant 0 : i32
    return %c0_i32, %c0_i32_0, %c0_i32_1 : i32, i32, i32
  }
  func.func @transform_6(%arg0: i32) -> (i32, i32, i32) {
    %c0_i32 = arith.constant 0 : i32
    %c0_i32_0 = arith.constant 0 : i32
    %c0_i32_1 = arith.constant 0 : i32
    %c0_i32_2 = arith.constant 0 : i32
    return %c0_i32, %c0_i32_0, %c0_i32_1 : i32, i32, i32
  }
  func.func @transform_7(%arg0: i32) -> (i32, i32, i32) {
    %c0_i32 = arith.constant 0 : i32
    %c0_i32_0 = arith.constant 0 : i32
    %c0_i32_1 = arith.constant 0 : i32
    %c0_i32_2 = arith.constant 0 : i32
    return %c0_i32, %c0_i32_0, %c0_i32_1 : i32, i32, i32
  }
  func.func @transform_8(%arg0: i32) -> (i32, i32, i32) {
    %c0_i32 = arith.constant 0 : i32
    %c0_i32_0 = arith.constant 0 : i32
    %c0_i32_1 = arith.constant 0 : i32
    %c0_i32_2 = arith.constant 0 : i32
    return %c0_i32, %c0_i32_0, %c0_i32_1 : i32, i32, i32
  }
  func.func @transform_9(%arg0: i32) -> (i32, i32) {
    %c0_i32 = arith.constant 0 : i32
    %c0_i32_0 = arith.constant 0 : i32
    %c0_i32_1 = arith.constant 0 : i32
    return %c0_i32, %c0_i32_0 : i32, i32
  }
  func.func @transform_10(%arg0: i32) -> (i32, i32) {
    %c0_i32 = arith.constant 0 : i32
    %c0_i32_0 = arith.constant 0 : i32
    %c0_i32_1 = arith.constant 0 : i32
    return %c0_i32, %c0_i32_0 : i32, i32
  }
  func.func @transform_11(%arg0: i32) -> (i32, i32) {
    %c0_i32 = arith.constant 0 : i32
    %c0_i32_0 = arith.constant 0 : i32
    %c0_i32_1 = arith.constant 0 : i32
    return %c0_i32, %c0_i32_0 : i32, i32
  }
  func.func @transform_12(%arg0: i32) -> (i32, i32, i32) {
    %c0_i32 = arith.constant 0 : i32
    %c0_i32_0 = arith.constant 0 : i32
    %c0_i32_1 = arith.constant 0 : i32
    return %arg0, %c0_i32, %c0_i32_0 : i32, i32, i32
  }
}

module attributes {stable_mosaic.version = 11 : i64} {
  func.func @_ffn_ln_kernel(%arg0: i32, %arg1: memref<1x65x32xbf16, #tpu.memory_space<vmem>>, %arg2: memref<32x2048xbf16, #tpu.memory_space<vmem>>, %arg3: memref<1x2048xf32, #tpu.memory_space<vmem>>, %arg4: memref<2048x32xbf16, #tpu.memory_space<vmem>>, %arg5: memref<1x32xf32, #tpu.memory_space<vmem>>, %arg6: memref<1x32xf32, #tpu.memory_space<vmem>>, %arg7: memref<1x32xf32, #tpu.memory_space<vmem>>, %arg8: memref<1x65x32xbf16, #tpu.memory_space<vmem>>) attributes {dimension_semantics = [#tpu.dimension_semantics<parallel>], iteration_bounds = array<i64: 2>, scalar_prefetch = 0 : i64, scratch_operands = 0 : i64, tpu.core_type = #tpu.core_type<tc>, window_params = [{transform_indices = @transform_0, window_bounds = array<i64: 1, 65, 32>}, {pipeline_mode = #tpu.pipeline_mode<synchronous>, transform_indices = @transform_1, window_bounds = array<i64: 32, 2048>}, {pipeline_mode = #tpu.pipeline_mode<synchronous>, transform_indices = @transform_2, window_bounds = array<i64: 1, 2048>}, {pipeline_mode = #tpu.pipeline_mode<synchronous>, transform_indices = @transform_3, window_bounds = array<i64: 2048, 32>}, {pipeline_mode = #tpu.pipeline_mode<synchronous>, transform_indices = @transform_4, window_bounds = array<i64: 1, 32>}, {pipeline_mode = #tpu.pipeline_mode<synchronous>, transform_indices = @transform_5, window_bounds = array<i64: 1, 32>}, {pipeline_mode = #tpu.pipeline_mode<synchronous>, transform_indices = @transform_6, window_bounds = array<i64: 1, 32>}, {transform_indices = @transform_7, window_bounds = array<i64: 1, 65, 32>}]} {
    %c0 = arith.constant 0 : index
    %c0_0 = arith.constant 0 : index
    %c0_1 = arith.constant 0 : index
    %0 = vector.load %arg1[%c0, %c0_0, %c0_1] : memref<1x65x32xbf16, #tpu.memory_space<vmem>>, vector<1x65x32xbf16>
    %1 = vector.shape_cast %0 : vector<1x65x32xbf16> to vector<65x32xbf16>
    %2 = arith.extf %1 : vector<65x32xbf16> to vector<65x32xf32>
    %c0_2 = arith.constant 0 : index
    %c0_3 = arith.constant 0 : index
    %3 = vector.load %arg2[%c0_2, %c0_3] : memref<32x2048xbf16, #tpu.memory_space<vmem>>, vector<32x2048xbf16>
    %cst = arith.constant dense<0.000000e+00> : vector<65x2048xf32>
    %4 = tpu.matmul %1, %3, %cst {dimension_numbers = #tpu.dot_dimension_numbers<[1], [0], [0], [1], [0, 0, 1, 1], [], []>} : vector<65x32xbf16>, vector<32x2048xbf16>, vector<65x2048xf32> -> vector<65x2048xf32>
    %c0_4 = arith.constant 0 : index
    %c0_5 = arith.constant 0 : index
    %5 = vector.load %arg3[%c0_4, %c0_5] : memref<1x2048xf32, #tpu.memory_space<vmem>>, vector<1x2048xf32>
    %6 = vector.broadcast %5 : vector<1x2048xf32> to vector<65x2048xf32>
    %7 = arith.addf %4, %6 : vector<65x2048xf32>
    %cst_6 = arith.constant 0.000000e+00 : f32
    %8 = vector.broadcast %cst_6 : f32 to vector<65x2048xf32>
    %9 = arith.maximumf %7, %8 : vector<65x2048xf32>
    %10 = arith.truncf %9 : vector<65x2048xf32> to vector<65x2048xbf16>
    %c0_7 = arith.constant 0 : index
    %c0_8 = arith.constant 0 : index
    %11 = vector.load %arg4[%c0_7, %c0_8] : memref<2048x32xbf16, #tpu.memory_space<vmem>>, vector<2048x32xbf16>
    %cst_9 = arith.constant dense<0.000000e+00> : vector<65x32xf32>
    %12 = tpu.matmul %10, %11, %cst_9 {dimension_numbers = #tpu.dot_dimension_numbers<[1], [0], [0], [1], [0, 0, 1, 1], [], []>} : vector<65x2048xbf16>, vector<2048x32xbf16>, vector<65x32xf32> -> vector<65x32xf32>
    %13 = arith.addf %2, %12 : vector<65x32xf32>
    %c0_10 = arith.constant 0 : index
    %c0_11 = arith.constant 0 : index
    %14 = vector.load %arg5[%c0_10, %c0_11] : memref<1x32xf32, #tpu.memory_space<vmem>>, vector<1x32xf32>
    %15 = vector.broadcast %14 : vector<1x32xf32> to vector<65x32xf32>
    %16 = arith.addf %13, %15 : vector<65x32xf32>
    %cst_12 = arith.constant dense<0.000000e+00> : vector<65xf32>
    %17 = vector.multi_reduction <add>, %16, %cst_12 [1] : vector<65x32xf32> to vector<65xf32>
    %18 = vector.shape_cast %17 : vector<65xf32> to vector<65x1xf32>
    %cst_13 = arith.constant 3.200000e+01 : f32
    %19 = vector.broadcast %cst_13 : f32 to vector<65x1xf32>
    %20 = arith.divf %18, %19 : vector<65x1xf32>
    %21 = vector.broadcast %20 : vector<65x1xf32> to vector<65x32xf32>
    %22 = arith.subf %16, %21 : vector<65x32xf32>
    %23 = arith.mulf %22, %22 : vector<65x32xf32>
    %cst_14 = arith.constant dense<0.000000e+00> : vector<65xf32>
    %24 = vector.multi_reduction <add>, %23, %cst_14 [1] : vector<65x32xf32> to vector<65xf32>
    %25 = vector.shape_cast %24 : vector<65xf32> to vector<65x1xf32>
    %cst_15 = arith.constant 3.200000e+01 : f32
    %26 = vector.broadcast %cst_15 : f32 to vector<65x1xf32>
    %27 = arith.divf %25, %26 : vector<65x1xf32>
    %28 = vector.broadcast %20 : vector<65x1xf32> to vector<65x32xf32>
    %29 = arith.subf %16, %28 : vector<65x32xf32>
    %cst_16 = arith.constant 9.99999974E-6 : f32
    %30 = vector.broadcast %cst_16 : f32 to vector<65x1xf32>
    %31 = arith.addf %27, %30 : vector<65x1xf32>
    %32 = math.rsqrt %31 : vector<65x1xf32>
    %33 = vector.broadcast %32 : vector<65x1xf32> to vector<65x32xf32>
    %34 = arith.mulf %29, %33 : vector<65x32xf32>
    %c0_17 = arith.constant 0 : index
    %c0_18 = arith.constant 0 : index
    %35 = vector.load %arg6[%c0_17, %c0_18] : memref<1x32xf32, #tpu.memory_space<vmem>>, vector<1x32xf32>
    %36 = vector.broadcast %35 : vector<1x32xf32> to vector<65x32xf32>
    %37 = arith.mulf %34, %36 : vector<65x32xf32>
    %c0_19 = arith.constant 0 : index
    %c0_20 = arith.constant 0 : index
    %38 = vector.load %arg7[%c0_19, %c0_20] : memref<1x32xf32, #tpu.memory_space<vmem>>, vector<1x32xf32>
    %39 = vector.broadcast %38 : vector<1x32xf32> to vector<65x32xf32>
    %40 = arith.addf %37, %39 : vector<65x32xf32>
    %41 = arith.truncf %40 : vector<65x32xf32> to vector<65x32xbf16>
    %c0_21 = arith.constant 0 : index
    %c0_22 = arith.constant 0 : index
    %c0_23 = arith.constant 0 : index
    %42 = vector.load %arg8[%c0_21, %c0_22, %c0_23] : memref<1x65x32xbf16, #tpu.memory_space<vmem>>, vector<1x65x32xbf16>
    %43 = vector.shape_cast %42 : vector<1x65x32xbf16> to vector<65x32xbf16>
    %44 = vector.shape_cast %41 : vector<65x32xbf16> to vector<1x65x32xbf16>
    tpu.vector_store %arg8[%c0_21, %c0_22, %c0_23], %44 {strides = array<i32>} : memref<1x65x32xbf16, #tpu.memory_space<vmem>>, vector<1x65x32xbf16>,
    return
  }
  func.func @transform_0(%arg0: i32) -> (i32, i32, i32) {
    %c0_i32 = arith.constant 0 : i32
    %c0_i32_0 = arith.constant 0 : i32
    %c0_i32_1 = arith.constant 0 : i32
    return %arg0, %c0_i32, %c0_i32_0 : i32, i32, i32
  }
  func.func @transform_1(%arg0: i32) -> (i32, i32) {
    %c0_i32 = arith.constant 0 : i32
    %c0_i32_0 = arith.constant 0 : i32
    %c0_i32_1 = arith.constant 0 : i32
    return %c0_i32, %c0_i32_0 : i32, i32
  }
  func.func @transform_2(%arg0: i32) -> (i32, i32) {
    %c0_i32 = arith.constant 0 : i32
    %c0_i32_0 = arith.constant 0 : i32
    %c0_i32_1 = arith.constant 0 : i32
    return %c0_i32, %c0_i32_0 : i32, i32
  }
  func.func @transform_3(%arg0: i32) -> (i32, i32) {
    %c0_i32 = arith.constant 0 : i32
    %c0_i32_0 = arith.constant 0 : i32
    %c0_i32_1 = arith.constant 0 : i32
    return %c0_i32, %c0_i32_0 : i32, i32
  }
  func.func @transform_4(%arg0: i32) -> (i32, i32) {
    %c0_i32 = arith.constant 0 : i32
    %c0_i32_0 = arith.constant 0 : i32
    %c0_i32_1 = arith.constant 0 : i32
    return %c0_i32, %c0_i32_0 : i32, i32
  }
  func.func @transform_5(%arg0: i32) -> (i32, i32) {
    %c0_i32 = arith.constant 0 : i32
    %c0_i32_0 = arith.constant 0 : i32
    %c0_i32_1 = arith.constant 0 : i32
    return %c0_i32, %c0_i32_0 : i32, i32
  }
  func.func @transform_6(%arg0: i32) -> (i32, i32) {
    %c0_i32 = arith.constant 0 : i32
    %c0_i32_0 = arith.constant 0 : i32
    %c0_i32_1 = arith.constant 0 : i32
    return %c0_i32, %c0_i32_0 : i32, i32
  }
  func.func @transform_7(%arg0: i32) -> (i32, i32, i32) {
    %c0_i32 = arith.constant 0 : i32
    %c0_i32_0 = arith.constant 0 : i32
    %c0_i32_1 = arith.constant 0 : i32
    return %arg0, %c0_i32, %c0_i32_0 : i32, i32, i32
  }
}

module attributes {stable_mosaic.version = 11 : i64} {
  func.func @_outproj_kernel(%arg0: i32, %arg1: memref<1x64x32xbf16, #tpu.memory_space<vmem>>, %arg2: memref<32x128xf32, #tpu.memory_space<vmem>>, %arg3: memref<1x128xf32, #tpu.memory_space<vmem>>, %arg4: memref<1x64x128xf32, #tpu.memory_space<vmem>>) attributes {dimension_semantics = [#tpu.dimension_semantics<parallel>], iteration_bounds = array<i64: 2>, scalar_prefetch = 0 : i64, scratch_operands = 0 : i64, tpu.core_type = #tpu.core_type<tc>, window_params = [{transform_indices = @transform_0, window_bounds = array<i64: 1, 64, 32>}, {pipeline_mode = #tpu.pipeline_mode<synchronous>, transform_indices = @transform_1, window_bounds = array<i64: 32, 128>}, {pipeline_mode = #tpu.pipeline_mode<synchronous>, transform_indices = @transform_2, window_bounds = array<i64: 1, 128>}, {transform_indices = @transform_3, window_bounds = array<i64: 1, 64, 128>}]} {
    %c0 = arith.constant 0 : index
    %c0_0 = arith.constant 0 : index
    %c0_1 = arith.constant 0 : index
    %0 = vector.load %arg1[%c0, %c0_0, %c0_1] : memref<1x64x32xbf16, #tpu.memory_space<vmem>>, vector<1x64x32xbf16>
    %1 = vector.shape_cast %0 : vector<1x64x32xbf16> to vector<64x32xbf16>
    %2 = arith.extf %1 : vector<64x32xbf16> to vector<64x32xf32>
    %c0_2 = arith.constant 0 : index
    %c0_3 = arith.constant 0 : index
    %3 = vector.load %arg2[%c0_2, %c0_3] : memref<32x128xf32, #tpu.memory_space<vmem>>, vector<32x128xf32>
    %cst = arith.constant dense<0.000000e+00> : vector<64x128xf32>
    %4 = tpu.matmul %2, %3, %cst {dimension_numbers = #tpu.dot_dimension_numbers<[1], [0], [0], [1], [0, 0, 1, 1], [], []>} : vector<64x32xf32>, vector<32x128xf32>, vector<64x128xf32> -> vector<64x128xf32>
    %c0_4 = arith.constant 0 : index
    %c0_5 = arith.constant 0 : index
    %5 = vector.load %arg3[%c0_4, %c0_5] : memref<1x128xf32, #tpu.memory_space<vmem>>, vector<1x128xf32>
    %6 = vector.broadcast %5 : vector<1x128xf32> to vector<64x128xf32>
    %7 = arith.addf %4, %6 : vector<64x128xf32>
    %c0_6 = arith.constant 0 : index
    %c0_7 = arith.constant 0 : index
    %c0_8 = arith.constant 0 : index
    %8 = vector.load %arg4[%c0_6, %c0_7, %c0_8] : memref<1x64x128xf32, #tpu.memory_space<vmem>>, vector<1x64x128xf32>
    %9 = vector.shape_cast %8 : vector<1x64x128xf32> to vector<64x128xf32>
    %10 = vector.shape_cast %7 : vector<64x128xf32> to vector<1x64x128xf32>
    tpu.vector_store %arg4[%c0_6, %c0_7, %c0_8], %10 {strides = array<i32>} : memref<1x64x128xf32, #tpu.memory_space<vmem>>, vector<1x64x128xf32>,
    return
  }
  func.func @transform_0(%arg0: i32) -> (i32, i32, i32) {
    %c0_i32 = arith.constant 0 : i32
    %c0_i32_0 = arith.constant 0 : i32
    %c0_i32_1 = arith.constant 0 : i32
    return %arg0, %c0_i32, %c0_i32_0 : i32, i32, i32
  }
  func.func @transform_1(%arg0: i32) -> (i32, i32) {
    %c0_i32 = arith.constant 0 : i32
    %c0_i32_0 = arith.constant 0 : i32
    %c0_i32_1 = arith.constant 0 : i32
    return %c0_i32, %c0_i32_0 : i32, i32
  }
  func.func @transform_2(%arg0: i32) -> (i32, i32) {
    %c0_i32 = arith.constant 0 : i32
    %c0_i32_0 = arith.constant 0 : i32
    %c0_i32_1 = arith.constant 0 : i32
    return %c0_i32, %c0_i32_0 : i32, i32
  }
  func.func @transform_3(%arg0: i32) -> (i32, i32, i32) {
    %c0_i32 = arith.constant 0 : i32
    %c0_i32_0 = arith.constant 0 : i32
    %c0_i32_1 = arith.constant 0 : i32
    return %arg0, %c0_i32, %c0_i32_0 : i32, i32, i32
  }
}

</mosaic_0001>

<llo_original>
// kernel: masked_autoencoder_forward.12
$region0: #{masked_autoencoder_forward.12}
  #allocation0 [shape = 'u32[]', space=smem, size = 0x4, offset = 0x4, fixed_abs, tag = 'smem constant byte address 0x4 - core index']
  #allocation1 [shape = 'u32[144,128]{1,0:T(1,128)}', space=vmem, size = 0x12000, scoped, tag = 'internal scratch']
  %s0 = inlined_call_operand.vmem [shape: f32[2,64,3], index: 0, kind: input, shape index: {}]
  %s1 = inlined_call_operand.vmem [shape: f32[2,64,1], index: 1, kind: input, shape index: {}]
  %s2 = inlined_call_operand.vmem [shape: f32[3,32], index: 2, kind: input, shape index: {}]
  %s3 = inlined_call_operand.vmem [shape: f32[1,32], index: 3, kind: input, shape index: {}]
  %s4 = inlined_call_operand.vmem [shape: f32[64,32], index: 4, kind: input, shape index: {}]
  %s5 = inlined_call_operand.vmem [shape: bf16[2,64,32], index: 5, kind: output, shape index: {}]
  %s6 = sld [smem:[#allocation0]]
  $region53: #{masked_autoencoder_forward.12} parent=0
    _
  %s8 = ssub.s32 1, %s6
  %s9 = scalar_select 0, %s8, %s6
  loop: start=0, step=1, limit=4
  $region2: #{masked_autoencoder_forward.12} parent=0 // loop_pre_header
    _
  $region3: #{masked_autoencoder_forward.12} parent=0 // loop_header
    %s11 = sphi 0, %s15
    %p12 = scmp.ge.s32.totalorder %s11, 4
    %s21 = sphi 0, %s23
    %s24 = sphi 0, %s21
    %s25 = sphi 0, %s24
    %s41 = sphi 0, %s25
    %s47 = sphi 0, %s49
    %s50 = sphi 0, %s47
    %s51 = sphi 0, %s50
    %s67 = sphi 0, %s51
    %s71 = sphi 0, %s71
    %s73 = sphi 0, %s71
    %s74 = sphi 0, %s73
    %s88 = sphi 0, %s74
    %s92 = sphi 0, %s92
    %s94 = sphi 0, %s92
    %s95 = sphi 0, %s94
    %s109 = sphi 0, %s95
    %s113 = sphi 0, %s113
    %s115 = sphi 0, %s113
    %s116 = sphi 0, %s115
    %s130 = sphi 0, %s116
    %s136 = sphi 0, %s138
    %s139 = sphi 0, %s136
    %s140 = sphi 0, %s139
    %s156 = sphi 0, %s140
  $region4: #{masked_autoencoder_forward.12} parent=0 // loop_header_branch
    %14 = sbr.rel (%p12) target = $region8
  $region5: #{masked_autoencoder_forward.12} parent=0 // loop_body
    %s16 = ssub.s32 %s11, 1
    %s17 = ssub.s32 %s11, 2
    %s18 = sadd.s32 %s11, 1
    %s19 = ssub.s32 %s11, %s18
    %p20 = scmp.eq.s32.totalorder %s19, 0
    %s22 = sadd.s32 %s21, 1
    %s23 = scalar_select %p20, %s21, %s22
    %p26 = pneg %p20
    %p27 = scmp.eq.s32.totalorder %s11, 1
    %p28 = por %p26, %p27
    %p29 = scmp.ne.s32.totalorder %s21, %s24
    %p30 = scmp.eq.s32.totalorder %s11, 0
    %p31 = por %p29, %p30
    %p32 = scmp.ne.s32.totalorder %s21, %s24
    %p33 = scmp.eq.s32.totalorder %s16, 1
    %p34 = por %p32, %p33
    %p35 = scmp.ne.s32.totalorder %s24, %s25
    %p36 = scmp.eq.s32.totalorder %s16, 0
    %p37 = por %p35, %p36
    %p38 = scmp.ne.s32.totalorder %s24, %s25
    %p39 = scmp.eq.s32.totalorder %s17, 1
    %p40 = por %p38, %p39
    %p42 = scmp.ne.s32.totalorder %s25, %s41
    %p43 = scmp.eq.s32.totalorder %s17, 0
    %p44 = por %p42, %p43
    %s45 = ssub.s32 %s11, %s18
    %p46 = scmp.eq.s32.totalorder %s45, 0
    %s48 = sadd.s32 %s47, 1
    %s49 = scalar_select %p46, %s47, %s48
    %p52 = pneg %p46
    %p53 = scmp.eq.s32.totalorder %s11, 1
    %p54 = por %p52, %p53
    %p55 = scmp.ne.s32.totalorder %s47, %s50
    %p56 = scmp.eq.s32.totalorder %s11, 0
    %p57 = por %p55, %p56
    %p58 = scmp.ne.s32.totalorder %s47, %s50
    %p59 = scmp.eq.s32.totalorder %s16, 1
    %p60 = por %p58, %p59
    %p61 = scmp.ne.s32.totalorder %s50, %s51
    %p62 = scmp.eq.s32.totalorder %s16, 0
    %p63 = por %p61, %p62
    %p64 = scmp.ne.s32.totalorder %s50, %s51
    %p65 = scmp.eq.s32.totalorder %s17, 1
    %p66 = por %p64, %p65
    %p68 = scmp.ne.s32.totalorder %s51, %s67
    %p69 = scmp.eq.s32.totalorder %s17, 0
    %p70 = por %p68, %p69
    %s72 = sadd.s32 %s71, 1
    %p75 = scmp.eq.s32.totalorder %s11, 1
    %p76 = scmp.ne.s32.totalorder %s71, %s73
    %p77 = scmp.eq.s32.totalorder %s11, 0
    %p78 = por %p76, %p77
    %p79 = scmp.ne.s32.totalorder %s71, %s73
    %p80 = scmp.eq.s32.totalorder %s16, 1
    %p81 = por %p79, %p80
    %p82 = scmp.ne.s32.totalorder %s73, %s74
    %p83 = scmp.eq.s32.totalorder %s16, 0
    %p84 = por %p82, %p83
    %p85 = scmp.ne.s32.totalorder %s73, %s74
    %p86 = scmp.eq.s32.totalorder %s17, 1
    %p87 = por %p85, %p86
    %p89 = scmp.ne.s32.totalorder %s74, %s88
    %p90 = scmp.eq.s32.totalorder %s17, 0
    %p91 = por %p89, %p90
    %s93 = sadd.s32 %s92, 1
    %p96 = scmp.eq.s32.totalorder %s11, 1
    %p97 = scmp.ne.s32.totalorder %s92, %s94
    %p98 = scmp.eq.s32.totalorder %s11, 0
    %p99 = por %p97, %p98
    %p100 = scmp.ne.s32.totalorder %s92, %s94
    %p101 = scmp.eq.s32.totalorder %s16, 1
    %p102 = por %p100, %p101
    %p103 = scmp.ne.s32.totalorder %s94, %s95
    %p104 = scmp.eq.s32.totalorder %s16, 0
    %p105 = por %p103, %p104
    %p106 = scmp.ne.s32.totalorder %s94, %s95
    %p107 = scmp.eq.s32.totalorder %s17, 1
    %p108 = por %p106, %p107
    %p110 = scmp.ne.s32.totalorder %s95, %s109
    %p111 = scmp.eq.s32.totalorder %s17, 0
    %p112 = por %p110, %p111
    %s114 = sadd.s32 %s113, 1
    %p117 = scmp.eq.s32.totalorder %s11, 1
    %p118 = scmp.ne.s32.totalorder %s113, %s115
    %p119 = scmp.eq.s32.totalorder %s11, 0
    %p120 = por %p118, %p119
    %p121 = scmp.ne.s32.totalorder %s113, %s115
    %p122 = scmp.eq.s32.totalorder %s16, 1
    %p123 = por %p121, %p122
    %p124 = scmp.ne.s32.totalorder %s115, %s116
    %p125 = scmp.eq.s32.totalorder %s16, 0
    %p126 = por %p124, %p125
    %p127 = scmp.ne.s32.totalorder %s115, %s116
    %p128 = scmp.eq.s32.totalorder %s17, 1
    %p129 = por %p127, %p128
    %p131 = scmp.ne.s32.totalorder %s116, %s130
    %p132 = scmp.eq.s32.totalorder %s17, 0
    %p133 = por %p131, %p132
    %s134 = ssub.s32 %s11, %s18
    %p135 = scmp.eq.s32.totalorder %s134, 0
    %s137 = sadd.s32 %s136, 1
    %s138 = scalar_select %p135, %s136, %s137
    %p141 = pneg %p135
    %p142 = scmp.eq.s32.totalorder %s11, 1
    %p143 = por %p141, %p142
    %p144 = scmp.ne.s32.totalorder %s136, %s139
    %p145 = scmp.eq.s32.totalorder %s11, 0
    %p146 = por %p144, %p145
    %p147 = scmp.ne.s32.totalorder %s136, %s139
    %p148 = scmp.eq.s32.totalorder %s16, 1
    %p149 = por %p147, %p148
    %p150 = scmp.ne.s32.totalorder %s139, %s140
    %p151 = scmp.eq.s32.totalorder %s16, 0
    %p152 = por %p150, %p151
    %p153 = scmp.ne.s32.totalorder %s139, %s140
    %p154 = scmp.eq.s32.totalorder %s17, 1
    %p155 = por %p153, %p154
    %p157 = scmp.ne.s32.totalorder %s140, %s156
    %p158 = scmp.eq.s32.totalorder %s17, 0
    %p159 = por %p157, %p158
    %p160 = scmp.le.s32.totalorder 1, %s11
    %p161 = scmp.lt.s32.totalorder %s11, 3
    %p162 = pnand %p160, %p161
    %p163 = pneg %p162
    // Predicated region
    $region9: #{masked_autoencoder_forward.12} parent=5 // pred_check
      _
    $region10: #{masked_autoencoder_forward.12} parent=5 // pred_check_branch
      %165 = sbr.rel (%p162) target = $region12
    $region11: #{masked_autoencoder_forward.12} parent=5 // pred_region
      %s166 = ssub.s32 %s11, 1
      // Predicated region
      $region13: #{masked_autoencoder_forward.12} parent=11 // pred_check
        %p167 = pneg %p84
      $region14: #{masked_autoencoder_forward.12} parent=11 // pred_check_branch
        %169 = sbr.rel (%p167) target = $region16
      $region15: #{masked_autoencoder_forward.12} parent=11 // pred_region
        _
      $region16: #{masked_autoencoder_forward.12} parent=11 // pred_fallthru
        _
      // Predicated region
      $region17: #{masked_autoencoder_forward.12} parent=11 // pred_check
        %p170 = pneg %p105
      $region18: #{masked_autoencoder_forward.12} parent=11 // pred_check_branch
        %172 = sbr.rel (%p170) target = $region20
      $region19: #{masked_autoencoder_forward.12} parent=11 // pred_region
        _
      $region20: #{masked_autoencoder_forward.12} parent=11 // pred_fallthru
        _
      // Predicated region
      $region21: #{masked_autoencoder_forward.12} parent=11 // pred_check
        %p173 = pneg %p126
      $region22: #{masked_autoencoder_forward.12} parent=11 // pred_check_branch
        %175 = sbr.rel (%p173) target = $region24
      $region23: #{masked_autoencoder_forward.12} parent=11 // pred_region
        _
      $region24: #{masked_autoencoder_forward.12} parent=11 // pred_fallthru
        _
    $region12: #{masked_autoencoder_forward.12} parent=5 // pred_fallthru
      _
    %p176 = scmp.lt.s32.totalorder %s11, 2
    // Predicated region
    $region25: #{masked_autoencoder_forward.12} parent=5 // pred_check
      %p177 = pneg %p176
    $region26: #{masked_autoencoder_forward.12} parent=5 // pred_check_branch
      %179 = sbr.rel (%p177) target = $region28
    $region27: #{masked_autoencoder_forward.12} parent=5 // pred_region
      // Predicated region
      $region29: #{masked_autoencoder_forward.12} parent=27 // pred_check
        %p180 = pneg %p31
      $region30: #{masked_autoencoder_forward.12} parent=27 // pred_check_branch
        %182 = sbr.rel (%p180) target = $region32
      $region31: #{masked_autoencoder_forward.12} parent=27 // pred_region
        %p183 = scmp.lt.s32.totalorder %s11, 1
        %s184 = scalar_select %p183, %s11, 1
        %s185 = smul.addr %s184, 8
        %s186 = smul.addr %s185, 8
        %s187 = scalar_lea.vmem %s0, %s186
      $region32: #{masked_autoencoder_forward.12} parent=27 // pred_fallthru
        _
      // Predicated region
      $region33: #{masked_autoencoder_forward.12} parent=27 // pred_check
        %p188 = pneg %p57
      $region34: #{masked_autoencoder_forward.12} parent=27 // pred_check_branch
        %190 = sbr.rel (%p188) target = $region36
      $region35: #{masked_autoencoder_forward.12} parent=27 // pred_region
        %p191 = scmp.lt.s32.totalorder %s11, 1
        %s192 = scalar_select %p191, %s11, 1
        %s193 = smul.addr %s192, 8
        %s194 = smul.addr %s193, 8
        %s195 = scalar_lea.vmem %s1, %s194
      $region36: #{masked_autoencoder_forward.12} parent=27 // pred_fallthru
        _
    $region28: #{masked_autoencoder_forward.12} parent=5 // pred_fallthru
      _
    %p196 = scmp.le.s32.totalorder 1, %s11
    %p197 = scmp.lt.s32.totalorder %s11, 3
    %p198 = pnand %p196, %p197
    %p199 = pneg %p198
    // Predicated region
    $region37: #{masked_autoencoder_forward.12} parent=5 // pred_check
      _
    $region38: #{masked_autoencoder_forward.12} parent=5 // pred_check_branch
      %201 = sbr.rel (%p198) target = $region40
    $region39: #{masked_autoencoder_forward.12} parent=5 // pred_region
      %s202 = ssub.s32 %s11, 1
      %p203 = scmp.lt.s32.totalorder %s16, 1
      %s204 = scalar_select %p203, %s16, 1
      %s205 = smul.addr %s204, 8
      %s206 = smul.addr %s205, 8
      %s207 = scalar_lea.vmem %s0, %s206
      %p208 = pneg %p37
      %p209 = pneg %p34
      %p210 = scmp.lt.s32.totalorder %s16, 1
      %s211 = scalar_select %p210, %s16, 1
      %s212 = smul.addr %s211, 8
      %s213 = smul.addr %s212, 8
      %s214 = scalar_lea.vmem %s1, %s213
      %p215 = pneg %p63
      %p216 = pneg %p60
      %p217 = pneg %p84
      %p218 = pneg %p81
      %p219 = pneg %p105
      %p220 = pneg %p102
      %p221 = pneg %p126
      %p222 = pneg %p123
      %p223 = pneg %p152
      %p224 = pneg %p149
      %p225 = scmp.lt.s32.totalorder %s16, 1
      %s226 = scalar_select %p225, %s16, 1
      %s227 = smul.addr %s226, 8
      %s228 = smul.addr %s227, 4
      %s229 = scalar_lea.vmem %s5, %s228
      %p230 = scmp.lt.s32.totalorder %s16, 1
      %s231 = scalar_select %p230, %s16, 1
      %s232 = smul.addr %s231, 8
      %s233 = smul.addr %s232, 8
      %s234 = scalar_lea.vmem %s0, %s233
      %p235 = scmp.lt.s32.totalorder %s16, 1
      %s236 = scalar_select %p235, %s16, 1
      %s237 = smul.addr %s236, 8
      %s238 = smul.addr %s237, 8
      %s239 = scalar_lea.vmem %s1, %s238
      %p240 = scmp.lt.s32.totalorder %s16, 1
      %s241 = scalar_select %p240, %s16, 1
      %s242 = smul.addr %s241, 8
      %s243 = smul.addr %s242, 4
      %s244 = scalar_lea.vmem %s5, %s243
      %v245 = vld [vmem:[%s234] sm:$0xff]
      %v246 = vld [vmem:[%s234 + $0x8] sm:$0xff]
      %v247 = vld [vmem:[%s234 + $0x10] sm:$0xff]
      %v248 = vld [vmem:[%s234 + $0x18] sm:$0xff]
      %v249 = vld [vmem:[%s234 + $0x20] sm:$0xff]
      %v250 = vld [vmem:[%s234 + $0x28] sm:$0xff]
      %v251 = vld [vmem:[%s234 + $0x30] sm:$0xff]
      %v252 = vld [vmem:[%s234 + $0x38] sm:$0xff]
      %v253 = vld [vmem:[%s239] sm:$0xff]
      %v254 = vld [vmem:[%s239 + $0x8] sm:$0xff]
      %v255 = vld [vmem:[%s239 + $0x10] sm:$0xff]
      %v256 = vld [vmem:[%s239 + $0x18] sm:$0xff]
      %v257 = vld [vmem:[%s239 + $0x20] sm:$0xff]
      %v258 = vld [vmem:[%s239 + $0x28] sm:$0xff]
      %v259 = vld [vmem:[%s239 + $0x30] sm:$0xff]
      %v260 = vld [vmem:[%s239 + $0x38] sm:$0xff]
      %262 = vset.pattern.permute.xlu0 0
      %263 = vperm.xlu0 %262, %v253
      %v264 = vpop.permute.xlu0 %263
      %267 = vset.pattern.permute.xlu0 0
      %268 = vperm.xlu0 %267, %v254
      %v269 = vpop.permute.xlu0 %268
      %272 = vset.pattern.permute.xlu0 0
      %273 = vperm.xlu0 %272, %v255
      %v274 = vpop.permute.xlu0 %273
      %277 = vset.pattern.permute.xlu0 0
      %278 = vperm.xlu0 %277, %v256
      %v279 = vpop.permute.xlu0 %278
      %282 = vset.pattern.permute.xlu0 0
      %283 = vperm.xlu0 %282, %v257
      %v284 = vpop.permute.xlu0 %283
      %287 = vset.pattern.permute.xlu0 0
      %288 = vperm.xlu0 %287, %v258
      %v289 = vpop.permute.xlu0 %288
      %292 = vset.pattern.permute.xlu0 0
      %293 = vperm.xlu0 %292, %v259
      %v294 = vpop.permute.xlu0 %293
      %297 = vset.pattern.permute.xlu0 0
      %298 = vperm.xlu0 %297, %v260
      %v299 = vpop.permute.xlu0 %298
      %v301 = vmul.f32 %v245, %v264
      %v302 = vmul.f32 %v246, %v269
      %v303 = vmul.f32 %v247, %v274
      %v304 = vmul.f32 %v248, %v279
      %v305 = vmul.f32 %v249, %v284
      %v306 = vmul.f32 %v250, %v289
      %v307 = vmul.f32 %v251, %v294
      %v308 = vmul.f32 %v252, %v299
      %v309 = vld [vmem:[%s2] sm:$0x7]
      %v310 = vld [vmem:[%s3] sm:$0x1]
      %v312 = vlaneseq
      %v313 = vshrl.u32 %v312, 7
      %v314 = vsub.s32 0, %v313
      %v315 = vrot.slane %v310, %v314
      %vm317 = vcmask 23552
      %v319 = vsel %vm317, %v301, 0
      %v322 = vsel %vm317, %v302, 0
      %v325 = vsel %vm317, %v303, 0
      %v328 = vsel %vm317, %v304, 0
      %v331 = vsel %vm317, %v305, 0
      %v334 = vsel %vm317, %v306, 0
      %v337 = vsel %vm317, %v307, 0
      %v340 = vsel %vm317, %v308, 0
      %vm342 = vcmask 1042432
      %v344 = vsel %vm342, %v309, 0
      %346 = vmatprep.subr.mxu0 0.0
      %347 = vmatpush1.msra.mxu0 %v344
      %348 = vmatprep.subr.mxu0 0.0
      %349 = vmatpush1.msra.mxu0 0.0
      %350 = vmatprep.subr.mxu0 0.0
      %351 = vmatpush1.msra.mxu0 0.0
      %352 = vmatprep.subr.mxu0 0.0
      %353 = vmatpush1.msra.mxu0 0.0
      %354 = vmatprep.subr.mxu0 0.0
      %355 = vmatpush1.msra.mxu0 0.0
      %356 = vmatprep.subr.mxu0 0.0
      %357 = vmatpush1.msra.mxu0 0.0
      %358 = vmatprep.subr.mxu0 0.0
      %359 = vmatpush1.msra.mxu0 0.0
      %360 = vmatprep.subr.mxu0 0.0
      %361 = vmatpush1.msra.mxu0 0.0
      %362 = vmatprep.subr.mxu0 0.0
      %363 = vmatpush1.msra.mxu0 0.0
      %364 = vmatprep.subr.mxu0 0.0
      %365 = vmatpush1.msra.mxu0 0.0
      %366 = vmatprep.subr.mxu0 0.0
      %367 = vmatpush1.msra.mxu0 0.0
      %368 = vmatprep.subr.mxu0 0.0
      %369 = vmatpush1.msra.mxu0 0.0
      %370 = vmatprep.subr.mxu0 0.0
      %371 = vmatpush1.msra.mxu0 0.0
      %372 = vmatprep.subr.mxu0 0.0
      %373 = vmatpush1.msra.mxu0 0.0
      %374 = vmatprep.subr.mxu0 0.0
      %375 = vmatpush1.msra.mxu0 0.0
      %376 = vmatprep.subr.mxu0 0.0
      %377 = vmatpush1.msra.mxu0 0.0
      %378 = vmatprep.subr.mxu0 0.0
      %379 = vmatpush1.msra.mxu0 0.0
      %380 = vmatprep.subr.mxu0 0.0
      %381 = vmatpush1.msra.mxu0 0.0
      %382 = vmatprep.subr.mxu0 0.0
      %383 = vmatpush1.msra.mxu0 0.0
      %384 = vmatprep.subr.mxu0 0.0
      %385 = vmatpush1.msra.mxu0 0.0
      %386 = vmatprep.subr.mxu0 0.0
      %387 = vmatpush1.msra.mxu0 0.0
      %388 = vmatprep.subr.mxu0 0.0
      %389 = vmatpush1.msra.mxu0 0.0
      %390 = vmatprep.subr.mxu0 0.0
      %391 = vmatpush1.msra.mxu0 0.0
      %392 = vmatprep.subr.mxu0 0.0
      %393 = vmatpush1.msra.mxu0 0.0
      %394 = vmatprep.subr.mxu0 0.0
      %395 = vmatpush1.msra.mxu0 0.0
      %396 = vmatprep.subr.mxu0 0.0
      %397 = vmatpush1.msra.mxu0 0.0
      %398 = vmatprep.subr.mxu0 0.0
      %399 = vmatpush1.msra.mxu0 0.0
      %400 = vmatprep.subr.mxu0 0.0
      %401 = vmatpush1.msra.mxu0 0.0
      %402 = vmatprep.subr.mxu0 0.0
      %403 = vmatpush1.msra.mxu0 0.0
      %404 = vmatprep.subr.mxu0 0.0
      %405 = vmatpush1.msra.mxu0 0.0
      %406 = vmatprep.subr.mxu0 0.0
      %407 = vmatpush1.msra.mxu0 0.0
      %408 = vmatprep.subr.mxu0 0.0
      %409 = vmatpush1.msra.mxu0 0.0
      %410 = vmatprep.mubr.f32.mxu0 0.0
      %411 = vmatmul.mubr.f32.gmra.mrb[0].mxu0 %v319
      %v412 = vpop.f32.mrb[0].mxu0
      %v413 = vadd.f32 %v315, %v412
      %v414 = vpop.f32.mrb[0].mxu0
      %415 = vmatprep.mubr.f32.mxu0 0.0
      %416 = vmatmul.mubr.f32.gmra.mrb[0].mxu0 %v322
      %v417 = vpop.f32.mrb[0].mxu0
      %v418 = vadd.f32 %v315, %v417
      %v419 = vpop.f32.mrb[0].mxu0
      %420 = vmatprep.mubr.f32.mxu0 0.0
      %421 = vmatmul.mubr.f32.gmra.mrb[0].mxu0 %v325
      %v422 = vpop.f32.mrb[0].mxu0
      %v423 = vadd.f32 %v315, %v422
      %v424 = vpop.f32.mrb[0].mxu0
      %425 = vmatprep.mubr.f32.mxu0 0.0
      %426 = vmatmul.mubr.f32.gmra.mrb[0].mxu0 %v328
      %v427 = vpop.f32.mrb[0].mxu0
      %v428 = vadd.f32 %v315, %v427
      %v429 = vpop.f32.mrb[0].mxu0
      %430 = vmatprep.mubr.f32.mxu0 0.0
      %431 = vmatmul.mubr.f32.gmra.mrb[0].mxu0 %v331
      %v432 = vpop.f32.mrb[0].mxu0
      %v433 = vadd.f32 %v315, %v432
      %v434 = vpop.f32.mrb[0].mxu0
      %435 = vmatprep.mubr.f32.mxu0 0.0
      %436 = vmatmul.mubr.f32.gmra.mrb[0].mxu0 %v334
      %v437 = vpop.f32.mrb[0].mxu0
      %v438 = vadd.f32 %v315, %v437
      %v439 = vpop.f32.mrb[0].mxu0
      %440 = vmatprep.mubr.f32.mxu0 0.0
      %441 = vmatmul.mubr.f32.gmra.mrb[0].mxu0 %v337
      %v442 = vpop.f32.mrb[0].mxu0
      %v443 = vadd.f32 %v315, %v442
      %v444 = vpop.f32.mrb[0].mxu0
      %445 = vmatprep.mubr.f32.mxu0 0.0
      %446 = vmatmul.mubr.f32.gmra.mrb[0].mxu0 %v340
      %v447 = vpop.f32.mrb[0].mxu0
      %v448 = vadd.f32 %v315, %v447
      %v449 = vpop.f32.mrb[0].mxu0
      %450 = vdwg.mxu0
      %v451 = vld [vmem:[%s4] sm:$0xff]
      %v452 = vld [vmem:[%s4 + $0x8] sm:$0xff]
      %v453 = vld [vmem:[%s4 + $0x10] sm:$0xff]
      %v454 = vld [vmem:[%s4 + $0x18] sm:$0xff]
      %v455 = vld [vmem:[%s4 + $0x20] sm:$0xff]
      %v456 = vld [vmem:[%s4 + $0x28] sm:$0xff]
      %v457 = vld [vmem:[%s4 + $0x30] sm:$0xff]
      %v458 = vld [vmem:[%s4 + $0x38] sm:$0xff]
      %v459 = vadd.f32 %v413, %v451
      %v460 = vadd.f32 %v418, %v452
      %v461 = vadd.f32 %v423, %v453
      %v462 = vadd.f32 %v428, %v454
      %v463 = vadd.f32 %v433, %v455
      %v464 = vadd.f32 %v438, %v456
      %v465 = vadd.f32 %v443, %v457
      %v466 = vadd.f32 %v448, %v458
      %v467 = vpack.c.bf16 %v460, %v459
      %v468 = vpack.c.bf16 %v462, %v461
      %v469 = vpack.c.bf16 %v464, %v463
      %v470 = vpack.c.bf16 %v466, %v465
      %v475 = vunpack.c.l.b16 %v467
      %v476 = vunpack.c.h.b16 %v467
      %v477 = vunpack.c.l.b16 %v468
      %v478 = vunpack.c.h.b16 %v468
      %v479 = vunpack.c.l.b16 %v469
      %v480 = vunpack.c.h.b16 %v469
      %v481 = vunpack.c.l.b16 %v470
      %v482 = vunpack.c.h.b16 %v470
      %v483 = vpack.c.b16 %v475, %v475
      %v484 = vpack.c.b16 %v476, %v476
      %v485 = vpack.c.b16 %v477, %v477
      %v486 = vpack.c.b16 %v478, %v478
      %v487 = vpack.c.b16 %v479, %v479
      %v488 = vpack.c.b16 %v480, %v480
      %v489 = vpack.c.b16 %v481, %v481
      %v490 = vpack.c.b16 %v482, %v482
      %vm499 = vcmask 257024
      %500 = vst.msk [vmem:[%s244] sm:$0xf] %vm499, %v483
      %501 = vst.msk [vmem:[%s244 + $0x4] sm:$0xf] %vm499, %v484
      %502 = vst.msk [vmem:[%s244 + $0x8] sm:$0xf] %vm499, %v485
      %503 = vst.msk [vmem:[%s244 + $0xc] sm:$0xf] %vm499, %v486
      %504 = vst.msk [vmem:[%s244 + $0x10] sm:$0xf] %vm499, %v487
      %505 = vst.msk [vmem:[%s244 + $0x14] sm:$0xf] %vm499, %v488
      %506 = vst.msk [vmem:[%s244 + $0x18] sm:$0xf] %vm499, %v489
      %507 = vst.msk [vmem:[%s244 + $0x1c] sm:$0xf] %vm499, %v490
      %p508 = scmp.lt.s32.totalorder %s16, 1
      %s509 = scalar_select %p508, %s16, 1
      %s510 = smul.addr %s509, 8
      %s511 = smul.addr %s510, 4
      %s512 = scalar_lea.vmem %s5, %s511
      // Predicated region
      $region41: #{masked_autoencoder_forward.12} parent=39 // pred_check
        %p513 = pneg %p149
      $region42: #{masked_autoencoder_forward.12} parent=39 // pred_check_branch
        %515 = sbr.rel (%p513) target = $region44
      $region43: #{masked_autoencoder_forward.12} parent=39 // pred_region
        _
      $region44: #{masked_autoencoder_forward.12} parent=39 // pred_fallthru
        _
    $region40: #{masked_autoencoder_forward.12} parent=5 // pred_fallthru
      _
    %p516 = scmp.le.s32.totalorder 2, %s11
    // Predicated region
    $region45: #{masked_autoencoder_forward.12} parent=5 // pred_check
      %p517 = pneg %p516
    $region46: #{masked_autoencoder_forward.12} parent=5 // pred_check_branch
      %519 = sbr.rel (%p517) target = $region48
    $region47: #{masked_autoencoder_forward.12} parent=5 // pred_region
      %s520 = ssub.s32 %s11, 2
      // Predicated region
      $region49: #{masked_autoencoder_forward.12} parent=47 // pred_check
        %p521 = pneg %p155
      $region50: #{masked_autoencoder_forward.12} parent=47 // pred_check_branch
        %523 = sbr.rel (%p521) target = $region52
      $region51: #{masked_autoencoder_forward.12} parent=47 // pred_region
        %p524 = scmp.lt.s32.totalorder %s17, 1
        %s525 = scalar_select %p524, %s17, 1
        %s526 = smul.addr %s525, 8
        %s527 = smul.addr %s526, 4
        %s528 = scalar_lea.vmem %s5, %s527
      $region52: #{masked_autoencoder_forward.12} parent=47 // pred_fallthru
        _
    $region48: #{masked_autoencoder_forward.12} parent=5 // pred_fallthru
      _
  $region6: #{masked_autoencoder_forward.12} parent=0 // loop_footer
    %s15 = sadd.s32 1, %s11
  $region7: #{masked_autoencoder_forward.12} parent=0 // loop_footer_branch
    %10 = sbr.rel target = $region3
  $region8: #{masked_autoencoder_forward.12} parent=0 // loop_exit
    _

// kernel: masked_autoencoder_forward.23
$region0: #{masked_autoencoder_forward.23}
  #allocation0 [shape = 'u32[]', space=smem, size = 0x4, offset = 0x4, fixed_abs, tag = 'smem constant byte address 0x4 - core index']
  #allocation1 [shape = 'u32[144,128]{1,0:T(1,128)}', space=vmem, size = 0x12000, scoped, tag = 'internal scratch']
  %s0 = inlined_call_operand.vmem [shape: bf16[2,64,32], index: 0, kind: input, shape index: {}]
  %s1 = inlined_call_operand.vmem [shape: f32[32,128], index: 1, kind: input, shape index: {}]
  %s2 = inlined_call_operand.vmem [shape: f32[1,128], index: 2, kind: input, shape index: {}]
  %s3 = inlined_call_operand.vmem [shape: f32[2,64,128], index: 3, kind: output, shape index: {}]
  %s4 = sld [smem:[#allocation0]]
  $region45: #{masked_autoencoder_forward.23} parent=0
    _
  %s6 = ssub.s32 1, %s4
  %s7 = scalar_select 0, %s6, %s4
  loop: start=0, step=1, limit=4
  $region2: #{masked_autoencoder_forward.23} parent=0 // loop_pre_header
    _
  $region3: #{masked_autoencoder_forward.23} parent=0 // loop_header
    %s9 = sphi 0, %s13
    %p10 = scmp.ge.s32.totalorder %s9, 4
    %s19 = sphi 0, %s21
    %s22 = sphi 0, %s19
    %s23 = sphi 0, %s22
    %s39 = sphi 0, %s23
    %s43 = sphi 0, %s43
    %s45 = sphi 0, %s43
    %s46 = sphi 0, %s45
    %s60 = sphi 0, %s46
    %s64 = sphi 0, %s64
    %s66 = sphi 0, %s64
    %s67 = sphi 0, %s66
    %s81 = sphi 0, %s67
    %s87 = sphi 0, %s89
    %s90 = sphi 0, %s87
    %s91 = sphi 0, %s90
    %s107 = sphi 0, %s91
  $region4: #{masked_autoencoder_forward.23} parent=0 // loop_header_branch
    %12 = sbr.rel (%p10) target = $region8
  $region5: #{masked_autoencoder_forward.23} parent=0 // loop_body
    %s14 = ssub.s32 %s9, 1
    %s15 = ssub.s32 %s9, 2
    %s16 = sadd.s32 %s9, 1
    %s17 = ssub.s32 %s9, %s16
    %p18 = scmp.eq.s32.totalorder %s17, 0
    %s20 = sadd.s32 %s19, 1
    %s21 = scalar_select %p18, %s19, %s20
    %p24 = pneg %p18
    %p25 = scmp.eq.s32.totalorder %s9, 1
    %p26 = por %p24, %p25
    %p27 = scmp.ne.s32.totalorder %s19, %s22
    %p28 = scmp.eq.s32.totalorder %s9, 0
    %p29 = por %p27, %p28
    %p30 = scmp.ne.s32.totalorder %s19, %s22
    %p31 = scmp.eq.s32.totalorder %s14, 1
    %p32 = por %p30, %p31
    %p33 = scmp.ne.s32.totalorder %s22, %s23
    %p34 = scmp.eq.s32.totalorder %s14, 0
    %p35 = por %p33, %p34
    %p36 = scmp.ne.s32.totalorder %s22, %s23
    %p37 = scmp.eq.s32.totalorder %s15, 1
    %p38 = por %p36, %p37
    %p40 = scmp.ne.s32.totalorder %s23, %s39
    %p41 = scmp.eq.s32.totalorder %s15, 0
    %p42 = por %p40, %p41
    %s44 = sadd.s32 %s43, 1
    %p47 = scmp.eq.s32.totalorder %s9, 1
    %p48 = scmp.ne.s32.totalorder %s43, %s45
    %p49 = scmp.eq.s32.totalorder %s9, 0
    %p50 = por %p48, %p49
    %p51 = scmp.ne.s32.totalorder %s43, %s45
    %p52 = scmp.eq.s32.totalorder %s14, 1
    %p53 = por %p51, %p52
    %p54 = scmp.ne.s32.totalorder %s45, %s46
    %p55 = scmp.eq.s32.totalorder %s14, 0
    %p56 = por %p54, %p55
    %p57 = scmp.ne.s32.totalorder %s45, %s46
    %p58 = scmp.eq.s32.totalorder %s15, 1
    %p59 = por %p57, %p58
    %p61 = scmp.ne.s32.totalorder %s46, %s60
    %p62 = scmp.eq.s32.totalorder %s15, 0
    %p63 = por %p61, %p62
    %s65 = sadd.s32 %s64, 1
    %p68 = scmp.eq.s32.totalorder %s9, 1
    %p69 = scmp.ne.s32.totalorder %s64, %s66
    %p70 = scmp.eq.s32.totalorder %s9, 0
    %p71 = por %p69, %p70
    %p72 = scmp.ne.s32.totalorder %s64, %s66
    %p73 = scmp.eq.s32.totalorder %s14, 1
    %p74 = por %p72, %p73
    %p75 = scmp.ne.s32.totalorder %s66, %s67
    %p76 = scmp.eq.s32.totalorder %s14, 0
    %p77 = por %p75, %p76
    %p78 = scmp.ne.s32.totalorder %s66, %s67
    %p79 = scmp.eq.s32.totalorder %s15, 1
    %p80 = por %p78, %p79
    %p82 = scmp.ne.s32.totalorder %s67, %s81
    %p83 = scmp.eq.s32.totalorder %s15, 0
    %p84 = por %p82, %p83
    %s85 = ssub.s32 %s9, %s16
    %p86 = scmp.eq.s32.totalorder %s85, 0
    %s88 = sadd.s32 %s87, 1
    %s89 = scalar_select %p86, %s87, %s88
    %p92 = pneg %p86
    %p93 = scmp.eq.s32.totalorder %s9, 1
    %p94 = por %p92, %p93
    %p95 = scmp.ne.s32.totalorder %s87, %s90
    %p96 = scmp.eq.s32.totalorder %s9, 0
    %p97 = por %p95, %p96
    %p98 = scmp.ne.s32.totalorder %s87, %s90
    %p99 = scmp.eq.s32.totalorder %s14, 1
    %p100 = por %p98, %p99
    %p101 = scmp.ne.s32.totalorder %s90, %s91
    %p102 = scmp.eq.s32.totalorder %s14, 0
    %p103 = por %p101, %p102
    %p104 = scmp.ne.s32.totalorder %s90, %s91
    %p105 = scmp.eq.s32.totalorder %s15, 1
    %p106 = por %p104, %p105
    %p108 = scmp.ne.s32.totalorder %s91, %s107
    %p109 = scmp.eq.s32.totalorder %s15, 0
    %p110 = por %p108, %p109
    %p111 = scmp.le.s32.totalorder 1, %s9
    %p112 = scmp.lt.s32.totalorder %s9, 3
    %p113 = pnand %p111, %p112
    %p114 = pneg %p113
    // Predicated region
    $region9: #{masked_autoencoder_forward.23} parent=5 // pred_check
      _
    $region10: #{masked_autoencoder_forward.23} parent=5 // pred_check_branch
      %116 = sbr.rel (%p113) target = $region12
    $region11: #{masked_autoencoder_forward.23} parent=5 // pred_region
      %s117 = ssub.s32 %s9, 1
      // Predicated region
      $region13: #{masked_autoencoder_forward.23} parent=11 // pred_check
        %p118 = pneg %p56
      $region14: #{masked_autoencoder_forward.23} parent=11 // pred_check_branch
        %120 = sbr.rel (%p118) target = $region16
      $region15: #{masked_autoencoder_forward.23} parent=11 // pred_region
        _
      $region16: #{masked_autoencoder_forward.23} parent=11 // pred_fallthru
        _
      // Predicated region
      $region17: #{masked_autoencoder_forward.23} parent=11 // pred_check
        %p121 = pneg %p77
      $region18: #{masked_autoencoder_forward.23} parent=11 // pred_check_branch
        %123 = sbr.rel (%p121) target = $region20
      $region19: #{masked_autoencoder_forward.23} parent=11 // pred_region
        _
      $region20: #{masked_autoencoder_forward.23} parent=11 // pred_fallthru
        _
    $region12: #{masked_autoencoder_forward.23} parent=5 // pred_fallthru
      _
    %p124 = scmp.lt.s32.totalorder %s9, 2
    // Predicated region
    $region21: #{masked_autoencoder_forward.23} parent=5 // pred_check
      %p125 = pneg %p124
    $region22: #{masked_autoencoder_forward.23} parent=5 // pred_check_branch
      %127 = sbr.rel (%p125) target = $region24
    $region23: #{masked_autoencoder_forward.23} parent=5 // pred_region
      // Predicated region
      $region25: #{masked_autoencoder_forward.23} parent=23 // pred_check
        %p128 = pneg %p29
      $region26: #{masked_autoencoder_forward.23} parent=23 // pred_check_branch
        %130 = sbr.rel (%p128) target = $region28
      $region27: #{masked_autoencoder_forward.23} parent=23 // pred_region
        %p131 = scmp.lt.s32.totalorder %s9, 1
        %s132 = scalar_select %p131, %s9, 1
        %s133 = smul.addr %s132, 8
        %s134 = smul.addr %s133, 4
        %s135 = scalar_lea.vmem %s0, %s134
      $region28: #{masked_autoencoder_forward.23} parent=23 // pred_fallthru
        _
    $region24: #{masked_autoencoder_forward.23} parent=5 // pred_fallthru
      _
    %p136 = scmp.le.s32.totalorder 1, %s9
    %p137 = scmp.lt.s32.totalorder %s9, 3
    %p138 = pnand %p136, %p137
    %p139 = pneg %p138
    // Predicated region
    $region29: #{masked_autoencoder_forward.23} parent=5 // pred_check
      _
    $region30: #{masked_autoencoder_forward.23} parent=5 // pred_check_branch
      %141 = sbr.rel (%p138) target = $region32
    $region31: #{masked_autoencoder_forward.23} parent=5 // pred_region
      %s142 = ssub.s32 %s9, 1
      %p143 = scmp.lt.s32.totalorder %s14, 1
      %s144 = scalar_select %p143, %s14, 1
      %s145 = smul.addr %s144, 8
      %s146 = smul.addr %s145, 4
      %s147 = scalar_lea.vmem %s0, %s146
      %p148 = pneg %p35
      %p149 = pneg %p32
      %p150 = pneg %p56
      %p151 = pneg %p53
      %p152 = pneg %p77
      %p153 = pneg %p74
      %p154 = pneg %p103
      %p155 = pneg %p100
      %p156 = scmp.lt.s32.totalorder %s14, 1
      %s157 = scalar_select %p156, %s14, 1
      %s158 = smul.addr %s157, 8
      %s159 = smul.addr %s158, 8
      %s160 = scalar_lea.vmem %s3, %s159
      %p161 = scmp.lt.s32.totalorder %s14, 1
      %s162 = scalar_select %p161, %s14, 1
      %s163 = smul.addr %s162, 8
      %s164 = smul.addr %s163, 4
      %s165 = scalar_lea.vmem %s0, %s164
      %p166 = scmp.lt.s32.totalorder %s14, 1
      %s167 = scalar_select %p166, %s14, 1
      %s168 = smul.addr %s167, 8
      %s169 = smul.addr %s168, 8
      %s170 = scalar_lea.vmem %s3, %s169
      %v171 = vld [vmem:[%s165] sm:$0xf]
      %v172 = vld [vmem:[%s165 + $0x4] sm:$0xf]
      %v173 = vld [vmem:[%s165 + $0x8] sm:$0xf]
      %v174 = vld [vmem:[%s165 + $0xc] sm:$0xf]
      %v175 = vld [vmem:[%s165 + $0x10] sm:$0xf]
      %v176 = vld [vmem:[%s165 + $0x14] sm:$0xf]
      %v177 = vld [vmem:[%s165 + $0x18] sm:$0xf]
      %v178 = vld [vmem:[%s165 + $0x1c] sm:$0xf]
      %v179 = vunpack.c.l.bf16 %v171
      %v180 = vunpack.c.l.bf16 %v172
      %v181 = vunpack.c.l.bf16 %v173
      %v182 = vunpack.c.l.bf16 %v174
      %v183 = vunpack.c.l.bf16 %v175
      %v184 = vunpack.c.l.bf16 %v176
      %v185 = vunpack.c.l.bf16 %v177
      %v186 = vunpack.c.l.bf16 %v178
      %v187 = vld [vmem:[%s1] sm:$0xff]
      %v188 = vld [vmem:[%s1 + $0x8] sm:$0xff]
      %v189 = vld [vmem:[%s1 + $0x10] sm:$0xff]
      %v190 = vld [vmem:[%s1 + $0x18] sm:$0xff]
      %v191 = vld [vmem:[%s2] sm:$0x1]
      %v193 = vlaneseq
      %v194 = vshrl.u32 %v193, 7
      %v195 = vsub.s32 0, %v194
      %v196 = vrot.slane %v191, %v195
      %vm198 = vcmask 261120
      %v200 = vsel %vm198, %v179, 0
      %v203 = vsel %vm198, %v180, 0
      %v206 = vsel %vm198, %v181, 0
      %v209 = vsel %vm198, %v182, 0
      %v212 = vsel %vm198, %v183, 0
      %v215 = vsel %vm198, %v184, 0
      %v218 = vsel %vm198, %v185, 0
      %v221 = vsel %vm198, %v186, 0
      %223 = vmatprep.subr.mxu0 0.0
      %224 = vmatpush1.msra.mxu0 %v187
      %225 = vmatprep.subr.mxu0 0.0
      %226 = vmatpush1.msra.mxu0 %v188
      %227 = vmatprep.subr.mxu0 0.0
      %228 = vmatpush1.msra.mxu0 %v189
      %229 = vmatprep.subr.mxu0 0.0
      %230 = vmatpush1.msra.mxu0 %v190
      %231 = vmatprep.subr.mxu0 0.0
      %232 = vmatpush1.msra.mxu0 0.0
      %233 = vmatprep.subr.mxu0 0.0
      %234 = vmatpush1.msra.mxu0 0.0
      %235 = vmatprep.subr.mxu0 0.0
      %236 = vmatpush1.msra.mxu0 0.0
      %237 = vmatprep.subr.mxu0 0.0
      %238 = vmatpush1.msra.mxu0 0.0
      %239 = vmatprep.subr.mxu0 0.0
      %240 = vmatpush1.msra.mxu0 0.0
      %241 = vmatprep.subr.mxu0 0.0
      %242 = vmatpush1.msra.mxu0 0.0
      %243 = vmatprep.subr.mxu0 0.0
      %244 = vmatpush1.msra.mxu0 0.0
      %245 = vmatprep.subr.mxu0 0.0
      %246 = vmatpush1.msra.mxu0 0.0
      %247 = vmatprep.subr.mxu0 0.0
      %248 = vmatpush1.msra.mxu0 0.0
      %249 = vmatprep.subr.mxu0 0.0
      %250 = vmatpush1.msra.mxu0 0.0
      %251 = vmatprep.subr.mxu0 0.0
      %252 = vmatpush1.msra.mxu0 0.0
      %253 = vmatprep.subr.mxu0 0.0
      %254 = vmatpush1.msra.mxu0 0.0
      %255 = vmatprep.subr.mxu0 0.0
      %256 = vmatpush1.msra.mxu0 0.0
      %257 = vmatprep.subr.mxu0 0.0
      %258 = vmatpush1.msra.mxu0 0.0
      %259 = vmatprep.subr.mxu0 0.0
      %260 = vmatpush1.msra.mxu0 0.0
      %261 = vmatprep.subr.mxu0 0.0
      %262 = vmatpush1.msra.mxu0 0.0
      %263 = vmatprep.subr.mxu0 0.0
      %264 = vmatpush1.msra.mxu0 0.0
      %265 = vmatprep.subr.mxu0 0.0
      %266 = vmatpush1.msra.mxu0 0.0
      %267 = vmatprep.subr.mxu0 0.0
      %268 = vmatpush1.msra.mxu0 0.0
      %269 = vmatprep.subr.mxu0 0.0
      %270 = vmatpush1.msra.mxu0 0.0
      %271 = vmatprep.subr.mxu0 0.0
      %272 = vmatpush1.msra.mxu0 0.0
      %273 = vmatprep.subr.mxu0 0.0
      %274 = vmatpush1.msra.mxu0 0.0
      %275 = vmatprep.subr.mxu0 0.0
      %276 = vmatpush1.msra.mxu0 0.0
      %277 = vmatprep.subr.mxu0 0.0
      %278 = vmatpush1.msra.mxu0 0.0
      %279 = vmatprep.subr.mxu0 0.0
      %280 = vmatpush1.msra.mxu0 0.0
      %281 = vmatprep.subr.mxu0 0.0
      %282 = vmatpush1.msra.mxu0 0.0
      %283 = vmatprep.subr.mxu0 0.0
      %284 = vmatpush1.msra.mxu0 0.0
      %285 = vmatprep.subr.mxu0 0.0
      %286 = vmatpush1.msra.mxu0 0.0
      %287 = vmatprep.mubr.f32.mxu0 0.0
      %288 = vmatmul.mubr.f32.gmra.mrb[0].mxu0 %v200
      %v289 = vpop.f32.mrb[0].mxu0
      %v290 = vadd.f32 %v196, %v289
      %v291 = vpop.f32.mrb[0].mxu0
      %292 = vmatprep.mubr.f32.mxu0 0.0
      %293 = vmatmul.mubr.f32.gmra.mrb[0].mxu0 %v203
      %v294 = vpop.f32.mrb[0].mxu0
      %v295 = vadd.f32 %v196, %v294
      %v296 = vpop.f32.mrb[0].mxu0
      %297 = vmatprep.mubr.f32.mxu0 0.0
      %298 = vmatmul.mubr.f32.gmra.mrb[0].mxu0 %v206
      %v299 = vpop.f32.mrb[0].mxu0
      %v300 = vadd.f32 %v196, %v299
      %v301 = vpop.f32.mrb[0].mxu0
      %302 = vmatprep.mubr.f32.mxu0 0.0
      %303 = vmatmul.mubr.f32.gmra.mrb[0].mxu0 %v209
      %v304 = vpop.f32.mrb[0].mxu0
      %v305 = vadd.f32 %v196, %v304
      %v306 = vpop.f32.mrb[0].mxu0
      %307 = vmatprep.mubr.f32.mxu0 0.0
      %308 = vmatmul.mubr.f32.gmra.mrb[0].mxu0 %v212
      %v309 = vpop.f32.mrb[0].mxu0
      %v310 = vadd.f32 %v196, %v309
      %v311 = vpop.f32.mrb[0].mxu0
      %312 = vmatprep.mubr.f32.mxu0 0.0
      %313 = vmatmul.mubr.f32.gmra.mrb[0].mxu0 %v215
      %v314 = vpop.f32.mrb[0].mxu0
      %v315 = vadd.f32 %v196, %v314
      %v316 = vpop.f32.mrb[0].mxu0
      %317 = vmatprep.mubr.f32.mxu0 0.0
      %318 = vmatmul.mubr.f32.gmra.mrb[0].mxu0 %v218
      %v319 = vpop.f32.mrb[0].mxu0
      %v320 = vadd.f32 %v196, %v319
      %v321 = vpop.f32.mrb[0].mxu0
      %322 = vmatprep.mubr.f32.mxu0 0.0
      %323 = vmatmul.mubr.f32.gmra.mrb[0].mxu0 %v221
      %v324 = vpop.f32.mrb[0].mxu0
      %v325 = vadd.f32 %v196, %v324
      %v326 = vpop.f32.mrb[0].mxu0
      %327 = vdwg.mxu0
      %328 = vst [vmem:[%s170] sm:$0xff] %v290
      %329 = vst [vmem:[%s170 + $0x8] sm:$0xff] %v295
      %330 = vst [vmem:[%s170 + $0x10] sm:$0xff] %v300
      %331 = vst [vmem:[%s170 + $0x18] sm:$0xff] %v305
      %332 = vst [vmem:[%s170 + $0x20] sm:$0xff] %v310
      %333 = vst [vmem:[%s170 + $0x28] sm:$0xff] %v315
      %334 = vst [vmem:[%s170 + $0x30] sm:$0xff] %v320
      %335 = vst [vmem:[%s170 + $0x38] sm:$0xff] %v325
      %p336 = scmp.lt.s32.totalorder %s14, 1
      %s337 = scalar_select %p336, %s14, 1
      %s338 = smul.addr %s337, 8
      %s339 = smul.addr %s338, 8
      %s340 = scalar_lea.vmem %s3, %s339
      // Predicated region
      $region33: #{masked_autoencoder_forward.23} parent=31 // pred_check
        %p341 = pneg %p100
      $region34: #{masked_autoencoder_forward.23} parent=31 // pred_check_branch
        %343 = sbr.rel (%p341) target = $region36
      $region35: #{masked_autoencoder_forward.23} parent=31 // pred_region
        _
      $region36: #{masked_autoencoder_forward.23} parent=31 // pred_fallthru
        _
    $region32: #{masked_autoencoder_forward.23} parent=5 // pred_fallthru
      _
    %p344 = scmp.le.s32.totalorder 2, %s9
    // Predicated region
    $region37: #{masked_autoencoder_forward.23} parent=5 // pred_check
      %p345 = pneg %p344
    $region38: #{masked_autoencoder_forward.23} parent=5 // pred_check_branch
      %347 = sbr.rel (%p345) target = $region40
    $region39: #{masked_autoencoder_forward.23} parent=5 // pred_region
      %s348 = ssub.s32 %s9, 2
      // Predicated region
      $region41: #{masked_autoencoder_forward.23} parent=39 // pred_check
        %p349 = pneg %p106
      $region42: #{masked_autoencoder_forward.23} parent=39 // pred_check_branch
        %351 = sbr.rel (%p349) target = $region44
      $region43: #{masked_autoencoder_forward.23} parent=39 // pred_region
        %p352 = scmp.lt.s32.totalorder %s15, 1
        %s353 = scalar_select %p352, %s15, 1
        %s354 = smul.addr %s353, 8
        %s355 = smul.addr %s354, 8
        %s356 = scalar_lea.vmem %s3, %s355
      $region44: #{masked_autoencoder_forward.23} parent=39 // pred_fallthru
        _
    $region40: #{masked_autoencoder_forward.23} parent=5 // pred_fallthru
      _
  $region6: #{masked_autoencoder_forward.23} parent=0 // loop_footer
    %s13 = sadd.s32 1, %s9
  $region7: #{masked_autoencoder_forward.23} parent=0 // loop_footer_branch
    %8 = sbr.rel target = $region3
  $region8: #{masked_autoencoder_forward.23} parent=0 // loop_exit
    _

// kernel: masked_autoencoder_forward.14
$region0: #{masked_autoencoder_forward.14}
  #allocation0 [shape = 'u32[]', space=smem, size = 0x4, offset = 0x4, fixed_abs, tag = 'smem constant byte address 0x4 - core index']
  #allocation1 [shape = 'u32[144,128]{1,0:T(1,128)}', space=vmem, size = 0x12000, scoped, tag = 'internal scratch']
  %s0 = inlined_call_operand.vmem [shape: bf16[2,65,32], index: 0, kind: input, shape index: {}, may-alias: {0,1}]
  %s1 = inlined_call_operand.vmem [shape: bf16[2,65,32], index: 1, kind: input, shape index: {}, may-alias: {0,1}]
  %s2 = inlined_call_operand.vmem [shape: bf16[4,32,8], index: 2, kind: input, shape index: {}]
  %s3 = inlined_call_operand.vmem [shape: bf16[4,32,8], index: 3, kind: input, shape index: {}]
  %s4 = inlined_call_operand.vmem [shape: bf16[4,32,8], index: 4, kind: input, shape index: {}]
  %s5 = inlined_call_operand.vmem [shape: f32[4,1,8], index: 5, kind: input, shape index: {}]
  %s6 = inlined_call_operand.vmem [shape: f32[4,1,8], index: 6, kind: input, shape index: {}]
  %s7 = inlined_call_operand.vmem [shape: f32[4,1,8], index: 7, kind: input, shape index: {}]
  %s8 = inlined_call_operand.vmem [shape: bf16[4,8,32], index: 8, kind: input, shape index: {}]
  %s9 = inlined_call_operand.vmem [shape: f32[1,32], index: 9, kind: input, shape index: {}]
  %s10 = inlined_call_operand.vmem [shape: f32[1,32], index: 10, kind: input, shape index: {}]
  %s11 = inlined_call_operand.vmem [shape: f32[1,32], index: 11, kind: input, shape index: {}]
  %s12 = inlined_call_operand.vmem [shape: bf16[2,65,32], index: 12, kind: output, shape index: {}]
  %s13 = sld [smem:[#allocation0]]
  $region81: #{masked_autoencoder_forward.14} parent=0
    _
  %s15 = ssub.s32 1, %s13
  %s16 = scalar_select 0, %s15, %s13
  loop: start=0, step=1, limit=4
  $region2: #{masked_autoencoder_forward.14} parent=0 // loop_pre_header
    _
  $region3: #{masked_autoencoder_forward.14} parent=0 // loop_header
    %s18 = sphi 0, %s22
    %p19 = scmp.ge.s32.totalorder %s18, 4
    %s28 = sphi 0, %s30
    %s31 = sphi 0, %s28
    %s32 = sphi 0, %s31
    %s48 = sphi 0, %s32
    %s54 = sphi 0, %s56
    %s57 = sphi 0, %s54
    %s58 = sphi 0, %s57
    %s74 = sphi 0, %s58
    %s78 = sphi 0, %s78
    %s80 = sphi 0, %s78
    %s81 = sphi 0, %s80
    %s95 = sphi 0, %s81
    %s99 = sphi 0, %s99
    %s101 = sphi 0, %s99
    %s102 = sphi 0, %s101
    %s116 = sphi 0, %s102
    %s120 = sphi 0, %s120
    %s122 = sphi 0, %s120
    %s123 = sphi 0, %s122
    %s137 = sphi 0, %s123
    %s141 = sphi 0, %s141
    %s143 = sphi 0, %s141
    %s144 = sphi 0, %s143
    %s158 = sphi 0, %s144
    %s162 = sphi 0, %s162
    %s164 = sphi 0, %s162
    %s165 = sphi 0, %s164
    %s179 = sphi 0, %s165
    %s183 = sphi 0, %s183
    %s185 = sphi 0, %s183
    %s186 = sphi 0, %s185
    %s200 = sphi 0, %s186
    %s204 = sphi 0, %s204
    %s206 = sphi 0, %s204
    %s207 = sphi 0, %s206
    %s221 = sphi 0, %s207
    %s225 = sphi 0, %s225
    %s227 = sphi 0, %s225
    %s228 = sphi 0, %s227
    %s242 = sphi 0, %s228
    %s246 = sphi 0, %s246
    %s248 = sphi 0, %s246
    %s249 = sphi 0, %s248
    %s263 = sphi 0, %s249
    %s267 = sphi 0, %s267
    %s269 = sphi 0, %s267
    %s270 = sphi 0, %s269
    %s284 = sphi 0, %s270
    %s290 = sphi 0, %s292
    %s293 = sphi 0, %s290
    %s294 = sphi 0, %s293
    %s310 = sphi 0, %s294
  $region4: #{masked_autoencoder_forward.14} parent=0 // loop_header_branch
    %21 = sbr.rel (%p19) target = $region8
  $region5: #{masked_autoencoder_forward.14} parent=0 // loop_body
    %s23 = ssub.s32 %s18, 1
    %s24 = ssub.s32 %s18, 2
    %s25 = sadd.s32 %s18, 1
    %s26 = ssub.s32 %s18, %s25
    %p27 = scmp.eq.s32.totalorder %s26, 0
    %s29 = sadd.s32 %s28, 1
    %s30 = scalar_select %p27, %s28, %s29
    %p33 = pneg %p27
    %p34 = scmp.eq.s32.totalorder %s18, 1
    %p35 = por %p33, %p34
    %p36 = scmp.ne.s32.totalorder %s28, %s31
    %p37 = scmp.eq.s32.totalorder %s18, 0
    %p38 = por %p36, %p37
    %p39 = scmp.ne.s32.totalorder %s28, %s31
    %p40 = scmp.eq.s32.totalorder %s23, 1
    %p41 = por %p39, %p40
    %p42 = scmp.ne.s32.totalorder %s31, %s32
    %p43 = scmp.eq.s32.totalorder %s23, 0
    %p44 = por %p42, %p43
    %p45 = scmp.ne.s32.totalorder %s31, %s32
    %p46 = scmp.eq.s32.totalorder %s24, 1
    %p47 = por %p45, %p46
    %p49 = scmp.ne.s32.totalorder %s32, %s48
    %p50 = scmp.eq.s32.totalorder %s24, 0
    %p51 = por %p49, %p50
    %s52 = ssub.s32 %s18, %s25
    %p53 = scmp.eq.s32.totalorder %s52, 0
    %s55 = sadd.s32 %s54, 1
    %s56 = scalar_select %p53, %s54, %s55
    %p59 = pneg %p53
    %p60 = scmp.eq.s32.totalorder %s18, 1
    %p61 = por %p59, %p60
    %p62 = scmp.ne.s32.totalorder %s54, %s57
    %p63 = scmp.eq.s32.totalorder %s18, 0
    %p64 = por %p62, %p63
    %p65 = scmp.ne.s32.totalorder %s54, %s57
    %p66 = scmp.eq.s32.totalorder %s23, 1
    %p67 = por %p65, %p66
    %p68 = scmp.ne.s32.totalorder %s57, %s58
    %p69 = scmp.eq.s32.totalorder %s23, 0
    %p70 = por %p68, %p69
    %p71 = scmp.ne.s32.totalorder %s57, %s58
    %p72 = scmp.eq.s32.totalorder %s24, 1
    %p73 = por %p71, %p72
    %p75 = scmp.ne.s32.totalorder %s58, %s74
    %p76 = scmp.eq.s32.totalorder %s24, 0
    %p77 = por %p75, %p76
    %s79 = sadd.s32 %s78, 1
    %p82 = scmp.eq.s32.totalorder %s18, 1
    %p83 = scmp.ne.s32.totalorder %s78, %s80
    %p84 = scmp.eq.s32.totalorder %s18, 0
    %p85 = por %p83, %p84
    %p86 = scmp.ne.s32.totalorder %s78, %s80
    %p87 = scmp.eq.s32.totalorder %s23, 1
    %p88 = por %p86, %p87
    %p89 = scmp.ne.s32.totalorder %s80, %s81
    %p90 = scmp.eq.s32.totalorder %s23, 0
    %p91 = por %p89, %p90
    %p92 = scmp.ne.s32.totalorder %s80, %s81
    %p93 = scmp.eq.s32.totalorder %s24, 1
    %p94 = por %p92, %p93
    %p96 = scmp.ne.s32.totalorder %s81, %s95
    %p97 = scmp.eq.s32.totalorder %s24, 0
    %p98 = por %p96, %p97
    %s100 = sadd.s32 %s99, 1
    %p103 = scmp.eq.s32.totalorder %s18, 1
    %p104 = scmp.ne.s32.totalorder %s99, %s101
    %p105 = scmp.eq.s32.totalorder %s18, 0
    %p106 = por %p104, %p105
    %p107 = scmp.ne.s32.totalorder %s99, %s101
    %p108 = scmp.eq.s32.totalorder %s23, 1
    %p109 = por %p107, %p108
    %p110 = scmp.ne.s32.totalorder %s101, %s102
    %p111 = scmp.eq.s32.totalorder %s23, 0
    %p112 = por %p110, %p111
    %p113 = scmp.ne.s32.totalorder %s101, %s102
    %p114 = scmp.eq.s32.totalorder %s24, 1
    %p115 = por %p113, %p114
    %p117 = scmp.ne.s32.totalorder %s102, %s116
    %p118 = scmp.eq.s32.totalorder %s24, 0
    %p119 = por %p117, %p118
    %s121 = sadd.s32 %s120, 1
    %p124 = scmp.eq.s32.totalorder %s18, 1
    %p125 = scmp.ne.s32.totalorder %s120, %s122
    %p126 = scmp.eq.s32.totalorder %s18, 0
    %p127 = por %p125, %p126
    %p128 = scmp.ne.s32.totalorder %s120, %s122
    %p129 = scmp.eq.s32.totalorder %s23, 1
    %p130 = por %p128, %p129
    %p131 = scmp.ne.s32.totalorder %s122, %s123
    %p132 = scmp.eq.s32.totalorder %s23, 0
    %p133 = por %p131, %p132
    %p134 = scmp.ne.s32.totalorder %s122, %s123
    %p135 = scmp.eq.s32.totalorder %s24, 1
    %p136 = por %p134, %p135
    %p138 = scmp.ne.s32.totalorder %s123, %s137
    %p139 = scmp.eq.s32.totalorder %s24, 0
    %p140 = por %p138, %p139
    %s142 = sadd.s32 %s141, 1
    %p145 = scmp.eq.s32.totalorder %s18, 1
    %p146 = scmp.ne.s32.totalorder %s141, %s143
    %p147 = scmp.eq.s32.totalorder %s18, 0
    %p148 = por %p146, %p147
    %p149 = scmp.ne.s32.totalorder %s141, %s143
    %p150 = scmp.eq.s32.totalorder %s23, 1
    %p151 = por %p149, %p150
    %p152 = scmp.ne.s32.totalorder %s143, %s144
    %p153 = scmp.eq.s32.totalorder %s23, 0
    %p154 = por %p152, %p153
    %p155 = scmp.ne.s32.totalorder %s143, %s144
    %p156 = scmp.eq.s32.totalorder %s24, 1
    %p157 = por %p155, %p156
    %p159 = scmp.ne.s32.totalorder %s144, %s158
    %p160 = scmp.eq.s32.totalorder %s24, 0
    %p161 = por %p159, %p160
    %s163 = sadd.s32 %s162, 1
    %p166 = scmp.eq.s32.totalorder %s18, 1
    %p167 = scmp.ne.s32.totalorder %s162, %s164
    %p168 = scmp.eq.s32.totalorder %s18, 0
    %p169 = por %p167, %p168
    %p170 = scmp.ne.s32.totalorder %s162, %s164
    %p171 = scmp.eq.s32.totalorder %s23, 1
    %p172 = por %p170, %p171
    %p173 = scmp.ne.s32.totalorder %s164, %s165
    %p174 = scmp.eq.s32.totalorder %s23, 0
    %p175 = por %p173, %p174
    %p176 = scmp.ne.s32.totalorder %s164, %s165
    %p177 = scmp.eq.s32.totalorder %s24, 1
    %p178 = por %p176, %p177
    %p180 = scmp.ne.s32.totalorder %s165, %s179
    %p181 = scmp.eq.s32.totalorder %s24, 0
    %p182 = por %p180, %p181
    %s184 = sadd.s32 %s183, 1
    %p187 = scmp.eq.s32.totalorder %s18, 1
    %p188 = scmp.ne.s32.totalorder %s183, %s185
    %p189 = scmp.eq.s32.totalorder %s18, 0
    %p190 = por %p188, %p189
    %p191 = scmp.ne.s32.totalorder %s183, %s185
    %p192 = scmp.eq.s32.totalorder %s23, 1
    %p193 = por %p191, %p192
    %p194 = scmp.ne.s32.totalorder %s185, %s186
    %p195 = scmp.eq.s32.totalorder %s23, 0
    %p196 = por %p194, %p195
    %p197 = scmp.ne.s32.totalorder %s185, %s186
    %p198 = scmp.eq.s32.totalorder %s24, 1
    %p199 = por %p197, %p198
    %p201 = scmp.ne.s32.totalorder %s186, %s200
    %p202 = scmp.eq.s32.totalorder %s24, 0
    %p203 = por %p201, %p202
    %s205 = sadd.s32 %s204, 1
    %p208 = scmp.eq.s32.totalorder %s18, 1
    %p209 = scmp.ne.s32.totalorder %s204, %s206
    %p210 = scmp.eq.s32.totalorder %s18, 0
    %p211 = por %p209, %p210
    %p212 = scmp.ne.s32.totalorder %s204, %s206
    %p213 = scmp.eq.s32.totalorder %s23, 1
    %p214 = por %p212, %p213
    %p215 = scmp.ne.s32.totalorder %s206, %s207
    %p216 = scmp.eq.s32.totalorder %s23, 0
    %p217 = por %p215, %p216
    %p218 = scmp.ne.s32.totalorder %s206, %s207
    %p219 = scmp.eq.s32.totalorder %s24, 1
    %p220 = por %p218, %p219
    %p222 = scmp.ne.s32.totalorder %s207, %s221
    %p223 = scmp.eq.s32.totalorder %s24, 0
    %p224 = por %p222, %p223
    %s226 = sadd.s32 %s225, 1
    %p229 = scmp.eq.s32.totalorder %s18, 1
    %p230 = scmp.ne.s32.totalorder %s225, %s227
    %p231 = scmp.eq.s32.totalorder %s18, 0
    %p232 = por %p230, %p231
    %p233 = scmp.ne.s32.totalorder %s225, %s227
    %p234 = scmp.eq.s32.totalorder %s23, 1
    %p235 = por %p233, %p234
    %p236 = scmp.ne.s32.totalorder %s227, %s228
    %p237 = scmp.eq.s32.totalorder %s23, 0
    %p238 = por %p236, %p237
    %p239 = scmp.ne.s32.totalorder %s227, %s228
    %p240 = scmp.eq.s32.totalorder %s24, 1
    %p241 = por %p239, %p240
    %p243 = scmp.ne.s32.totalorder %s228, %s242
    %p244 = scmp.eq.s32.totalorder %s24, 0
    %p245 = por %p243, %p244
    %s247 = sadd.s32 %s246, 1
    %p250 = scmp.eq.s32.totalorder %s18, 1
    %p251 = scmp.ne.s32.totalorder %s246, %s248
    %p252 = scmp.eq.s32.totalorder %s18, 0
    %p253 = por %p251, %p252
    %p254 = scmp.ne.s32.totalorder %s246, %s248
    %p255 = scmp.eq.s32.totalorder %s23, 1
    %p256 = por %p254, %p255
    %p257 = scmp.ne.s32.totalorder %s248, %s249
    %p258 = scmp.eq.s32.totalorder %s23, 0
    %p259 = por %p257, %p258
    %p260 = scmp.ne.s32.totalorder %s248, %s249
    %p261 = scmp.eq.s32.totalorder %s24, 1
    %p262 = por %p260, %p261
    %p264 = scmp.ne.s32.totalorder %s249, %s263
    %p265 = scmp.eq.s32.totalorder %s24, 0
    %p266 = por %p264, %p265
    %s268 = sadd.s32 %s267, 1
    %p271 = scmp.eq.s32.totalorder %s18, 1
    %p272 = scmp.ne.s32.totalorder %s267, %s269
    %p273 = scmp.eq.s32.totalorder %s18, 0
    %p274 = por %p272, %p273
    %p275 = scmp.ne.s32.totalorder %s267, %s269
    %p276 = scmp.eq.s32.totalorder %s23, 1
    %p277 = por %p275, %p276
    %p278 = scmp.ne.s32.totalorder %s269, %s270
    %p279 = scmp.eq.s32.totalorder %s23, 0
    %p280 = por %p278, %p279
    %p281 = scmp.ne.s32.totalorder %s269, %s270
    %p282 = scmp.eq.s32.totalorder %s24, 1
    %p283 = por %p281, %p282
    %p285 = scmp.ne.s32.totalorder %s270, %s284
    %p286 = scmp.eq.s32.totalorder %s24, 0
    %p287 = por %p285, %p286
    %s288 = ssub.s32 %s18, %s25
    %p289 = scmp.eq.s32.totalorder %s288, 0
    %s291 = sadd.s32 %s290, 1
    %s292 = scalar_select %p289, %s290, %s291
    %p295 = pneg %p289
    %p296 = scmp.eq.s32.totalorder %s18, 1
    %p297 = por %p295, %p296
    %p298 = scmp.ne.s32.totalorder %s290, %s293
    %p299 = scmp.eq.s32.totalorder %s18, 0
    %p300 = por %p298, %p299
    %p301 = scmp.ne.s32.totalorder %s290, %s293
    %p302 = scmp.eq.s32.totalorder %s23, 1
    %p303 = por %p301, %p302
    %p304 = scmp.ne.s32.totalorder %s293, %s294
    %p305 = scmp.eq.s32.totalorder %s23, 0
    %p306 = por %p304, %p305
    %p307 = scmp.ne.s32.totalorder %s293, %s294
    %p308 = scmp.eq.s32.totalorder %s24, 1
    %p309 = por %p307, %p308
    %p311 = scmp.ne.s32.totalorder %s294, %s310
    %p312 = scmp.eq.s32.totalorder %s24, 0
    %p313 = por %p311, %p312
    %p314 = scmp.le.s32.totalorder 1, %s18
    %p315 = scmp.lt.s32.totalorder %s18, 3
    %p316 = pnand %p314, %p315
    %p317 = pneg %p316
    // Predicated region
    $region9: #{masked_autoencoder_forward.14} parent=5 // pred_check
      _
    $region10: #{masked_autoencoder_forward.14} parent=5 // pred_check_branch
      %319 = sbr.rel (%p316) target = $region12
    $region11: #{masked_autoencoder_forward.14} parent=5 // pred_region
      %s320 = ssub.s32 %s18, 1
      // Predicated region
      $region13: #{masked_autoencoder_forward.14} parent=11 // pred_check
        %p321 = pneg %p91
      $region14: #{masked_autoencoder_forward.14} parent=11 // pred_check_branch
        %323 = sbr.rel (%p321) target = $region16
      $region15: #{masked_autoencoder_forward.14} parent=11 // pred_region
        _
      $region16: #{masked_autoencoder_forward.14} parent=11 // pred_fallthru
        _
      // Predicated region
      $region17: #{masked_autoencoder_forward.14} parent=11 // pred_check
        %p324 = pneg %p112
      $region18: #{masked_autoencoder_forward.14} parent=11 // pred_check_branch
        %326 = sbr.rel (%p324) target = $region20
      $region19: #{masked_autoencoder_forward.14} parent=11 // pred_region
        _
      $region20: #{masked_autoencoder_forward.14} parent=11 // pred_fallthru
        _
      // Predicated region
      $region21: #{masked_autoencoder_forward.14} parent=11 // pred_check
        %p327 = pneg %p133
      $region22: #{masked_autoencoder_forward.14} parent=11 // pred_check_branch
        %329 = sbr.rel (%p327) target = $region24
      $region23: #{masked_autoencoder_forward.14} parent=11 // pred_region
        _
      $region24: #{masked_autoencoder_forward.14} parent=11 // pred_fallthru
        _
      // Predicated region
      $region25: #{masked_autoencoder_forward.14} parent=11 // pred_check
        %p330 = pneg %p154
      $region26: #{masked_autoencoder_forward.14} parent=11 // pred_check_branch
        %332 = sbr.rel (%p330) target = $region28
      $region27: #{masked_autoencoder_forward.14} parent=11 // pred_region
        _
      $region28: #{masked_autoencoder_forward.14} parent=11 // pred_fallthru
        _
      // Predicated region
      $region29: #{masked_autoencoder_forward.14} parent=11 // pred_check
        %p333 = pneg %p175
      $region30: #{masked_autoencoder_forward.14} parent=11 // pred_check_branch
        %335 = sbr.rel (%p333) target = $region32
      $region31: #{masked_autoencoder_forward.14} parent=11 // pred_region
        _
      $region32: #{masked_autoencoder_forward.14} parent=11 // pred_fallthru
        _
      // Predicated region
      $region33: #{masked_autoencoder_forward.14} parent=11 // pred_check
        %p336 = pneg %p196
      $region34: #{masked_autoencoder_forward.14} parent=11 // pred_check_branch
        %338 = sbr.rel (%p336) target = $region36
      $region35: #{masked_autoencoder_forward.14} parent=11 // pred_region
        _
      $region36: #{masked_autoencoder_forward.14} parent=11 // pred_fallthru
        _
      // Predicated region
      $region37: #{masked_autoencoder_forward.14} parent=11 // pred_check
        %p339 = pneg %p217
      $region38: #{masked_autoencoder_forward.14} parent=11 // pred_check_branch
        %341 = sbr.rel (%p339) target = $region40
      $region39: #{masked_autoencoder_forward.14} parent=11 // pred_region
        _
      $region40: #{masked_autoencoder_forward.14} parent=11 // pred_fallthru
        _
      // Predicated region
      $region41: #{masked_autoencoder_forward.14} parent=11 // pred_check
        %p342 = pneg %p238
      $region42: #{masked_autoencoder_forward.14} parent=11 // pred_check_branch
        %344 = sbr.rel (%p342) target = $region44
      $region43: #{masked_autoencoder_forward.14} parent=11 // pred_region
        _
      $region44: #{masked_autoencoder_forward.14} parent=11 // pred_fallthru
        _
      // Predicated region
      $region45: #{masked_autoencoder_forward.14} parent=11 // pred_check
        %p345 = pneg %p259
      $region46: #{masked_autoencoder_forward.14} parent=11 // pred_check_branch
        %347 = sbr.rel (%p345) target = $region48
      $region47: #{masked_autoencoder_forward.14} parent=11 // pred_region
        _
      $region48: #{masked_autoencoder_forward.14} parent=11 // pred_fallthru
        _
      // Predicated region
      $region49: #{masked_autoencoder_forward.14} parent=11 // pred_check
        %p348 = pneg %p280
      $region50: #{masked_autoencoder_forward.14} parent=11 // pred_check_branch
        %350 = sbr.rel (%p348) target = $region52
      $region51: #{masked_autoencoder_forward.14} parent=11 // pred_region
        _
      $region52: #{masked_autoencoder_forward.14} parent=11 // pred_fallthru
        _
    $region12: #{masked_autoencoder_forward.14} parent=5 // pred_fallthru
      _
    %p351 = scmp.lt.s32.totalorder %s18, 2
    // Predicated region
    $region53: #{masked_autoencoder_forward.14} parent=5 // pred_check
      %p352 = pneg %p351
    $region54: #{masked_autoencoder_forward.14} parent=5 // pred_check_branch
      %354 = sbr.rel (%p352) target = $region56
    $region55: #{masked_autoencoder_forward.14} parent=5 // pred_region
      // Predicated region
      $region57: #{masked_autoencoder_forward.14} parent=55 // pred_check
        %p355 = pneg %p38
      $region58: #{masked_autoencoder_forward.14} parent=55 // pred_check_branch
        %357 = sbr.rel (%p355) target = $region60
      $region59: #{masked_autoencoder_forward.14} parent=55 // pred_region
        %p358 = scmp.lt.s32.totalorder %s18, 1
        %s359 = scalar_select %p358, %s18, 1
        %s360 = smul.addr %s359, 9
        %s361 = smul.addr %s360, 4
        %s362 = scalar_lea.vmem %s0, %s361
      $region60: #{masked_autoencoder_forward.14} parent=55 // pred_fallthru
        _
      // Predicated region
      $region61: #{masked_autoencoder_forward.14} parent=55 // pred_check
        %p363 = pneg %p64
      $region62: #{masked_autoencoder_forward.14} parent=55 // pred_check_branch
        %365 = sbr.rel (%p363) target = $region64
      $region63: #{masked_autoencoder_forward.14} parent=55 // pred_region
        %p366 = scmp.lt.s32.totalorder %s18, 1
        %s367 = scalar_select %p366, %s18, 1
        %s368 = smul.addr %s367, 9
        %s369 = smul.addr %s368, 4
        %s370 = scalar_lea.vmem %s1, %s369
      $region64: #{masked_autoencoder_forward.14} parent=55 // pred_fallthru
        _
    $region56: #{masked_autoencoder_forward.14} parent=5 // pred_fallthru
      _
    %p371 = scmp.le.s32.totalorder 1, %s18
    %p372 = scmp.lt.s32.totalorder %s18, 3
    %p373 = pnand %p371, %p372
    %p374 = pneg %p373
    // Predicated region
    $region65: #{masked_autoencoder_forward.14} parent=5 // pred_check
      _
    $region66: #{masked_autoencoder_forward.14} parent=5 // pred_check_branch
      %376 = sbr.rel (%p373) target = $region68
    $region67: #{masked_autoencoder_forward.14} parent=5 // pred_region
      %s377 = ssub.s32 %s18, 1
      %p378 = scmp.lt.s32.totalorder %s23, 1
      %s379 = scalar_select %p378, %s23, 1
      %s380 = smul.addr %s379, 9
      %s381 = smul.addr %s380, 4
      %s382 = scalar_lea.vmem %s0, %s381
      %p383 = pneg %p44
      %p384 = pneg %p41
      %p385 = scmp.lt.s32.totalorder %s23, 1
      %s386 = scalar_select %p385, %s23, 1
      %s387 = smul.addr %s386, 9
      %s388 = smul.addr %s387, 4
      %s389 = scalar_lea.vmem %s1, %s388
      %p390 = pneg %p70
      %p391 = pneg %p67
      %p392 = pneg %p91
      %p393 = pneg %p88
      %p394 = pneg %p112
      %p395 = pneg %p109
      %p396 = pneg %p133
      %p397 = pneg %p130
      %p398 = pneg %p154
      %p399 = pneg %p151
      %p400 = pneg %p175
      %p401 = pneg %p172
      %p402 = pneg %p196
      %p403 = pneg %p193
      %p404 = pneg %p217
      %p405 = pneg %p214
      %p406 = pneg %p238
      %p407 = pneg %p235
      %p408 = pneg %p259
      %p409 = pneg %p256
      %p410 = pneg %p280
      %p411 = pneg %p277
      %p412 = pneg %p306
      %p413 = pneg %p303
      %p414 = scmp.lt.s32.totalorder %s23, 1
      %s415 = scalar_select %p414, %s23, 1
      %s416 = smul.addr %s415, 9
      %s417 = smul.addr %s416, 4
      %s418 = scalar_lea.vmem %s12, %s417
      %p419 = scmp.lt.s32.totalorder %s23, 1
      %s420 = scalar_select %p419, %s23, 1
      %s421 = smul.addr %s420, 9
      %s422 = smul.addr %s421, 4
      %s423 = scalar_lea.vmem %s0, %s422
      %p424 = scmp.lt.s32.totalorder %s23, 1
      %s425 = scalar_select %p424, %s23, 1
      %s426 = smul.addr %s425, 9
      %s427 = smul.addr %s426, 4
      %s428 = scalar_lea.vmem %s1, %s427
      %p429 = scmp.lt.s32.totalorder %s23, 1
      %s430 = scalar_select %p429, %s23, 1
      %s431 = smul.addr %s430, 9
      %s432 = smul.addr %s431, 4
      %s433 = scalar_lea.vmem %s12, %s432
      %v435 = vld [vmem:[%s423] sm:$0xf]
      %v436 = vld [vmem:[%s423 + $0x4] sm:$0xf]
      %v437 = vld [vmem:[%s423 + $0x8] sm:$0xf]
      %v438 = vld [vmem:[%s423 + $0xc] sm:$0xf]
      %v439 = vld [vmem:[%s423 + $0x10] sm:$0xf]
      %v440 = vld [vmem:[%s423 + $0x14] sm:$0xf]
      %v441 = vld [vmem:[%s423 + $0x18] sm:$0xf]
      %v442 = vld [vmem:[%s423 + $0x1c] sm:$0xf]
      %v443 = vld [vmem:[%s423 + $0x20] sm:$0x1]
      %v444 = vld [vmem:[%s428] sm:$0xf]
      %v445 = vld [vmem:[%s428 + $0x4] sm:$0xf]
      %v446 = vld [vmem:[%s428 + $0x8] sm:$0xf]
      %v447 = vld [vmem:[%s428 + $0xc] sm:$0xf]
      %v448 = vld [vmem:[%s428 + $0x10] sm:$0xf]
      %v449 = vld [vmem:[%s428 + $0x14] sm:$0xf]
      %v450 = vld [vmem:[%s428 + $0x18] sm:$0xf]
      %v451 = vld [vmem:[%s428 + $0x1c] sm:$0xf]
      %v452 = vld [vmem:[%s428 + $0x20] sm:$0x1]
      %v453 = vunpack.c.l.bf16 %v435
      %v454 = vunpack.c.l.bf16 %v436
      %v455 = vunpack.c.l.bf16 %v437
      %v456 = vunpack.c.l.bf16 %v438
      %v457 = vunpack.c.l.bf16 %v439
      %v458 = vunpack.c.l.bf16 %v440
      %v459 = vunpack.c.l.bf16 %v441
      %v460 = vunpack.c.l.bf16 %v442
      %v461 = vunpack.c.l.bf16 %v443
      %v462 = vld [vmem:[%s2] sm:$0xf]
      %v463 = vld [vmem:[%s2 + $0x4] sm:$0xf]
      %v464 = vld [vmem:[%s2 + $0x8] sm:$0xf]
      %v465 = vld [vmem:[%s2 + $0xc] sm:$0xf]
      %v466 = vld [vmem:[%s5] sm:$0x1]
      %v468 = vlaneseq
      %v469 = vshrl.u32 %v468, 7
      %v470 = vsub.s32 0, %v469
      %v471 = vrot.slane %v466, %v470
      %v482 = vunpack.c.l.b16 %v435
      %v483 = vunpack.c.l.b16 %v436
      %v484 = vunpack.c.l.b16 %v437
      %v485 = vunpack.c.l.b16 %v438
      %v486 = vunpack.c.l.b16 %v439
      %v487 = vunpack.c.l.b16 %v440
      %v488 = vunpack.c.l.b16 %v441
      %v489 = vunpack.c.l.b16 %v442
      %v490 = vunpack.c.l.b16 %v443
      %v491 = vpack.c.b16 %v483, %v482
      %v492 = vpack.c.b16 %v485, %v484
      %v493 = vpack.c.b16 %v487, %v486
      %v494 = vpack.c.b16 %v489, %v488
      %v495 = vpack.c.b16 %v490, %v490
      %v500 = vunpack.c.l.b16 %v462
      %v501 = vunpack.c.l.b16 %v463
      %v502 = vunpack.c.l.b16 %v464
      %v503 = vunpack.c.l.b16 %v465
      %v504 = vpack.c.b16 %v501, %v500
      %v505 = vpack.c.b16 %v503, %v502
      %vm508 = vcmask 261120
      %v510 = vsel %vm508, %v491, 0
      %v513 = vsel %vm508, %v492, 0
      %v516 = vsel %vm508, %v493, 0
      %v519 = vsel %vm508, %v494, 0
      %v522 = vsel %vm508, %v495, 0
      %524 = vmatprep.subr.bf16.mxu0 0
      %525 = vmatpush1.bf16.msra.mxu0 %v504
      %526 = vmatprep.subr.bf16.mxu0 0
      %527 = vmatpush1.bf16.msra.mxu0 %v505
      %528 = vmatprep.subr.bf16.mxu0 0
      %529 = vmatpush1.bf16.msra.mxu0 0
      %530 = vmatprep.subr.bf16.mxu0 0
      %531 = vmatpush1.bf16.msra.mxu0 0
      %532 = vmatprep.subr.bf16.mxu0 0
      %533 = vmatpush1.bf16.msra.mxu0 0
      %534 = vmatprep.subr.bf16.mxu0 0
      %535 = vmatpush1.bf16.msra.mxu0 0
      %536 = vmatprep.subr.bf16.mxu0 0
      %537 = vmatpush1.bf16.msra.mxu0 0
      %538 = vmatprep.subr.bf16.mxu0 0
      %539 = vmatpush1.bf16.msra.mxu0 0
      %540 = vmatprep.subr.bf16.mxu0 0
      %541 = vmatpush1.bf16.msra.mxu0 0
      %542 = vmatprep.subr.bf16.mxu0 0
      %543 = vmatpush1.bf16.msra.mxu0 0
      %544 = vmatprep.subr.bf16.mxu0 0
      %545 = vmatpush1.bf16.msra.mxu0 0
      %546 = vmatprep.subr.bf16.mxu0 0
      %547 = vmatpush1.bf16.msra.mxu0 0
      %548 = vmatprep.subr.bf16.mxu0 0
      %549 = vmatpush1.bf16.msra.mxu0 0
      %550 = vmatprep.subr.bf16.mxu0 0
      %551 = vmatpush1.bf16.msra.mxu0 0
      %552 = vmatprep.subr.bf16.mxu0 0
      %553 = vmatpush1.bf16.msra.mxu0 0
      %554 = vmatprep.subr.bf16.mxu0 0
      %555 = vmatpush1.bf16.msra.mxu0 0
      %556 = vmatprep.mubr.bf16.mxu0 0
      %557 = vmatmul.mubr.bf16.gmra.mrb[0].mxu0 %v510
      %v558 = vpop.f32.mrb[0].mxu0
      %v559 = vadd.f32 %v471, %v558
      %v560 = vpop.f32.mrb[0].mxu0
      %v561 = vpop.f32.mrb[0].mxu0
      %v562 = vadd.f32 %v471, %v561
      %v563 = vpop.f32.mrb[0].mxu0
      %564 = vmatprep.mubr.bf16.mxu0 0
      %565 = vmatmul.mubr.bf16.gmra.mrb[0].mxu0 %v513
      %v566 = vpop.f32.mrb[0].mxu0
      %v567 = vadd.f32 %v471, %v566
      %v568 = vpop.f32.mrb[0].mxu0
      %v569 = vpop.f32.mrb[0].mxu0
      %v570 = vadd.f32 %v471, %v569
      %v571 = vpop.f32.mrb[0].mxu0
      %572 = vmatprep.mubr.bf16.mxu0 0
      %573 = vmatmul.mubr.bf16.gmra.mrb[0].mxu0 %v516
      %v574 = vpop.f32.mrb[0].mxu0
      %v575 = vadd.f32 %v471, %v574
      %v576 = vpop.f32.mrb[0].mxu0
      %v577 = vpop.f32.mrb[0].mxu0
      %v578 = vadd.f32 %v471, %v577
      %v579 = vpop.f32.mrb[0].mxu0
      %580 = vmatprep.mubr.bf16.mxu0 0
      %581 = vmatmul.mubr.bf16.gmra.mrb[0].mxu0 %v519
      %v582 = vpop.f32.mrb[0].mxu0
      %v583 = vadd.f32 %v471, %v582
      %v584 = vpop.f32.mrb[0].mxu0
      %v585 = vpop.f32.mrb[0].mxu0
      %v586 = vadd.f32 %v471, %v585
      %v587 = vpop.f32.mrb[0].mxu0
      %588 = vmatprep.mubr.bf16.mxu0 0
      %589 = vmatmul.mubr.bf16.gmra.mrb[0].mxu0 %v522
      %v590 = vpop.f32.mrb[0].mxu0
      %v591 = vadd.f32 %v471, %v590
      %v592 = vpop.f32.mrb[0].mxu0
      %v593 = vpop.f32.mrb[0].mxu0
      %v594 = vpop.f32.mrb[0].mxu0
      %595 = vdwg.mxu0
      %v596 = vld [vmem:[%s3] sm:$0xf]
      %v597 = vld [vmem:[%s3 + $0x4] sm:$0xf]
      %v598 = vld [vmem:[%s3 + $0x8] sm:$0xf]
      %v599 = vld [vmem:[%s3 + $0xc] sm:$0xf]
      %v600 = vld [vmem:[%s6] sm:$0x1]
      %v602 = vlaneseq
      %v603 = vshrl.u32 %v602, 7
      %v604 = vsub.s32 0, %v603
      %v605 = vrot.slane %v600, %v604
      %v616 = vunpack.c.l.b16 %v444
      %v617 = vunpack.c.l.b16 %v445
      %v618 = vunpack.c.l.b16 %v446
      %v619 = vunpack.c.l.b16 %v447
      %v620 = vunpack.c.l.b16 %v448
      %v621 = vunpack.c.l.b16 %v449
      %v622 = vunpack.c.l.b16 %v450
      %v623 = vunpack.c.l.b16 %v451
      %v624 = vunpack.c.l.b16 %v452
      %v625 = vpack.c.b16 %v617, %v616
      %v626 = vpack.c.b16 %v619, %v618
      %v627 = vpack.c.b16 %v621, %v620
      %v628 = vpack.c.b16 %v623, %v622
      %v629 = vpack.c.b16 %v624, %v624
      %v634 = vunpack.c.l.b16 %v596
      %v635 = vunpack.c.l.b16 %v597
      %v636 = vunpack.c.l.b16 %v598
      %v637 = vunpack.c.l.b16 %v599
      %v638 = vpack.c.b16 %v635, %v634
      %v639 = vpack.c.b16 %v637, %v636
      %v643 = vsel %vm508, %v625, 0
      %v646 = vsel %vm508, %v626, 0
      %v649 = vsel %vm508, %v627, 0
      %v652 = vsel %vm508, %v628, 0
      %v655 = vsel %vm508, %v629, 0
      %657 = vmatprep.subr.bf16.mxu0 0
      %658 = vmatpush1.bf16.msra.mxu0 %v638
      %659 = vmatprep.subr.bf16.mxu0 0
      %660 = vmatpush1.bf16.msra.mxu0 %v639
      %661 = vmatprep.subr.bf16.mxu0 0
      %662 = vmatpush1.bf16.msra.mxu0 0
      %663 = vmatprep.subr.bf16.mxu0 0
      %664 = vmatpush1.bf16.msra.mxu0 0
      %665 = vmatprep.subr.bf16.mxu0 0
      %666 = vmatpush1.bf16.msra.mxu0 0
      %667 = vmatprep.subr.bf16.mxu0 0
      %668 = vmatpush1.bf16.msra.mxu0 0
      %669 = vmatprep.subr.bf16.mxu0 0
      %670 = vmatpush1.bf16.msra.mxu0 0
      %671 = vmatprep.subr.bf16.mxu0 0
      %672 = vmatpush1.bf16.msra.mxu0 0
      %673 = vmatprep.subr.bf16.mxu0 0
      %674 = vmatpush1.bf16.msra.mxu0 0
      %675 = vmatprep.subr.bf16.mxu0 0
      %676 = vmatpush1.bf16.msra.mxu0 0
      %677 = vmatprep.subr.bf16.mxu0 0
      %678 = vmatpush1.bf16.msra.mxu0 0
      %679 = vmatprep.subr.bf16.mxu0 0
      %680 = vmatpush1.bf16.msra.mxu0 0
      %681 = vmatprep.subr.bf16.mxu0 0
      %682 = vmatpush1.bf16.msra.mxu0 0
      %683 = vmatprep.subr.bf16.mxu0 0
      %684 = vmatpush1.bf16.msra.mxu0 0
      %685 = vmatprep.subr.bf16.mxu0 0
      %686 = vmatpush1.bf16.msra.mxu0 0
      %687 = vmatprep.subr.bf16.mxu0 0
      %688 = vmatpush1.bf16.msra.mxu0 0
      %689 = vmatprep.mubr.bf16.mxu0 0
      %690 = vmatmul.mubr.bf16.gmra.mrb[0].mxu0 %v643
      %v691 = vpop.f32.mrb[0].mxu0
      %v692 = vadd.f32 %v605, %v691
      %v693 = vpop.f32.mrb[0].mxu0
      %v694 = vpop.f32.mrb[0].mxu0
      %v695 = vadd.f32 %v605, %v694
      %v696 = vpop.f32.mrb[0].mxu0
      %697 = vmatprep.mubr.bf16.mxu0 0
      %698 = vmatmul.mubr.bf16.gmra.mrb[0].mxu0 %v646
      %v699 = vpop.f32.mrb[0].mxu0
      %v700 = vadd.f32 %v605, %v699
      %v701 = vpop.f32.mrb[0].mxu0
      %v702 = vpop.f32.mrb[0].mxu0
      %v703 = vadd.f32 %v605, %v702
      %v704 = vpop.f32.mrb[0].mxu0
      %705 = vmatprep.mubr.bf16.mxu0 0
      %706 = vmatmul.mubr.bf16.gmra.mrb[0].mxu0 %v649
      %v707 = vpop.f32.mrb[0].mxu0
      %v708 = vadd.f32 %v605, %v707
      %v709 = vpop.f32.mrb[0].mxu0
      %v710 = vpop.f32.mrb[0].mxu0
      %v711 = vadd.f32 %v605, %v710
      %v712 = vpop.f32.mrb[0].mxu0
      %713 = vmatprep.mubr.bf16.mxu0 0
      %714 = vmatmul.mubr.bf16.gmra.mrb[0].mxu0 %v652
      %v715 = vpop.f32.mrb[0].mxu0
      %v716 = vadd.f32 %v605, %v715
      %v717 = vpop.f32.mrb[0].mxu0
      %v718 = vpop.f32.mrb[0].mxu0
      %v719 = vadd.f32 %v605, %v718
      %v720 = vpop.f32.mrb[0].mxu0
      %721 = vmatprep.mubr.bf16.mxu0 0
      %722 = vmatmul.mubr.bf16.gmra.mrb[0].mxu0 %v655
      %v723 = vpop.f32.mrb[0].mxu0
      %v724 = vadd.f32 %v605, %v723
      %v725 = vpop.f32.mrb[0].mxu0
      %v726 = vpop.f32.mrb[0].mxu0
      %v727 = vpop.f32.mrb[0].mxu0
      %728 = vdwg.mxu0
      %v729 = vld [vmem:[%s4] sm:$0xf]
      %v730 = vld [vmem:[%s4 + $0x4] sm:$0xf]
      %v731 = vld [vmem:[%s4 + $0x8] sm:$0xf]
      %v732 = vld [vmem:[%s4 + $0xc] sm:$0xf]
      %v733 = vld [vmem:[%s7] sm:$0x1]
      %v735 = vlaneseq
      %v736 = vshrl.u32 %v735, 7
      %v737 = vsub.s32 0, %v736
      %v738 = vrot.slane %v733, %v737
      %v744 = vunpack.c.l.b16 %v729
      %v745 = vunpack.c.l.b16 %v730
      %v746 = vunpack.c.l.b16 %v731
      %v747 = vunpack.c.l.b16 %v732
      %v748 = vpack.c.b16 %v745, %v744
      %v749 = vpack.c.b16 %v747, %v746
      %752 = vmatprep.subr.bf16.mxu0 0
      %753 = vmatpush1.bf16.msra.mxu0 %v748
      %754 = vmatprep.subr.bf16.mxu0 0
      %755 = vmatpush1.bf16.msra.mxu0 %v749
      %756 = vmatprep.subr.bf16.mxu0 0
      %757 = vmatpush1.bf16.msra.mxu0 0
      %758 = vmatprep.subr.bf16.mxu0 0
      %759 = vmatpush1.bf16.msra.mxu0 0
      %760 = vmatprep.subr.bf16.mxu0 0
      %761 = vmatpush1.bf16.msra.mxu0 0
      %762 = vmatprep.subr.bf16.mxu0 0
      %763 = vmatpush1.bf16.msra.mxu0 0
      %764 = vmatprep.subr.bf16.mxu0 0
      %765 = vmatpush1.bf16.msra.mxu0 0
      %766 = vmatprep.subr.bf16.mxu0 0
      %767 = vmatpush1.bf16.msra.mxu0 0
      %768 = vmatprep.subr.bf16.mxu0 0
      %769 = vmatpush1.bf16.msra.mxu0 0
      %770 = vmatprep.subr.bf16.mxu0 0
      %771 = vmatpush1.bf16.msra.mxu0 0
      %772 = vmatprep.subr.bf16.mxu0 0
      %773 = vmatpush1.bf16.msra.mxu0 0
      %774 = vmatprep.subr.bf16.mxu0 0
      %775 = vmatpush1.bf16.msra.mxu0 0
      %776 = vmatprep.subr.bf16.mxu0 0
      %777 = vmatpush1.bf16.msra.mxu0 0
      %778 = vmatprep.subr.bf16.mxu0 0
      %779 = vmatpush1.bf16.msra.mxu0 0
      %780 = vmatprep.subr.bf16.mxu0 0
      %781 = vmatpush1.bf16.msra.mxu0 0
      %782 = vmatprep.subr.bf16.mxu0 0
      %783 = vmatpush1.bf16.msra.mxu0 0
      %784 = vmatprep.mubr.bf16.mxu0 0
      %785 = vmatmul.mubr.bf16.gmra.mrb[0].mxu0 %v643
      %v786 = vpop.f32.mrb[0].mxu0
      %v787 = vadd.f32 %v738, %v786
      %v788 = vpop.f32.mrb[0].mxu0
      %v789 = vpop.f32.mrb[0].mxu0
      %v790 = vadd.f32 %v738, %v789
      %v791 = vpop.f32.mrb[0].mxu0
      %792 = vmatprep.mubr.bf16.mxu0 0
      %793 = vmatmul.mubr.bf16.gmra.mrb[0].mxu0 %v646
      %v794 = vpop.f32.mrb[0].mxu0
      %v795 = vadd.f32 %v738, %v794
      %v796 = vpop.f32.mrb[0].mxu0
      %v797 = vpop.f32.mrb[0].mxu0
      %v798 = vadd.f32 %v738, %v797
      %v799 = vpop.f32.mrb[0].mxu0
      %800 = vmatprep.mubr.bf16.mxu0 0
      %801 = vmatmul.mubr.bf16.gmra.mrb[0].mxu0 %v649
      %v802 = vpop.f32.mrb[0].mxu0
      %v803 = vadd.f32 %v738, %v802
      %v804 = vpop.f32.mrb[0].mxu0
      %v805 = vpop.f32.mrb[0].mxu0
      %v806 = vadd.f32 %v738, %v805
      %v807 = vpop.f32.mrb[0].mxu0
      %808 = vmatprep.mubr.bf16.mxu0 0
      %809 = vmatmul.mubr.bf16.gmra.mrb[0].mxu0 %v652
      %v810 = vpop.f32.mrb[0].mxu0
      %v811 = vadd.f32 %v738, %v810
      %v812 = vpop.f32.mrb[0].mxu0
      %v813 = vpop.f32.mrb[0].mxu0
      %v814 = vadd.f32 %v738, %v813
      %v815 = vpop.f32.mrb[0].mxu0
      %816 = vmatprep.mubr.bf16.mxu0 0
      %817 = vmatmul.mubr.bf16.gmra.mrb[0].mxu0 %v655
      %v818 = vpop.f32.mrb[0].mxu0
      %v819 = vadd.f32 %v738, %v818
      %v820 = vpop.f32.mrb[0].mxu0
      %v821 = vpop.f32.mrb[0].mxu0
      %v822 = vpop.f32.mrb[0].mxu0
      %823 = vdwg.mxu0
      %vm824 = vcmask 64512
      %v826 = vsel %vm824, %v559, 0
      %v829 = vsel %vm824, %v562, 0
      %v832 = vsel %vm824, %v567, 0
      %v835 = vsel %vm824, %v570, 0
      %v838 = vsel %vm824, %v575, 0
      %v841 = vsel %vm824, %v578, 0
      %v844 = vsel %vm824, %v583, 0
      %v847 = vsel %vm824, %v586, 0
      %v850 = vsel %vm824, %v591, 0
      %v853 = vsel %vm824, %v692, 0
      %v856 = vsel %vm824, %v695, 0
      %v859 = vsel %vm824, %v700, 0
      %v862 = vsel %vm824, %v703, 0
      %v865 = vsel %vm824, %v708, 0
      %v868 = vsel %vm824, %v711, 0
      %v871 = vsel %vm824, %v716, 0
      %v874 = vsel %vm824, %v719, 0
      %v877 = vsel %vm824, %v724, 0
      %879 = vmatprep.subr.mxu0 0.0
      %880 = vmatpush1.xpose.msra.mxu0 %v853
      %881 = vmatprep.subr.mxu0 0.0
      %882 = vmatpush1.xpose.msra.mxu0 %v856
      %883 = vmatprep.subr.mxu0 0.0
      %884 = vmatpush1.xpose.msra.mxu0 %v859
      %885 = vmatprep.subr.mxu0 0.0
      %886 = vmatpush1.xpose.msra.mxu0 %v862
      %887 = vmatprep.subr.mxu0 0.0
      %888 = vmatpush1.xpose.msra.mxu0 %v865
      %889 = vmatprep.subr.mxu0 0.0
      %890 = vmatpush1.xpose.msra.mxu0 %v868
      %891 = vmatprep.subr.mxu0 0.0
      %892 = vmatpush1.xpose.msra.mxu0 %v871
      %893 = vmatprep.subr.mxu0 0.0
      %894 = vmatpush1.xpose.msra.mxu0 %v874
      %895 = vmatprep.subr.mxu0 0.0
      %896 = vmatpush1.xpose.msra.mxu0 %v877
      %897 = vmatprep.subr.mxu0 0.0
      %898 = vmatpush1.xpose.msra.mxu0 0.0
      %899 = vmatprep.subr.mxu0 0.0
      %900 = vmatpush1.xpose.msra.mxu0 0.0
      %901 = vmatprep.subr.mxu0 0.0
      %902 = vmatpush1.xpose.msra.mxu0 0.0
      %903 = vmatprep.subr.mxu0 0.0
      %904 = vmatpush1.xpose.msra.mxu0 0.0
      %905 = vmatprep.subr.mxu0 0.0
      %906 = vmatpush1.xpose.msra.mxu0 0.0
      %907 = vmatprep.subr.mxu0 0.0
      %908 = vmatpush1.xpose.msra.mxu0 0.0
      %909 = vmatprep.subr.mxu0 0.0
      %910 = vmatpush1.xpose.msra.mxu0 0.0
      %911 = vmatprep.subr.mxu0 0.0
      %912 = vmatpush1.xpose.msra.mxu0 0.0
      %913 = vmatprep.subr.mxu0 0.0
      %914 = vmatpush1.xpose.msra.mxu0 0.0
      %915 = vmatprep.subr.mxu0 0.0
      %916 = vmatpush1.xpose.msra.mxu0 0.0
      %917 = vmatprep.subr.mxu0 0.0
      %918 = vmatpush1.xpose.msra.mxu0 0.0
      %919 = vmatprep.subr.mxu0 0.0
      %920 = vmatpush1.xpose.msra.mxu0 0.0
      %921 = vmatprep.subr.mxu0 0.0
      %922 = vmatpush1.xpose.msra.mxu0 0.0
      %923 = vmatprep.subr.mxu0 0.0
      %924 = vmatpush1.xpose.msra.mxu0 0.0
      %925 = vmatprep.subr.mxu0 0.0
      %926 = vmatpush1.xpose.msra.mxu0 0.0
      %927 = vmatprep.subr.mxu0 0.0
      %928 = vmatpush1.xpose.msra.mxu0 0.0
      %929 = vmatprep.subr.mxu0 0.0
      %930 = vmatpush1.xpose.msra.mxu0 0.0
      %931 = vmatprep.subr.mxu0 0.0
      %932 = vmatpush1.xpose.msra.mxu0 0.0
      %933 = vmatprep.subr.mxu0 0.0
      %934 = vmatpush1.xpose.msra.mxu0 0.0
      %935 = vmatprep.subr.mxu0 0.0
      %936 = vmatpush1.xpose.msra.mxu0 0.0
      %937 = vmatprep.subr.mxu0 0.0
      %938 = vmatpush1.xpose.msra.mxu0 0.0
      %939 = vmatprep.subr.mxu0 0.0
      %940 = vmatpush1.xpose.msra.mxu0 0.0
      %941 = vmatprep.subr.mxu0 0.0
      %942 = vmatpush1.xpose.msra.mxu0 0.0
      %943 = vmatprep.mubr.f32.mxu0 0.0
      %944 = vmatmul.mubr.f32.gmra.mrb[0].mxu0 %v826
      %v945 = vpop.f32.mrb[0].mxu0
      %v946 = vadd.f32 0.0, %v945
      %v947 = vpop.f32.mrb[0].mxu0
      %948 = vmatprep.mubr.f32.mxu0 0.0
      %949 = vmatmul.mubr.f32.gmra.mrb[0].mxu0 %v829
      %v950 = vpop.f32.mrb[0].mxu0
      %v951 = vadd.f32 0.0, %v950
      %v952 = vpop.f32.mrb[0].mxu0
      %953 = vmatprep.mubr.f32.mxu0 0.0
      %954 = vmatmul.mubr.f32.gmra.mrb[0].mxu0 %v832
      %v955 = vpop.f32.mrb[0].mxu0
      %v956 = vadd.f32 0.0, %v955
      %v957 = vpop.f32.mrb[0].mxu0
      %958 = vmatprep.mubr.f32.mxu0 0.0
      %959 = vmatmul.mubr.f32.gmra.mrb[0].mxu0 %v835
      %v960 = vpop.f32.mrb[0].mxu0
      %v961 = vadd.f32 0.0, %v960
      %v962 = vpop.f32.mrb[0].mxu0
      %963 = vmatprep.mubr.f32.mxu0 0.0
      %964 = vmatmul.mubr.f32.gmra.mrb[0].mxu0 %v838
      %v965 = vpop.f32.mrb[0].mxu0
      %v966 = vadd.f32 0.0, %v965
      %v967 = vpop.f32.mrb[0].mxu0
      %968 = vmatprep.mubr.f32.mxu0 0.0
      %969 = vmatmul.mubr.f32.gmra.mrb[0].mxu0 %v841
      %v970 = vpop.f32.mrb[0].mxu0
      %v971 = vadd.f32 0.0, %v970
      %v972 = vpop.f32.mrb[0].mxu0
      %973 = vmatprep.mubr.f32.mxu0 0.0
      %974 = vmatmul.mubr.f32.gmra.mrb[0].mxu0 %v844
      %v975 = vpop.f32.mrb[0].mxu0
      %v976 = vadd.f32 0.0, %v975
      %v977 = vpop.f32.mrb[0].mxu0
      %978 = vmatprep.mubr.f32.mxu0 0.0
      %979 = vmatmul.mubr.f32.gmra.mrb[0].mxu0 %v847
      %v980 = vpop.f32.mrb[0].mxu0
      %v981 = vadd.f32 0.0, %v980
      %v982 = vpop.f32.mrb[0].mxu0
      %983 = vmatprep.mubr.f32.mxu0 0.0
      %984 = vmatmul.mubr.f32.gmra.mrb[0].mxu0 %v850
      %v985 = vpop.f32.mrb[0].mxu0
      %v986 = vadd.f32 0.0, %v985
      %v987 = vpop.f32.mrb[0].mxu0
      %988 = vdwg.mxu0
      %v989 = vmul.f32 %v946, 0.35355338
      %v990 = vmul.f32 %v951, 0.35355338
      %v991 = vmul.f32 %v956, 0.35355338
      %v992 = vmul.f32 %v961, 0.35355338
      %v993 = vmul.f32 %v966, 0.35355338
      %v994 = vmul.f32 %v971, 0.35355338
      %v995 = vmul.f32 %v976, 0.35355338
      %v996 = vmul.f32 %v981, 0.35355338
      %v997 = vmul.f32 %v986, 0.35355338
      %vm998 = vcmask 531456
      %v999 = vsel %vm998, %v989, -inf
      %1000 = vmax.xlane.f32.xlu0 %v999
      %v1001 = vpop.xlane.xlu0 %1000
      %v1002 = vsel %vm998, %v990, -inf
      %1003 = vmax.xlane.f32.xlu0 %v1002
      %v1004 = vpop.xlane.xlu0 %1003
      %v1005 = vsel %vm998, %v991, -inf
      %1006 = vmax.xlane.f32.xlu0 %v1005
      %v1007 = vpop.xlane.xlu0 %1006
      %v1008 = vsel %vm998, %v992, -inf
      %1009 = vmax.xlane.f32.xlu0 %v1008
      %v1010 = vpop.xlane.xlu0 %1009
      %v1011 = vsel %vm998, %v993, -inf
      %1012 = vmax.xlane.f32.xlu0 %v1011
      %v1013 = vpop.xlane.xlu0 %1012
      %v1014 = vsel %vm998, %v994, -inf
      %1015 = vmax.xlane.f32.xlu0 %v1014
      %v1016 = vpop.xlane.xlu0 %1015
      %v1017 = vsel %vm998, %v995, -inf
      %1018 = vmax.xlane.f32.xlu0 %v1017
      %v1019 = vpop.xlane.xlu0 %1018
      %v1020 = vsel %vm998, %v996, -inf
      %1021 = vmax.xlane.f32.xlu0 %v1020
      %v1022 = vpop.xlane.xlu0 %1021
      %vm1023 = vcmask 524288
      %v1024 = vsel %vm1023, %v997, -inf
      %1025 = vmax.xlane.f32.xlu0 %v1024
      %v1026 = vpop.xlane.xlu0 %1025
      %v1027 = vsub.f32 %v989, %v1001
      %v1028 = vsub.f32 %v990, %v1004
      %v1029 = vsub.f32 %v991, %v1007
      %v1030 = vsub.f32 %v992, %v1010
      %v1031 = vsub.f32 %v993, %v1013
      %v1032 = vsub.f32 %v994, %v1016
      %v1033 = vsub.f32 %v995, %v1019
      %v1034 = vsub.f32 %v996, %v1022
      %v1035 = vsub.f32 %v997, %v1026
      %v1036 = vmul.f32 %v1027, 1.442695
      %v1037 = vpow.pop %v1036
      %v1038 = vmul.f32 %v1028, 1.442695
      %v1039 = vpow.pop %v1038
      %v1040 = vmul.f32 %v1029, 1.442695
      %v1041 = vpow.pop %v1040
      %v1042 = vmul.f32 %v1030, 1.442695
      %v1043 = vpow.pop %v1042
      %v1044 = vmul.f32 %v1031, 1.442695
      %v1045 = vpow.pop %v1044
      %v1046 = vmul.f32 %v1032, 1.442695
      %v1047 = vpow.pop %v1046
      %v1048 = vmul.f32 %v1033, 1.442695
      %v1049 = vpow.pop %v1048
      %v1050 = vmul.f32 %v1034, 1.442695
      %v1051 = vpow.pop %v1050
      %v1052 = vmul.f32 %v1035, 1.442695
      %v1053 = vpow.pop %v1052
      %v1054 = vsel %vm998, %v1037, 0.0
      %1055 = vadd.xlane.f32.xlu0 %v1054
      %v1056 = vpop.xlane.xlu0 %1055
      %v1057 = vsel %vm998, %v1039, 0.0
      %1058 = vadd.xlane.f32.xlu0 %v1057
      %v1059 = vpop.xlane.xlu0 %1058
      %v1060 = vsel %vm998, %v1041, 0.0
      %1061 = vadd.xlane.f32.xlu0 %v1060
      %v1062 = vpop.xlane.xlu0 %1061
      %v1063 = vsel %vm998, %v1043, 0.0
      %1064 = vadd.xlane.f32.xlu0 %v1063
      %v1065 = vpop.xlane.xlu0 %1064
      %v1066 = vsel %vm998, %v1045, 0.0
      %1067 = vadd.xlane.f32.xlu0 %v1066
      %v1068 = vpop.xlane.xlu0 %1067
      %v1069 = vsel %vm998, %v1047, 0.0
      %1070 = vadd.xlane.f32.xlu0 %v1069
      %v1071 = vpop.xlane.xlu0 %1070
      %v1072 = vsel %vm998, %v1049, 0.0
      %1073 = vadd.xlane.f32.xlu0 %v1072
      %v1074 = vpop.xlane.xlu0 %1073
      %v1075 = vsel %vm998, %v1051, 0.0
      %1076 = vadd.xlane.f32.xlu0 %v1075
      %v1077 = vpop.xlane.xlu0 %1076
      %v1078 = vsel %vm1023, %v1053, 0.0
      %1079 = vadd.xlane.f32.xlu0 %v1078
      %v1080 = vpop.xlane.xlu0 %1079
      %v1081 = vrcp.pop %v1056
      %v1082 = vrcp.pop %v1059
      %v1083 = vrcp.pop %v1062
      %v1084 = vrcp.pop %v1065
      %v1085 = vrcp.pop %v1068
      %v1086 = vrcp.pop %v1071
      %v1087 = vrcp.pop %v1074
      %v1088 = vrcp.pop %v1077
      %v1089 = vrcp.pop %v1080
      %v1090 = vmul.f32 %v1037, %v1081
      %v1091 = vmul.f32 %v1039, %v1082
      %v1092 = vmul.f32 %v1041, %v1083
      %v1093 = vmul.f32 %v1043, %v1084
      %v1094 = vmul.f32 %v1045, %v1085
      %v1095 = vmul.f32 %v1047, %v1086
      %v1096 = vmul.f32 %v1049, %v1087
      %v1097 = vmul.f32 %v1051, %v1088
      %v1098 = vmul.f32 %v1053, %v1089
      %v1100 = vsel %vm998, %v1090, 0
      %v1103 = vsel %vm998, %v1091, 0
      %v1106 = vsel %vm998, %v1092, 0
      %v1109 = vsel %vm998, %v1093, 0
      %v1112 = vsel %vm998, %v1094, 0
      %v1115 = vsel %vm998, %v1095, 0
      %v1118 = vsel %vm998, %v1096, 0
      %v1121 = vsel %vm998, %v1097, 0
      %v1124 = vsel %vm998, %v1098, 0
      %vm1126 = vcmask 1040384
      %v1128 = vsel %vm1126, %v819, 0
      %1130 = vmatprep.subr.mxu0 0.0
      %1131 = vmatpush1.msra.mxu0 %v787
      %1132 = vmatprep.subr.mxu0 0.0
      %1133 = vmatpush1.msra.mxu0 %v790
      %1134 = vmatprep.subr.mxu0 0.0
      %1135 = vmatpush1.msra.mxu0 %v795
      %1136 = vmatprep.subr.mxu0 0.0
      %1137 = vmatpush1.msra.mxu0 %v798
      %1138 = vmatprep.subr.mxu0 0.0
      %1139 = vmatpush1.msra.mxu0 %v803
      %1140 = vmatprep.subr.mxu0 0.0
      %1141 = vmatpush1.msra.mxu0 %v806
      %1142 = vmatprep.subr.mxu0 0.0
      %1143 = vmatpush1.msra.mxu0 %v811
      %1144 = vmatprep.subr.mxu0 0.0
      %1145 = vmatpush1.msra.mxu0 %v814
      %1146 = vmatprep.subr.mxu0 0.0
      %1147 = vmatpush1.msra.mxu0 %v1128
      %1148 = vmatprep.subr.mxu0 0.0
      %1149 = vmatpush1.msra.mxu0 0.0
      %1150 = vmatprep.subr.mxu0 0.0
      %1151 = vmatpush1.msra.mxu0 0.0
      %1152 = vmatprep.subr.mxu0 0.0
      %1153 = vmatpush1.msra.mxu0 0.0
      %1154 = vmatprep.subr.mxu0 0.0
      %1155 = vmatpush1.msra.mxu0 0.0
      %1156 = vmatprep.subr.mxu0 0.0
      %1157 = vmatpush1.msra.mxu0 0.0
      %1158 = vmatprep.subr.mxu0 0.0
      %1159 = vmatpush1.msra.mxu0 0.0
      %1160 = vmatprep.subr.mxu0 0.0
      %1161 = vmatpush1.msra.mxu0 0.0
      %1162 = vmatprep.subr.mxu0 0.0
      %1163 = vmatpush1.msra.mxu0 0.0
      %1164 = vmatprep.subr.mxu0 0.0
      %1165 = vmatpush1.msra.mxu0 0.0
      %1166 = vmatprep.subr.mxu0 0.0
      %1167 = vmatpush1.msra.mxu0 0.0
      %1168 = vmatprep.subr.mxu0 0.0
      %1169 = vmatpush1.msra.mxu0 0.0
      %1170 = vmatprep.subr.mxu0 0.0
      %1171 = vmatpush1.msra.mxu0 0.0
      %1172 = vmatprep.subr.mxu0 0.0
      %1173 = vmatpush1.msra.mxu0 0.0
      %1174 = vmatprep.subr.mxu0 0.0
      %1175 = vmatpush1.msra.mxu0 0.0
      %1176 = vmatprep.subr.mxu0 0.0
      %1177 = vmatpush1.msra.mxu0 0.0
      %1178 = vmatprep.subr.mxu0 0.0
      %1179 = vmatpush1.msra.mxu0 0.0
      %1180 = vmatprep.subr.mxu0 0.0
      %1181 = vmatpush1.msra.mxu0 0.0
      %1182 = vmatprep.subr.mxu0 0.0
      %1183 = vmatpush1.msra.mxu0 0.0
      %1184 = vmatprep.subr.mxu0 0.0
      %1185 = vmatpush1.msra.mxu0 0.0
      %1186 = vmatprep.subr.mxu0 0.0
      %1187 = vmatpush1.msra.mxu0 0.0
      %1188 = vmatprep.subr.mxu0 0.0
      %1189 = vmatpush1.msra.mxu0 0.0
      %1190 = vmatprep.subr.mxu0 0.0
      %1191 = vmatpush1.msra.mxu0 0.0
      %1192 = vmatprep.subr.mxu0 0.0
      %1193 = vmatpush1.msra.mxu0 0.0
      %1194 = vmatprep.mubr.f32.mxu0 0.0
      %1195 = vmatmul.mubr.f32.gmra.mrb[0].mxu0 %v1100
      %v1196 = vpop.f32.mrb[0].mxu0
      %v1197 = vadd.f32 0.0, %v1196
      %v1198 = vpop.f32.mrb[0].mxu0
      %1199 = vmatprep.mubr.f32.mxu0 0.0
      %1200 = vmatmul.mubr.f32.gmra.mrb[0].mxu0 %v1103
      %v1201 = vpop.f32.mrb[0].mxu0
      %v1202 = vadd.f32 0.0, %v1201
      %v1203 = vpop.f32.mrb[0].mxu0
      %1204 = vmatprep.mubr.f32.mxu0 0.0
      %1205 = vmatmul.mubr.f32.gmra.mrb[0].mxu0 %v1106
      %v1206 = vpop.f32.mrb[0].mxu0
      %v1207 = vadd.f32 0.0, %v1206
      %v1208 = vpop.f32.mrb[0].mxu0
      %1209 = vmatprep.mubr.f32.mxu0 0.0
      %1210 = vmatmul.mubr.f32.gmra.mrb[0].mxu0 %v1109
      %v1211 = vpop.f32.mrb[0].mxu0
      %v1212 = vadd.f32 0.0, %v1211
      %v1213 = vpop.f32.mrb[0].mxu0
      %1214 = vmatprep.mubr.f32.mxu0 0.0
      %1215 = vmatmul.mubr.f32.gmra.mrb[0].mxu0 %v1112
      %v1216 = vpop.f32.mrb[0].mxu0
      %v1217 = vadd.f32 0.0, %v1216
      %v1218 = vpop.f32.mrb[0].mxu0
      %1219 = vmatprep.mubr.f32.mxu0 0.0
      %1220 = vmatmul.mubr.f32.gmra.mrb[0].mxu0 %v1115
      %v1221 = vpop.f32.mrb[0].mxu0
      %v1222 = vadd.f32 0.0, %v1221
      %v1223 = vpop.f32.mrb[0].mxu0
      %1224 = vmatprep.mubr.f32.mxu0 0.0
      %1225 = vmatmul.mubr.f32.gmra.mrb[0].mxu0 %v1118
      %v1226 = vpop.f32.mrb[0].mxu0
      %v1227 = vadd.f32 0.0, %v1226
      %v1228 = vpop.f32.mrb[0].mxu0
      %1229 = vmatprep.mubr.f32.mxu0 0.0
      %1230 = vmatmul.mubr.f32.gmra.mrb[0].mxu0 %v1121
      %v1231 = vpop.f32.mrb[0].mxu0
      %v1232 = vadd.f32 0.0, %v1231
      %v1233 = vpop.f32.mrb[0].mxu0
      %1234 = vmatprep.mubr.f32.mxu0 0.0
      %1235 = vmatmul.mubr.f32.gmra.mrb[0].mxu0 %v1124
      %v1236 = vpop.f32.mrb[0].mxu0
      %v1237 = vadd.f32 0.0, %v1236
      %v1238 = vpop.f32.mrb[0].mxu0
      %1239 = vdwg.mxu0
      %v1240 = vpack.c.bf16 %v1202, %v1197
      %v1241 = vpack.c.bf16 %v1212, %v1207
      %v1242 = vpack.c.bf16 %v1222, %v1217
      %v1243 = vpack.c.bf16 %v1232, %v1227
      %v1244 = vpack.c.bf16 %v1237, %v1237
      %v1245 = vld [vmem:[%s8] sm:$0xf]
      %s1246 = scalar_lea.vmem %s2, 16
      %v1247 = vld [vmem:[%s1246] sm:$0xf]
      %v1248 = vld [vmem:[%s1246 + $0x4] sm:$0xf]
      %v1249 = vld [vmem:[%s1246 + $0x8] sm:$0xf]
      %v1250 = vld [vmem:[%s1246 + $0xc] sm:$0xf]
      %s1251 = scalar_lea.vmem %s5, 1
      %v1252 = vld [vmem:[%s1251] sm:$0x1]
      %v1254 = vlaneseq
      %v1255 = vshrl.u32 %v1254, 7
      %v1256 = vsub.s32 0, %v1255
      %v1257 = vrot.slane %v1252, %v1256
      %v1263 = vunpack.c.l.b16 %v1247
      %v1264 = vunpack.c.l.b16 %v1248
      %v1265 = vunpack.c.l.b16 %v1249
      %v1266 = vunpack.c.l.b16 %v1250
      %v1267 = vpack.c.b16 %v1264, %v1263
      %v1268 = vpack.c.b16 %v1266, %v1265
      %1271 = vmatprep.subr.bf16.mxu0 0
      %1272 = vmatpush1.bf16.msra.mxu0 %v1267
      %1273 = vmatprep.subr.bf16.mxu0 0
      %1274 = vmatpush1.bf16.msra.mxu0 %v1268
      %1275 = vmatprep.subr.bf16.mxu0 0
      %1276 = vmatpush1.bf16.msra.mxu0 0
      %1277 = vmatprep.subr.bf16.mxu0 0
      %1278 = vmatpush1.bf16.msra.mxu0 0
      %1279 = vmatprep.subr.bf16.mxu0 0
      %1280 = vmatpush1.bf16.msra.mxu0 0
      %1281 = vmatprep.subr.bf16.mxu0 0
      %1282 = vmatpush1.bf16.msra.mxu0 0
      %1283 = vmatprep.subr.bf16.mxu0 0
      %1284 = vmatpush1.bf16.msra.mxu0 0
      %1285 = vmatprep.subr.bf16.mxu0 0
      %1286 = vmatpush1.bf16.msra.mxu0 0
      %1287 = vmatprep.subr.bf16.mxu0 0
      %1288 = vmatpush1.bf16.msra.mxu0 0
      %1289 = vmatprep.subr.bf16.mxu0 0
      %1290 = vmatpush1.bf16.msra.mxu0 0
      %1291 = vmatprep.subr.bf16.mxu0 0
      %1292 = vmatpush1.bf16.msra.mxu0 0
      %1293 = vmatprep.subr.bf16.mxu0 0
      %1294 = vmatpush1.bf16.msra.mxu0 0
      %1295 = vmatprep.subr.bf16.mxu0 0
      %1296 = vmatpush1.bf16.msra.mxu0 0
      %1297 = vmatprep.subr.bf16.mxu0 0
      %1298 = vmatpush1.bf16.msra.mxu0 0
      %1299 = vmatprep.subr.bf16.mxu0 0
      %1300 = vmatpush1.bf16.msra.mxu0 0
      %1301 = vmatprep.subr.bf16.mxu0 0
      %1302 = vmatpush1.bf16.msra.mxu0 0
      %1303 = vmatprep.mubr.bf16.mxu0 0
      %1304 = vmatmul.mubr.bf16.gmra.mrb[0].mxu0 %v510
      %v1305 = vpop.f32.mrb[0].mxu0
      %v1306 = vadd.f32 %v1257, %v1305
      %v1307 = vpop.f32.mrb[0].mxu0
      %v1308 = vpop.f32.mrb[0].mxu0
      %v1309 = vadd.f32 %v1257, %v1308
      %v1310 = vpop.f32.mrb[0].mxu0
      %1311 = vmatprep.mubr.bf16.mxu0 0
      %1312 = vmatmul.mubr.bf16.gmra.mrb[0].mxu0 %v513
      %v1313 = vpop.f32.mrb[0].mxu0
      %v1314 = vadd.f32 %v1257, %v1313
      %v1315 = vpop.f32.mrb[0].mxu0
      %v1316 = vpop.f32.mrb[0].mxu0
      %v1317 = vadd.f32 %v1257, %v1316
      %v1318 = vpop.f32.mrb[0].mxu0
      %1319 = vmatprep.mubr.bf16.mxu0 0
      %1320 = vmatmul.mubr.bf16.gmra.mrb[0].mxu0 %v516
      %v1321 = vpop.f32.mrb[0].mxu0
      %v1322 = vadd.f32 %v1257, %v1321
      %v1323 = vpop.f32.mrb[0].mxu0
      %v1324 = vpop.f32.mrb[0].mxu0
      %v1325 = vadd.f32 %v1257, %v1324
      %v1326 = vpop.f32.mrb[0].mxu0
      %1327 = vmatprep.mubr.bf16.mxu0 0
      %1328 = vmatmul.mubr.bf16.gmra.mrb[0].mxu0 %v519
      %v1329 = vpop.f32.mrb[0].mxu0
      %v1330 = vadd.f32 %v1257, %v1329
      %v1331 = vpop.f32.mrb[0].mxu0
      %v1332 = vpop.f32.mrb[0].mxu0
      %v1333 = vadd.f32 %v1257, %v1332
      %v1334 = vpop.f32.mrb[0].mxu0
      %1335 = vmatprep.mubr.bf16.mxu0 0
      %1336 = vmatmul.mubr.bf16.gmra.mrb[0].mxu0 %v522
      %v1337 = vpop.f32.mrb[0].mxu0
      %v1338 = vadd.f32 %v1257, %v1337
      %v1339 = vpop.f32.mrb[0].mxu0
      %v1340 = vpop.f32.mrb[0].mxu0
      %v1341 = vpop.f32.mrb[0].mxu0
      %1342 = vdwg.mxu0
      %s1343 = scalar_lea.vmem %s3, 16
      %v1344 = vld [vmem:[%s1343] sm:$0xf]
      %v1345 = vld [vmem:[%s1343 + $0x4] sm:$0xf]
      %v1346 = vld [vmem:[%s1343 + $0x8] sm:$0xf]
      %v1347 = vld [vmem:[%s1343 + $0xc] sm:$0xf]
      %s1348 = scalar_lea.vmem %s6, 1
      %v1349 = vld [vmem:[%s1348] sm:$0x1]
      %v1351 = vlaneseq
      %v1352 = vshrl.u32 %v1351, 7
      %v1353 = vsub.s32 0, %v1352
      %v1354 = vrot.slane %v1349, %v1353
      %v1360 = vunpack.c.l.b16 %v1344
      %v1361 = vunpack.c.l.b16 %v1345
      %v1362 = vunpack.c.l.b16 %v1346
      %v1363 = vunpack.c.l.b16 %v1347
      %v1364 = vpack.c.b16 %v1361, %v1360
      %v1365 = vpack.c.b16 %v1363, %v1362
      %1368 = vmatprep.subr.bf16.mxu0 0
      %1369 = vmatpush1.bf16.msra.mxu0 %v1364
      %1370 = vmatprep.subr.bf16.mxu0 0
      %1371 = vmatpush1.bf16.msra.mxu0 %v1365
      %1372 = vmatprep.subr.bf16.mxu0 0
      %1373 = vmatpush1.bf16.msra.mxu0 0
      %1374 = vmatprep.subr.bf16.mxu0 0
      %1375 = vmatpush1.bf16.msra.mxu0 0
      %1376 = vmatprep.subr.bf16.mxu0 0
      %1377 = vmatpush1.bf16.msra.mxu0 0
      %1378 = vmatprep.subr.bf16.mxu0 0
      %1379 = vmatpush1.bf16.msra.mxu0 0
      %1380 = vmatprep.subr.bf16.mxu0 0
      %1381 = vmatpush1.bf16.msra.mxu0 0
      %1382 = vmatprep.subr.bf16.mxu0 0
      %1383 = vmatpush1.bf16.msra.mxu0 0
      %1384 = vmatprep.subr.bf16.mxu0 0
      %1385 = vmatpush1.bf16.msra.mxu0 0
      %1386 = vmatprep.subr.bf16.mxu0 0
      %1387 = vmatpush1.bf16.msra.mxu0 0
      %1388 = vmatprep.subr.bf16.mxu0 0
      %1389 = vmatpush1.bf16.msra.mxu0 0
      %1390 = vmatprep.subr.bf16.mxu0 0
      %1391 = vmatpush1.bf16.msra.mxu0 0
      %1392 = vmatprep.subr.bf16.mxu0 0
      %1393 = vmatpush1.bf16.msra.mxu0 0
      %1394 = vmatprep.subr.bf16.mxu0 0
      %1395 = vmatpush1.bf16.msra.mxu0 0
      %1396 = vmatprep.subr.bf16.mxu0 0
      %1397 = vmatpush1.bf16.msra.mxu0 0
      %1398 = vmatprep.subr.bf16.mxu0 0
      %1399 = vmatpush1.bf16.msra.mxu0 0
      %1400 = vmatprep.mubr.bf16.mxu0 0
      %1401 = vmatmul.mubr.bf16.gmra.mrb[0].mxu0 %v643
      %v1402 = vpop.f32.mrb[0].mxu0
      %v1403 = vadd.f32 %v1354, %v1402
      %v1404 = vpop.f32.mrb[0].mxu0
      %v1405 = vpop.f32.mrb[0].mxu0
      %v1406 = vadd.f32 %v1354, %v1405
      %v1407 = vpop.f32.mrb[0].mxu0
      %1408 = vmatprep.mubr.bf16.mxu0 0
      %1409 = vmatmul.mubr.bf16.gmra.mrb[0].mxu0 %v646
      %v1410 = vpop.f32.mrb[0].mxu0
      %v1411 = vadd.f32 %v1354, %v1410
      %v1412 = vpop.f32.mrb[0].mxu0
      %v1413 = vpop.f32.mrb[0].mxu0
      %v1414 = vadd.f32 %v1354, %v1413
      %v1415 = vpop.f32.mrb[0].mxu0
      %1416 = vmatprep.mubr.bf16.mxu0 0
      %1417 = vmatmul.mubr.bf16.gmra.mrb[0].mxu0 %v649
      %v1418 = vpop.f32.mrb[0].mxu0
      %v1419 = vadd.f32 %v1354, %v1418
      %v1420 = vpop.f32.mrb[0].mxu0
      %v1421 = vpop.f32.mrb[0].mxu0
      %v1422 = vadd.f32 %v1354, %v1421
      %v1423 = vpop.f32.mrb[0].mxu0
      %1424 = vmatprep.mubr.bf16.mxu0 0
      %1425 = vmatmul.mubr.bf16.gmra.mrb[0].mxu0 %v652
      %v1426 = vpop.f32.mrb[0].mxu0
      %v1427 = vadd.f32 %v1354, %v1426
      %v1428 = vpop.f32.mrb[0].mxu0
      %v1429 = vpop.f32.mrb[0].mxu0
      %v1430 = vadd.f32 %v1354, %v1429
      %v1431 = vpop.f32.mrb[0].mxu0
      %1432 = vmatprep.mubr.bf16.mxu0 0
      %1433 = vmatmul.mubr.bf16.gmra.mrb[0].mxu0 %v655
      %v1434 = vpop.f32.mrb[0].mxu0
      %v1435 = vadd.f32 %v1354, %v1434
      %v1436 = vpop.f32.mrb[0].mxu0
      %v1437 = vpop.f32.mrb[0].mxu0
      %v1438 = vpop.f32.mrb[0].mxu0
      %1439 = vdwg.mxu0
      %s1440 = scalar_lea.vmem %s4, 16
      %v1441 = vld [vmem:[%s1440] sm:$0xf]
      %v1442 = vld [vmem:[%s1440 + $0x4] sm:$0xf]
      %v1443 = vld [vmem:[%s1440 + $0x8] sm:$0xf]
      %v1444 = vld [vmem:[%s1440 + $0xc] sm:$0xf]
      %s1445 = scalar_lea.vmem %s7, 1
      %v1446 = vld [vmem:[%s1445] sm:$0x1]
      %v1448 = vlaneseq
      %v1449 = vshrl.u32 %v1448, 7
      %v1450 = vsub.s32 0, %v1449
      %v1451 = vrot.slane %v1446, %v1450
      %v1457 = vunpack.c.l.b16 %v1441
      %v1458 = vunpack.c.l.b16 %v1442
      %v1459 = vunpack.c.l.b16 %v1443
      %v1460 = vunpack.c.l.b16 %v1444
      %v1461 = vpack.c.b16 %v1458, %v1457
      %v1462 = vpack.c.b16 %v1460, %v1459
      %1465 = vmatprep.subr.bf16.mxu0 0
      %1466 = vmatpush1.bf16.msra.mxu0 %v1461
      %1467 = vmatprep.subr.bf16.mxu0 0
      %1468 = vmatpush1.bf16.msra.mxu0 %v1462
      %1469 = vmatprep.subr.bf16.mxu0 0
      %1470 = vmatpush1.bf16.msra.mxu0 0
      %1471 = vmatprep.subr.bf16.mxu0 0
      %1472 = vmatpush1.bf16.msra.mxu0 0
      %1473 = vmatprep.subr.bf16.mxu0 0
      %1474 = vmatpush1.bf16.msra.mxu0 0
      %1475 = vmatprep.subr.bf16.mxu0 0
      %1476 = vmatpush1.bf16.msra.mxu0 0
      %1477 = vmatprep.subr.bf16.mxu0 0
      %1478 = vmatpush1.bf16.msra.mxu0 0
      %1479 = vmatprep.subr.bf16.mxu0 0
      %1480 = vmatpush1.bf16.msra.mxu0 0
      %1481 = vmatprep.subr.bf16.mxu0 0
      %1482 = vmatpush1.bf16.msra.mxu0 0
      %1483 = vmatprep.subr.bf16.mxu0 0
      %1484 = vmatpush1.bf16.msra.mxu0 0
      %1485 = vmatprep.subr.bf16.mxu0 0
      %1486 = vmatpush1.bf16.msra.mxu0 0
      %1487 = vmatprep.subr.bf16.mxu0 0
      %1488 = vmatpush1.bf16.msra.mxu0 0
      %1489 = vmatprep.subr.bf16.mxu0 0
      %1490 = vmatpush1.bf16.msra.mxu0 0
      %1491 = vmatprep.subr.bf16.mxu0 0
      %1492 = vmatpush1.bf16.msra.mxu0 0
      %1493 = vmatprep.subr.bf16.mxu0 0
      %1494 = vmatpush1.bf16.msra.mxu0 0
      %1495 = vmatprep.subr.bf16.mxu0 0
      %1496 = vmatpush1.bf16.msra.mxu0 0
      %1497 = vmatprep.mubr.bf16.mxu0 0
      %1498 = vmatmul.mubr.bf16.gmra.mrb[0].mxu0 %v643
      %v1499 = vpop.f32.mrb[0].mxu0
      %v1500 = vadd.f32 %v1451, %v1499
      %v1501 = vpop.f32.mrb[0].mxu0
      %v1502 = vpop.f32.mrb[0].mxu0
      %v1503 = vadd.f32 %v1451, %v1502
      %v1504 = vpop.f32.mrb[0].mxu0
      %1505 = vmatprep.mubr.bf16.mxu0 0
      %1506 = vmatmul.mubr.bf16.gmra.mrb[0].mxu0 %v646
      %v1507 = vpop.f32.mrb[0].mxu0
      %v1508 = vadd.f32 %v1451, %v1507
      %v1509 = vpop.f32.mrb[0].mxu0
      %v1510 = vpop.f32.mrb[0].mxu0
      %v1511 = vadd.f32 %v1451, %v1510
      %v1512 = vpop.f32.mrb[0].mxu0
      %1513 = vmatprep.mubr.bf16.mxu0 0
      %1514 = vmatmul.mubr.bf16.gmra.mrb[0].mxu0 %v649
      %v1515 = vpop.f32.mrb[0].mxu0
      %v1516 = vadd.f32 %v1451, %v1515
      %v1517 = vpop.f32.mrb[0].mxu0
      %v1518 = vpop.f32.mrb[0].mxu0
      %v1519 = vadd.f32 %v1451, %v1518
      %v1520 = vpop.f32.mrb[0].mxu0
      %1521 = vmatprep.mubr.bf16.mxu0 0
      %1522 = vmatmul.mubr.bf16.gmra.mrb[0].mxu0 %v652
      %v1523 = vpop.f32.mrb[0].mxu0
      %v1524 = vadd.f32 %v1451, %v1523
      %v1525 = vpop.f32.mrb[0].mxu0
      %v1526 = vpop.f32.mrb[0].mxu0
      %v1527 = vadd.f32 %v1451, %v1526
      %v1528 = vpop.f32.mrb[0].mxu0
      %1529 = vmatprep.mubr.bf16.mxu0 0
      %1530 = vmatmul.mubr.bf16.gmra.mrb[0].mxu0 %v655
      %v1531 = vpop.f32.mrb[0].mxu0
      %v1532 = vadd.f32 %v1451, %v1531
      %v1533 = vpop.f32.mrb[0].mxu0
      %v1534 = vpop.f32.mrb[0].mxu0
      %v1535 = vpop.f32.mrb[0].mxu0
      %1536 = vdwg.mxu0
      %v1538 = vsel %vm824, %v1306, 0
      %v1541 = vsel %vm824, %v1309, 0
      %v1544 = vsel %vm824, %v1314, 0
      %v1547 = vsel %vm824, %v1317, 0
      %v1550 = vsel %vm824, %v1322, 0
      %v1553 = vsel %vm824, %v1325, 0
      %v1556 = vsel %vm824, %v1330, 0
      %v1559 = vsel %vm824, %v1333, 0
      %v1562 = vsel %vm824, %v1338, 0
      %v1565 = vsel %vm824, %v1403, 0
      %v1568 = vsel %vm824, %v1406, 0
      %v1571 = vsel %vm824, %v1411, 0
      %v1574 = vsel %vm824, %v1414, 0
      %v1577 = vsel %vm824, %v1419, 0
      %v1580 = vsel %vm824, %v1422, 0
      %v1583 = vsel %vm824, %v1427, 0
      %v1586 = vsel %vm824, %v1430, 0
      %v1589 = vsel %vm824, %v1435, 0
      %1591 = vmatprep.subr.mxu0 0.0
      %1592 = vmatpush1.xpose.msra.mxu0 %v1565
      %1593 = vmatprep.subr.mxu0 0.0
      %1594 = vmatpush1.xpose.msra.mxu0 %v1568
      %1595 = vmatprep.subr.mxu0 0.0
      %1596 = vmatpush1.xpose.msra.mxu0 %v1571
      %1597 = vmatprep.subr.mxu0 0.0
      %1598 = vmatpush1.xpose.msra.mxu0 %v1574
      %1599 = vmatprep.subr.mxu0 0.0
      %1600 = vmatpush1.xpose.msra.mxu0 %v1577
      %1601 = vmatprep.subr.mxu0 0.0
      %1602 = vmatpush1.xpose.msra.mxu0 %v1580
      %1603 = vmatprep.subr.mxu0 0.0
      %1604 = vmatpush1.xpose.msra.mxu0 %v1583
      %1605 = vmatprep.subr.mxu0 0.0
      %1606 = vmatpush1.xpose.msra.mxu0 %v1586
      %1607 = vmatprep.subr.mxu0 0.0
      %1608 = vmatpush1.xpose.msra.mxu0 %v1589
      %1609 = vmatprep.subr.mxu0 0.0
      %1610 = vmatpush1.xpose.msra.mxu0 0.0
      %1611 = vmatprep.subr.mxu0 0.0
      %1612 = vmatpush1.xpose.msra.mxu0 0.0
      %1613 = vmatprep.subr.mxu0 0.0
      %1614 = vmatpush1.xpose.msra.mxu0 0.0
      %1615 = vmatprep.subr.mxu0 0.0
      %1616 = vmatpush1.xpose.msra.mxu0 0.0
      %1617 = vmatprep.subr.mxu0 0.0
      %1618 = vmatpush1.xpose.msra.mxu0 0.0
      %1619 = vmatprep.subr.mxu0 0.0
      %1620 = vmatpush1.xpose.msra.mxu0 0.0
      %1621 = vmatprep.subr.mxu0 0.0
      %1622 = vmatpush1.xpose.msra.mxu0 0.0
      %1623 = vmatprep.subr.mxu0 0.0
      %1624 = vmatpush1.xpose.msra.mxu0 0.0
      %1625 = vmatprep.subr.mxu0 0.0
      %1626 = vmatpush1.xpose.msra.mxu0 0.0
      %1627 = vmatprep.subr.mxu0 0.0
      %1628 = vmatpush1.xpose.msra.mxu0 0.0
      %1629 = vmatprep.subr.mxu0 0.0
      %1630 = vmatpush1.xpose.msra.mxu0 0.0
      %1631 = vmatprep.subr.mxu0 0.0
      %1632 = vmatpush1.xpose.msra.mxu0 0.0
      %1633 = vmatprep.subr.mxu0 0.0
      %1634 = vmatpush1.xpose.msra.mxu0 0.0
      %1635 = vmatprep.subr.mxu0 0.0
      %1636 = vmatpush1.xpose.msra.mxu0 0.0
      %1637 = vmatprep.subr.mxu0 0.0
      %1638 = vmatpush1.xpose.msra.mxu0 0.0
      %1639 = vmatprep.subr.mxu0 0.0
      %1640 = vmatpush1.xpose.msra.mxu0 0.0
      %1641 = vmatprep.subr.mxu0 0.0
      %1642 = vmatpush1.xpose.msra.mxu0 0.0
      %1643 = vmatprep.subr.mxu0 0.0
      %1644 = vmatpush1.xpose.msra.mxu0 0.0
      %1645 = vmatprep.subr.mxu0 0.0
      %1646 = vmatpush1.xpose.msra.mxu0 0.0
      %1647 = vmatprep.subr.mxu0 0.0
      %1648 = vmatpush1.xpose.msra.mxu0 0.0
      %1649 = vmatprep.subr.mxu0 0.0
      %1650 = vmatpush1.xpose.msra.mxu0 0.0
      %1651 = vmatprep.subr.mxu0 0.0
      %1652 = vmatpush1.xpose.msra.mxu0 0.0
      %1653 = vmatprep.subr.mxu0 0.0
      %1654 = vmatpush1.xpose.msra.mxu0 0.0
      %1655 = vmatprep.mubr.f32.mxu0 0.0
      %1656 = vmatmul.mubr.f32.gmra.mrb[0].mxu0 %v1538
      %v1657 = vpop.f32.mrb[0].mxu0
      %v1658 = vadd.f32 0.0, %v1657
      %v1659 = vpop.f32.mrb[0].mxu0
      %1660 = vmatprep.mubr.f32.mxu0 0.0
      %1661 = vmatmul.mubr.f32.gmra.mrb[0].mxu0 %v1541
      %v1662 = vpop.f32.mrb[0].mxu0
      %v1663 = vadd.f32 0.0, %v1662
      %v1664 = vpop.f32.mrb[0].mxu0
      %1665 = vmatprep.mubr.f32.mxu0 0.0
      %1666 = vmatmul.mubr.f32.gmra.mrb[0].mxu0 %v1544
      %v1667 = vpop.f32.mrb[0].mxu0
      %v1668 = vadd.f32 0.0, %v1667
      %v1669 = vpop.f32.mrb[0].mxu0
      %1670 = vmatprep.mubr.f32.mxu0 0.0
      %1671 = vmatmul.mubr.f32.gmra.mrb[0].mxu0 %v1547
      %v1672 = vpop.f32.mrb[0].mxu0
      %v1673 = vadd.f32 0.0, %v1672
      %v1674 = vpop.f32.mrb[0].mxu0
      %1675 = vmatprep.mubr.f32.mxu0 0.0
      %1676 = vmatmul.mubr.f32.gmra.mrb[0].mxu0 %v1550
      %v1677 = vpop.f32.mrb[0].mxu0
      %v1678 = vadd.f32 0.0, %v1677
      %v1679 = vpop.f32.mrb[0].mxu0
      %1680 = vmatprep.mubr.f32.mxu0 0.0
      %1681 = vmatmul.mubr.f32.gmra.mrb[0].mxu0 %v1553
      %v1682 = vpop.f32.mrb[0].mxu0
      %v1683 = vadd.f32 0.0, %v1682
      %v1684 = vpop.f32.mrb[0].mxu0
      %1685 = vmatprep.mubr.f32.mxu0 0.0
      %1686 = vmatmul.mubr.f32.gmra.mrb[0].mxu0 %v1556
      %v1687 = vpop.f32.mrb[0].mxu0
      %v1688 = vadd.f32 0.0, %v1687
      %v1689 = vpop.f32.mrb[0].mxu0
      %1690 = vmatprep.mubr.f32.mxu0 0.0
      %1691 = vmatmul.mubr.f32.gmra.mrb[0].mxu0 %v1559
      %v1692 = vpop.f32.mrb[0].mxu0
      %v1693 = vadd.f32 0.0, %v1692
      %v1694 = vpop.f32.mrb[0].mxu0
      %1695 = vmatprep.mubr.f32.mxu0 0.0
      %1696 = vmatmul.mubr.f32.gmra.mrb[0].mxu0 %v1562
      %v1697 = vpop.f32.mrb[0].mxu0
      %v1698 = vadd.f32 0.0, %v1697
      %v1699 = vpop.f32.mrb[0].mxu0
      %1700 = vdwg.mxu0
      %v1701 = vmul.f32 %v1658, 0.35355338
      %v1702 = vmul.f32 %v1663, 0.35355338
      %v1703 = vmul.f32 %v1668, 0.35355338
      %v1704 = vmul.f32 %v1673, 0.35355338
      %v1705 = vmul.f32 %v1678, 0.35355338
      %v1706 = vmul.f32 %v1683, 0.35355338
      %v1707 = vmul.f32 %v1688, 0.35355338
      %v1708 = vmul.f32 %v1693, 0.35355338
      %v1709 = vmul.f32 %v1698, 0.35355338
      %v1710 = vsel %vm998, %v1701, -inf
      %1711 = vmax.xlane.f32.xlu0 %v1710
      %v1712 = vpop.xlane.xlu0 %1711
      %v1713 = vsel %vm998, %v1702, -inf
      %1714 = vmax.xlane.f32.xlu0 %v1713
      %v1715 = vpop.xlane.xlu0 %1714
      %v1716 = vsel %vm998, %v1703, -inf
      %1717 = vmax.xlane.f32.xlu0 %v1716
      %v1718 = vpop.xlane.xlu0 %1717
      %v1719 = vsel %vm998, %v1704, -inf
      %1720 = vmax.xlane.f32.xlu0 %v1719
      %v1721 = vpop.xlane.xlu0 %1720
      %v1722 = vsel %vm998, %v1705, -inf
      %1723 = vmax.xlane.f32.xlu0 %v1722
      %v1724 = vpop.xlane.xlu0 %1723
      %v1725 = vsel %vm998, %v1706, -inf
      %1726 = vmax.xlane.f32.xlu0 %v1725
      %v1727 = vpop.xlane.xlu0 %1726
      %v1728 = vsel %vm998, %v1707, -inf
      %1729 = vmax.xlane.f32.xlu0 %v1728
      %v1730 = vpop.xlane.xlu0 %1729
      %v1731 = vsel %vm998, %v1708, -inf
      %1732 = vmax.xlane.f32.xlu0 %v1731
      %v1733 = vpop.xlane.xlu0 %1732
      %v1734 = vsel %vm1023, %v1709, -inf
      %1735 = vmax.xlane.f32.xlu0 %v1734
      %v1736 = vpop.xlane.xlu0 %1735
      %v1737 = vsub.f32 %v1701, %v1712
      %v1738 = vsub.f32 %v1702, %v1715
      %v1739 = vsub.f32 %v1703, %v1718
      %v1740 = vsub.f32 %v1704, %v1721
      %v1741 = vsub.f32 %v1705, %v1724
      %v1742 = vsub.f32 %v1706, %v1727
      %v1743 = vsub.f32 %v1707, %v1730
      %v1744 = vsub.f32 %v1708, %v1733
      %v1745 = vsub.f32 %v1709, %v1736
      %v1746 = vmul.f32 %v1737, 1.442695
      %v1747 = vpow.pop %v1746
      %v1748 = vmul.f32 %v1738, 1.442695
      %v1749 = vpow.pop %v1748
      %v1750 = vmul.f32 %v1739, 1.442695
      %v1751 = vpow.pop %v1750
      %v1752 = vmul.f32 %v1740, 1.442695
      %v1753 = vpow.pop %v1752
      %v1754 = vmul.f32 %v1741, 1.442695
      %v1755 = vpow.pop %v1754
      %v1756 = vmul.f32 %v1742, 1.442695
      %v1757 = vpow.pop %v1756
      %v1758 = vmul.f32 %v1743, 1.442695
      %v1759 = vpow.pop %v1758
      %v1760 = vmul.f32 %v1744, 1.442695
      %v1761 = vpow.pop %v1760
      %v1762 = vmul.f32 %v1745, 1.442695
      %v1763 = vpow.pop %v1762
      %v1764 = vsel %vm998, %v1747, 0.0
      %1765 = vadd.xlane.f32.xlu0 %v1764
      %v1766 = vpop.xlane.xlu0 %1765
      %v1767 = vsel %vm998, %v1749, 0.0
      %1768 = vadd.xlane.f32.xlu0 %v1767
      %v1769 = vpop.xlane.xlu0 %1768
      %v1770 = vsel %vm998, %v1751, 0.0
      %1771 = vadd.xlane.f32.xlu0 %v1770
      %v1772 = vpop.xlane.xlu0 %1771
      %v1773 = vsel %vm998, %v1753, 0.0
      %1774 = vadd.xlane.f32.xlu0 %v1773
      %v1775 = vpop.xlane.xlu0 %1774
      %v1776 = vsel %vm998, %v1755, 0.0
      %1777 = vadd.xlane.f32.xlu0 %v1776
      %v1778 = vpop.xlane.xlu0 %1777
      %v1779 = vsel %vm998, %v1757, 0.0
      %1780 = vadd.xlane.f32.xlu0 %v1779
      %v1781 = vpop.xlane.xlu0 %1780
      %v1782 = vsel %vm998, %v1759, 0.0
      %1783 = vadd.xlane.f32.xlu0 %v1782
      %v1784 = vpop.xlane.xlu0 %1783
      %v1785 = vsel %vm998, %v1761, 0.0
      %1786 = vadd.xlane.f32.xlu0 %v1785
      %v1787 = vpop.xlane.xlu0 %1786
      %v1788 = vsel %vm1023, %v1763, 0.0
      %1789 = vadd.xlane.f32.xlu0 %v1788
      %v1790 = vpop.xlane.xlu0 %1789
      %v1791 = vrcp.pop %v1766
      %v1792 = vrcp.pop %v1769
      %v1793 = vrcp.pop %v1772
      %v1794 = vrcp.pop %v1775
      %v1795 = vrcp.pop %v1778
      %v1796 = vrcp.pop %v1781
      %v1797 = vrcp.pop %v1784
      %v1798 = vrcp.pop %v1787
      %v1799 = vrcp.pop %v1790
      %v1800 = vmul.f32 %v1747, %v1791
      %v1801 = vmul.f32 %v1749, %v1792
      %v1802 = vmul.f32 %v1751, %v1793
      %v1803 = vmul.f32 %v1753, %v1794
      %v1804 = vmul.f32 %v1755, %v1795
      %v1805 = vmul.f32 %v1757, %v1796
      %v1806 = vmul.f32 %v1759, %v1797
      %v1807 = vmul.f32 %v1761, %v1798
      %v1808 = vmul.f32 %v1763, %v1799
      %v1810 = vsel %vm998, %v1800, 0
      %v1813 = vsel %vm998, %v1801, 0
      %v1816 = vsel %vm998, %v1802, 0
      %v1819 = vsel %vm998, %v1803, 0
      %v1822 = vsel %vm998, %v1804, 0
      %v1825 = vsel %vm998, %v1805, 0
      %v1828 = vsel %vm998, %v1806, 0
      %v1831 = vsel %vm998, %v1807, 0
      %v1834 = vsel %vm998, %v1808, 0
      %v1837 = vsel %vm1126, %v1532, 0
      %1839 = vmatprep.subr.mxu0 0.0
      %1840 = vmatpush1.msra.mxu0 %v1500
      %1841 = vmatprep.subr.mxu0 0.0
      %1842 = vmatpush1.msra.mxu0 %v1503
      %1843 = vmatprep.subr.mxu0 0.0
      %1844 = vmatpush1.msra.mxu0 %v1508
      %1845 = vmatprep.subr.mxu0 0.0
      %1846 = vmatpush1.msra.mxu0 %v1511
      %1847 = vmatprep.subr.mxu0 0.0
      %1848 = vmatpush1.msra.mxu0 %v1516
      %1849 = vmatprep.subr.mxu0 0.0
      %1850 = vmatpush1.msra.mxu0 %v1519
      %1851 = vmatprep.subr.mxu0 0.0
      %1852 = vmatpush1.msra.mxu0 %v1524
      %1853 = vmatprep.subr.mxu0 0.0
      %1854 = vmatpush1.msra.mxu0 %v1527
      %1855 = vmatprep.subr.mxu0 0.0
      %1856 = vmatpush1.msra.mxu0 %v1837
      %1857 = vmatprep.subr.mxu0 0.0
      %1858 = vmatpush1.msra.mxu0 0.0
      %1859 = vmatprep.subr.mxu0 0.0
      %1860 = vmatpush1.msra.mxu0 0.0
      %1861 = vmatprep.subr.mxu0 0.0
      %1862 = vmatpush1.msra.mxu0 0.0
      %1863 = vmatprep.subr.mxu0 0.0
      %1864 = vmatpush1.msra.mxu0 0.0
      %1865 = vmatprep.subr.mxu0 0.0
      %1866 = vmatpush1.msra.mxu0 0.0
      %1867 = vmatprep.subr.mxu0 0.0
      %1868 = vmatpush1.msra.mxu0 0.0
      %1869 = vmatprep.subr.mxu0 0.0
      %1870 = vmatpush1.msra.mxu0 0.0
      %1871 = vmatprep.subr.mxu0 0.0
      %1872 = vmatpush1.msra.mxu0 0.0
      %1873 = vmatprep.subr.mxu0 0.0
      %1874 = vmatpush1.msra.mxu0 0.0
      %1875 = vmatprep.subr.mxu0 0.0
      %1876 = vmatpush1.msra.mxu0 0.0
      %1877 = vmatprep.subr.mxu0 0.0
      %1878 = vmatpush1.msra.mxu0 0.0
      %1879 = vmatprep.subr.mxu0 0.0
      %1880 = vmatpush1.msra.mxu0 0.0
      %1881 = vmatprep.subr.mxu0 0.0
      %1882 = vmatpush1.msra.mxu0 0.0
      %1883 = vmatprep.subr.mxu0 0.0
      %1884 = vmatpush1.msra.mxu0 0.0
      %1885 = vmatprep.subr.mxu0 0.0
      %1886 = vmatpush1.msra.mxu0 0.0
      %1887 = vmatprep.subr.mxu0 0.0
      %1888 = vmatpush1.msra.mxu0 0.0
      %1889 = vmatprep.subr.mxu0 0.0
      %1890 = vmatpush1.msra.mxu0 0.0
      %1891 = vmatprep.subr.mxu0 0.0
      %1892 = vmatpush1.msra.mxu0 0.0
      %1893 = vmatprep.subr.mxu0 0.0
      %1894 = vmatpush1.msra.mxu0 0.0
      %1895 = vmatprep.subr.mxu0 0.0
      %1896 = vmatpush1.msra.mxu0 0.0
      %1897 = vmatprep.subr.mxu0 0.0
      %1898 = vmatpush1.msra.mxu0 0.0
      %1899 = vmatprep.subr.mxu0 0.0
      %1900 = vmatpush1.msra.mxu0 0.0
      %1901 = vmatprep.subr.mxu0 0.0
      %1902 = vmatpush1.msra.mxu0 0.0
      %1903 = vmatprep.mubr.f32.mxu0 0.0
      %1904 = vmatmul.mubr.f32.gmra.mrb[0].mxu0 %v1810
      %v1905 = vpop.f32.mrb[0].mxu0
      %v1906 = vadd.f32 0.0, %v1905
      %v1907 = vpop.f32.mrb[0].mxu0
      %1908 = vmatprep.mubr.f32.mxu0 0.0
      %1909 = vmatmul.mubr.f32.gmra.mrb[0].mxu0 %v1813
      %v1910 = vpop.f32.mrb[0].mxu0
      %v1911 = vadd.f32 0.0, %v1910
      %v1912 = vpop.f32.mrb[0].mxu0
      %1913 = vmatprep.mubr.f32.mxu0 0.0
      %1914 = vmatmul.mubr.f32.gmra.mrb[0].mxu0 %v1816
      %v1915 = vpop.f32.mrb[0].mxu0
      %v1916 = vadd.f32 0.0, %v1915
      %v1917 = vpop.f32.mrb[0].mxu0
      %1918 = vmatprep.mubr.f32.mxu0 0.0
      %1919 = vmatmul.mubr.f32.gmra.mrb[0].mxu0 %v1819
      %v1920 = vpop.f32.mrb[0].mxu0
      %v1921 = vadd.f32 0.0, %v1920
      %v1922 = vpop.f32.mrb[0].mxu0
      %1923 = vmatprep.mubr.f32.mxu0 0.0
      %1924 = vmatmul.mubr.f32.gmra.mrb[0].mxu0 %v1822
      %v1925 = vpop.f32.mrb[0].mxu0
      %v1926 = vadd.f32 0.0, %v1925
      %v1927 = vpop.f32.mrb[0].mxu0
      %1928 = vmatprep.mubr.f32.mxu0 0.0
      %1929 = vmatmul.mubr.f32.gmra.mrb[0].mxu0 %v1825
      %v1930 = vpop.f32.mrb[0].mxu0
      %v1931 = vadd.f32 0.0, %v1930
      %v1932 = vpop.f32.mrb[0].mxu0
      %1933 = vmatprep.mubr.f32.mxu0 0.0
      %1934 = vmatmul.mubr.f32.gmra.mrb[0].mxu0 %v1828
      %v1935 = vpop.f32.mrb[0].mxu0
      %v1936 = vadd.f32 0.0, %v1935
      %v1937 = vpop.f32.mrb[0].mxu0
      %1938 = vmatprep.mubr.f32.mxu0 0.0
      %1939 = vmatmul.mubr.f32.gmra.mrb[0].mxu0 %v1831
      %v1940 = vpop.f32.mrb[0].mxu0
      %v1941 = vadd.f32 0.0, %v1940
      %v1942 = vpop.f32.mrb[0].mxu0
      %1943 = vmatprep.mubr.f32.mxu0 0.0
      %1944 = vmatmul.mubr.f32.gmra.mrb[0].mxu0 %v1834
      %v1945 = vpop.f32.mrb[0].mxu0
      %v1946 = vadd.f32 0.0, %v1945
      %v1947 = vpop.f32.mrb[0].mxu0
      %1948 = vdwg.mxu0
      %v1949 = vpack.c.bf16 %v1911, %v1906
      %v1950 = vpack.c.bf16 %v1921, %v1916
      %v1951 = vpack.c.bf16 %v1931, %v1926
      %v1952 = vpack.c.bf16 %v1941, %v1936
      %v1953 = vpack.c.bf16 %v1946, %v1946
      %s1954 = scalar_lea.vmem %s8, 4
      %v1955 = vld [vmem:[%s1954] sm:$0xf]
      %v1957 = vsel %vm824, %v1949, 0
      %v1960 = vsel %vm824, %v1950, 0
      %v1963 = vsel %vm824, %v1951, 0
      %v1966 = vsel %vm824, %v1952, 0
      %v1969 = vsel %vm824, %v1953, 0
      %vm1971 = vcmask 1043456
      %v1973 = vsel %vm1971, %v1955, 0
      %1975 = vmatprep.subr.bf16.mxu0 0
      %1976 = vmatpush1.bf16.msra.mxu0 %v1973
      %1977 = vmatprep.subr.bf16.mxu0 0
      %1978 = vmatpush1.bf16.msra.mxu0 0
      %1979 = vmatprep.subr.bf16.mxu0 0
      %1980 = vmatpush1.bf16.msra.mxu0 0
      %1981 = vmatprep.subr.bf16.mxu0 0
      %1982 = vmatpush1.bf16.msra.mxu0 0
      %1983 = vmatprep.subr.bf16.mxu0 0
      %1984 = vmatpush1.bf16.msra.mxu0 0
      %1985 = vmatprep.subr.bf16.mxu0 0
      %1986 = vmatpush1.bf16.msra.mxu0 0
      %1987 = vmatprep.subr.bf16.mxu0 0
      %1988 = vmatpush1.bf16.msra.mxu0 0
      %1989 = vmatprep.subr.bf16.mxu0 0
      %1990 = vmatpush1.bf16.msra.mxu0 0
      %1991 = vmatprep.subr.bf16.mxu0 0
      %1992 = vmatpush1.bf16.msra.mxu0 0
      %1993 = vmatprep.subr.bf16.mxu0 0
      %1994 = vmatpush1.bf16.msra.mxu0 0
      %1995 = vmatprep.subr.bf16.mxu0 0
      %1996 = vmatpush1.bf16.msra.mxu0 0
      %1997 = vmatprep.subr.bf16.mxu0 0
      %1998 = vmatpush1.bf16.msra.mxu0 0
      %1999 = vmatprep.subr.bf16.mxu0 0
      %2000 = vmatpush1.bf16.msra.mxu0 0
      %2001 = vmatprep.subr.bf16.mxu0 0
      %2002 = vmatpush1.bf16.msra.mxu0 0
      %2003 = vmatprep.subr.bf16.mxu0 0
      %2004 = vmatpush1.bf16.msra.mxu0 0
      %2005 = vmatprep.subr.bf16.mxu0 0
      %2006 = vmatpush1.bf16.msra.mxu0 0
      %2007 = vmatprep.mubr.bf16.mxu0 0
      %2008 = vmatmul.mubr.bf16.gmra.mrb[0].mxu0 %v1957
      %v2009 = vpop.f32.mrb[0].mxu0
      %v2010 = vadd.f32 0.0, %v2009
      %v2011 = vpop.f32.mrb[0].mxu0
      %v2012 = vpop.f32.mrb[0].mxu0
      %v2013 = vadd.f32 0.0, %v2012
      %v2014 = vpop.f32.mrb[0].mxu0
      %2015 = vmatprep.mubr.bf16.mxu0 0
      %2016 = vmatmul.mubr.bf16.gmra.mrb[0].mxu0 %v1960
      %v2017 = vpop.f32.mrb[0].mxu0
      %v2018 = vadd.f32 0.0, %v2017
      %v2019 = vpop.f32.mrb[0].mxu0
      %v2020 = vpop.f32.mrb[0].mxu0
      %v2021 = vadd.f32 0.0, %v2020
      %v2022 = vpop.f32.mrb[0].mxu0
      %2023 = vmatprep.mubr.bf16.mxu0 0
      %2024 = vmatmul.mubr.bf16.gmra.mrb[0].mxu0 %v1963
      %v2025 = vpop.f32.mrb[0].mxu0
      %v2026 = vadd.f32 0.0, %v2025
      %v2027 = vpop.f32.mrb[0].mxu0
      %v2028 = vpop.f32.mrb[0].mxu0
      %v2029 = vadd.f32 0.0, %v2028
      %v2030 = vpop.f32.mrb[0].mxu0
      %2031 = vmatprep.mubr.bf16.mxu0 0
      %2032 = vmatmul.mubr.bf16.gmra.mrb[0].mxu0 %v1966
      %v2033 = vpop.f32.mrb[0].mxu0
      %v2034 = vadd.f32 0.0, %v2033
      %v2035 = vpop.f32.mrb[0].mxu0
      %v2036 = vpop.f32.mrb[0].mxu0
      %v2037 = vadd.f32 0.0, %v2036
      %v2038 = vpop.f32.mrb[0].mxu0
      %2039 = vmatprep.mubr.bf16.mxu0 0
      %2040 = vmatmul.mubr.bf16.gmra.mrb[0].mxu0 %v1969
      %v2041 = vpop.f32.mrb[0].mxu0
      %v2042 = vadd.f32 0.0, %v2041
      %v2043 = vpop.f32.mrb[0].mxu0
      %v2044 = vpop.f32.mrb[0].mxu0
      %v2045 = vpop.f32.mrb[0].mxu0
      %2046 = vdwg.mxu0
      %v2048 = vsel %vm824, %v1240, 0
      %v2051 = vsel %vm824, %v1241, 0
      %v2054 = vsel %vm824, %v1242, 0
      %v2057 = vsel %vm824, %v1243, 0
      %v2060 = vsel %vm824, %v1244, 0
      %v2063 = vsel %vm1971, %v1245, 0
      %2065 = vmatprep.subr.bf16.mxu0 0
      %2066 = vmatpush1.bf16.msra.mxu0 %v2063
      %2067 = vmatprep.subr.bf16.mxu0 0
      %2068 = vmatpush1.bf16.msra.mxu0 0
      %2069 = vmatprep.subr.bf16.mxu0 0
      %2070 = vmatpush1.bf16.msra.mxu0 0
      %2071 = vmatprep.subr.bf16.mxu0 0
      %2072 = vmatpush1.bf16.msra.mxu0 0
      %2073 = vmatprep.subr.bf16.mxu0 0
      %2074 = vmatpush1.bf16.msra.mxu0 0
      %2075 = vmatprep.subr.bf16.mxu0 0
      %2076 = vmatpush1.bf16.msra.mxu0 0
      %2077 = vmatprep.subr.bf16.mxu0 0
      %2078 = vmatpush1.bf16.msra.mxu0 0
      %2079 = vmatprep.subr.bf16.mxu0 0
      %2080 = vmatpush1.bf16.msra.mxu0 0
      %2081 = vmatprep.subr.bf16.mxu0 0
      %2082 = vmatpush1.bf16.msra.mxu0 0
      %2083 = vmatprep.subr.bf16.mxu0 0
      %2084 = vmatpush1.bf16.msra.mxu0 0
      %2085 = vmatprep.subr.bf16.mxu0 0
      %2086 = vmatpush1.bf16.msra.mxu0 0
      %2087 = vmatprep.subr.bf16.mxu0 0
      %2088 = vmatpush1.bf16.msra.mxu0 0
      %2089 = vmatprep.subr.bf16.mxu0 0
      %2090 = vmatpush1.bf16.msra.mxu0 0
      %2091 = vmatprep.subr.bf16.mxu0 0
      %2092 = vmatpush1.bf16.msra.mxu0 0
      %2093 = vmatprep.subr.bf16.mxu0 0
      %2094 = vmatpush1.bf16.msra.mxu0 0
      %2095 = vmatprep.subr.bf16.mxu0 0
      %2096 = vmatpush1.bf16.msra.mxu0 0
      %2097 = vmatprep.mubr.bf16.mxu0 0
      %2098 = vmatmul.mubr.bf16.gmra.mrb[0].mxu0 %v2048
      %v2099 = vpop.f32.mrb[0].mxu0
      %v2100 = vadd.f32 %v2010, %v2099
      %v2101 = vpop.f32.mrb[0].mxu0
      %v2102 = vpop.f32.mrb[0].mxu0
      %v2103 = vadd.f32 %v2013, %v2102
      %v2104 = vpop.f32.mrb[0].mxu0
      %2105 = vmatprep.mubr.bf16.mxu0 0
      %2106 = vmatmul.mubr.bf16.gmra.mrb[0].mxu0 %v2051
      %v2107 = vpop.f32.mrb[0].mxu0
      %v2108 = vadd.f32 %v2018, %v2107
      %v2109 = vpop.f32.mrb[0].mxu0
      %v2110 = vpop.f32.mrb[0].mxu0
      %v2111 = vadd.f32 %v2021, %v2110
      %v2112 = vpop.f32.mrb[0].mxu0
      %2113 = vmatprep.mubr.bf16.mxu0 0
      %2114 = vmatmul.mubr.bf16.gmra.mrb[0].mxu0 %v2054
      %v2115 = vpop.f32.mrb[0].mxu0
      %v2116 = vadd.f32 %v2026, %v2115
      %v2117 = vpop.f32.mrb[0].mxu0
      %v2118 = vpop.f32.mrb[0].mxu0
      %v2119 = vadd.f32 %v2029, %v2118
      %v2120 = vpop.f32.mrb[0].mxu0
      %2121 = vmatprep.mubr.bf16.mxu0 0
      %2122 = vmatmul.mubr.bf16.gmra.mrb[0].mxu0 %v2057
      %v2123 = vpop.f32.mrb[0].mxu0
      %v2124 = vadd.f32 %v2034, %v2123
      %v2125 = vpop.f32.mrb[0].mxu0
      %v2126 = vpop.f32.mrb[0].mxu0
      %v2127 = vadd.f32 %v2037, %v2126
      %v2128 = vpop.f32.mrb[0].mxu0
      %2129 = vmatprep.mubr.bf16.mxu0 0
      %2130 = vmatmul.mubr.bf16.gmra.mrb[0].mxu0 %v2060
      %v2131 = vpop.f32.mrb[0].mxu0
      %v2132 = vadd.f32 %v2042, %v2131
      %v2133 = vpop.f32.mrb[0].mxu0
      %v2134 = vpop.f32.mrb[0].mxu0
      %v2135 = vpop.f32.mrb[0].mxu0
      %2136 = vdwg.mxu0
      %s2137 = scalar_lea.vmem %s2, 32
      %v2138 = vld [vmem:[%s2137] sm:$0xf]
      %v2139 = vld [vmem:[%s2137 + $0x4] sm:$0xf]
      %v2140 = vld [vmem:[%s2137 + $0x8] sm:$0xf]
      %v2141 = vld [vmem:[%s2137 + $0xc] sm:$0xf]
      %s2142 = scalar_lea.vmem %s5, 2
      %v2143 = vld [vmem:[%s2142] sm:$0x1]
      %v2145 = vlaneseq
      %v2146 = vshrl.u32 %v2145, 7
      %v2147 = vsub.s32 0, %v2146
      %v2148 = vrot.slane %v2143, %v2147
      %v2154 = vunpack.c.l.b16 %v2138
      %v2155 = vunpack.c.l.b16 %v2139
      %v2156 = vunpack.c.l.b16 %v2140
      %v2157 = vunpack.c.l.b16 %v2141
      %v2158 = vpack.c.b16 %v2155, %v2154
      %v2159 = vpack.c.b16 %v2157, %v2156
      %2162 = vmatprep.subr.bf16.mxu0 0
      %2163 = vmatpush1.bf16.msra.mxu0 %v2158
      %2164 = vmatprep.subr.bf16.mxu0 0
      %2165 = vmatpush1.bf16.msra.mxu0 %v2159
      %2166 = vmatprep.subr.bf16.mxu0 0
      %2167 = vmatpush1.bf16.msra.mxu0 0
      %2168 = vmatprep.subr.bf16.mxu0 0
      %2169 = vmatpush1.bf16.msra.mxu0 0
      %2170 = vmatprep.subr.bf16.mxu0 0
      %2171 = vmatpush1.bf16.msra.mxu0 0
      %2172 = vmatprep.subr.bf16.mxu0 0
      %2173 = vmatpush1.bf16.msra.mxu0 0
      %2174 = vmatprep.subr.bf16.mxu0 0
      %2175 = vmatpush1.bf16.msra.mxu0 0
      %2176 = vmatprep.subr.bf16.mxu0 0
      %2177 = vmatpush1.bf16.msra.mxu0 0
      %2178 = vmatprep.subr.bf16.mxu0 0
      %2179 = vmatpush1.bf16.msra.mxu0 0
      %2180 = vmatprep.subr.bf16.mxu0 0
      %2181 = vmatpush1.bf16.msra.mxu0 0
      %2182 = vmatprep.subr.bf16.mxu0 0
      %2183 = vmatpush1.bf16.msra.mxu0 0
      %2184 = vmatprep.subr.bf16.mxu0 0
      %2185 = vmatpush1.bf16.msra.mxu0 0
      %2186 = vmatprep.subr.bf16.mxu0 0
      %2187 = vmatpush1.bf16.msra.mxu0 0
      %2188 = vmatprep.subr.bf16.mxu0 0
      %2189 = vmatpush1.bf16.msra.mxu0 0
      %2190 = vmatprep.subr.bf16.mxu0 0
      %2191 = vmatpush1.bf16.msra.mxu0 0
      %2192 = vmatprep.subr.bf16.mxu0 0
      %2193 = vmatpush1.bf16.msra.mxu0 0
      %2194 = vmatprep.mubr.bf16.mxu0 0
      %2195 = vmatmul.mubr.bf16.gmra.mrb[0].mxu0 %v510
      %v2196 = vpop.f32.mrb[0].mxu0
      %v2197 = vadd.f32 %v2148, %v2196
      %v2198 = vpop.f32.mrb[0].mxu0
      %v2199 = vpop.f32.mrb[0].mxu0
      %v2200 = vadd.f32 %v2148, %v2199
      %v2201 = vpop.f32.mrb[0].mxu0
      %2202 = vmatprep.mubr.bf16.mxu0 0
      %2203 = vmatmul.mubr.bf16.gmra.mrb[0].mxu0 %v513
      %v2204 = vpop.f32.mrb[0].mxu0
      %v2205 = vadd.f32 %v2148, %v2204
      %v2206 = vpop.f32.mrb[0].mxu0
      %v2207 = vpop.f32.mrb[0].mxu0
      %v2208 = vadd.f32 %v2148, %v2207
      %v2209 = vpop.f32.mrb[0].mxu0
      %2210 = vmatprep.mubr.bf16.mxu0 0
      %2211 = vmatmul.mubr.bf16.gmra.mrb[0].mxu0 %v516
      %v2212 = vpop.f32.mrb[0].mxu0
      %v2213 = vadd.f32 %v2148, %v2212
      %v2214 = vpop.f32.mrb[0].mxu0
      %v2215 = vpop.f32.mrb[0].mxu0
      %v2216 = vadd.f32 %v2148, %v2215
      %v2217 = vpop.f32.mrb[0].mxu0
      %2218 = vmatprep.mubr.bf16.mxu0 0
      %2219 = vmatmul.mubr.bf16.gmra.mrb[0].mxu0 %v519
      %v2220 = vpop.f32.mrb[0].mxu0
      %v2221 = vadd.f32 %v2148, %v2220
      %v2222 = vpop.f32.mrb[0].mxu0
      %v2223 = vpop.f32.mrb[0].mxu0
      %v2224 = vadd.f32 %v2148, %v2223
      %v2225 = vpop.f32.mrb[0].mxu0
      %2226 = vmatprep.mubr.bf16.mxu0 0
      %2227 = vmatmul.mubr.bf16.gmra.mrb[0].mxu0 %v522
      %v2228 = vpop.f32.mrb[0].mxu0
      %v2229 = vadd.f32 %v2148, %v2228
      %v2230 = vpop.f32.mrb[0].mxu0
      %v2231 = vpop.f32.mrb[0].mxu0
      %v2232 = vpop.f32.mrb[0].mxu0
      %2233 = vdwg.mxu0
      %s2234 = scalar_lea.vmem %s3, 32
      %v2235 = vld [vmem:[%s2234] sm:$0xf]
      %v2236 = vld [vmem:[%s2234 + $0x4] sm:$0xf]
      %v2237 = vld [vmem:[%s2234 + $0x8] sm:$0xf]
      %v2238 = vld [vmem:[%s2234 + $0xc] sm:$0xf]
      %s2239 = scalar_lea.vmem %s6, 2
      %v2240 = vld [vmem:[%s2239] sm:$0x1]
      %v2242 = vlaneseq
      %v2243 = vshrl.u32 %v2242, 7
      %v2244 = vsub.s32 0, %v2243
      %v2245 = vrot.slane %v2240, %v2244
      %v2251 = vunpack.c.l.b16 %v2235
      %v2252 = vunpack.c.l.b16 %v2236
      %v2253 = vunpack.c.l.b16 %v2237
      %v2254 = vunpack.c.l.b16 %v2238
      %v2255 = vpack.c.b16 %v2252, %v2251
      %v2256 = vpack.c.b16 %v2254, %v2253
      %2259 = vmatprep.subr.bf16.mxu0 0
      %2260 = vmatpush1.bf16.msra.mxu0 %v2255
      %2261 = vmatprep.subr.bf16.mxu0 0
      %2262 = vmatpush1.bf16.msra.mxu0 %v2256
      %2263 = vmatprep.subr.bf16.mxu0 0
      %2264 = vmatpush1.bf16.msra.mxu0 0
      %2265 = vmatprep.subr.bf16.mxu0 0
      %2266 = vmatpush1.bf16.msra.mxu0 0
      %2267 = vmatprep.subr.bf16.mxu0 0
      %2268 = vmatpush1.bf16.msra.mxu0 0
      %2269 = vmatprep.subr.bf16.mxu0 0
      %2270 = vmatpush1.bf16.msra.mxu0 0
      %2271 = vmatprep.subr.bf16.mxu0 0
      %2272 = vmatpush1.bf16.msra.mxu0 0
      %2273 = vmatprep.subr.bf16.mxu0 0
      %2274 = vmatpush1.bf16.msra.mxu0 0
      %2275 = vmatprep.subr.bf16.mxu0 0
      %2276 = vmatpush1.bf16.msra.mxu0 0
      %2277 = vmatprep.subr.bf16.mxu0 0
      %2278 = vmatpush1.bf16.msra.mxu0 0
      %2279 = vmatprep.subr.bf16.mxu0 0
      %2280 = vmatpush1.bf16.msra.mxu0 0
      %2281 = vmatprep.subr.bf16.mxu0 0
      %2282 = vmatpush1.bf16.msra.mxu0 0
      %2283 = vmatprep.subr.bf16.mxu0 0
      %2284 = vmatpush1.bf16.msra.mxu0 0
      %2285 = vmatprep.subr.bf16.mxu0 0
      %2286 = vmatpush1.bf16.msra.mxu0 0
      %2287 = vmatprep.subr.bf16.mxu0 0
      %2288 = vmatpush1.bf16.msra.mxu0 0
      %2289 = vmatprep.subr.bf16.mxu0 0
      %2290 = vmatpush1.bf16.msra.mxu0 0
      %2291 = vmatprep.mubr.bf16.mxu0 0
      %2292 = vmatmul.mubr.bf16.gmra.mrb[0].mxu0 %v643
      %v2293 = vpop.f32.mrb[0].mxu0
      %v2294 = vadd.f32 %v2245, %v2293
      %v2295 = vpop.f32.mrb[0].mxu0
      %v2296 = vpop.f32.mrb[0].mxu0
      %v2297 = vadd.f32 %v2245, %v2296
      %v2298 = vpop.f32.mrb[0].mxu0
      %2299 = vmatprep.mubr.bf16.mxu0 0
      %2300 = vmatmul.mubr.bf16.gmra.mrb[0].mxu0 %v646
      %v2301 = vpop.f32.mrb[0].mxu0
      %v2302 = vadd.f32 %v2245, %v2301
      %v2303 = vpop.f32.mrb[0].mxu0
      %v2304 = vpop.f32.mrb[0].mxu0
      %v2305 = vadd.f32 %v2245, %v2304
      %v2306 = vpop.f32.mrb[0].mxu0
      %2307 = vmatprep.mubr.bf16.mxu0 0
      %2308 = vmatmul.mubr.bf16.gmra.mrb[0].mxu0 %v649
      %v2309 = vpop.f32.mrb[0].mxu0
      %v2310 = vadd.f32 %v2245, %v2309
      %v2311 = vpop.f32.mrb[0].mxu0
      %v2312 = vpop.f32.mrb[0].mxu0
      %v2313 = vadd.f32 %v2245, %v2312
      %v2314 = vpop.f32.mrb[0].mxu0
      %2315 = vmatprep.mubr.bf16.mxu0 0
      %2316 = vmatmul.mubr.bf16.gmra.mrb[0].mxu0 %v652
      %v2317 = vpop.f32.mrb[0].mxu0
      %v2318 = vadd.f32 %v2245, %v2317
      %v2319 = vpop.f32.mrb[0].mxu0
      %v2320 = vpop.f32.mrb[0].mxu0
      %v2321 = vadd.f32 %v2245, %v2320
      %v2322 = vpop.f32.mrb[0].mxu0
      %2323 = vmatprep.mubr.bf16.mxu0 0
      %2324 = vmatmul.mubr.bf16.gmra.mrb[0].mxu0 %v655
      %v2325 = vpop.f32.mrb[0].mxu0
      %v2326 = vadd.f32 %v2245, %v2325
      %v2327 = vpop.f32.mrb[0].mxu0
      %v2328 = vpop.f32.mrb[0].mxu0
      %v2329 = vpop.f32.mrb[0].mxu0
      %2330 = vdwg.mxu0
      %s2331 = scalar_lea.vmem %s4, 32
      %v2332 = vld [vmem:[%s2331] sm:$0xf]
      %v2333 = vld [vmem:[%s2331 + $0x4] sm:$0xf]
      %v2334 = vld [vmem:[%s2331 + $0x8] sm:$0xf]
      %v2335 = vld [vmem:[%s2331 + $0xc] sm:$0xf]
      %s2336 = scalar_lea.vmem %s7, 2
      %v2337 = vld [vmem:[%s2336] sm:$0x1]
      %v2339 = vlaneseq
      %v2340 = vshrl.u32 %v2339, 7
      %v2341 = vsub.s32 0, %v2340
      %v2342 = vrot.slane %v2337, %v2341
      %v2348 = vunpack.c.l.b16 %v2332
      %v2349 = vunpack.c.l.b16 %v2333
      %v2350 = vunpack.c.l.b16 %v2334
      %v2351 = vunpack.c.l.b16 %v2335
      %v2352 = vpack.c.b16 %v2349, %v2348
      %v2353 = vpack.c.b16 %v2351, %v2350
      %2356 = vmatprep.subr.bf16.mxu0 0
      %2357 = vmatpush1.bf16.msra.mxu0 %v2352
      %2358 = vmatprep.subr.bf16.mxu0 0
      %2359 = vmatpush1.bf16.msra.mxu0 %v2353
      %2360 = vmatprep.subr.bf16.mxu0 0
      %2361 = vmatpush1.bf16.msra.mxu0 0
      %2362 = vmatprep.subr.bf16.mxu0 0
      %2363 = vmatpush1.bf16.msra.mxu0 0
      %2364 = vmatprep.subr.bf16.mxu0 0
      %2365 = vmatpush1.bf16.msra.mxu0 0
      %2366 = vmatprep.subr.bf16.mxu0 0
      %2367 = vmatpush1.bf16.msra.mxu0 0
      %2368 = vmatprep.subr.bf16.mxu0 0
      %2369 = vmatpush1.bf16.msra.mxu0 0
      %2370 = vmatprep.subr.bf16.mxu0 0
      %2371 = vmatpush1.bf16.msra.mxu0 0
      %2372 = vmatprep.subr.bf16.mxu0 0
      %2373 = vmatpush1.bf16.msra.mxu0 0
      %2374 = vmatprep.subr.bf16.mxu0 0
      %2375 = vmatpush1.bf16.msra.mxu0 0
      %2376 = vmatprep.subr.bf16.mxu0 0
      %2377 = vmatpush1.bf16.msra.mxu0 0
      %2378 = vmatprep.subr.bf16.mxu0 0
      %2379 = vmatpush1.bf16.msra.mxu0 0
      %2380 = vmatprep.subr.bf16.mxu0 0
      %2381 = vmatpush1.bf16.msra.mxu0 0
      %2382 = vmatprep.subr.bf16.mxu0 0
      %2383 = vmatpush1.bf16.msra.mxu0 0
      %2384 = vmatprep.subr.bf16.mxu0 0
      %2385 = vmatpush1.bf16.msra.mxu0 0
      %2386 = vmatprep.subr.bf16.mxu0 0
      %2387 = vmatpush1.bf16.msra.mxu0 0
      %2388 = vmatprep.mubr.bf16.mxu0 0
      %2389 = vmatmul.mubr.bf16.gmra.mrb[0].mxu0 %v643
      %v2390 = vpop.f32.mrb[0].mxu0
      %v2391 = vadd.f32 %v2342, %v2390
      %v2392 = vpop.f32.mrb[0].mxu0
      %v2393 = vpop.f32.mrb[0].mxu0
      %v2394 = vadd.f32 %v2342, %v2393
      %v2395 = vpop.f32.mrb[0].mxu0
      %2396 = vmatprep.mubr.bf16.mxu0 0
      %2397 = vmatmul.mubr.bf16.gmra.mrb[0].mxu0 %v646
      %v2398 = vpop.f32.mrb[0].mxu0
      %v2399 = vadd.f32 %v2342, %v2398
      %v2400 = vpop.f32.mrb[0].mxu0
      %v2401 = vpop.f32.mrb[0].mxu0
      %v2402 = vadd.f32 %v2342, %v2401
      %v2403 = vpop.f32.mrb[0].mxu0
      %2404 = vmatprep.mubr.bf16.mxu0 0
      %2405 = vmatmul.mubr.bf16.gmra.mrb[0].mxu0 %v649
      %v2406 = vpop.f32.mrb[0].mxu0
      %v2407 = vadd.f32 %v2342, %v2406
      %v2408 = vpop.f32.mrb[0].mxu0
      %v2409 = vpop.f32.mrb[0].mxu0
      %v2410 = vadd.f32 %v2342, %v2409
      %v2411 = vpop.f32.mrb[0].mxu0
      %2412 = vmatprep.mubr.bf16.mxu0 0
      %2413 = vmatmul.mubr.bf16.gmra.mrb[0].mxu0 %v652
      %v2414 = vpop.f32.mrb[0].mxu0
      %v2415 = vadd.f32 %v2342, %v2414
      %v2416 = vpop.f32.mrb[0].mxu0
      %v2417 = vpop.f32.mrb[0].mxu0
      %v2418 = vadd.f32 %v2342, %v2417
      %v2419 = vpop.f32.mrb[0].mxu0
      %2420 = vmatprep.mubr.bf16.mxu0 0
      %2421 = vmatmul.mubr.bf16.gmra.mrb[0].mxu0 %v655
      %v2422 = vpop.f32.mrb[0].mxu0
      %v2423 = vadd.f32 %v2342, %v2422
      %v2424 = vpop.f32.mrb[0].mxu0
      %v2425 = vpop.f32.mrb[0].mxu0
      %v2426 = vpop.f32.mrb[0].mxu0
      %2427 = vdwg.mxu0
      %v2429 = vsel %vm824, %v2197, 0
      %v2432 = vsel %vm824, %v2200, 0
      %v2435 = vsel %vm824, %v2205, 0
      %v2438 = vsel %vm824, %v2208, 0
      %v2441 = vsel %vm824, %v2213, 0
      %v2444 = vsel %vm824, %v2216, 0
      %v2447 = vsel %vm824, %v2221, 0
      %v2450 = vsel %vm824, %v2224, 0
      %v2453 = vsel %vm824, %v2229, 0
      %v2456 = vsel %vm824, %v2294, 0
      %v2459 = vsel %vm824, %v2297, 0
      %v2462 = vsel %vm824, %v2302, 0
      %v2465 = vsel %vm824, %v2305, 0
      %v2468 = vsel %vm824, %v2310, 0
      %v2471 = vsel %vm824, %v2313, 0
      %v2474 = vsel %vm824, %v2318, 0
      %v2477 = vsel %vm824, %v2321, 0
      %v2480 = vsel %vm824, %v2326, 0
      %2482 = vmatprep.subr.mxu0 0.0
      %2483 = vmatpush1.xpose.msra.mxu0 %v2456
      %2484 = vmatprep.subr.mxu0 0.0
      %2485 = vmatpush1.xpose.msra.mxu0 %v2459
      %2486 = vmatprep.subr.mxu0 0.0
      %2487 = vmatpush1.xpose.msra.mxu0 %v2462
      %2488 = vmatprep.subr.mxu0 0.0
      %2489 = vmatpush1.xpose.msra.mxu0 %v2465
      %2490 = vmatprep.subr.mxu0 0.0
      %2491 = vmatpush1.xpose.msra.mxu0 %v2468
      %2492 = vmatprep.subr.mxu0 0.0
      %2493 = vmatpush1.xpose.msra.mxu0 %v2471
      %2494 = vmatprep.subr.mxu0 0.0
      %2495 = vmatpush1.xpose.msra.mxu0 %v2474
      %2496 = vmatprep.subr.mxu0 0.0
      %2497 = vmatpush1.xpose.msra.mxu0 %v2477
      %2498 = vmatprep.subr.mxu0 0.0
      %2499 = vmatpush1.xpose.msra.mxu0 %v2480
      %2500 = vmatprep.subr.mxu0 0.0
      %2501 = vmatpush1.xpose.msra.mxu0 0.0
      %2502 = vmatprep.subr.mxu0 0.0
      %2503 = vmatpush1.xpose.msra.mxu0 0.0
      %2504 = vmatprep.subr.mxu0 0.0
      %2505 = vmatpush1.xpose.msra.mxu0 0.0
      %2506 = vmatprep.subr.mxu0 0.0
      %2507 = vmatpush1.xpose.msra.mxu0 0.0
      %2508 = vmatprep.subr.mxu0 0.0
      %2509 = vmatpush1.xpose.msra.mxu0 0.0
      %2510 = vmatprep.subr.mxu0 0.0
      %2511 = vmatpush1.xpose.msra.mxu0 0.0
      %2512 = vmatprep.subr.mxu0 0.0
      %2513 = vmatpush1.xpose.msra.mxu0 0.0
      %2514 = vmatprep.subr.mxu0 0.0
      %2515 = vmatpush1.xpose.msra.mxu0 0.0
      %2516 = vmatprep.subr.mxu0 0.0
      %2517 = vmatpush1.xpose.msra.mxu0 0.0
      %2518 = vmatprep.subr.mxu0 0.0
      %2519 = vmatpush1.xpose.msra.mxu0 0.0
      %2520 = vmatprep.subr.mxu0 0.0
      %2521 = vmatpush1.xpose.msra.mxu0 0.0
      %2522 = vmatprep.subr.mxu0 0.0
      %2523 = vmatpush1.xpose.msra.mxu0 0.0
      %2524 = vmatprep.subr.mxu0 0.0
      %2525 = vmatpush1.xpose.msra.mxu0 0.0
      %2526 = vmatprep.subr.mxu0 0.0
      %2527 = vmatpush1.xpose.msra.mxu0 0.0
      %2528 = vmatprep.subr.mxu0 0.0
      %2529 = vmatpush1.xpose.msra.mxu0 0.0
      %2530 = vmatprep.subr.mxu0 0.0
      %2531 = vmatpush1.xpose.msra.mxu0 0.0
      %2532 = vmatprep.subr.mxu0 0.0
      %2533 = vmatpush1.xpose.msra.mxu0 0.0
      %2534 = vmatprep.subr.mxu0 0.0
      %2535 = vmatpush1.xpose.msra.mxu0 0.0
      %2536 = vmatprep.subr.mxu0 0.0
      %2537 = vmatpush1.xpose.msra.mxu0 0.0
      %2538 = vmatprep.subr.mxu0 0.0
      %2539 = vmatpush1.xpose.msra.mxu0 0.0
      %2540 = vmatprep.subr.mxu0 0.0
      %2541 = vmatpush1.xpose.msra.mxu0 0.0
      %2542 = vmatprep.subr.mxu0 0.0
      %2543 = vmatpush1.xpose.msra.mxu0 0.0
      %2544 = vmatprep.subr.mxu0 0.0
      %2545 = vmatpush1.xpose.msra.mxu0 0.0
      %2546 = vmatprep.mubr.f32.mxu0 0.0
      %2547 = vmatmul.mubr.f32.gmra.mrb[0].mxu0 %v2429
      %v2548 = vpop.f32.mrb[0].mxu0
      %v2549 = vadd.f32 0.0, %v2548
      %v2550 = vpop.f32.mrb[0].mxu0
      %2551 = vmatprep.mubr.f32.mxu0 0.0
      %2552 = vmatmul.mubr.f32.gmra.mrb[0].mxu0 %v2432
      %v2553 = vpop.f32.mrb[0].mxu0
      %v2554 = vadd.f32 0.0, %v2553
      %v2555 = vpop.f32.mrb[0].mxu0
      %2556 = vmatprep.mubr.f32.mxu0 0.0
      %2557 = vmatmul.mubr.f32.gmra.mrb[0].mxu0 %v2435
      %v2558 = vpop.f32.mrb[0].mxu0
      %v2559 = vadd.f32 0.0, %v2558
      %v2560 = vpop.f32.mrb[0].mxu0
      %2561 = vmatprep.mubr.f32.mxu0 0.0
      %2562 = vmatmul.mubr.f32.gmra.mrb[0].mxu0 %v2438
      %v2563 = vpop.f32.mrb[0].mxu0
      %v2564 = vadd.f32 0.0, %v2563
      %v2565 = vpop.f32.mrb[0].mxu0
      %2566 = vmatprep.mubr.f32.mxu0 0.0
      %2567 = vmatmul.mubr.f32.gmra.mrb[0].mxu0 %v2441
      %v2568 = vpop.f32.mrb[0].mxu0
      %v2569 = vadd.f32 0.0, %v2568
      %v2570 = vpop.f32.mrb[0].mxu0
      %2571 = vmatprep.mubr.f32.mxu0 0.0
      %2572 = vmatmul.mubr.f32.gmra.mrb[0].mxu0 %v2444
      %v2573 = vpop.f32.mrb[0].mxu0
      %v2574 = vadd.f32 0.0, %v2573
      %v2575 = vpop.f32.mrb[0].mxu0
      %2576 = vmatprep.mubr.f32.mxu0 0.0
      %2577 = vmatmul.mubr.f32.gmra.mrb[0].mxu0 %v2447
      %v2578 = vpop.f32.mrb[0].mxu0
      %v2579 = vadd.f32 0.0, %v2578
      %v2580 = vpop.f32.mrb[0].mxu0
      %2581 = vmatprep.mubr.f32.mxu0 0.0
      %2582 = vmatmul.mubr.f32.gmra.mrb[0].mxu0 %v2450
      %v2583 = vpop.f32.mrb[0].mxu0
      %v2584 = vadd.f32 0.0, %v2583
      %v2585 = vpop.f32.mrb[0].mxu0
      %2586 = vmatprep.mubr.f32.mxu0 0.0
      %2587 = vmatmul.mubr.f32.gmra.mrb[0].mxu0 %v2453
      %v2588 = vpop.f32.mrb[0].mxu0
      %v2589 = vadd.f32 0.0, %v2588
      %v2590 = vpop.f32.mrb[0].mxu0
      %2591 = vdwg.mxu0
      %v2592 = vmul.f32 %v2549, 0.35355338
      %v2593 = vmul.f32 %v2554, 0.35355338
      %v2594 = vmul.f32 %v2559, 0.35355338
      %v2595 = vmul.f32 %v2564, 0.35355338
      %v2596 = vmul.f32 %v2569, 0.35355338
      %v2597 = vmul.f32 %v2574, 0.35355338
      %v2598 = vmul.f32 %v2579, 0.35355338
      %v2599 = vmul.f32 %v2584, 0.35355338
      %v2600 = vmul.f32 %v2589, 0.35355338
      %v2601 = vsel %vm998, %v2592, -inf
      %2602 = vmax.xlane.f32.xlu0 %v2601
      %v2603 = vpop.xlane.xlu0 %2602
      %v2604 = vsel %vm998, %v2593, -inf
      %2605 = vmax.xlane.f32.xlu0 %v2604
      %v2606 = vpop.xlane.xlu0 %2605
      %v2607 = vsel %vm998, %v2594, -inf
      %2608 = vmax.xlane.f32.xlu0 %v2607
      %v2609 = vpop.xlane.xlu0 %2608
      %v2610 = vsel %vm998, %v2595, -inf
      %2611 = vmax.xlane.f32.xlu0 %v2610
      %v2612 = vpop.xlane.xlu0 %2611
      %v2613 = vsel %vm998, %v2596, -inf
      %2614 = vmax.xlane.f32.xlu0 %v2613
      %v2615 = vpop.xlane.xlu0 %2614
      %v2616 = vsel %vm998, %v2597, -inf
      %2617 = vmax.xlane.f32.xlu0 %v2616
      %v2618 = vpop.xlane.xlu0 %2617
      %v2619 = vsel %vm998, %v2598, -inf
      %2620 = vmax.xlane.f32.xlu0 %v2619
      %v2621 = vpop.xlane.xlu0 %2620
      %v2622 = vsel %vm998, %v2599, -inf
      %2623 = vmax.xlane.f32.xlu0 %v2622
      %v2624 = vpop.xlane.xlu0 %2623
      %v2625 = vsel %vm1023, %v2600, -inf
      %2626 = vmax.xlane.f32.xlu0 %v2625
      %v2627 = vpop.xlane.xlu0 %2626
      %v2628 = vsub.f32 %v2592, %v2603
      %v2629 = vsub.f32 %v2593, %v2606
      %v2630 = vsub.f32 %v2594, %v2609
      %v2631 = vsub.f32 %v2595, %v2612
      %v2632 = vsub.f32 %v2596, %v2615
      %v2633 = vsub.f32 %v2597, %v2618
      %v2634 = vsub.f32 %v2598, %v2621
      %v2635 = vsub.f32 %v2599, %v2624
      %v2636 = vsub.f32 %v2600, %v2627
      %v2637 = vmul.f32 %v2628, 1.442695
      %v2638 = vpow.pop %v2637
      %v2639 = vmul.f32 %v2629, 1.442695
      %v2640 = vpow.pop %v2639
      %v2641 = vmul.f32 %v2630, 1.442695
      %v2642 = vpow.pop %v2641
      %v2643 = vmul.f32 %v2631, 1.442695
      %v2644 = vpow.pop %v2643
      %v2645 = vmul.f32 %v2632, 1.442695
      %v2646 = vpow.pop %v2645
      %v2647 = vmul.f32 %v2633, 1.442695
      %v2648 = vpow.pop %v2647
      %v2649 = vmul.f32 %v2634, 1.442695
      %v2650 = vpow.pop %v2649
      %v2651 = vmul.f32 %v2635, 1.442695
      %v2652 = vpow.pop %v2651
      %v2653 = vmul.f32 %v2636, 1.442695
      %v2654 = vpow.pop %v2653
      %v2655 = vsel %vm998, %v2638, 0.0
      %2656 = vadd.xlane.f32.xlu0 %v2655
      %v2657 = vpop.xlane.xlu0 %2656
      %v2658 = vsel %vm998, %v2640, 0.0
      %2659 = vadd.xlane.f32.xlu0 %v2658
      %v2660 = vpop.xlane.xlu0 %2659
      %v2661 = vsel %vm998, %v2642, 0.0
      %2662 = vadd.xlane.f32.xlu0 %v2661
      %v2663 = vpop.xlane.xlu0 %2662
      %v2664 = vsel %vm998, %v2644, 0.0
      %2665 = vadd.xlane.f32.xlu0 %v2664
      %v2666 = vpop.xlane.xlu0 %2665
      %v2667 = vsel %vm998, %v2646, 0.0
      %2668 = vadd.xlane.f32.xlu0 %v2667
      %v2669 = vpop.xlane.xlu0 %2668
      %v2670 = vsel %vm998, %v2648, 0.0
      %2671 = vadd.xlane.f32.xlu0 %v2670
      %v2672 = vpop.xlane.xlu0 %2671
      %v2673 = vsel %vm998, %v2650, 0.0
      %2674 = vadd.xlane.f32.xlu0 %v2673
      %v2675 = vpop.xlane.xlu0 %2674
      %v2676 = vsel %vm998, %v2652, 0.0
      %2677 = vadd.xlane.f32.xlu0 %v2676
      %v2678 = vpop.xlane.xlu0 %2677
      %v2679 = vsel %vm1023, %v2654, 0.0
      %2680 = vadd.xlane.f32.xlu0 %v2679
      %v2681 = vpop.xlane.xlu0 %2680
      %v2682 = vrcp.pop %v2657
      %v2683 = vrcp.pop %v2660
      %v2684 = vrcp.pop %v2663
      %v2685 = vrcp.pop %v2666
      %v2686 = vrcp.pop %v2669
      %v2687 = vrcp.pop %v2672
      %v2688 = vrcp.pop %v2675
      %v2689 = vrcp.pop %v2678
      %v2690 = vrcp.pop %v2681
      %v2691 = vmul.f32 %v2638, %v2682
      %v2692 = vmul.f32 %v2640, %v2683
      %v2693 = vmul.f32 %v2642, %v2684
      %v2694 = vmul.f32 %v2644, %v2685
      %v2695 = vmul.f32 %v2646, %v2686
      %v2696 = vmul.f32 %v2648, %v2687
      %v2697 = vmul.f32 %v2650, %v2688
      %v2698 = vmul.f32 %v2652, %v2689
      %v2699 = vmul.f32 %v2654, %v2690
      %v2701 = vsel %vm998, %v2691, 0
      %v2704 = vsel %vm998, %v2692, 0
      %v2707 = vsel %vm998, %v2693, 0
      %v2710 = vsel %vm998, %v2694, 0
      %v2713 = vsel %vm998, %v2695, 0
      %v2716 = vsel %vm998, %v2696, 0
      %v2719 = vsel %vm998, %v2697, 0
      %v2722 = vsel %vm998, %v2698, 0
      %v2725 = vsel %vm998, %v2699, 0
      %v2728 = vsel %vm1126, %v2423, 0
      %2730 = vmatprep.subr.mxu0 0.0
      %2731 = vmatpush1.msra.mxu0 %v2391
      %2732 = vmatprep.subr.mxu0 0.0
      %2733 = vmatpush1.msra.mxu0 %v2394
      %2734 = vmatprep.subr.mxu0 0.0
      %2735 = vmatpush1.msra.mxu0 %v2399
      %2736 = vmatprep.subr.mxu0 0.0
      %2737 = vmatpush1.msra.mxu0 %v2402
      %2738 = vmatprep.subr.mxu0 0.0
      %2739 = vmatpush1.msra.mxu0 %v2407
      %2740 = vmatprep.subr.mxu0 0.0
      %2741 = vmatpush1.msra.mxu0 %v2410
      %2742 = vmatprep.subr.mxu0 0.0
      %2743 = vmatpush1.msra.mxu0 %v2415
      %2744 = vmatprep.subr.mxu0 0.0
      %2745 = vmatpush1.msra.mxu0 %v2418
      %2746 = vmatprep.subr.mxu0 0.0
      %2747 = vmatpush1.msra.mxu0 %v2728
      %2748 = vmatprep.subr.mxu0 0.0
      %2749 = vmatpush1.msra.mxu0 0.0
      %2750 = vmatprep.subr.mxu0 0.0
      %2751 = vmatpush1.msra.mxu0 0.0
      %2752 = vmatprep.subr.mxu0 0.0
      %2753 = vmatpush1.msra.mxu0 0.0
      %2754 = vmatprep.subr.mxu0 0.0
      %2755 = vmatpush1.msra.mxu0 0.0
      %2756 = vmatprep.subr.mxu0 0.0
      %2757 = vmatpush1.msra.mxu0 0.0
      %2758 = vmatprep.subr.mxu0 0.0
      %2759 = vmatpush1.msra.mxu0 0.0
      %2760 = vmatprep.subr.mxu0 0.0
      %2761 = vmatpush1.msra.mxu0 0.0
      %2762 = vmatprep.subr.mxu0 0.0
      %2763 = vmatpush1.msra.mxu0 0.0
      %2764 = vmatprep.subr.mxu0 0.0
      %2765 = vmatpush1.msra.mxu0 0.0
      %2766 = vmatprep.subr.mxu0 0.0
      %2767 = vmatpush1.msra.mxu0 0.0
      %2768 = vmatprep.subr.mxu0 0.0
      %2769 = vmatpush1.msra.mxu0 0.0
      %2770 = vmatprep.subr.mxu0 0.0
      %2771 = vmatpush1.msra.mxu0 0.0
      %2772 = vmatprep.subr.mxu0 0.0
      %2773 = vmatpush1.msra.mxu0 0.0
      %2774 = vmatprep.subr.mxu0 0.0
      %2775 = vmatpush1.msra.mxu0 0.0
      %2776 = vmatprep.subr.mxu0 0.0
      %2777 = vmatpush1.msra.mxu0 0.0
      %2778 = vmatprep.subr.mxu0 0.0
      %2779 = vmatpush1.msra.mxu0 0.0
      %2780 = vmatprep.subr.mxu0 0.0
      %2781 = vmatpush1.msra.mxu0 0.0
      %2782 = vmatprep.subr.mxu0 0.0
      %2783 = vmatpush1.msra.mxu0 0.0
      %2784 = vmatprep.subr.mxu0 0.0
      %2785 = vmatpush1.msra.mxu0 0.0
      %2786 = vmatprep.subr.mxu0 0.0
      %2787 = vmatpush1.msra.mxu0 0.0
      %2788 = vmatprep.subr.mxu0 0.0
      %2789 = vmatpush1.msra.mxu0 0.0
      %2790 = vmatprep.subr.mxu0 0.0
      %2791 = vmatpush1.msra.mxu0 0.0
      %2792 = vmatprep.subr.mxu0 0.0
      %2793 = vmatpush1.msra.mxu0 0.0
      %2794 = vmatprep.mubr.f32.mxu0 0.0
      %2795 = vmatmul.mubr.f32.gmra.mrb[0].mxu0 %v2701
      %v2796 = vpop.f32.mrb[0].mxu0
      %v2797 = vadd.f32 0.0, %v2796
      %v2798 = vpop.f32.mrb[0].mxu0
      %2799 = vmatprep.mubr.f32.mxu0 0.0
      %2800 = vmatmul.mubr.f32.gmra.mrb[0].mxu0 %v2704
      %v2801 = vpop.f32.mrb[0].mxu0
      %v2802 = vadd.f32 0.0, %v2801
      %v2803 = vpop.f32.mrb[0].mxu0
      %2804 = vmatprep.mubr.f32.mxu0 0.0
      %2805 = vmatmul.mubr.f32.gmra.mrb[0].mxu0 %v2707
      %v2806 = vpop.f32.mrb[0].mxu0
      %v2807 = vadd.f32 0.0, %v2806
      %v2808 = vpop.f32.mrb[0].mxu0
      %2809 = vmatprep.mubr.f32.mxu0 0.0
      %2810 = vmatmul.mubr.f32.gmra.mrb[0].mxu0 %v2710
      %v2811 = vpop.f32.mrb[0].mxu0
      %v2812 = vadd.f32 0.0, %v2811
      %v2813 = vpop.f32.mrb[0].mxu0
      %2814 = vmatprep.mubr.f32.mxu0 0.0
      %2815 = vmatmul.mubr.f32.gmra.mrb[0].mxu0 %v2713
      %v2816 = vpop.f32.mrb[0].mxu0
      %v2817 = vadd.f32 0.0, %v2816
      %v2818 = vpop.f32.mrb[0].mxu0
      %2819 = vmatprep.mubr.f32.mxu0 0.0
      %2820 = vmatmul.mubr.f32.gmra.mrb[0].mxu0 %v2716
      %v2821 = vpop.f32.mrb[0].mxu0
      %v2822 = vadd.f32 0.0, %v2821
      %v2823 = vpop.f32.mrb[0].mxu0
      %2824 = vmatprep.mubr.f32.mxu0 0.0
      %2825 = vmatmul.mubr.f32.gmra.mrb[0].mxu0 %v2719
      %v2826 = vpop.f32.mrb[0].mxu0
      %v2827 = vadd.f32 0.0, %v2826
      %v2828 = vpop.f32.mrb[0].mxu0
      %2829 = vmatprep.mubr.f32.mxu0 0.0
      %2830 = vmatmul.mubr.f32.gmra.mrb[0].mxu0 %v2722
      %v2831 = vpop.f32.mrb[0].mxu0
      %v2832 = vadd.f32 0.0, %v2831
      %v2833 = vpop.f32.mrb[0].mxu0
      %2834 = vmatprep.mubr.f32.mxu0 0.0
      %2835 = vmatmul.mubr.f32.gmra.mrb[0].mxu0 %v2725
      %v2836 = vpop.f32.mrb[0].mxu0
      %v2837 = vadd.f32 0.0, %v2836
      %v2838 = vpop.f32.mrb[0].mxu0
      %2839 = vdwg.mxu0
      %v2840 = vpack.c.bf16 %v2802, %v2797
      %v2841 = vpack.c.bf16 %v2812, %v2807
      %v2842 = vpack.c.bf16 %v2822, %v2817
      %v2843 = vpack.c.bf16 %v2832, %v2827
      %v2844 = vpack.c.bf16 %v2837, %v2837
      %s2845 = scalar_lea.vmem %s8, 8
      %v2846 = vld [vmem:[%s2845] sm:$0xf]
      %v2848 = vsel %vm824, %v2840, 0
      %v2851 = vsel %vm824, %v2841, 0
      %v2854 = vsel %vm824, %v2842, 0
      %v2857 = vsel %vm824, %v2843, 0
      %v2860 = vsel %vm824, %v2844, 0
      %v2863 = vsel %vm1971, %v2846, 0
      %2865 = vmatprep.subr.bf16.mxu0 0
      %2866 = vmatpush1.bf16.msra.mxu0 %v2863
      %2867 = vmatprep.subr.bf16.mxu0 0
      %2868 = vmatpush1.bf16.msra.mxu0 0
      %2869 = vmatprep.subr.bf16.mxu0 0
      %2870 = vmatpush1.bf16.msra.mxu0 0
      %2871 = vmatprep.subr.bf16.mxu0 0
      %2872 = vmatpush1.bf16.msra.mxu0 0
      %2873 = vmatprep.subr.bf16.mxu0 0
      %2874 = vmatpush1.bf16.msra.mxu0 0
      %2875 = vmatprep.subr.bf16.mxu0 0
      %2876 = vmatpush1.bf16.msra.mxu0 0
      %2877 = vmatprep.subr.bf16.mxu0 0
      %2878 = vmatpush1.bf16.msra.mxu0 0
      %2879 = vmatprep.subr.bf16.mxu0 0
      %2880 = vmatpush1.bf16.msra.mxu0 0
      %2881 = vmatprep.subr.bf16.mxu0 0
      %2882 = vmatpush1.bf16.msra.mxu0 0
      %2883 = vmatprep.subr.bf16.mxu0 0
      %2884 = vmatpush1.bf16.msra.mxu0 0
      %2885 = vmatprep.subr.bf16.mxu0 0
      %2886 = vmatpush1.bf16.msra.mxu0 0
      %2887 = vmatprep.subr.bf16.mxu0 0
      %2888 = vmatpush1.bf16.msra.mxu0 0
      %2889 = vmatprep.subr.bf16.mxu0 0
      %2890 = vmatpush1.bf16.msra.mxu0 0
      %2891 = vmatprep.subr.bf16.mxu0 0
      %2892 = vmatpush1.bf16.msra.mxu0 0
      %2893 = vmatprep.subr.bf16.mxu0 0
      %2894 = vmatpush1.bf16.msra.mxu0 0
      %2895 = vmatprep.subr.bf16.mxu0 0
      %2896 = vmatpush1.bf16.msra.mxu0 0
      %2897 = vmatprep.mubr.bf16.mxu0 0
      %2898 = vmatmul.mubr.bf16.gmra.mrb[0].mxu0 %v2848
      %v2899 = vpop.f32.mrb[0].mxu0
      %v2900 = vadd.f32 0.0, %v2899
      %v2901 = vpop.f32.mrb[0].mxu0
      %v2902 = vpop.f32.mrb[0].mxu0
      %v2903 = vadd.f32 0.0, %v2902
      %v2904 = vpop.f32.mrb[0].mxu0
      %2905 = vmatprep.mubr.bf16.mxu0 0
      %2906 = vmatmul.mubr.bf16.gmra.mrb[0].mxu0 %v2851
      %v2907 = vpop.f32.mrb[0].mxu0
      %v2908 = vadd.f32 0.0, %v2907
      %v2909 = vpop.f32.mrb[0].mxu0
      %v2910 = vpop.f32.mrb[0].mxu0
      %v2911 = vadd.f32 0.0, %v2910
      %v2912 = vpop.f32.mrb[0].mxu0
      %2913 = vmatprep.mubr.bf16.mxu0 0
      %2914 = vmatmul.mubr.bf16.gmra.mrb[0].mxu0 %v2854
      %v2915 = vpop.f32.mrb[0].mxu0
      %v2916 = vadd.f32 0.0, %v2915
      %v2917 = vpop.f32.mrb[0].mxu0
      %v2918 = vpop.f32.mrb[0].mxu0
      %v2919 = vadd.f32 0.0, %v2918
      %v2920 = vpop.f32.mrb[0].mxu0
      %2921 = vmatprep.mubr.bf16.mxu0 0
      %2922 = vmatmul.mubr.bf16.gmra.mrb[0].mxu0 %v2857
      %v2923 = vpop.f32.mrb[0].mxu0
      %v2924 = vadd.f32 0.0, %v2923
      %v2925 = vpop.f32.mrb[0].mxu0
      %v2926 = vpop.f32.mrb[0].mxu0
      %v2927 = vadd.f32 0.0, %v2926
      %v2928 = vpop.f32.mrb[0].mxu0
      %2929 = vmatprep.mubr.bf16.mxu0 0
      %2930 = vmatmul.mubr.bf16.gmra.mrb[0].mxu0 %v2860
      %v2931 = vpop.f32.mrb[0].mxu0
      %v2932 = vadd.f32 0.0, %v2931
      %v2933 = vpop.f32.mrb[0].mxu0
      %v2934 = vpop.f32.mrb[0].mxu0
      %v2935 = vpop.f32.mrb[0].mxu0
      %2936 = vdwg.mxu0
      %v2937 = vadd.f32 %v2100, %v2900
      %v2938 = vadd.f32 %v2103, %v2903
      %v2939 = vadd.f32 %v2108, %v2908
      %v2940 = vadd.f32 %v2111, %v2911
      %v2941 = vadd.f32 %v2116, %v2916
      %v2942 = vadd.f32 %v2119, %v2919
      %v2943 = vadd.f32 %v2124, %v2924
      %v2944 = vadd.f32 %v2127, %v2927
      %v2945 = vadd.f32 %v2132, %v2932
      %s2946 = scalar_lea.vmem %s2, 48
      %v2947 = vld [vmem:[%s2946] sm:$0xf]
      %v2948 = vld [vmem:[%s2946 + $0x4] sm:$0xf]
      %v2949 = vld [vmem:[%s2946 + $0x8] sm:$0xf]
      %v2950 = vld [vmem:[%s2946 + $0xc] sm:$0xf]
      %s2951 = scalar_lea.vmem %s5, 3
      %v2952 = vld [vmem:[%s2951] sm:$0x1]
      %v2954 = vlaneseq
      %v2955 = vshrl.u32 %v2954, 7
      %v2956 = vsub.s32 0, %v2955
      %v2957 = vrot.slane %v2952, %v2956
      %v2963 = vunpack.c.l.b16 %v2947
      %v2964 = vunpack.c.l.b16 %v2948
      %v2965 = vunpack.c.l.b16 %v2949
      %v2966 = vunpack.c.l.b16 %v2950
      %v2967 = vpack.c.b16 %v2964, %v2963
      %v2968 = vpack.c.b16 %v2966, %v2965
      %2971 = vmatprep.subr.bf16.mxu0 0
      %2972 = vmatpush1.bf16.msra.mxu0 %v2967
      %2973 = vmatprep.subr.bf16.mxu0 0
      %2974 = vmatpush1.bf16.msra.mxu0 %v2968
      %2975 = vmatprep.subr.bf16.mxu0 0
      %2976 = vmatpush1.bf16.msra.mxu0 0
      %2977 = vmatprep.subr.bf16.mxu0 0
      %2978 = vmatpush1.bf16.msra.mxu0 0
      %2979 = vmatprep.subr.bf16.mxu0 0
      %2980 = vmatpush1.bf16.msra.mxu0 0
      %2981 = vmatprep.subr.bf16.mxu0 0
      %2982 = vmatpush1.bf16.msra.mxu0 0
      %2983 = vmatprep.subr.bf16.mxu0 0
      %2984 = vmatpush1.bf16.msra.mxu0 0
      %2985 = vmatprep.subr.bf16.mxu0 0
      %2986 = vmatpush1.bf16.msra.mxu0 0
      %2987 = vmatprep.subr.bf16.mxu0 0
      %2988 = vmatpush1.bf16.msra.mxu0 0
      %2989 = vmatprep.subr.bf16.mxu0 0
      %2990 = vmatpush1.bf16.msra.mxu0 0
      %2991 = vmatprep.subr.bf16.mxu0 0
      %2992 = vmatpush1.bf16.msra.mxu0 0
      %2993 = vmatprep.subr.bf16.mxu0 0
      %2994 = vmatpush1.bf16.msra.mxu0 0
      %2995 = vmatprep.subr.bf16.mxu0 0
      %2996 = vmatpush1.bf16.msra.mxu0 0
      %2997 = vmatprep.subr.bf16.mxu0 0
      %2998 = vmatpush1.bf16.msra.mxu0 0
      %2999 = vmatprep.subr.bf16.mxu0 0
      %3000 = vmatpush1.bf16.msra.mxu0 0
      %3001 = vmatprep.subr.bf16.mxu0 0
      %3002 = vmatpush1.bf16.msra.mxu0 0
      %3003 = vmatprep.mubr.bf16.mxu0 0
      %3004 = vmatmul.mubr.bf16.gmra.mrb[0].mxu0 %v510
      %v3005 = vpop.f32.mrb[0].mxu0
      %v3006 = vadd.f32 %v2957, %v3005
      %v3007 = vpop.f32.mrb[0].mxu0
      %v3008 = vpop.f32.mrb[0].mxu0
      %v3009 = vadd.f32 %v2957, %v3008
      %v3010 = vpop.f32.mrb[0].mxu0
      %3011 = vmatprep.mubr.bf16.mxu0 0
      %3012 = vmatmul.mubr.bf16.gmra.mrb[0].mxu0 %v513
      %v3013 = vpop.f32.mrb[0].mxu0
      %v3014 = vadd.f32 %v2957, %v3013
      %v3015 = vpop.f32.mrb[0].mxu0
      %v3016 = vpop.f32.mrb[0].mxu0
      %v3017 = vadd.f32 %v2957, %v3016
      %v3018 = vpop.f32.mrb[0].mxu0
      %3019 = vmatprep.mubr.bf16.mxu0 0
      %3020 = vmatmul.mubr.bf16.gmra.mrb[0].mxu0 %v516
      %v3021 = vpop.f32.mrb[0].mxu0
      %v3022 = vadd.f32 %v2957, %v3021
      %v3023 = vpop.f32.mrb[0].mxu0
      %v3024 = vpop.f32.mrb[0].mxu0
      %v3025 = vadd.f32 %v2957, %v3024
      %v3026 = vpop.f32.mrb[0].mxu0
      %3027 = vmatprep.mubr.bf16.mxu0 0
      %3028 = vmatmul.mubr.bf16.gmra.mrb[0].mxu0 %v519
      %v3029 = vpop.f32.mrb[0].mxu0
      %v3030 = vadd.f32 %v2957, %v3029
      %v3031 = vpop.f32.mrb[0].mxu0
      %v3032 = vpop.f32.mrb[0].mxu0
      %v3033 = vadd.f32 %v2957, %v3032
      %v3034 = vpop.f32.mrb[0].mxu0
      %3035 = vmatprep.mubr.bf16.mxu0 0
      %3036 = vmatmul.mubr.bf16.gmra.mrb[0].mxu0 %v522
      %v3037 = vpop.f32.mrb[0].mxu0
      %v3038 = vadd.f32 %v2957, %v3037
      %v3039 = vpop.f32.mrb[0].mxu0
      %v3040 = vpop.f32.mrb[0].mxu0
      %v3041 = vpop.f32.mrb[0].mxu0
      %3042 = vdwg.mxu0
      %s3043 = scalar_lea.vmem %s3, 48
      %v3044 = vld [vmem:[%s3043] sm:$0xf]
      %v3045 = vld [vmem:[%s3043 + $0x4] sm:$0xf]
      %v3046 = vld [vmem:[%s3043 + $0x8] sm:$0xf]
      %v3047 = vld [vmem:[%s3043 + $0xc] sm:$0xf]
      %s3048 = scalar_lea.vmem %s6, 3
      %v3049 = vld [vmem:[%s3048] sm:$0x1]
      %v3051 = vlaneseq
      %v3052 = vshrl.u32 %v3051, 7
      %v3053 = vsub.s32 0, %v3052
      %v3054 = vrot.slane %v3049, %v3053
      %v3060 = vunpack.c.l.b16 %v3044
      %v3061 = vunpack.c.l.b16 %v3045
      %v3062 = vunpack.c.l.b16 %v3046
      %v3063 = vunpack.c.l.b16 %v3047
      %v3064 = vpack.c.b16 %v3061, %v3060
      %v3065 = vpack.c.b16 %v3063, %v3062
      %3068 = vmatprep.subr.bf16.mxu0 0
      %3069 = vmatpush1.bf16.msra.mxu0 %v3064
      %3070 = vmatprep.subr.bf16.mxu0 0
      %3071 = vmatpush1.bf16.msra.mxu0 %v3065
      %3072 = vmatprep.subr.bf16.mxu0 0
      %3073 = vmatpush1.bf16.msra.mxu0 0
      %3074 = vmatprep.subr.bf16.mxu0 0
      %3075 = vmatpush1.bf16.msra.mxu0 0
      %3076 = vmatprep.subr.bf16.mxu0 0
      %3077 = vmatpush1.bf16.msra.mxu0 0
      %3078 = vmatprep.subr.bf16.mxu0 0
      %3079 = vmatpush1.bf16.msra.mxu0 0
      %3080 = vmatprep.subr.bf16.mxu0 0
      %3081 = vmatpush1.bf16.msra.mxu0 0
      %3082 = vmatprep.subr.bf16.mxu0 0
      %3083 = vmatpush1.bf16.msra.mxu0 0
      %3084 = vmatprep.subr.bf16.mxu0 0
      %3085 = vmatpush1.bf16.msra.mxu0 0
      %3086 = vmatprep.subr.bf16.mxu0 0
      %3087 = vmatpush1.bf16.msra.mxu0 0
      %3088 = vmatprep.subr.bf16.mxu0 0
      %3089 = vmatpush1.bf16.msra.mxu0 0
      %3090 = vmatprep.subr.bf16.mxu0 0
      %3091 = vmatpush1.bf16.msra.mxu0 0
      %3092 = vmatprep.subr.bf16.mxu0 0
      %3093 = vmatpush1.bf16.msra.mxu0 0
      %3094 = vmatprep.subr.bf16.mxu0 0
      %3095 = vmatpush1.bf16.msra.mxu0 0
      %3096 = vmatprep.subr.bf16.mxu0 0
      %3097 = vmatpush1.bf16.msra.mxu0 0
      %3098 = vmatprep.subr.bf16.mxu0 0
      %3099 = vmatpush1.bf16.msra.mxu0 0
      %3100 = vmatprep.mubr.bf16.mxu0 0
      %3101 = vmatmul.mubr.bf16.gmra.mrb[0].mxu0 %v643
      %v3102 = vpop.f32.mrb[0].mxu0
      %v3103 = vadd.f32 %v3054, %v3102
      %v3104 = vpop.f32.mrb[0].mxu0
      %v3105 = vpop.f32.mrb[0].mxu0
      %v3106 = vadd.f32 %v3054, %v3105
      %v3107 = vpop.f32.mrb[0].mxu0
      %3108 = vmatprep.mubr.bf16.mxu0 0
      %3109 = vmatmul.mubr.bf16.gmra.mrb[0].mxu0 %v646
      %v3110 = vpop.f32.mrb[0].mxu0
      %v3111 = vadd.f32 %v3054, %v3110
      %v3112 = vpop.f32.mrb[0].mxu0
      %v3113 = vpop.f32.mrb[0].mxu0
      %v3114 = vadd.f32 %v3054, %v3113
      %v3115 = vpop.f32.mrb[0].mxu0
      %3116 = vmatprep.mubr.bf16.mxu0 0
      %3117 = vmatmul.mubr.bf16.gmra.mrb[0].mxu0 %v649
      %v3118 = vpop.f32.mrb[0].mxu0
      %v3119 = vadd.f32 %v3054, %v3118
      %v3120 = vpop.f32.mrb[0].mxu0
      %v3121 = vpop.f32.mrb[0].mxu0
      %v3122 = vadd.f32 %v3054, %v3121
      %v3123 = vpop.f32.mrb[0].mxu0
      %3124 = vmatprep.mubr.bf16.mxu0 0
      %3125 = vmatmul.mubr.bf16.gmra.mrb[0].mxu0 %v652
      %v3126 = vpop.f32.mrb[0].mxu0
      %v3127 = vadd.f32 %v3054, %v3126
      %v3128 = vpop.f32.mrb[0].mxu0
      %v3129 = vpop.f32.mrb[0].mxu0
      %v3130 = vadd.f32 %v3054, %v3129
      %v3131 = vpop.f32.mrb[0].mxu0
      %3132 = vmatprep.mubr.bf16.mxu0 0
      %3133 = vmatmul.mubr.bf16.gmra.mrb[0].mxu0 %v655
      %v3134 = vpop.f32.mrb[0].mxu0
      %v3135 = vadd.f32 %v3054, %v3134
      %v3136 = vpop.f32.mrb[0].mxu0
      %v3137 = vpop.f32.mrb[0].mxu0
      %v3138 = vpop.f32.mrb[0].mxu0
      %3139 = vdwg.mxu0
      %s3140 = scalar_lea.vmem %s4, 48
      %v3141 = vld [vmem:[%s3140] sm:$0xf]
      %v3142 = vld [vmem:[%s3140 + $0x4] sm:$0xf]
      %v3143 = vld [vmem:[%s3140 + $0x8] sm:$0xf]
      %v3144 = vld [vmem:[%s3140 + $0xc] sm:$0xf]
      %s3145 = scalar_lea.vmem %s7, 3
      %v3146 = vld [vmem:[%s3145] sm:$0x1]
      %v3148 = vlaneseq
      %v3149 = vshrl.u32 %v3148, 7
      %v3150 = vsub.s32 0, %v3149
      %v3151 = vrot.slane %v3146, %v3150
      %v3157 = vunpack.c.l.b16 %v3141
      %v3158 = vunpack.c.l.b16 %v3142
      %v3159 = vunpack.c.l.b16 %v3143
      %v3160 = vunpack.c.l.b16 %v3144
      %v3161 = vpack.c.b16 %v3158, %v3157
      %v3162 = vpack.c.b16 %v3160, %v3159
      %3165 = vmatprep.subr.bf16.mxu0 0
      %3166 = vmatpush1.bf16.msra.mxu0 %v3161
      %3167 = vmatprep.subr.bf16.mxu0 0
      %3168 = vmatpush1.bf16.msra.mxu0 %v3162
      %3169 = vmatprep.subr.bf16.mxu0 0
      %3170 = vmatpush1.bf16.msra.mxu0 0
      %3171 = vmatprep.subr.bf16.mxu0 0
      %3172 = vmatpush1.bf16.msra.mxu0 0
      %3173 = vmatprep.subr.bf16.mxu0 0
      %3174 = vmatpush1.bf16.msra.mxu0 0
      %3175 = vmatprep.subr.bf16.mxu0 0
      %3176 = vmatpush1.bf16.msra.mxu0 0
      %3177 = vmatprep.subr.bf16.mxu0 0
      %3178 = vmatpush1.bf16.msra.mxu0 0
      %3179 = vmatprep.subr.bf16.mxu0 0
      %3180 = vmatpush1.bf16.msra.mxu0 0
      %3181 = vmatprep.subr.bf16.mxu0 0
      %3182 = vmatpush1.bf16.msra.mxu0 0
      %3183 = vmatprep.subr.bf16.mxu0 0
      %3184 = vmatpush1.bf16.msra.mxu0 0
      %3185 = vmatprep.subr.bf16.mxu0 0
      %3186 = vmatpush1.bf16.msra.mxu0 0
      %3187 = vmatprep.subr.bf16.mxu0 0
      %3188 = vmatpush1.bf16.msra.mxu0 0
      %3189 = vmatprep.subr.bf16.mxu0 0
      %3190 = vmatpush1.bf16.msra.mxu0 0
      %3191 = vmatprep.subr.bf16.mxu0 0
      %3192 = vmatpush1.bf16.msra.mxu0 0
      %3193 = vmatprep.subr.bf16.mxu0 0
      %3194 = vmatpush1.bf16.msra.mxu0 0
      %3195 = vmatprep.subr.bf16.mxu0 0
      %3196 = vmatpush1.bf16.msra.mxu0 0
      %3197 = vmatprep.mubr.bf16.mxu0 0
      %3198 = vmatmul.mubr.bf16.gmra.mrb[0].mxu0 %v643
      %v3199 = vpop.f32.mrb[0].mxu0
      %v3200 = vadd.f32 %v3151, %v3199
      %v3201 = vpop.f32.mrb[0].mxu0
      %v3202 = vpop.f32.mrb[0].mxu0
      %v3203 = vadd.f32 %v3151, %v3202
      %v3204 = vpop.f32.mrb[0].mxu0
      %3205 = vmatprep.mubr.bf16.mxu0 0
      %3206 = vmatmul.mubr.bf16.gmra.mrb[0].mxu0 %v646
      %v3207 = vpop.f32.mrb[0].mxu0
      %v3208 = vadd.f32 %v3151, %v3207
      %v3209 = vpop.f32.mrb[0].mxu0
      %v3210 = vpop.f32.mrb[0].mxu0
      %v3211 = vadd.f32 %v3151, %v3210
      %v3212 = vpop.f32.mrb[0].mxu0
      %3213 = vmatprep.mubr.bf16.mxu0 0
      %3214 = vmatmul.mubr.bf16.gmra.mrb[0].mxu0 %v649
      %v3215 = vpop.f32.mrb[0].mxu0
      %v3216 = vadd.f32 %v3151, %v3215
      %v3217 = vpop.f32.mrb[0].mxu0
      %v3218 = vpop.f32.mrb[0].mxu0
      %v3219 = vadd.f32 %v3151, %v3218
      %v3220 = vpop.f32.mrb[0].mxu0
      %3221 = vmatprep.mubr.bf16.mxu0 0
      %3222 = vmatmul.mubr.bf16.gmra.mrb[0].mxu0 %v652
      %v3223 = vpop.f32.mrb[0].mxu0
      %v3224 = vadd.f32 %v3151, %v3223
      %v3225 = vpop.f32.mrb[0].mxu0
      %v3226 = vpop.f32.mrb[0].mxu0
      %v3227 = vadd.f32 %v3151, %v3226
      %v3228 = vpop.f32.mrb[0].mxu0
      %3229 = vmatprep.mubr.bf16.mxu0 0
      %3230 = vmatmul.mubr.bf16.gmra.mrb[0].mxu0 %v655
      %v3231 = vpop.f32.mrb[0].mxu0
      %v3232 = vadd.f32 %v3151, %v3231
      %v3233 = vpop.f32.mrb[0].mxu0
      %v3234 = vpop.f32.mrb[0].mxu0
      %v3235 = vpop.f32.mrb[0].mxu0
      %3236 = vdwg.mxu0
      %v3238 = vsel %vm824, %v3006, 0
      %v3241 = vsel %vm824, %v3009, 0
      %v3244 = vsel %vm824, %v3014, 0
      %v3247 = vsel %vm824, %v3017, 0
      %v3250 = vsel %vm824, %v3022, 0
      %v3253 = vsel %vm824, %v3025, 0
      %v3256 = vsel %vm824, %v3030, 0
      %v3259 = vsel %vm824, %v3033, 0
      %v3262 = vsel %vm824, %v3038, 0
      %v3265 = vsel %vm824, %v3103, 0
      %v3268 = vsel %vm824, %v3106, 0
      %v3271 = vsel %vm824, %v3111, 0
      %v3274 = vsel %vm824, %v3114, 0
      %v3277 = vsel %vm824, %v3119, 0
      %v3280 = vsel %vm824, %v3122, 0
      %v3283 = vsel %vm824, %v3127, 0
      %v3286 = vsel %vm824, %v3130, 0
      %v3289 = vsel %vm824, %v3135, 0
      %3291 = vmatprep.subr.mxu0 0.0
      %3292 = vmatpush1.xpose.msra.mxu0 %v3265
      %3293 = vmatprep.subr.mxu0 0.0
      %3294 = vmatpush1.xpose.msra.mxu0 %v3268
      %3295 = vmatprep.subr.mxu0 0.0
      %3296 = vmatpush1.xpose.msra.mxu0 %v3271
      %3297 = vmatprep.subr.mxu0 0.0
      %3298 = vmatpush1.xpose.msra.mxu0 %v3274
      %3299 = vmatprep.subr.mxu0 0.0
      %3300 = vmatpush1.xpose.msra.mxu0 %v3277
      %3301 = vmatprep.subr.mxu0 0.0
      %3302 = vmatpush1.xpose.msra.mxu0 %v3280
      %3303 = vmatprep.subr.mxu0 0.0
      %3304 = vmatpush1.xpose.msra.mxu0 %v3283
      %3305 = vmatprep.subr.mxu0 0.0
      %3306 = vmatpush1.xpose.msra.mxu0 %v3286
      %3307 = vmatprep.subr.mxu0 0.0
      %3308 = vmatpush1.xpose.msra.mxu0 %v3289
      %3309 = vmatprep.subr.mxu0 0.0
      %3310 = vmatpush1.xpose.msra.mxu0 0.0
      %3311 = vmatprep.subr.mxu0 0.0
      %3312 = vmatpush1.xpose.msra.mxu0 0.0
      %3313 = vmatprep.subr.mxu0 0.0
      %3314 = vmatpush1.xpose.msra.mxu0 0.0
      %3315 = vmatprep.subr.mxu0 0.0
      %3316 = vmatpush1.xpose.msra.mxu0 0.0
      %3317 = vmatprep.subr.mxu0 0.0
      %3318 = vmatpush1.xpose.msra.mxu0 0.0
      %3319 = vmatprep.subr.mxu0 0.0
      %3320 = vmatpush1.xpose.msra.mxu0 0.0
      %3321 = vmatprep.subr.mxu0 0.0
      %3322 = vmatpush1.xpose.msra.mxu0 0.0
      %3323 = vmatprep.subr.mxu0 0.0
      %3324 = vmatpush1.xpose.msra.mxu0 0.0
      %3325 = vmatprep.subr.mxu0 0.0
      %3326 = vmatpush1.xpose.msra.mxu0 0.0
      %3327 = vmatprep.subr.mxu0 0.0
      %3328 = vmatpush1.xpose.msra.mxu0 0.0
      %3329 = vmatprep.subr.mxu0 0.0
      %3330 = vmatpush1.xpose.msra.mxu0 0.0
      %3331 = vmatprep.subr.mxu0 0.0
      %3332 = vmatpush1.xpose.msra.mxu0 0.0
      %3333 = vmatprep.subr.mxu0 0.0
      %3334 = vmatpush1.xpose.msra.mxu0 0.0
      %3335 = vmatprep.subr.mxu0 0.0
      %3336 = vmatpush1.xpose.msra.mxu0 0.0
      %3337 = vmatprep.subr.mxu0 0.0
      %3338 = vmatpush1.xpose.msra.mxu0 0.0
      %3339 = vmatprep.subr.mxu0 0.0
      %3340 = vmatpush1.xpose.msra.mxu0 0.0
      %3341 = vmatprep.subr.mxu0 0.0
      %3342 = vmatpush1.xpose.msra.mxu0 0.0
      %3343 = vmatprep.subr.mxu0 0.0
      %3344 = vmatpush1.xpose.msra.mxu0 0.0
      %3345 = vmatprep.subr.mxu0 0.0
      %3346 = vmatpush1.xpose.msra.mxu0 0.0
      %3347 = vmatprep.subr.mxu0 0.0
      %3348 = vmatpush1.xpose.msra.mxu0 0.0
      %3349 = vmatprep.subr.mxu0 0.0
      %3350 = vmatpush1.xpose.msra.mxu0 0.0
      %3351 = vmatprep.subr.mxu0 0.0
      %3352 = vmatpush1.xpose.msra.mxu0 0.0
      %3353 = vmatprep.subr.mxu0 0.0
      %3354 = vmatpush1.xpose.msra.mxu0 0.0
      %3355 = vmatprep.mubr.f32.mxu0 0.0
      %3356 = vmatmul.mubr.f32.gmra.mrb[0].mxu0 %v3238
      %v3357 = vpop.f32.mrb[0].mxu0
      %v3358 = vadd.f32 0.0, %v3357
      %v3359 = vpop.f32.mrb[0].mxu0
      %3360 = vmatprep.mubr.f32.mxu0 0.0
      %3361 = vmatmul.mubr.f32.gmra.mrb[0].mxu0 %v3241
      %v3362 = vpop.f32.mrb[0].mxu0
      %v3363 = vadd.f32 0.0, %v3362
      %v3364 = vpop.f32.mrb[0].mxu0
      %3365 = vmatprep.mubr.f32.mxu0 0.0
      %3366 = vmatmul.mubr.f32.gmra.mrb[0].mxu0 %v3244
      %v3367 = vpop.f32.mrb[0].mxu0
      %v3368 = vadd.f32 0.0, %v3367
      %v3369 = vpop.f32.mrb[0].mxu0
      %3370 = vmatprep.mubr.f32.mxu0 0.0
      %3371 = vmatmul.mubr.f32.gmra.mrb[0].mxu0 %v3247
      %v3372 = vpop.f32.mrb[0].mxu0
      %v3373 = vadd.f32 0.0, %v3372
      %v3374 = vpop.f32.mrb[0].mxu0
      %3375 = vmatprep.mubr.f32.mxu0 0.0
      %3376 = vmatmul.mubr.f32.gmra.mrb[0].mxu0 %v3250
      %v3377 = vpop.f32.mrb[0].mxu0
      %v3378 = vadd.f32 0.0, %v3377
      %v3379 = vpop.f32.mrb[0].mxu0
      %3380 = vmatprep.mubr.f32.mxu0 0.0
      %3381 = vmatmul.mubr.f32.gmra.mrb[0].mxu0 %v3253
      %v3382 = vpop.f32.mrb[0].mxu0
      %v3383 = vadd.f32 0.0, %v3382
      %v3384 = vpop.f32.mrb[0].mxu0
      %3385 = vmatprep.mubr.f32.mxu0 0.0
      %3386 = vmatmul.mubr.f32.gmra.mrb[0].mxu0 %v3256
      %v3387 = vpop.f32.mrb[0].mxu0
      %v3388 = vadd.f32 0.0, %v3387
      %v3389 = vpop.f32.mrb[0].mxu0
      %3390 = vmatprep.mubr.f32.mxu0 0.0
      %3391 = vmatmul.mubr.f32.gmra.mrb[0].mxu0 %v3259
      %v3392 = vpop.f32.mrb[0].mxu0
      %v3393 = vadd.f32 0.0, %v3392
      %v3394 = vpop.f32.mrb[0].mxu0
      %3395 = vmatprep.mubr.f32.mxu0 0.0
      %3396 = vmatmul.mubr.f32.gmra.mrb[0].mxu0 %v3262
      %v3397 = vpop.f32.mrb[0].mxu0
      %v3398 = vadd.f32 0.0, %v3397
      %v3399 = vpop.f32.mrb[0].mxu0
      %3400 = vdwg.mxu0
      %v3401 = vmul.f32 %v3358, 0.35355338
      %v3402 = vmul.f32 %v3363, 0.35355338
      %v3403 = vmul.f32 %v3368, 0.35355338
      %v3404 = vmul.f32 %v3373, 0.35355338
      %v3405 = vmul.f32 %v3378, 0.35355338
      %v3406 = vmul.f32 %v3383, 0.35355338
      %v3407 = vmul.f32 %v3388, 0.35355338
      %v3408 = vmul.f32 %v3393, 0.35355338
      %v3409 = vmul.f32 %v3398, 0.35355338
      %v3410 = vsel %vm998, %v3401, -inf
      %3411 = vmax.xlane.f32.xlu0 %v3410
      %v3412 = vpop.xlane.xlu0 %3411
      %v3413 = vsel %vm998, %v3402, -inf
      %3414 = vmax.xlane.f32.xlu0 %v3413
      %v3415 = vpop.xlane.xlu0 %3414
      %v3416 = vsel %vm998, %v3403, -inf
      %3417 = vmax.xlane.f32.xlu0 %v3416
      %v3418 = vpop.xlane.xlu0 %3417
      %v3419 = vsel %vm998, %v3404, -inf
      %3420 = vmax.xlane.f32.xlu0 %v3419
      %v3421 = vpop.xlane.xlu0 %3420
      %v3422 = vsel %vm998, %v3405, -inf
      %3423 = vmax.xlane.f32.xlu0 %v3422
      %v3424 = vpop.xlane.xlu0 %3423
      %v3425 = vsel %vm998, %v3406, -inf
      %3426 = vmax.xlane.f32.xlu0 %v3425
      %v3427 = vpop.xlane.xlu0 %3426
      %v3428 = vsel %vm998, %v3407, -inf
      %3429 = vmax.xlane.f32.xlu0 %v3428
      %v3430 = vpop.xlane.xlu0 %3429
      %v3431 = vsel %vm998, %v3408, -inf
      %3432 = vmax.xlane.f32.xlu0 %v3431
      %v3433 = vpop.xlane.xlu0 %3432
      %v3434 = vsel %vm1023, %v3409, -inf
      %3435 = vmax.xlane.f32.xlu0 %v3434
      %v3436 = vpop.xlane.xlu0 %3435
      %v3437 = vsub.f32 %v3401, %v3412
      %v3438 = vsub.f32 %v3402, %v3415
      %v3439 = vsub.f32 %v3403, %v3418
      %v3440 = vsub.f32 %v3404, %v3421
      %v3441 = vsub.f32 %v3405, %v3424
      %v3442 = vsub.f32 %v3406, %v3427
      %v3443 = vsub.f32 %v3407, %v3430
      %v3444 = vsub.f32 %v3408, %v3433
      %v3445 = vsub.f32 %v3409, %v3436
      %v3446 = vmul.f32 %v3437, 1.442695
      %v3447 = vpow.pop %v3446
      %v3448 = vmul.f32 %v3438, 1.442695
      %v3449 = vpow.pop %v3448
      %v3450 = vmul.f32 %v3439, 1.442695
      %v3451 = vpow.pop %v3450
      %v3452 = vmul.f32 %v3440, 1.442695
      %v3453 = vpow.pop %v3452
      %v3454 = vmul.f32 %v3441, 1.442695
      %v3455 = vpow.pop %v3454
      %v3456 = vmul.f32 %v3442, 1.442695
      %v3457 = vpow.pop %v3456
      %v3458 = vmul.f32 %v3443, 1.442695
      %v3459 = vpow.pop %v3458
      %v3460 = vmul.f32 %v3444, 1.442695
      %v3461 = vpow.pop %v3460
      %v3462 = vmul.f32 %v3445, 1.442695
      %v3463 = vpow.pop %v3462
      %v3464 = vsel %vm998, %v3447, 0.0
      %3465 = vadd.xlane.f32.xlu0 %v3464
      %v3466 = vpop.xlane.xlu0 %3465
      %v3467 = vsel %vm998, %v3449, 0.0
      %3468 = vadd.xlane.f32.xlu0 %v3467
      %v3469 = vpop.xlane.xlu0 %3468
      %v3470 = vsel %vm998, %v3451, 0.0
      %3471 = vadd.xlane.f32.xlu0 %v3470
      %v3472 = vpop.xlane.xlu0 %3471
      %v3473 = vsel %vm998, %v3453, 0.0
      %3474 = vadd.xlane.f32.xlu0 %v3473
      %v3475 = vpop.xlane.xlu0 %3474
      %v3476 = vsel %vm998, %v3455, 0.0
      %3477 = vadd.xlane.f32.xlu0 %v3476
      %v3478 = vpop.xlane.xlu0 %3477
      %v3479 = vsel %vm998, %v3457, 0.0
      %3480 = vadd.xlane.f32.xlu0 %v3479
      %v3481 = vpop.xlane.xlu0 %3480
      %v3482 = vsel %vm998, %v3459, 0.0
      %3483 = vadd.xlane.f32.xlu0 %v3482
      %v3484 = vpop.xlane.xlu0 %3483
      %v3485 = vsel %vm998, %v3461, 0.0
      %3486 = vadd.xlane.f32.xlu0 %v3485
      %v3487 = vpop.xlane.xlu0 %3486
      %v3488 = vsel %vm1023, %v3463, 0.0
      %3489 = vadd.xlane.f32.xlu0 %v3488
      %v3490 = vpop.xlane.xlu0 %3489
      %v3491 = vrcp.pop %v3466
      %v3492 = vrcp.pop %v3469
      %v3493 = vrcp.pop %v3472
      %v3494 = vrcp.pop %v3475
      %v3495 = vrcp.pop %v3478
      %v3496 = vrcp.pop %v3481
      %v3497 = vrcp.pop %v3484
      %v3498 = vrcp.pop %v3487
      %v3499 = vrcp.pop %v3490
      %v3500 = vmul.f32 %v3447, %v3491
      %v3501 = vmul.f32 %v3449, %v3492
      %v3502 = vmul.f32 %v3451, %v3493
      %v3503 = vmul.f32 %v3453, %v3494
      %v3504 = vmul.f32 %v3455, %v3495
      %v3505 = vmul.f32 %v3457, %v3496
      %v3506 = vmul.f32 %v3459, %v3497
      %v3507 = vmul.f32 %v3461, %v3498
      %v3508 = vmul.f32 %v3463, %v3499
      %v3510 = vsel %vm998, %v3500, 0
      %v3513 = vsel %vm998, %v3501, 0
      %v3516 = vsel %vm998, %v3502, 0
      %v3519 = vsel %vm998, %v3503, 0
      %v3522 = vsel %vm998, %v3504, 0
      %v3525 = vsel %vm998, %v3505, 0
      %v3528 = vsel %vm998, %v3506, 0
      %v3531 = vsel %vm998, %v3507, 0
      %v3534 = vsel %vm998, %v3508, 0
      %v3537 = vsel %vm1126, %v3232, 0
      %3539 = vmatprep.subr.mxu0 0.0
      %3540 = vmatpush1.msra.mxu0 %v3200
      %3541 = vmatprep.subr.mxu0 0.0
      %3542 = vmatpush1.msra.mxu0 %v3203
      %3543 = vmatprep.subr.mxu0 0.0
      %3544 = vmatpush1.msra.mxu0 %v3208
      %3545 = vmatprep.subr.mxu0 0.0
      %3546 = vmatpush1.msra.mxu0 %v3211
      %3547 = vmatprep.subr.mxu0 0.0
      %3548 = vmatpush1.msra.mxu0 %v3216
      %3549 = vmatprep.subr.mxu0 0.0
      %3550 = vmatpush1.msra.mxu0 %v3219
      %3551 = vmatprep.subr.mxu0 0.0
      %3552 = vmatpush1.msra.mxu0 %v3224
      %3553 = vmatprep.subr.mxu0 0.0
      %3554 = vmatpush1.msra.mxu0 %v3227
      %3555 = vmatprep.subr.mxu0 0.0
      %3556 = vmatpush1.msra.mxu0 %v3537
      %3557 = vmatprep.subr.mxu0 0.0
      %3558 = vmatpush1.msra.mxu0 0.0
      %3559 = vmatprep.subr.mxu0 0.0
      %3560 = vmatpush1.msra.mxu0 0.0
      %3561 = vmatprep.subr.mxu0 0.0
      %3562 = vmatpush1.msra.mxu0 0.0
      %3563 = vmatprep.subr.mxu0 0.0
      %3564 = vmatpush1.msra.mxu0 0.0
      %3565 = vmatprep.subr.mxu0 0.0
      %3566 = vmatpush1.msra.mxu0 0.0
      %3567 = vmatprep.subr.mxu0 0.0
      %3568 = vmatpush1.msra.mxu0 0.0
      %3569 = vmatprep.subr.mxu0 0.0
      %3570 = vmatpush1.msra.mxu0 0.0
      %3571 = vmatprep.subr.mxu0 0.0
      %3572 = vmatpush1.msra.mxu0 0.0
      %3573 = vmatprep.subr.mxu0 0.0
      %3574 = vmatpush1.msra.mxu0 0.0
      %3575 = vmatprep.subr.mxu0 0.0
      %3576 = vmatpush1.msra.mxu0 0.0
      %3577 = vmatprep.subr.mxu0 0.0
      %3578 = vmatpush1.msra.mxu0 0.0
      %3579 = vmatprep.subr.mxu0 0.0
      %3580 = vmatpush1.msra.mxu0 0.0
      %3581 = vmatprep.subr.mxu0 0.0
      %3582 = vmatpush1.msra.mxu0 0.0
      %3583 = vmatprep.subr.mxu0 0.0
      %3584 = vmatpush1.msra.mxu0 0.0
      %3585 = vmatprep.subr.mxu0 0.0
      %3586 = vmatpush1.msra.mxu0 0.0
      %3587 = vmatprep.subr.mxu0 0.0
      %3588 = vmatpush1.msra.mxu0 0.0
      %3589 = vmatprep.subr.mxu0 0.0
      %3590 = vmatpush1.msra.mxu0 0.0
      %3591 = vmatprep.subr.mxu0 0.0
      %3592 = vmatpush1.msra.mxu0 0.0
      %3593 = vmatprep.subr.mxu0 0.0
      %3594 = vmatpush1.msra.mxu0 0.0
      %3595 = vmatprep.subr.mxu0 0.0
      %3596 = vmatpush1.msra.mxu0 0.0
      %3597 = vmatprep.subr.mxu0 0.0
      %3598 = vmatpush1.msra.mxu0 0.0
      %3599 = vmatprep.subr.mxu0 0.0
      %3600 = vmatpush1.msra.mxu0 0.0
      %3601 = vmatprep.subr.mxu0 0.0
      %3602 = vmatpush1.msra.mxu0 0.0
      %3603 = vmatprep.mubr.f32.mxu0 0.0
      %3604 = vmatmul.mubr.f32.gmra.mrb[0].mxu0 %v3510
      %v3605 = vpop.f32.mrb[0].mxu0
      %v3606 = vadd.f32 0.0, %v3605
      %v3607 = vpop.f32.mrb[0].mxu0
      %3608 = vmatprep.mubr.f32.mxu0 0.0
      %3609 = vmatmul.mubr.f32.gmra.mrb[0].mxu0 %v3513
      %v3610 = vpop.f32.mrb[0].mxu0
      %v3611 = vadd.f32 0.0, %v3610
      %v3612 = vpop.f32.mrb[0].mxu0
      %3613 = vmatprep.mubr.f32.mxu0 0.0
      %3614 = vmatmul.mubr.f32.gmra.mrb[0].mxu0 %v3516
      %v3615 = vpop.f32.mrb[0].mxu0
      %v3616 = vadd.f32 0.0, %v3615
      %v3617 = vpop.f32.mrb[0].mxu0
      %3618 = vmatprep.mubr.f32.mxu0 0.0
      %3619 = vmatmul.mubr.f32.gmra.mrb[0].mxu0 %v3519
      %v3620 = vpop.f32.mrb[0].mxu0
      %v3621 = vadd.f32 0.0, %v3620
      %v3622 = vpop.f32.mrb[0].mxu0
      %3623 = vmatprep.mubr.f32.mxu0 0.0
      %3624 = vmatmul.mubr.f32.gmra.mrb[0].mxu0 %v3522
      %v3625 = vpop.f32.mrb[0].mxu0
      %v3626 = vadd.f32 0.0, %v3625
      %v3627 = vpop.f32.mrb[0].mxu0
      %3628 = vmatprep.mubr.f32.mxu0 0.0
      %3629 = vmatmul.mubr.f32.gmra.mrb[0].mxu0 %v3525
      %v3630 = vpop.f32.mrb[0].mxu0
      %v3631 = vadd.f32 0.0, %v3630
      %v3632 = vpop.f32.mrb[0].mxu0
      %3633 = vmatprep.mubr.f32.mxu0 0.0
      %3634 = vmatmul.mubr.f32.gmra.mrb[0].mxu0 %v3528
      %v3635 = vpop.f32.mrb[0].mxu0
      %v3636 = vadd.f32 0.0, %v3635
      %v3637 = vpop.f32.mrb[0].mxu0
      %3638 = vmatprep.mubr.f32.mxu0 0.0
      %3639 = vmatmul.mubr.f32.gmra.mrb[0].mxu0 %v3531
      %v3640 = vpop.f32.mrb[0].mxu0
      %v3641 = vadd.f32 0.0, %v3640
      %v3642 = vpop.f32.mrb[0].mxu0
      %3643 = vmatprep.mubr.f32.mxu0 0.0
      %3644 = vmatmul.mubr.f32.gmra.mrb[0].mxu0 %v3534
      %v3645 = vpop.f32.mrb[0].mxu0
      %v3646 = vadd.f32 0.0, %v3645
      %v3647 = vpop.f32.mrb[0].mxu0
      %3648 = vdwg.mxu0
      %v3649 = vpack.c.bf16 %v3611, %v3606
      %v3650 = vpack.c.bf16 %v3621, %v3616
      %v3651 = vpack.c.bf16 %v3631, %v3626
      %v3652 = vpack.c.bf16 %v3641, %v3636
      %v3653 = vpack.c.bf16 %v3646, %v3646
      %s3654 = scalar_lea.vmem %s8, 12
      %v3655 = vld [vmem:[%s3654] sm:$0xf]
      %v3657 = vsel %vm824, %v3649, 0
      %v3660 = vsel %vm824, %v3650, 0
      %v3663 = vsel %vm824, %v3651, 0
      %v3666 = vsel %vm824, %v3652, 0
      %v3669 = vsel %vm824, %v3653, 0
      %v3672 = vsel %vm1971, %v3655, 0
      %3674 = vmatprep.subr.bf16.mxu0 0
      %3675 = vmatpush1.bf16.msra.mxu0 %v3672
      %3676 = vmatprep.subr.bf16.mxu0 0
      %3677 = vmatpush1.bf16.msra.mxu0 0
      %3678 = vmatprep.subr.bf16.mxu0 0
      %3679 = vmatpush1.bf16.msra.mxu0 0
      %3680 = vmatprep.subr.bf16.mxu0 0
      %3681 = vmatpush1.bf16.msra.mxu0 0
      %3682 = vmatprep.subr.bf16.mxu0 0
      %3683 = vmatpush1.bf16.msra.mxu0 0
      %3684 = vmatprep.subr.bf16.mxu0 0
      %3685 = vmatpush1.bf16.msra.mxu0 0
      %3686 = vmatprep.subr.bf16.mxu0 0
      %3687 = vmatpush1.bf16.msra.mxu0 0
      %3688 = vmatprep.subr.bf16.mxu0 0
      %3689 = vmatpush1.bf16.msra.mxu0 0
      %3690 = vmatprep.subr.bf16.mxu0 0
      %3691 = vmatpush1.bf16.msra.mxu0 0
      %3692 = vmatprep.subr.bf16.mxu0 0
      %3693 = vmatpush1.bf16.msra.mxu0 0
      %3694 = vmatprep.subr.bf16.mxu0 0
      %3695 = vmatpush1.bf16.msra.mxu0 0
      %3696 = vmatprep.subr.bf16.mxu0 0
      %3697 = vmatpush1.bf16.msra.mxu0 0
      %3698 = vmatprep.subr.bf16.mxu0 0
      %3699 = vmatpush1.bf16.msra.mxu0 0
      %3700 = vmatprep.subr.bf16.mxu0 0
      %3701 = vmatpush1.bf16.msra.mxu0 0
      %3702 = vmatprep.subr.bf16.mxu0 0
      %3703 = vmatpush1.bf16.msra.mxu0 0
      %3704 = vmatprep.subr.bf16.mxu0 0
      %3705 = vmatpush1.bf16.msra.mxu0 0
      %3706 = vmatprep.mubr.bf16.mxu0 0
      %3707 = vmatmul.mubr.bf16.gmra.mrb[0].mxu0 %v3657
      %v3708 = vpop.f32.mrb[0].mxu0
      %v3709 = vadd.f32 0.0, %v3708
      %v3710 = vpop.f32.mrb[0].mxu0
      %v3711 = vpop.f32.mrb[0].mxu0
      %v3712 = vadd.f32 0.0, %v3711
      %v3713 = vpop.f32.mrb[0].mxu0
      %3714 = vmatprep.mubr.bf16.mxu0 0
      %3715 = vmatmul.mubr.bf16.gmra.mrb[0].mxu0 %v3660
      %v3716 = vpop.f32.mrb[0].mxu0
      %v3717 = vadd.f32 0.0, %v3716
      %v3718 = vpop.f32.mrb[0].mxu0
      %v3719 = vpop.f32.mrb[0].mxu0
      %v3720 = vadd.f32 0.0, %v3719
      %v3721 = vpop.f32.mrb[0].mxu0
      %3722 = vmatprep.mubr.bf16.mxu0 0
      %3723 = vmatmul.mubr.bf16.gmra.mrb[0].mxu0 %v3663
      %v3724 = vpop.f32.mrb[0].mxu0
      %v3725 = vadd.f32 0.0, %v3724
      %v3726 = vpop.f32.mrb[0].mxu0
      %v3727 = vpop.f32.mrb[0].mxu0
      %v3728 = vadd.f32 0.0, %v3727
      %v3729 = vpop.f32.mrb[0].mxu0
      %3730 = vmatprep.mubr.bf16.mxu0 0
      %3731 = vmatmul.mubr.bf16.gmra.mrb[0].mxu0 %v3666
      %v3732 = vpop.f32.mrb[0].mxu0
      %v3733 = vadd.f32 0.0, %v3732
      %v3734 = vpop.f32.mrb[0].mxu0
      %v3735 = vpop.f32.mrb[0].mxu0
      %v3736 = vadd.f32 0.0, %v3735
      %v3737 = vpop.f32.mrb[0].mxu0
      %3738 = vmatprep.mubr.bf16.mxu0 0
      %3739 = vmatmul.mubr.bf16.gmra.mrb[0].mxu0 %v3669
      %v3740 = vpop.f32.mrb[0].mxu0
      %v3741 = vadd.f32 0.0, %v3740
      %v3742 = vpop.f32.mrb[0].mxu0
      %v3743 = vpop.f32.mrb[0].mxu0
      %v3744 = vpop.f32.mrb[0].mxu0
      %3745 = vdwg.mxu0
      %v3746 = vadd.f32 %v2937, %v3709
      %v3747 = vadd.f32 %v2938, %v3712
      %v3748 = vadd.f32 %v2939, %v3717
      %v3749 = vadd.f32 %v2940, %v3720
      %v3750 = vadd.f32 %v2941, %v3725
      %v3751 = vadd.f32 %v2942, %v3728
      %v3752 = vadd.f32 %v2943, %v3733
      %v3753 = vadd.f32 %v2944, %v3736
      %v3754 = vadd.f32 %v2945, %v3741
      %v3755 = vadd.f32 %v453, %v3746
      %v3756 = vadd.f32 %v454, %v3747
      %v3757 = vadd.f32 %v455, %v3748
      %v3758 = vadd.f32 %v456, %v3749
      %v3759 = vadd.f32 %v457, %v3750
      %v3760 = vadd.f32 %v458, %v3751
      %v3761 = vadd.f32 %v459, %v3752
      %v3762 = vadd.f32 %v460, %v3753
      %v3763 = vadd.f32 %v461, %v3754
      %v3764 = vld [vmem:[%s9] sm:$0x1]
      %v3766 = vlaneseq
      %v3767 = vshrl.u32 %v3766, 7
      %v3768 = vsub.s32 0, %v3767
      %v3769 = vrot.slane %v3764, %v3768
      %v3771 = vadd.f32 %v3755, %v3769
      %v3772 = vadd.f32 %v3756, %v3769
      %v3773 = vadd.f32 %v3757, %v3769
      %v3774 = vadd.f32 %v3758, %v3769
      %v3775 = vadd.f32 %v3759, %v3769
      %v3776 = vadd.f32 %v3760, %v3769
      %v3777 = vadd.f32 %v3761, %v3769
      %v3778 = vadd.f32 %v3762, %v3769
      %v3779 = vadd.f32 %v3763, %v3769
      %v3780 = vsel %vm508, %v3771, 0.0
      %3781 = vadd.xlane.f32.xlu0 %v3780
      %v3782 = vpop.xlane.xlu0 %3781
      %v3783 = vsel %vm508, %v3772, 0.0
      %3784 = vadd.xlane.f32.xlu0 %v3783
      %v3785 = vpop.xlane.xlu0 %3784
      %v3786 = vsel %vm508, %v3773, 0.0
      %3787 = vadd.xlane.f32.xlu0 %v3786
      %v3788 = vpop.xlane.xlu0 %3787
      %v3789 = vsel %vm508, %v3774, 0.0
      %3790 = vadd.xlane.f32.xlu0 %v3789
      %v3791 = vpop.xlane.xlu0 %3790
      %v3792 = vsel %vm508, %v3775, 0.0
      %3793 = vadd.xlane.f32.xlu0 %v3792
      %v3794 = vpop.xlane.xlu0 %3793
      %v3795 = vsel %vm508, %v3776, 0.0
      %3796 = vadd.xlane.f32.xlu0 %v3795
      %v3797 = vpop.xlane.xlu0 %3796
      %v3798 = vsel %vm508, %v3777, 0.0
      %3799 = vadd.xlane.f32.xlu0 %v3798
      %v3800 = vpop.xlane.xlu0 %3799
      %v3801 = vsel %vm508, %v3778, 0.0
      %3802 = vadd.xlane.f32.xlu0 %v3801
      %v3803 = vpop.xlane.xlu0 %3802
      %vm3804 = vcmask 253952
      %v3805 = vsel %vm3804, %v3779, 0.0
      %3806 = vadd.xlane.f32.xlu0 %v3805
      %v3807 = vpop.xlane.xlu0 %3806
      %v3808 = vrcp.pop 32.0
      %v3809 = vmul.f32 %v3782, %v3808
      %v3810 = vmul.f32 %v3785, %v3808
      %v3811 = vmul.f32 %v3788, %v3808
      %v3812 = vmul.f32 %v3791, %v3808
      %v3813 = vmul.f32 %v3794, %v3808
      %v3814 = vmul.f32 %v3797, %v3808
      %v3815 = vmul.f32 %v3800, %v3808
      %v3816 = vmul.f32 %v3803, %v3808
      %v3817 = vmul.f32 %v3807, %v3808
      %v3818 = vsub.f32 %v3771, %v3809
      %v3819 = vsub.f32 %v3772, %v3810
      %v3820 = vsub.f32 %v3773, %v3811
      %v3821 = vsub.f32 %v3774, %v3812
      %v3822 = vsub.f32 %v3775, %v3813
      %v3823 = vsub.f32 %v3776, %v3814
      %v3824 = vsub.f32 %v3777, %v3815
      %v3825 = vsub.f32 %v3778, %v3816
      %v3826 = vsub.f32 %v3779, %v3817
      %v3827 = vmul.f32 %v3818, %v3818
      %v3828 = vmul.f32 %v3819, %v3819
      %v3829 = vmul.f32 %v3820, %v3820
      %v3830 = vmul.f32 %v3821, %v3821
      %v3831 = vmul.f32 %v3822, %v3822
      %v3832 = vmul.f32 %v3823, %v3823
      %v3833 = vmul.f32 %v3824, %v3824
      %v3834 = vmul.f32 %v3825, %v3825
      %v3835 = vmul.f32 %v3826, %v3826
      %v3836 = vsel %vm508, %v3827, 0.0
      %3837 = vadd.xlane.f32.xlu0 %v3836
      %v3838 = vpop.xlane.xlu0 %3837
      %v3839 = vsel %vm508, %v3828, 0.0
      %3840 = vadd.xlane.f32.xlu0 %v3839
      %v3841 = vpop.xlane.xlu0 %3840
      %v3842 = vsel %vm508, %v3829, 0.0
      %3843 = vadd.xlane.f32.xlu0 %v3842
      %v3844 = vpop.xlane.xlu0 %3843
      %v3845 = vsel %vm508, %v3830, 0.0
      %3846 = vadd.xlane.f32.xlu0 %v3845
      %v3847 = vpop.xlane.xlu0 %3846
      %v3848 = vsel %vm508, %v3831, 0.0
      %3849 = vadd.xlane.f32.xlu0 %v3848
      %v3850 = vpop.xlane.xlu0 %3849
      %v3851 = vsel %vm508, %v3832, 0.0
      %3852 = vadd.xlane.f32.xlu0 %v3851
      %v3853 = vpop.xlane.xlu0 %3852
      %v3854 = vsel %vm508, %v3833, 0.0
      %3855 = vadd.xlane.f32.xlu0 %v3854
      %v3856 = vpop.xlane.xlu0 %3855
      %v3857 = vsel %vm508, %v3834, 0.0
      %3858 = vadd.xlane.f32.xlu0 %v3857
      %v3859 = vpop.xlane.xlu0 %3858
      %v3860 = vsel %vm3804, %v3835, 0.0
      %3861 = vadd.xlane.f32.xlu0 %v3860
      %v3862 = vpop.xlane.xlu0 %3861
      %v3863 = vmul.f32 %v3838, %v3808
      %v3864 = vmul.f32 %v3841, %v3808
      %v3865 = vmul.f32 %v3844, %v3808
      %v3866 = vmul.f32 %v3847, %v3808
      %v3867 = vmul.f32 %v3850, %v3808
      %v3868 = vmul.f32 %v3853, %v3808
      %v3869 = vmul.f32 %v3856, %v3808
      %v3870 = vmul.f32 %v3859, %v3808
      %v3871 = vmul.f32 %v3862, %v3808
      %v3872 = vadd.f32 %v3863, 1e-05
      %v3873 = vadd.f32 %v3864, 1e-05
      %v3874 = vadd.f32 %v3865, 1e-05
      %v3875 = vadd.f32 %v3866, 1e-05
      %v3876 = vadd.f32 %v3867, 1e-05
      %v3877 = vadd.f32 %v3868, 1e-05
      %v3878 = vadd.f32 %v3869, 1e-05
      %v3879 = vadd.f32 %v3870, 1e-05
      %v3880 = vadd.f32 %v3871, 1e-05
      %v3881 = vrsqrt.pop %v3872
      %v3882 = vrsqrt.pop %v3873
      %v3883 = vrsqrt.pop %v3874
      %v3884 = vrsqrt.pop %v3875
      %v3885 = vrsqrt.pop %v3876
      %v3886 = vrsqrt.pop %v3877
      %v3887 = vrsqrt.pop %v3878
      %v3888 = vrsqrt.pop %v3879
      %v3889 = vrsqrt.pop %v3880
      %v3890 = vmul.f32 %v3818, %v3881
      %v3891 = vmul.f32 %v3819, %v3882
      %v3892 = vmul.f32 %v3820, %v3883
      %v3893 = vmul.f32 %v3821, %v3884
      %v3894 = vmul.f32 %v3822, %v3885
      %v3895 = vmul.f32 %v3823, %v3886
      %v3896 = vmul.f32 %v3824, %v3887
      %v3897 = vmul.f32 %v3825, %v3888
      %v3898 = vmul.f32 %v3826, %v3889
      %v3899 = vld [vmem:[%s10] sm:$0x1]
      %v3901 = vlaneseq
      %v3902 = vshrl.u32 %v3901, 7
      %v3903 = vsub.s32 0, %v3902
      %v3904 = vrot.slane %v3899, %v3903
      %v3906 = vmul.f32 %v3890, %v3904
      %v3907 = vmul.f32 %v3891, %v3904
      %v3908 = vmul.f32 %v3892, %v3904
      %v3909 = vmul.f32 %v3893, %v3904
      %v3910 = vmul.f32 %v3894, %v3904
      %v3911 = vmul.f32 %v3895, %v3904
      %v3912 = vmul.f32 %v3896, %v3904
      %v3913 = vmul.f32 %v3897, %v3904
      %v3914 = vmul.f32 %v3898, %v3904
      %v3915 = vld [vmem:[%s11] sm:$0x1]
      %v3917 = vlaneseq
      %v3918 = vshrl.u32 %v3917, 7
      %v3919 = vsub.s32 0, %v3918
      %v3920 = vrot.slane %v3915, %v3919
      %v3922 = vadd.f32 %v3906, %v3920
      %v3923 = vadd.f32 %v3907, %v3920
      %v3924 = vadd.f32 %v3908, %v3920
      %v3925 = vadd.f32 %v3909, %v3920
      %v3926 = vadd.f32 %v3910, %v3920
      %v3927 = vadd.f32 %v3911, %v3920
      %v3928 = vadd.f32 %v3912, %v3920
      %v3929 = vadd.f32 %v3913, %v3920
      %v3930 = vadd.f32 %v3914, %v3920
      %v3931 = vpack.c.bf16 %v3923, %v3922
      %v3932 = vpack.c.bf16 %v3925, %v3924
      %v3933 = vpack.c.bf16 %v3927, %v3926
      %v3934 = vpack.c.bf16 %v3929, %v3928
      %v3935 = vpack.c.bf16 %v3930, %v3930
      %v3941 = vunpack.c.l.b16 %v3931
      %v3942 = vunpack.c.h.b16 %v3931
      %v3943 = vunpack.c.l.b16 %v3932
      %v3944 = vunpack.c.h.b16 %v3932
      %v3945 = vunpack.c.l.b16 %v3933
      %v3946 = vunpack.c.h.b16 %v3933
      %v3947 = vunpack.c.l.b16 %v3934
      %v3948 = vunpack.c.h.b16 %v3934
      %v3949 = vunpack.c.l.b16 %v3935
      %v3950 = vpack.c.b16 %v3941, %v3941
      %v3951 = vpack.c.b16 %v3942, %v3942
      %v3952 = vpack.c.b16 %v3943, %v3943
      %v3953 = vpack.c.b16 %v3944, %v3944
      %v3954 = vpack.c.b16 %v3945, %v3945
      %v3955 = vpack.c.b16 %v3946, %v3946
      %v3956 = vpack.c.b16 %v3947, %v3947
      %v3957 = vpack.c.b16 %v3948, %v3948
      %v3958 = vpack.c.b16 %v3949, %v3949
      %vm3968 = vcmask 257024
      %3969 = vst.msk [vmem:[%s433] sm:$0xf] %vm3968, %v3950
      %3970 = vst.msk [vmem:[%s433 + $0x4] sm:$0xf] %vm3968, %v3951
      %3971 = vst.msk [vmem:[%s433 + $0x8] sm:$0xf] %vm3968, %v3952
      %3972 = vst.msk [vmem:[%s433 + $0xc] sm:$0xf] %vm3968, %v3953
      %3973 = vst.msk [vmem:[%s433 + $0x10] sm:$0xf] %vm3968, %v3954
      %3974 = vst.msk [vmem:[%s433 + $0x14] sm:$0xf] %vm3968, %v3955
      %3975 = vst.msk [vmem:[%s433 + $0x18] sm:$0xf] %vm3968, %v3956
      %3976 = vst.msk [vmem:[%s433 + $0x1c] sm:$0xf] %vm3968, %v3957
      %vm3977 = vcmask 253952
      %vm3978 = vsmask.f32 256
      %vm3979 = vmand %vm3977, %vm3978
      %v3980 = vld [vmem:[%s433 + $0x20] sm:$0x1]
      %v3981 = vsel %vm3979, %v3958, %v3980
      %3982 = vst [vmem:[%s433 + $0x20] sm:$0x1] %v3981
      %p3983 = scmp.lt.s32.totalorder %s23, 1
      %s3984 = scalar_select %p3983, %s23, 1
      %s3985 = smul.addr %s3984, 9
      %s3986 = smul.addr %s3985, 4
      %s3987 = scalar_lea.vmem %s12, %s3986
      // Predicated region
      $region69: #{masked_autoencoder_forward.14} parent=67 // pred_check
        %p3988 = pneg %p303
      $region70: #{masked_autoencoder_forward.14} parent=67 // pred_check_branch
        %3990 = sbr.rel (%p3988) target = $region72
      $region71: #{masked_autoencoder_forward.14} parent=67 // pred_region
        _
      $region72: #{masked_autoencoder_forward.14} parent=67 // pred_fallthru
        _
    $region68: #{masked_autoencoder_forward.14} parent=5 // pred_fallthru
      _
    %p3991 = scmp.le.s32.totalorder 2, %s18
    // Predicated region
    $region73: #{masked_autoencoder_forward.14} parent=5 // pred_check
      %p3992 = pneg %p3991
    $region74: #{masked_autoencoder_forward.14} parent=5 // pred_check_branch
      %3994 = sbr.rel (%p3992) target = $region76
    $region75: #{masked_autoencoder_forward.14} parent=5 // pred_region
      %s3995 = ssub.s32 %s18, 2
      // Predicated region
      $region77: #{masked_autoencoder_forward.14} parent=75 // pred_check
        %p3996 = pneg %p309
      $region78: #{masked_autoencoder_forward.14} parent=75 // pred_check_branch
        %3998 = sbr.rel (%p3996) target = $region80
      $region79: #{masked_autoencoder_forward.14} parent=75 // pred_region
        %p3999 = scmp.lt.s32.totalorder %s24, 1
        %s4000 = scalar_select %p3999, %s24, 1
        %s4001 = smul.addr %s4000, 9
        %s4002 = smul.addr %s4001, 4
        %s4003 = scalar_lea.vmem %s12, %s4002
      $region80: #{masked_autoencoder_forward.14} parent=75 // pred_fallthru
        _
    $region76: #{masked_autoencoder_forward.14} parent=5 // pred_fallthru
      _
  $region6: #{masked_autoencoder_forward.14} parent=0 // loop_footer
    %s22 = sadd.s32 1, %s18
  $region7: #{masked_autoencoder_forward.14} parent=0 // loop_footer_branch
    %17 = sbr.rel target = $region3
  $region8: #{masked_autoencoder_forward.14} parent=0 // loop_exit
    _

// kernel: masked_autoencoder_forward.15
$region0: #{masked_autoencoder_forward.15}
  #allocation0 [shape = 'u32[]', space=smem, size = 0x4, offset = 0x4, fixed_abs, tag = 'smem constant byte address 0x4 - core index']
  #allocation1 [shape = 'u32[144,128]{1,0:T(1,128)}', space=vmem, size = 0x12000, scoped, tag = 'internal scratch']
  %s0 = inlined_call_operand.vmem [shape: bf16[2,65,32], index: 0, kind: input, shape index: {}]
  %s1 = inlined_call_operand.vmem [shape: bf16[32,2048], index: 1, kind: input, shape index: {}]
  %s2 = inlined_call_operand.vmem [shape: f32[1,2048], index: 2, kind: input, shape index: {}]
  %s3 = inlined_call_operand.vmem [shape: bf16[2048,32], index: 3, kind: input, shape index: {}]
  %s4 = inlined_call_operand.vmem [shape: f32[1,32], index: 4, kind: input, shape index: {}]
  %s5 = inlined_call_operand.vmem [shape: f32[1,32], index: 5, kind: input, shape index: {}]
  %s6 = inlined_call_operand.vmem [shape: f32[1,32], index: 6, kind: input, shape index: {}]
  %s7 = inlined_call_operand.vmem [shape: bf16[2,65,32], index: 7, kind: output, shape index: {}]
  %s8 = sld [smem:[#allocation0]]
  $region61: #{masked_autoencoder_forward.15} parent=0
    _
  %s10 = ssub.s32 1, %s8
  %s11 = scalar_select 0, %s10, %s8
  loop: start=0, step=1, limit=4
  $region2: #{masked_autoencoder_forward.15} parent=0 // loop_pre_header
    _
  $region3: #{masked_autoencoder_forward.15} parent=0 // loop_header
    %s13 = sphi 0, %s17
    %p14 = scmp.ge.s32.totalorder %s13, 4
    %s23 = sphi 0, %s25
    %s26 = sphi 0, %s23
    %s27 = sphi 0, %s26
    %s43 = sphi 0, %s27
    %s47 = sphi 0, %s47
    %s49 = sphi 0, %s47
    %s50 = sphi 0, %s49
    %s64 = sphi 0, %s50
    %s68 = sphi 0, %s68
    %s70 = sphi 0, %s68
    %s71 = sphi 0, %s70
    %s85 = sphi 0, %s71
    %s89 = sphi 0, %s89
    %s91 = sphi 0, %s89
    %s92 = sphi 0, %s91
    %s106 = sphi 0, %s92
    %s110 = sphi 0, %s110
    %s112 = sphi 0, %s110
    %s113 = sphi 0, %s112
    %s127 = sphi 0, %s113
    %s131 = sphi 0, %s131
    %s133 = sphi 0, %s131
    %s134 = sphi 0, %s133
    %s148 = sphi 0, %s134
    %s152 = sphi 0, %s152
    %s154 = sphi 0, %s152
    %s155 = sphi 0, %s154
    %s169 = sphi 0, %s155
    %s175 = sphi 0, %s177
    %s178 = sphi 0, %s175
    %s179 = sphi 0, %s178
    %s195 = sphi 0, %s179
  $region4: #{masked_autoencoder_forward.15} parent=0 // loop_header_branch
    %16 = sbr.rel (%p14) target = $region8
  $region5: #{masked_autoencoder_forward.15} parent=0 // loop_body
    %s18 = ssub.s32 %s13, 1
    %s19 = ssub.s32 %s13, 2
    %s20 = sadd.s32 %s13, 1
    %s21 = ssub.s32 %s13, %s20
    %p22 = scmp.eq.s32.totalorder %s21, 0
    %s24 = sadd.s32 %s23, 1
    %s25 = scalar_select %p22, %s23, %s24
    %p28 = pneg %p22
    %p29 = scmp.eq.s32.totalorder %s13, 1
    %p30 = por %p28, %p29
    %p31 = scmp.ne.s32.totalorder %s23, %s26
    %p32 = scmp.eq.s32.totalorder %s13, 0
    %p33 = por %p31, %p32
    %p34 = scmp.ne.s32.totalorder %s23, %s26
    %p35 = scmp.eq.s32.totalorder %s18, 1
    %p36 = por %p34, %p35
    %p37 = scmp.ne.s32.totalorder %s26, %s27
    %p38 = scmp.eq.s32.totalorder %s18, 0
    %p39 = por %p37, %p38
    %p40 = scmp.ne.s32.totalorder %s26, %s27
    %p41 = scmp.eq.s32.totalorder %s19, 1
    %p42 = por %p40, %p41
    %p44 = scmp.ne.s32.totalorder %s27, %s43
    %p45 = scmp.eq.s32.totalorder %s19, 0
    %p46 = por %p44, %p45
    %s48 = sadd.s32 %s47, 1
    %p51 = scmp.eq.s32.totalorder %s13, 1
    %p52 = scmp.ne.s32.totalorder %s47, %s49
    %p53 = scmp.eq.s32.totalorder %s13, 0
    %p54 = por %p52, %p53
    %p55 = scmp.ne.s32.totalorder %s47, %s49
    %p56 = scmp.eq.s32.totalorder %s18, 1
    %p57 = por %p55, %p56
    %p58 = scmp.ne.s32.totalorder %s49, %s50
    %p59 = scmp.eq.s32.totalorder %s18, 0
    %p60 = por %p58, %p59
    %p61 = scmp.ne.s32.totalorder %s49, %s50
    %p62 = scmp.eq.s32.totalorder %s19, 1
    %p63 = por %p61, %p62
    %p65 = scmp.ne.s32.totalorder %s50, %s64
    %p66 = scmp.eq.s32.totalorder %s19, 0
    %p67 = por %p65, %p66
    %s69 = sadd.s32 %s68, 1
    %p72 = scmp.eq.s32.totalorder %s13, 1
    %p73 = scmp.ne.s32.totalorder %s68, %s70
    %p74 = scmp.eq.s32.totalorder %s13, 0
    %p75 = por %p73, %p74
    %p76 = scmp.ne.s32.totalorder %s68, %s70
    %p77 = scmp.eq.s32.totalorder %s18, 1
    %p78 = por %p76, %p77
    %p79 = scmp.ne.s32.totalorder %s70, %s71
    %p80 = scmp.eq.s32.totalorder %s18, 0
    %p81 = por %p79, %p80
    %p82 = scmp.ne.s32.totalorder %s70, %s71
    %p83 = scmp.eq.s32.totalorder %s19, 1
    %p84 = por %p82, %p83
    %p86 = scmp.ne.s32.totalorder %s71, %s85
    %p87 = scmp.eq.s32.totalorder %s19, 0
    %p88 = por %p86, %p87
    %s90 = sadd.s32 %s89, 1
    %p93 = scmp.eq.s32.totalorder %s13, 1
    %p94 = scmp.ne.s32.totalorder %s89, %s91
    %p95 = scmp.eq.s32.totalorder %s13, 0
    %p96 = por %p94, %p95
    %p97 = scmp.ne.s32.totalorder %s89, %s91
    %p98 = scmp.eq.s32.totalorder %s18, 1
    %p99 = por %p97, %p98
    %p100 = scmp.ne.s32.totalorder %s91, %s92
    %p101 = scmp.eq.s32.totalorder %s18, 0
    %p102 = por %p100, %p101
    %p103 = scmp.ne.s32.totalorder %s91, %s92
    %p104 = scmp.eq.s32.totalorder %s19, 1
    %p105 = por %p103, %p104
    %p107 = scmp.ne.s32.totalorder %s92, %s106
    %p108 = scmp.eq.s32.totalorder %s19, 0
    %p109 = por %p107, %p108
    %s111 = sadd.s32 %s110, 1
    %p114 = scmp.eq.s32.totalorder %s13, 1
    %p115 = scmp.ne.s32.totalorder %s110, %s112
    %p116 = scmp.eq.s32.totalorder %s13, 0
    %p117 = por %p115, %p116
    %p118 = scmp.ne.s32.totalorder %s110, %s112
    %p119 = scmp.eq.s32.totalorder %s18, 1
    %p120 = por %p118, %p119
    %p121 = scmp.ne.s32.totalorder %s112, %s113
    %p122 = scmp.eq.s32.totalorder %s18, 0
    %p123 = por %p121, %p122
    %p124 = scmp.ne.s32.totalorder %s112, %s113
    %p125 = scmp.eq.s32.totalorder %s19, 1
    %p126 = por %p124, %p125
    %p128 = scmp.ne.s32.totalorder %s113, %s127
    %p129 = scmp.eq.s32.totalorder %s19, 0
    %p130 = por %p128, %p129
    %s132 = sadd.s32 %s131, 1
    %p135 = scmp.eq.s32.totalorder %s13, 1
    %p136 = scmp.ne.s32.totalorder %s131, %s133
    %p137 = scmp.eq.s32.totalorder %s13, 0
    %p138 = por %p136, %p137
    %p139 = scmp.ne.s32.totalorder %s131, %s133
    %p140 = scmp.eq.s32.totalorder %s18, 1
    %p141 = por %p139, %p140
    %p142 = scmp.ne.s32.totalorder %s133, %s134
    %p143 = scmp.eq.s32.totalorder %s18, 0
    %p144 = por %p142, %p143
    %p145 = scmp.ne.s32.totalorder %s133, %s134
    %p146 = scmp.eq.s32.totalorder %s19, 1
    %p147 = por %p145, %p146
    %p149 = scmp.ne.s32.totalorder %s134, %s148
    %p150 = scmp.eq.s32.totalorder %s19, 0
    %p151 = por %p149, %p150
    %s153 = sadd.s32 %s152, 1
    %p156 = scmp.eq.s32.totalorder %s13, 1
    %p157 = scmp.ne.s32.totalorder %s152, %s154
    %p158 = scmp.eq.s32.totalorder %s13, 0
    %p159 = por %p157, %p158
    %p160 = scmp.ne.s32.totalorder %s152, %s154
    %p161 = scmp.eq.s32.totalorder %s18, 1
    %p162 = por %p160, %p161
    %p163 = scmp.ne.s32.totalorder %s154, %s155
    %p164 = scmp.eq.s32.totalorder %s18, 0
    %p165 = por %p163, %p164
    %p166 = scmp.ne.s32.totalorder %s154, %s155
    %p167 = scmp.eq.s32.totalorder %s19, 1
    %p168 = por %p166, %p167
    %p170 = scmp.ne.s32.totalorder %s155, %s169
    %p171 = scmp.eq.s32.totalorder %s19, 0
    %p172 = por %p170, %p171
    %s173 = ssub.s32 %s13, %s20
    %p174 = scmp.eq.s32.totalorder %s173, 0
    %s176 = sadd.s32 %s175, 1
    %s177 = scalar_select %p174, %s175, %s176
    %p180 = pneg %p174
    %p181 = scmp.eq.s32.totalorder %s13, 1
    %p182 = por %p180, %p181
    %p183 = scmp.ne.s32.totalorder %s175, %s178
    %p184 = scmp.eq.s32.totalorder %s13, 0
    %p185 = por %p183, %p184
    %p186 = scmp.ne.s32.totalorder %s175, %s178
    %p187 = scmp.eq.s32.totalorder %s18, 1
    %p188 = por %p186, %p187
    %p189 = scmp.ne.s32.totalorder %s178, %s179
    %p190 = scmp.eq.s32.totalorder %s18, 0
    %p191 = por %p189, %p190
    %p192 = scmp.ne.s32.totalorder %s178, %s179
    %p193 = scmp.eq.s32.totalorder %s19, 1
    %p194 = por %p192, %p193
    %p196 = scmp.ne.s32.totalorder %s179, %s195
    %p197 = scmp.eq.s32.totalorder %s19, 0
    %p198 = por %p196, %p197
    %p199 = scmp.le.s32.totalorder 1, %s13
    %p200 = scmp.lt.s32.totalorder %s13, 3
    %p201 = pnand %p199, %p200
    %p202 = pneg %p201
    // Predicated region
    $region9: #{masked_autoencoder_forward.15} parent=5 // pred_check
      _
    $region10: #{masked_autoencoder_forward.15} parent=5 // pred_check_branch
      %204 = sbr.rel (%p201) target = $region12
    $region11: #{masked_autoencoder_forward.15} parent=5 // pred_region
      %s205 = ssub.s32 %s13, 1
      // Predicated region
      $region13: #{masked_autoencoder_forward.15} parent=11 // pred_check
        %p206 = pneg %p60
      $region14: #{masked_autoencoder_forward.15} parent=11 // pred_check_branch
        %208 = sbr.rel (%p206) target = $region16
      $region15: #{masked_autoencoder_forward.15} parent=11 // pred_region
        _
      $region16: #{masked_autoencoder_forward.15} parent=11 // pred_fallthru
        _
      // Predicated region
      $region17: #{masked_autoencoder_forward.15} parent=11 // pred_check
        %p209 = pneg %p81
      $region18: #{masked_autoencoder_forward.15} parent=11 // pred_check_branch
        %211 = sbr.rel (%p209) target = $region20
      $region19: #{masked_autoencoder_forward.15} parent=11 // pred_region
        _
      $region20: #{masked_autoencoder_forward.15} parent=11 // pred_fallthru
        _
      // Predicated region
      $region21: #{masked_autoencoder_forward.15} parent=11 // pred_check
        %p212 = pneg %p102
      $region22: #{masked_autoencoder_forward.15} parent=11 // pred_check_branch
        %214 = sbr.rel (%p212) target = $region24
      $region23: #{masked_autoencoder_forward.15} parent=11 // pred_region
        _
      $region24: #{masked_autoencoder_forward.15} parent=11 // pred_fallthru
        _
      // Predicated region
      $region25: #{masked_autoencoder_forward.15} parent=11 // pred_check
        %p215 = pneg %p123
      $region26: #{masked_autoencoder_forward.15} parent=11 // pred_check_branch
        %217 = sbr.rel (%p215) target = $region28
      $region27: #{masked_autoencoder_forward.15} parent=11 // pred_region
        _
      $region28: #{masked_autoencoder_forward.15} parent=11 // pred_fallthru
        _
      // Predicated region
      $region29: #{masked_autoencoder_forward.15} parent=11 // pred_check
        %p218 = pneg %p144
      $region30: #{masked_autoencoder_forward.15} parent=11 // pred_check_branch
        %220 = sbr.rel (%p218) target = $region32
      $region31: #{masked_autoencoder_forward.15} parent=11 // pred_region
        _
      $region32: #{masked_autoencoder_forward.15} parent=11 // pred_fallthru
        _
      // Predicated region
      $region33: #{masked_autoencoder_forward.15} parent=11 // pred_check
        %p221 = pneg %p165
      $region34: #{masked_autoencoder_forward.15} parent=11 // pred_check_branch
        %223 = sbr.rel (%p221) target = $region36
      $region35: #{masked_autoencoder_forward.15} parent=11 // pred_region
        _
      $region36: #{masked_autoencoder_forward.15} parent=11 // pred_fallthru
        _
    $region12: #{masked_autoencoder_forward.15} parent=5 // pred_fallthru
      _
    %p224 = scmp.lt.s32.totalorder %s13, 2
    // Predicated region
    $region37: #{masked_autoencoder_forward.15} parent=5 // pred_check
      %p225 = pneg %p224
    $region38: #{masked_autoencoder_forward.15} parent=5 // pred_check_branch
      %227 = sbr.rel (%p225) target = $region40
    $region39: #{masked_autoencoder_forward.15} parent=5 // pred_region
      // Predicated region
      $region41: #{masked_autoencoder_forward.15} parent=39 // pred_check
        %p228 = pneg %p33
      $region42: #{masked_autoencoder_forward.15} parent=39 // pred_check_branch
        %230 = sbr.rel (%p228) target = $region44
      $region43: #{masked_autoencoder_forward.15} parent=39 // pred_region
        %p231 = scmp.lt.s32.totalorder %s13, 1
        %s232 = scalar_select %p231, %s13, 1
        %s233 = smul.addr %s232, 9
        %s234 = smul.addr %s233, 4
        %s235 = scalar_lea.vmem %s0, %s234
      $region44: #{masked_autoencoder_forward.15} parent=39 // pred_fallthru
        _
    $region40: #{masked_autoencoder_forward.15} parent=5 // pred_fallthru
      _
    %p236 = scmp.le.s32.totalorder 1, %s13
    %p237 = scmp.lt.s32.totalorder %s13, 3
    %p238 = pnand %p236, %p237
    %p239 = pneg %p238
    // Predicated region
    $region45: #{masked_autoencoder_forward.15} parent=5 // pred_check
      _
    $region46: #{masked_autoencoder_forward.15} parent=5 // pred_check_branch
      %241 = sbr.rel (%p238) target = $region48
    $region47: #{masked_autoencoder_forward.15} parent=5 // pred_region
      %s242 = ssub.s32 %s13, 1
      %p243 = scmp.lt.s32.totalorder %s18, 1
      %s244 = scalar_select %p243, %s18, 1
      %s245 = smul.addr %s244, 9
      %s246 = smul.addr %s245, 4
      %s247 = scalar_lea.vmem %s0, %s246
      %p248 = pneg %p39
      %p249 = pneg %p36
      %p250 = pneg %p60
      %p251 = pneg %p57
      %p252 = pneg %p81
      %p253 = pneg %p78
      %p254 = pneg %p102
      %p255 = pneg %p99
      %p256 = pneg %p123
      %p257 = pneg %p120
      %p258 = pneg %p144
      %p259 = pneg %p141
      %p260 = pneg %p165
      %p261 = pneg %p162
      %p262 = pneg %p191
      %p263 = pneg %p188
      %p264 = scmp.lt.s32.totalorder %s18, 1
      %s265 = scalar_select %p264, %s18, 1
      %s266 = smul.addr %s265, 9
      %s267 = smul.addr %s266, 4
      %s268 = scalar_lea.vmem %s7, %s267
      %p269 = scmp.lt.s32.totalorder %s18, 1
      %s270 = scalar_select %p269, %s18, 1
      %s271 = smul.addr %s270, 9
      %s272 = smul.addr %s271, 4
      %s273 = scalar_lea.vmem %s0, %s272
      %p274 = scmp.lt.s32.totalorder %s18, 1
      %s275 = scalar_select %p274, %s18, 1
      %s276 = smul.addr %s275, 9
      %s277 = smul.addr %s276, 4
      %s278 = scalar_lea.vmem %s7, %s277
      %v280 = vld [vmem:[%s273] sm:$0xf]
      %v281 = vld [vmem:[%s273 + $0x4] sm:$0xf]
      %v282 = vld [vmem:[%s273 + $0x8] sm:$0xf]
      %v283 = vld [vmem:[%s273 + $0xc] sm:$0xf]
      %v284 = vld [vmem:[%s273 + $0x10] sm:$0xf]
      %v285 = vld [vmem:[%s273 + $0x14] sm:$0xf]
      %v286 = vld [vmem:[%s273 + $0x18] sm:$0xf]
      %v287 = vld [vmem:[%s273 + $0x1c] sm:$0xf]
      %v288 = vld [vmem:[%s273 + $0x20] sm:$0x1]
      %v289 = vunpack.c.l.bf16 %v280
      %v290 = vunpack.c.l.bf16 %v281
      %v291 = vunpack.c.l.bf16 %v282
      %v292 = vunpack.c.l.bf16 %v283
      %v293 = vunpack.c.l.bf16 %v284
      %v294 = vunpack.c.l.bf16 %v285
      %v295 = vunpack.c.l.bf16 %v286
      %v296 = vunpack.c.l.bf16 %v287
      %v297 = vunpack.c.l.bf16 %v288
      %v298 = vld [vmem:[%s1] sm:$0xff]
      %v299 = vld [vmem:[%s1 + $0x8] sm:$0xff]
      %v300 = vld [vmem:[%s1 + $0x10] sm:$0xff]
      %v301 = vld [vmem:[%s1 + $0x18] sm:$0xff]
      %v302 = vld [vmem:[%s1 + $0x20] sm:$0xff]
      %v303 = vld [vmem:[%s1 + $0x28] sm:$0xff]
      %v304 = vld [vmem:[%s1 + $0x30] sm:$0xff]
      %v305 = vld [vmem:[%s1 + $0x38] sm:$0xff]
      %v306 = vld [vmem:[%s1 + $0x40] sm:$0xff]
      %v307 = vld [vmem:[%s1 + $0x48] sm:$0xff]
      %v308 = vld [vmem:[%s1 + $0x50] sm:$0xff]
      %v309 = vld [vmem:[%s1 + $0x58] sm:$0xff]
      %v310 = vld [vmem:[%s1 + $0x60] sm:$0xff]
      %v311 = vld [vmem:[%s1 + $0x68] sm:$0xff]
      %v312 = vld [vmem:[%s1 + $0x70] sm:$0xff]
      %v313 = vld [vmem:[%s1 + $0x78] sm:$0xff]
      %v314 = vld [vmem:[%s1 + $0x80] sm:$0xff]
      %v315 = vld [vmem:[%s1 + $0x88] sm:$0xff]
      %v316 = vld [vmem:[%s1 + $0x90] sm:$0xff]
      %v317 = vld [vmem:[%s1 + $0x98] sm:$0xff]
      %v318 = vld [vmem:[%s1 + $0xa0] sm:$0xff]
      %v319 = vld [vmem:[%s1 + $0xa8] sm:$0xff]
      %v320 = vld [vmem:[%s1 + $0xb0] sm:$0xff]
      %v321 = vld [vmem:[%s1 + $0xb8] sm:$0xff]
      %v322 = vld [vmem:[%s1 + $0xc0] sm:$0xff]
      %v323 = vld [vmem:[%s1 + $0xc8] sm:$0xff]
      %v324 = vld [vmem:[%s1 + $0xd0] sm:$0xff]
      %v325 = vld [vmem:[%s1 + $0xd8] sm:$0xff]
      %v326 = vld [vmem:[%s1 + $0xe0] sm:$0xff]
      %v327 = vld [vmem:[%s1 + $0xe8] sm:$0xff]
      %v328 = vld [vmem:[%s1 + $0xf0] sm:$0xff]
      %v329 = vld [vmem:[%s1 + $0xf8] sm:$0xff]
      %v330 = vld [vmem:[%s2] sm:$0xff]
      %v331 = vld [vmem:[%s2 + $0x8] sm:$0xff]
      %v334 = vlaneseq
      %v335 = vshrl.u32 %v334, 7
      %v336 = vsub.s32 0, %v335
      %v337 = vrot.slane %v330, %v336
      %v338 = vlaneseq
      %v339 = vshrl.u32 %v338, 7
      %v340 = vsub.s32 1, %v339
      %v341 = vrot.slane %v330, %v340
      %v342 = vlaneseq
      %v343 = vshrl.u32 %v342, 7
      %v344 = vsub.s32 2, %v343
      %v345 = vrot.slane %v330, %v344
      %v346 = vlaneseq
      %v347 = vshrl.u32 %v346, 7
      %v348 = vsub.s32 3, %v347
      %v349 = vrot.slane %v330, %v348
      %v350 = vlaneseq
      %v351 = vshrl.u32 %v350, 7
      %v352 = vsub.s32 4, %v351
      %v353 = vrot.slane %v330, %v352
      %v354 = vlaneseq
      %v355 = vshrl.u32 %v354, 7
      %v356 = vsub.s32 5, %v355
      %v357 = vrot.slane %v330, %v356
      %v358 = vlaneseq
      %v359 = vshrl.u32 %v358, 7
      %v360 = vsub.s32 6, %v359
      %v361 = vrot.slane %v330, %v360
      %v362 = vlaneseq
      %v363 = vshrl.u32 %v362, 7
      %v364 = vsub.s32 7, %v363
      %v365 = vrot.slane %v330, %v364
      %v366 = vlaneseq
      %v367 = vshrl.u32 %v366, 7
      %v368 = vsub.s32 0, %v367
      %v369 = vrot.slane %v331, %v368
      %v370 = vlaneseq
      %v371 = vshrl.u32 %v370, 7
      %v372 = vsub.s32 1, %v371
      %v373 = vrot.slane %v331, %v372
      %v374 = vlaneseq
      %v375 = vshrl.u32 %v374, 7
      %v376 = vsub.s32 2, %v375
      %v377 = vrot.slane %v331, %v376
      %v378 = vlaneseq
      %v379 = vshrl.u32 %v378, 7
      %v380 = vsub.s32 3, %v379
      %v381 = vrot.slane %v331, %v380
      %v382 = vlaneseq
      %v383 = vshrl.u32 %v382, 7
      %v384 = vsub.s32 4, %v383
      %v385 = vrot.slane %v331, %v384
      %v386 = vlaneseq
      %v387 = vshrl.u32 %v386, 7
      %v388 = vsub.s32 5, %v387
      %v389 = vrot.slane %v331, %v388
      %v390 = vlaneseq
      %v391 = vshrl.u32 %v390, 7
      %v392 = vsub.s32 6, %v391
      %v393 = vrot.slane %v331, %v392
      %v394 = vlaneseq
      %v395 = vshrl.u32 %v394, 7
      %v396 = vsub.s32 7, %v395
      %v397 = vrot.slane %v331, %v396
      %v423 = vunpack.c.l.b16 %v280
      %v424 = vunpack.c.l.b16 %v281
      %v425 = vunpack.c.l.b16 %v282
      %v426 = vunpack.c.l.b16 %v283
      %v427 = vunpack.c.l.b16 %v284
      %v428 = vunpack.c.l.b16 %v285
      %v429 = vunpack.c.l.b16 %v286
      %v430 = vunpack.c.l.b16 %v287
      %v431 = vunpack.c.l.b16 %v288
      %v432 = vpack.c.b16 %v424, %v423
      %v433 = vpack.c.b16 %v426, %v425
      %v434 = vpack.c.b16 %v428, %v427
      %v435 = vpack.c.b16 %v430, %v429
      %v436 = vpack.c.b16 %v431, %v431
      %v469 = vunpack.c.l.b16 %v298
      %v470 = vunpack.c.h.b16 %v298
      %v471 = vunpack.c.l.b16 %v299
      %v472 = vunpack.c.h.b16 %v299
      %v473 = vunpack.c.l.b16 %v300
      %v474 = vunpack.c.h.b16 %v300
      %v475 = vunpack.c.l.b16 %v301
      %v476 = vunpack.c.h.b16 %v301
      %v477 = vunpack.c.l.b16 %v302
      %v478 = vunpack.c.h.b16 %v302
      %v479 = vunpack.c.l.b16 %v303
      %v480 = vunpack.c.h.b16 %v303
      %v481 = vunpack.c.l.b16 %v304
      %v482 = vunpack.c.h.b16 %v304
      %v483 = vunpack.c.l.b16 %v305
      %v484 = vunpack.c.h.b16 %v305
      %v485 = vunpack.c.l.b16 %v306
      %v486 = vunpack.c.h.b16 %v306
      %v487 = vunpack.c.l.b16 %v307
      %v488 = vunpack.c.h.b16 %v307
      %v489 = vunpack.c.l.b16 %v308
      %v490 = vunpack.c.h.b16 %v308
      %v491 = vunpack.c.l.b16 %v309
      %v492 = vunpack.c.h.b16 %v309
      %v493 = vunpack.c.l.b16 %v310
      %v494 = vunpack.c.h.b16 %v310
      %v495 = vunpack.c.l.b16 %v311
      %v496 = vunpack.c.h.b16 %v311
      %v497 = vunpack.c.l.b16 %v312
      %v498 = vunpack.c.h.b16 %v312
      %v499 = vunpack.c.l.b16 %v313
      %v500 = vunpack.c.h.b16 %v313
      %v501 = vunpack.c.l.b16 %v314
      %v502 = vunpack.c.h.b16 %v314
      %v503 = vunpack.c.l.b16 %v315
      %v504 = vunpack.c.h.b16 %v315
      %v505 = vunpack.c.l.b16 %v316
      %v506 = vunpack.c.h.b16 %v316
      %v507 = vunpack.c.l.b16 %v317
      %v508 = vunpack.c.h.b16 %v317
      %v509 = vunpack.c.l.b16 %v318
      %v510 = vunpack.c.h.b16 %v318
      %v511 = vunpack.c.l.b16 %v319
      %v512 = vunpack.c.h.b16 %v319
      %v513 = vunpack.c.l.b16 %v320
      %v514 = vunpack.c.h.b16 %v320
      %v515 = vunpack.c.l.b16 %v321
      %v516 = vunpack.c.h.b16 %v321
      %v517 = vunpack.c.l.b16 %v322
      %v518 = vunpack.c.h.b16 %v322
      %v519 = vunpack.c.l.b16 %v323
      %v520 = vunpack.c.h.b16 %v323
      %v521 = vunpack.c.l.b16 %v324
      %v522 = vunpack.c.h.b16 %v324
      %v523 = vunpack.c.l.b16 %v325
      %v524 = vunpack.c.h.b16 %v325
      %v525 = vunpack.c.l.b16 %v326
      %v526 = vunpack.c.h.b16 %v326
      %v527 = vunpack.c.l.b16 %v327
      %v528 = vunpack.c.h.b16 %v327
      %v529 = vunpack.c.l.b16 %v328
      %v530 = vunpack.c.h.b16 %v328
      %v531 = vunpack.c.l.b16 %v329
      %v532 = vunpack.c.h.b16 %v329
      %v533 = vpack.c.b16 %v485, %v469
      %v534 = vpack.c.b16 %v486, %v470
      %v535 = vpack.c.b16 %v487, %v471
      %v536 = vpack.c.b16 %v488, %v472
      %v537 = vpack.c.b16 %v489, %v473
      %v538 = vpack.c.b16 %v490, %v474
      %v539 = vpack.c.b16 %v491, %v475
      %v540 = vpack.c.b16 %v492, %v476
      %v541 = vpack.c.b16 %v493, %v477
      %v542 = vpack.c.b16 %v494, %v478
      %v543 = vpack.c.b16 %v495, %v479
      %v544 = vpack.c.b16 %v496, %v480
      %v545 = vpack.c.b16 %v497, %v481
      %v546 = vpack.c.b16 %v498, %v482
      %v547 = vpack.c.b16 %v499, %v483
      %v548 = vpack.c.b16 %v500, %v484
      %v549 = vpack.c.b16 %v517, %v501
      %v550 = vpack.c.b16 %v518, %v502
      %v551 = vpack.c.b16 %v519, %v503
      %v552 = vpack.c.b16 %v520, %v504
      %v553 = vpack.c.b16 %v521, %v505
      %v554 = vpack.c.b16 %v522, %v506
      %v555 = vpack.c.b16 %v523, %v507
      %v556 = vpack.c.b16 %v524, %v508
      %v557 = vpack.c.b16 %v525, %v509
      %v558 = vpack.c.b16 %v526, %v510
      %v559 = vpack.c.b16 %v527, %v511
      %v560 = vpack.c.b16 %v528, %v512
      %v561 = vpack.c.b16 %v529, %v513
      %v562 = vpack.c.b16 %v530, %v514
      %v563 = vpack.c.b16 %v531, %v515
      %v564 = vpack.c.b16 %v532, %v516
      %vm597 = vcmask 261120
      %v599 = vsel %vm597, %v432, 0
      %v602 = vsel %vm597, %v433, 0
      %v605 = vsel %vm597, %v434, 0
      %v608 = vsel %vm597, %v435, 0
      %v611 = vsel %vm597, %v436, 0
      %613 = vmatprep.subr.bf16.mxu0 %v534
      %614 = vmatpush1.bf16.msra.mxu0 %v533
      %615 = vmatprep.subr.bf16.mxu0 %v550
      %616 = vmatpush1.bf16.msra.mxu0 %v549
      %617 = vmatprep.subr.bf16.mxu0 0
      %618 = vmatpush1.bf16.msra.mxu0 0
      %619 = vmatprep.subr.bf16.mxu0 0
      %620 = vmatpush1.bf16.msra.mxu0 0
      %621 = vmatprep.subr.bf16.mxu0 0
      %622 = vmatpush1.bf16.msra.mxu0 0
      %623 = vmatprep.subr.bf16.mxu0 0
      %624 = vmatpush1.bf16.msra.mxu0 0
      %625 = vmatprep.subr.bf16.mxu0 0
      %626 = vmatpush1.bf16.msra.mxu0 0
      %627 = vmatprep.subr.bf16.mxu0 0
      %628 = vmatpush1.bf16.msra.mxu0 0
      %629 = vmatprep.subr.bf16.mxu0 0
      %630 = vmatpush1.bf16.msra.mxu0 0
      %631 = vmatprep.subr.bf16.mxu0 0
      %632 = vmatpush1.bf16.msra.mxu0 0
      %633 = vmatprep.subr.bf16.mxu0 0
      %634 = vmatpush1.bf16.msra.mxu0 0
      %635 = vmatprep.subr.bf16.mxu0 0
      %636 = vmatpush1.bf16.msra.mxu0 0
      %637 = vmatprep.subr.bf16.mxu0 0
      %638 = vmatpush1.bf16.msra.mxu0 0
      %639 = vmatprep.subr.bf16.mxu0 0
      %640 = vmatpush1.bf16.msra.mxu0 0
      %641 = vmatprep.subr.bf16.mxu0 0
      %642 = vmatpush1.bf16.msra.mxu0 0
      %643 = vmatprep.subr.bf16.mxu0 0
      %644 = vmatpush1.bf16.msra.mxu0 0
      %645 = vmatprep.mubr.bf16.mxu0 0
      %646 = vmatmul.mubr.bf16.gmra.mrb[0].mxu0 %v599
      %v647 = vpop.f32.mrb[0].mxu0
      %v648 = vadd.f32 %v337, %v647
      %v649 = vpop.f32.mrb[0].mxu0
      %v650 = vadd.f32 %v341, %v649
      %v651 = vpop.f32.mrb[0].mxu0
      %v652 = vadd.f32 %v337, %v651
      %v653 = vpop.f32.mrb[0].mxu0
      %v654 = vadd.f32 %v341, %v653
      %655 = vmatprep.mubr.bf16.mxu0 0
      %656 = vmatmul.mubr.bf16.gmra.mrb[0].mxu0 %v602
      %v657 = vpop.f32.mrb[0].mxu0
      %v658 = vadd.f32 %v337, %v657
      %v659 = vpop.f32.mrb[0].mxu0
      %v660 = vadd.f32 %v341, %v659
      %v661 = vpop.f32.mrb[0].mxu0
      %v662 = vadd.f32 %v337, %v661
      %v663 = vpop.f32.mrb[0].mxu0
      %v664 = vadd.f32 %v341, %v663
      %665 = vmatprep.mubr.bf16.mxu0 0
      %666 = vmatmul.mubr.bf16.gmra.mrb[0].mxu0 %v605
      %v667 = vpop.f32.mrb[0].mxu0
      %v668 = vadd.f32 %v337, %v667
      %v669 = vpop.f32.mrb[0].mxu0
      %v670 = vadd.f32 %v341, %v669
      %v671 = vpop.f32.mrb[0].mxu0
      %v672 = vadd.f32 %v337, %v671
      %v673 = vpop.f32.mrb[0].mxu0
      %v674 = vadd.f32 %v341, %v673
      %675 = vmatprep.mubr.bf16.mxu0 0
      %676 = vmatmul.mubr.bf16.gmra.mrb[0].mxu0 %v608
      %v677 = vpop.f32.mrb[0].mxu0
      %v678 = vadd.f32 %v337, %v677
      %v679 = vpop.f32.mrb[0].mxu0
      %v680 = vadd.f32 %v341, %v679
      %v681 = vpop.f32.mrb[0].mxu0
      %v682 = vadd.f32 %v337, %v681
      %v683 = vpop.f32.mrb[0].mxu0
      %v684 = vadd.f32 %v341, %v683
      %685 = vmatprep.mubr.bf16.mxu0 0
      %686 = vmatmul.mubr.bf16.gmra.mrb[0].mxu0 %v611
      %v687 = vpop.f32.mrb[0].mxu0
      %v688 = vadd.f32 %v337, %v687
      %v689 = vpop.f32.mrb[0].mxu0
      %v690 = vadd.f32 %v341, %v689
      %v691 = vpop.f32.mrb[0].mxu0
      %v692 = vpop.f32.mrb[0].mxu0
      %693 = vdwg.mxu0
      %694 = vmatprep.subr.bf16.mxu0 %v536
      %695 = vmatpush1.bf16.msra.mxu0 %v535
      %696 = vmatprep.subr.bf16.mxu0 %v552
      %697 = vmatpush1.bf16.msra.mxu0 %v551
      %698 = vmatprep.subr.bf16.mxu0 0
      %699 = vmatpush1.bf16.msra.mxu0 0
      %700 = vmatprep.subr.bf16.mxu0 0
      %701 = vmatpush1.bf16.msra.mxu0 0
      %702 = vmatprep.subr.bf16.mxu0 0
      %703 = vmatpush1.bf16.msra.mxu0 0
      %704 = vmatprep.subr.bf16.mxu0 0
      %705 = vmatpush1.bf16.msra.mxu0 0
      %706 = vmatprep.subr.bf16.mxu0 0
      %707 = vmatpush1.bf16.msra.mxu0 0
      %708 = vmatprep.subr.bf16.mxu0 0
      %709 = vmatpush1.bf16.msra.mxu0 0
      %710 = vmatprep.subr.bf16.mxu0 0
      %711 = vmatpush1.bf16.msra.mxu0 0
      %712 = vmatprep.subr.bf16.mxu0 0
      %713 = vmatpush1.bf16.msra.mxu0 0
      %714 = vmatprep.subr.bf16.mxu0 0
      %715 = vmatpush1.bf16.msra.mxu0 0
      %716 = vmatprep.subr.bf16.mxu0 0
      %717 = vmatpush1.bf16.msra.mxu0 0
      %718 = vmatprep.subr.bf16.mxu0 0
      %719 = vmatpush1.bf16.msra.mxu0 0
      %720 = vmatprep.subr.bf16.mxu0 0
      %721 = vmatpush1.bf16.msra.mxu0 0
      %722 = vmatprep.subr.bf16.mxu0 0
      %723 = vmatpush1.bf16.msra.mxu0 0
      %724 = vmatprep.subr.bf16.mxu0 0
      %725 = vmatpush1.bf16.msra.mxu0 0
      %726 = vmatprep.mubr.bf16.mxu0 0
      %727 = vmatmul.mubr.bf16.gmra.mrb[0].mxu0 %v599
      %v728 = vpop.f32.mrb[0].mxu0
      %v729 = vadd.f32 %v345, %v728
      %v730 = vpop.f32.mrb[0].mxu0
      %v731 = vadd.f32 %v349, %v730
      %v732 = vpop.f32.mrb[0].mxu0
      %v733 = vadd.f32 %v345, %v732
      %v734 = vpop.f32.mrb[0].mxu0
      %v735 = vadd.f32 %v349, %v734
      %736 = vmatprep.mubr.bf16.mxu0 0
      %737 = vmatmul.mubr.bf16.gmra.mrb[0].mxu0 %v602
      %v738 = vpop.f32.mrb[0].mxu0
      %v739 = vadd.f32 %v345, %v738
      %v740 = vpop.f32.mrb[0].mxu0
      %v741 = vadd.f32 %v349, %v740
      %v742 = vpop.f32.mrb[0].mxu0
      %v743 = vadd.f32 %v345, %v742
      %v744 = vpop.f32.mrb[0].mxu0
      %v745 = vadd.f32 %v349, %v744
      %746 = vmatprep.mubr.bf16.mxu0 0
      %747 = vmatmul.mubr.bf16.gmra.mrb[0].mxu0 %v605
      %v748 = vpop.f32.mrb[0].mxu0
      %v749 = vadd.f32 %v345, %v748
      %v750 = vpop.f32.mrb[0].mxu0
      %v751 = vadd.f32 %v349, %v750
      %v752 = vpop.f32.mrb[0].mxu0
      %v753 = vadd.f32 %v345, %v752
      %v754 = vpop.f32.mrb[0].mxu0
      %v755 = vadd.f32 %v349, %v754
      %756 = vmatprep.mubr.bf16.mxu0 0
      %757 = vmatmul.mubr.bf16.gmra.mrb[0].mxu0 %v608
      %v758 = vpop.f32.mrb[0].mxu0
      %v759 = vadd.f32 %v345, %v758
      %v760 = vpop.f32.mrb[0].mxu0
      %v761 = vadd.f32 %v349, %v760
      %v762 = vpop.f32.mrb[0].mxu0
      %v763 = vadd.f32 %v345, %v762
      %v764 = vpop.f32.mrb[0].mxu0
      %v765 = vadd.f32 %v349, %v764
      %766 = vmatprep.mubr.bf16.mxu0 0
      %767 = vmatmul.mubr.bf16.gmra.mrb[0].mxu0 %v611
      %v768 = vpop.f32.mrb[0].mxu0
      %v769 = vadd.f32 %v345, %v768
      %v770 = vpop.f32.mrb[0].mxu0
      %v771 = vadd.f32 %v349, %v770
      %v772 = vpop.f32.mrb[0].mxu0
      %v773 = vpop.f32.mrb[0].mxu0
      %774 = vdwg.mxu0
      %775 = vmatprep.subr.bf16.mxu0 %v538
      %776 = vmatpush1.bf16.msra.mxu0 %v537
      %777 = vmatprep.subr.bf16.mxu0 %v554
      %778 = vmatpush1.bf16.msra.mxu0 %v553
      %779 = vmatprep.subr.bf16.mxu0 0
      %780 = vmatpush1.bf16.msra.mxu0 0
      %781 = vmatprep.subr.bf16.mxu0 0
      %782 = vmatpush1.bf16.msra.mxu0 0
      %783 = vmatprep.subr.bf16.mxu0 0
      %784 = vmatpush1.bf16.msra.mxu0 0
      %785 = vmatprep.subr.bf16.mxu0 0
      %786 = vmatpush1.bf16.msra.mxu0 0
      %787 = vmatprep.subr.bf16.mxu0 0
      %788 = vmatpush1.bf16.msra.mxu0 0
      %789 = vmatprep.subr.bf16.mxu0 0
      %790 = vmatpush1.bf16.msra.mxu0 0
      %791 = vmatprep.subr.bf16.mxu0 0
      %792 = vmatpush1.bf16.msra.mxu0 0
      %793 = vmatprep.subr.bf16.mxu0 0
      %794 = vmatpush1.bf16.msra.mxu0 0
      %795 = vmatprep.subr.bf16.mxu0 0
      %796 = vmatpush1.bf16.msra.mxu0 0
      %797 = vmatprep.subr.bf16.mxu0 0
      %798 = vmatpush1.bf16.msra.mxu0 0
      %799 = vmatprep.subr.bf16.mxu0 0
      %800 = vmatpush1.bf16.msra.mxu0 0
      %801 = vmatprep.subr.bf16.mxu0 0
      %802 = vmatpush1.bf16.msra.mxu0 0
      %803 = vmatprep.subr.bf16.mxu0 0
      %804 = vmatpush1.bf16.msra.mxu0 0
      %805 = vmatprep.subr.bf16.mxu0 0
      %806 = vmatpush1.bf16.msra.mxu0 0
      %807 = vmatprep.mubr.bf16.mxu0 0
      %808 = vmatmul.mubr.bf16.gmra.mrb[0].mxu0 %v599
      %v809 = vpop.f32.mrb[0].mxu0
      %v810 = vadd.f32 %v353, %v809
      %v811 = vpop.f32.mrb[0].mxu0
      %v812 = vadd.f32 %v357, %v811
      %v813 = vpop.f32.mrb[0].mxu0
      %v814 = vadd.f32 %v353, %v813
      %v815 = vpop.f32.mrb[0].mxu0
      %v816 = vadd.f32 %v357, %v815
      %817 = vmatprep.mubr.bf16.mxu0 0
      %818 = vmatmul.mubr.bf16.gmra.mrb[0].mxu0 %v602
      %v819 = vpop.f32.mrb[0].mxu0
      %v820 = vadd.f32 %v353, %v819
      %v821 = vpop.f32.mrb[0].mxu0
      %v822 = vadd.f32 %v357, %v821
      %v823 = vpop.f32.mrb[0].mxu0
      %v824 = vadd.f32 %v353, %v823
      %v825 = vpop.f32.mrb[0].mxu0
      %v826 = vadd.f32 %v357, %v825
      %827 = vmatprep.mubr.bf16.mxu0 0
      %828 = vmatmul.mubr.bf16.gmra.mrb[0].mxu0 %v605
      %v829 = vpop.f32.mrb[0].mxu0
      %v830 = vadd.f32 %v353, %v829
      %v831 = vpop.f32.mrb[0].mxu0
      %v832 = vadd.f32 %v357, %v831
      %v833 = vpop.f32.mrb[0].mxu0
      %v834 = vadd.f32 %v353, %v833
      %v835 = vpop.f32.mrb[0].mxu0
      %v836 = vadd.f32 %v357, %v835
      %837 = vmatprep.mubr.bf16.mxu0 0
      %838 = vmatmul.mubr.bf16.gmra.mrb[0].mxu0 %v608
      %v839 = vpop.f32.mrb[0].mxu0
      %v840 = vadd.f32 %v353, %v839
      %v841 = vpop.f32.mrb[0].mxu0
      %v842 = vadd.f32 %v357, %v841
      %v843 = vpop.f32.mrb[0].mxu0
      %v844 = vadd.f32 %v353, %v843
      %v845 = vpop.f32.mrb[0].mxu0
      %v846 = vadd.f32 %v357, %v845
      %847 = vmatprep.mubr.bf16.mxu0 0
      %848 = vmatmul.mubr.bf16.gmra.mrb[0].mxu0 %v611
      %v849 = vpop.f32.mrb[0].mxu0
      %v850 = vadd.f32 %v353, %v849
      %v851 = vpop.f32.mrb[0].mxu0
      %v852 = vadd.f32 %v357, %v851
      %v853 = vpop.f32.mrb[0].mxu0
      %v854 = vpop.f32.mrb[0].mxu0
      %855 = vdwg.mxu0
      %856 = vmatprep.subr.bf16.mxu0 %v540
      %857 = vmatpush1.bf16.msra.mxu0 %v539
      %858 = vmatprep.subr.bf16.mxu0 %v556
      %859 = vmatpush1.bf16.msra.mxu0 %v555
      %860 = vmatprep.subr.bf16.mxu0 0
      %861 = vmatpush1.bf16.msra.mxu0 0
      %862 = vmatprep.subr.bf16.mxu0 0
      %863 = vmatpush1.bf16.msra.mxu0 0
      %864 = vmatprep.subr.bf16.mxu0 0
      %865 = vmatpush1.bf16.msra.mxu0 0
      %866 = vmatprep.subr.bf16.mxu0 0
      %867 = vmatpush1.bf16.msra.mxu0 0
      %868 = vmatprep.subr.bf16.mxu0 0
      %869 = vmatpush1.bf16.msra.mxu0 0
      %870 = vmatprep.subr.bf16.mxu0 0
      %871 = vmatpush1.bf16.msra.mxu0 0
      %872 = vmatprep.subr.bf16.mxu0 0
      %873 = vmatpush1.bf16.msra.mxu0 0
      %874 = vmatprep.subr.bf16.mxu0 0
      %875 = vmatpush1.bf16.msra.mxu0 0
      %876 = vmatprep.subr.bf16.mxu0 0
      %877 = vmatpush1.bf16.msra.mxu0 0
      %878 = vmatprep.subr.bf16.mxu0 0
      %879 = vmatpush1.bf16.msra.mxu0 0
      %880 = vmatprep.subr.bf16.mxu0 0
      %881 = vmatpush1.bf16.msra.mxu0 0
      %882 = vmatprep.subr.bf16.mxu0 0
      %883 = vmatpush1.bf16.msra.mxu0 0
      %884 = vmatprep.subr.bf16.mxu0 0
      %885 = vmatpush1.bf16.msra.mxu0 0
      %886 = vmatprep.subr.bf16.mxu0 0
      %887 = vmatpush1.bf16.msra.mxu0 0
      %888 = vmatprep.mubr.bf16.mxu0 0
      %889 = vmatmul.mubr.bf16.gmra.mrb[0].mxu0 %v599
      %v890 = vpop.f32.mrb[0].mxu0
      %v891 = vadd.f32 %v361, %v890
      %v892 = vpop.f32.mrb[0].mxu0
      %v893 = vadd.f32 %v365, %v892
      %v894 = vpop.f32.mrb[0].mxu0
      %v895 = vadd.f32 %v361, %v894
      %v896 = vpop.f32.mrb[0].mxu0
      %v897 = vadd.f32 %v365, %v896
      %898 = vmatprep.mubr.bf16.mxu0 0
      %899 = vmatmul.mubr.bf16.gmra.mrb[0].mxu0 %v602
      %v900 = vpop.f32.mrb[0].mxu0
      %v901 = vadd.f32 %v361, %v900
      %v902 = vpop.f32.mrb[0].mxu0
      %v903 = vadd.f32 %v365, %v902
      %v904 = vpop.f32.mrb[0].mxu0
      %v905 = vadd.f32 %v361, %v904
      %v906 = vpop.f32.mrb[0].mxu0
      %v907 = vadd.f32 %v365, %v906
      %908 = vmatprep.mubr.bf16.mxu0 0
      %909 = vmatmul.mubr.bf16.gmra.mrb[0].mxu0 %v605
      %v910 = vpop.f32.mrb[0].mxu0
      %v911 = vadd.f32 %v361, %v910
      %v912 = vpop.f32.mrb[0].mxu0
      %v913 = vadd.f32 %v365, %v912
      %v914 = vpop.f32.mrb[0].mxu0
      %v915 = vadd.f32 %v361, %v914
      %v916 = vpop.f32.mrb[0].mxu0
      %v917 = vadd.f32 %v365, %v916
      %918 = vmatprep.mubr.bf16.mxu0 0
      %919 = vmatmul.mubr.bf16.gmra.mrb[0].mxu0 %v608
      %v920 = vpop.f32.mrb[0].mxu0
      %v921 = vadd.f32 %v361, %v920
      %v922 = vpop.f32.mrb[0].mxu0
      %v923 = vadd.f32 %v365, %v922
      %v924 = vpop.f32.mrb[0].mxu0
      %v925 = vadd.f32 %v361, %v924
      %v926 = vpop.f32.mrb[0].mxu0
      %v927 = vadd.f32 %v365, %v926
      %928 = vmatprep.mubr.bf16.mxu0 0
      %929 = vmatmul.mubr.bf16.gmra.mrb[0].mxu0 %v611
      %v930 = vpop.f32.mrb[0].mxu0
      %v931 = vadd.f32 %v361, %v930
      %v932 = vpop.f32.mrb[0].mxu0
      %v933 = vadd.f32 %v365, %v932
      %v934 = vpop.f32.mrb[0].mxu0
      %v935 = vpop.f32.mrb[0].mxu0
      %936 = vdwg.mxu0
      %937 = vmatprep.subr.bf16.mxu0 %v542
      %938 = vmatpush1.bf16.msra.mxu0 %v541
      %939 = vmatprep.subr.bf16.mxu0 %v558
      %940 = vmatpush1.bf16.msra.mxu0 %v557
      %941 = vmatprep.subr.bf16.mxu0 0
      %942 = vmatpush1.bf16.msra.mxu0 0
      %943 = vmatprep.subr.bf16.mxu0 0
      %944 = vmatpush1.bf16.msra.mxu0 0
      %945 = vmatprep.subr.bf16.mxu0 0
      %946 = vmatpush1.bf16.msra.mxu0 0
      %947 = vmatprep.subr.bf16.mxu0 0
      %948 = vmatpush1.bf16.msra.mxu0 0
      %949 = vmatprep.subr.bf16.mxu0 0
      %950 = vmatpush1.bf16.msra.mxu0 0
      %951 = vmatprep.subr.bf16.mxu0 0
      %952 = vmatpush1.bf16.msra.mxu0 0
      %953 = vmatprep.subr.bf16.mxu0 0
      %954 = vmatpush1.bf16.msra.mxu0 0
      %955 = vmatprep.subr.bf16.mxu0 0
      %956 = vmatpush1.bf16.msra.mxu0 0
      %957 = vmatprep.subr.bf16.mxu0 0
      %958 = vmatpush1.bf16.msra.mxu0 0
      %959 = vmatprep.subr.bf16.mxu0 0
      %960 = vmatpush1.bf16.msra.mxu0 0
      %961 = vmatprep.subr.bf16.mxu0 0
      %962 = vmatpush1.bf16.msra.mxu0 0
      %963 = vmatprep.subr.bf16.mxu0 0
      %964 = vmatpush1.bf16.msra.mxu0 0
      %965 = vmatprep.subr.bf16.mxu0 0
      %966 = vmatpush1.bf16.msra.mxu0 0
      %967 = vmatprep.subr.bf16.mxu0 0
      %968 = vmatpush1.bf16.msra.mxu0 0
      %969 = vmatprep.mubr.bf16.mxu0 0
      %970 = vmatmul.mubr.bf16.gmra.mrb[0].mxu0 %v599
      %v971 = vpop.f32.mrb[0].mxu0
      %v972 = vadd.f32 %v369, %v971
      %v973 = vpop.f32.mrb[0].mxu0
      %v974 = vadd.f32 %v373, %v973
      %v975 = vpop.f32.mrb[0].mxu0
      %v976 = vadd.f32 %v369, %v975
      %v977 = vpop.f32.mrb[0].mxu0
      %v978 = vadd.f32 %v373, %v977
      %979 = vmatprep.mubr.bf16.mxu0 0
      %980 = vmatmul.mubr.bf16.gmra.mrb[0].mxu0 %v602
      %v981 = vpop.f32.mrb[0].mxu0
      %v982 = vadd.f32 %v369, %v981
      %v983 = vpop.f32.mrb[0].mxu0
      %v984 = vadd.f32 %v373, %v983
      %v985 = vpop.f32.mrb[0].mxu0
      %v986 = vadd.f32 %v369, %v985
      %v987 = vpop.f32.mrb[0].mxu0
      %v988 = vadd.f32 %v373, %v987
      %989 = vmatprep.mubr.bf16.mxu0 0
      %990 = vmatmul.mubr.bf16.gmra.mrb[0].mxu0 %v605
      %v991 = vpop.f32.mrb[0].mxu0
      %v992 = vadd.f32 %v369, %v991
      %v993 = vpop.f32.mrb[0].mxu0
      %v994 = vadd.f32 %v373, %v993
      %v995 = vpop.f32.mrb[0].mxu0
      %v996 = vadd.f32 %v369, %v995
      %v997 = vpop.f32.mrb[0].mxu0
      %v998 = vadd.f32 %v373, %v997
      %999 = vmatprep.mubr.bf16.mxu0 0
      %1000 = vmatmul.mubr.bf16.gmra.mrb[0].mxu0 %v608
      %v1001 = vpop.f32.mrb[0].mxu0
      %v1002 = vadd.f32 %v369, %v1001
      %v1003 = vpop.f32.mrb[0].mxu0
      %v1004 = vadd.f32 %v373, %v1003
      %v1005 = vpop.f32.mrb[0].mxu0
      %v1006 = vadd.f32 %v369, %v1005
      %v1007 = vpop.f32.mrb[0].mxu0
      %v1008 = vadd.f32 %v373, %v1007
      %1009 = vmatprep.mubr.bf16.mxu0 0
      %1010 = vmatmul.mubr.bf16.gmra.mrb[0].mxu0 %v611
      %v1011 = vpop.f32.mrb[0].mxu0
      %v1012 = vadd.f32 %v369, %v1011
      %v1013 = vpop.f32.mrb[0].mxu0
      %v1014 = vadd.f32 %v373, %v1013
      %v1015 = vpop.f32.mrb[0].mxu0
      %v1016 = vpop.f32.mrb[0].mxu0
      %1017 = vdwg.mxu0
      %1018 = vmatprep.subr.bf16.mxu0 %v544
      %1019 = vmatpush1.bf16.msra.mxu0 %v543
      %1020 = vmatprep.subr.bf16.mxu0 %v560
      %1021 = vmatpush1.bf16.msra.mxu0 %v559
      %1022 = vmatprep.subr.bf16.mxu0 0
      %1023 = vmatpush1.bf16.msra.mxu0 0
      %1024 = vmatprep.subr.bf16.mxu0 0
      %1025 = vmatpush1.bf16.msra.mxu0 0
      %1026 = vmatprep.subr.bf16.mxu0 0
      %1027 = vmatpush1.bf16.msra.mxu0 0
      %1028 = vmatprep.subr.bf16.mxu0 0
      %1029 = vmatpush1.bf16.msra.mxu0 0
      %1030 = vmatprep.subr.bf16.mxu0 0
      %1031 = vmatpush1.bf16.msra.mxu0 0
      %1032 = vmatprep.subr.bf16.mxu0 0
      %1033 = vmatpush1.bf16.msra.mxu0 0
      %1034 = vmatprep.subr.bf16.mxu0 0
      %1035 = vmatpush1.bf16.msra.mxu0 0
      %1036 = vmatprep.subr.bf16.mxu0 0
      %1037 = vmatpush1.bf16.msra.mxu0 0
      %1038 = vmatprep.subr.bf16.mxu0 0
      %1039 = vmatpush1.bf16.msra.mxu0 0
      %1040 = vmatprep.subr.bf16.mxu0 0
      %1041 = vmatpush1.bf16.msra.mxu0 0
      %1042 = vmatprep.subr.bf16.mxu0 0
      %1043 = vmatpush1.bf16.msra.mxu0 0
      %1044 = vmatprep.subr.bf16.mxu0 0
      %1045 = vmatpush1.bf16.msra.mxu0 0
      %1046 = vmatprep.subr.bf16.mxu0 0
      %1047 = vmatpush1.bf16.msra.mxu0 0
      %1048 = vmatprep.subr.bf16.mxu0 0
      %1049 = vmatpush1.bf16.msra.mxu0 0
      %1050 = vmatprep.mubr.bf16.mxu0 0
      %1051 = vmatmul.mubr.bf16.gmra.mrb[0].mxu0 %v599
      %v1052 = vpop.f32.mrb[0].mxu0
      %v1053 = vadd.f32 %v377, %v1052
      %v1054 = vpop.f32.mrb[0].mxu0
      %v1055 = vadd.f32 %v381, %v1054
      %v1056 = vpop.f32.mrb[0].mxu0
      %v1057 = vadd.f32 %v377, %v1056
      %v1058 = vpop.f32.mrb[0].mxu0
      %v1059 = vadd.f32 %v381, %v1058
      %1060 = vmatprep.mubr.bf16.mxu0 0
      %1061 = vmatmul.mubr.bf16.gmra.mrb[0].mxu0 %v602
      %v1062 = vpop.f32.mrb[0].mxu0
      %v1063 = vadd.f32 %v377, %v1062
      %v1064 = vpop.f32.mrb[0].mxu0
      %v1065 = vadd.f32 %v381, %v1064
      %v1066 = vpop.f32.mrb[0].mxu0
      %v1067 = vadd.f32 %v377, %v1066
      %v1068 = vpop.f32.mrb[0].mxu0
      %v1069 = vadd.f32 %v381, %v1068
      %1070 = vmatprep.mubr.bf16.mxu0 0
      %1071 = vmatmul.mubr.bf16.gmra.mrb[0].mxu0 %v605
      %v1072 = vpop.f32.mrb[0].mxu0
      %v1073 = vadd.f32 %v377, %v1072
      %v1074 = vpop.f32.mrb[0].mxu0
      %v1075 = vadd.f32 %v381, %v1074
      %v1076 = vpop.f32.mrb[0].mxu0
      %v1077 = vadd.f32 %v377, %v1076
      %v1078 = vpop.f32.mrb[0].mxu0
      %v1079 = vadd.f32 %v381, %v1078
      %1080 = vmatprep.mubr.bf16.mxu0 0
      %1081 = vmatmul.mubr.bf16.gmra.mrb[0].mxu0 %v608
      %v1082 = vpop.f32.mrb[0].mxu0
      %v1083 = vadd.f32 %v377, %v1082
      %v1084 = vpop.f32.mrb[0].mxu0
      %v1085 = vadd.f32 %v381, %v1084
      %v1086 = vpop.f32.mrb[0].mxu0
      %v1087 = vadd.f32 %v377, %v1086
      %v1088 = vpop.f32.mrb[0].mxu0
      %v1089 = vadd.f32 %v381, %v1088
      %1090 = vmatprep.mubr.bf16.mxu0 0
      %1091 = vmatmul.mubr.bf16.gmra.mrb[0].mxu0 %v611
      %v1092 = vpop.f32.mrb[0].mxu0
      %v1093 = vadd.f32 %v377, %v1092
      %v1094 = vpop.f32.mrb[0].mxu0
      %v1095 = vadd.f32 %v381, %v1094
      %v1096 = vpop.f32.mrb[0].mxu0
      %v1097 = vpop.f32.mrb[0].mxu0
      %1098 = vdwg.mxu0
      %1099 = vmatprep.subr.bf16.mxu0 %v546
      %1100 = vmatpush1.bf16.msra.mxu0 %v545
      %1101 = vmatprep.subr.bf16.mxu0 %v562
      %1102 = vmatpush1.bf16.msra.mxu0 %v561
      %1103 = vmatprep.subr.bf16.mxu0 0
      %1104 = vmatpush1.bf16.msra.mxu0 0
      %1105 = vmatprep.subr.bf16.mxu0 0
      %1106 = vmatpush1.bf16.msra.mxu0 0
      %1107 = vmatprep.subr.bf16.mxu0 0
      %1108 = vmatpush1.bf16.msra.mxu0 0
      %1109 = vmatprep.subr.bf16.mxu0 0
      %1110 = vmatpush1.bf16.msra.mxu0 0
      %1111 = vmatprep.subr.bf16.mxu0 0
      %1112 = vmatpush1.bf16.msra.mxu0 0
      %1113 = vmatprep.subr.bf16.mxu0 0
      %1114 = vmatpush1.bf16.msra.mxu0 0
      %1115 = vmatprep.subr.bf16.mxu0 0
      %1116 = vmatpush1.bf16.msra.mxu0 0
      %1117 = vmatprep.subr.bf16.mxu0 0
      %1118 = vmatpush1.bf16.msra.mxu0 0
      %1119 = vmatprep.subr.bf16.mxu0 0
      %1120 = vmatpush1.bf16.msra.mxu0 0
      %1121 = vmatprep.subr.bf16.mxu0 0
      %1122 = vmatpush1.bf16.msra.mxu0 0
      %1123 = vmatprep.subr.bf16.mxu0 0
      %1124 = vmatpush1.bf16.msra.mxu0 0
      %1125 = vmatprep.subr.bf16.mxu0 0
      %1126 = vmatpush1.bf16.msra.mxu0 0
      %1127 = vmatprep.subr.bf16.mxu0 0
      %1128 = vmatpush1.bf16.msra.mxu0 0
      %1129 = vmatprep.subr.bf16.mxu0 0
      %1130 = vmatpush1.bf16.msra.mxu0 0
      %1131 = vmatprep.mubr.bf16.mxu0 0
      %1132 = vmatmul.mubr.bf16.gmra.mrb[0].mxu0 %v599
      %v1133 = vpop.f32.mrb[0].mxu0
      %v1134 = vadd.f32 %v385, %v1133
      %v1135 = vpop.f32.mrb[0].mxu0
      %v1136 = vadd.f32 %v389, %v1135
      %v1137 = vpop.f32.mrb[0].mxu0
      %v1138 = vadd.f32 %v385, %v1137
      %v1139 = vpop.f32.mrb[0].mxu0
      %v1140 = vadd.f32 %v389, %v1139
      %1141 = vmatprep.mubr.bf16.mxu0 0
      %1142 = vmatmul.mubr.bf16.gmra.mrb[0].mxu0 %v602
      %v1143 = vpop.f32.mrb[0].mxu0
      %v1144 = vadd.f32 %v385, %v1143
      %v1145 = vpop.f32.mrb[0].mxu0
      %v1146 = vadd.f32 %v389, %v1145
      %v1147 = vpop.f32.mrb[0].mxu0
      %v1148 = vadd.f32 %v385, %v1147
      %v1149 = vpop.f32.mrb[0].mxu0
      %v1150 = vadd.f32 %v389, %v1149
      %1151 = vmatprep.mubr.bf16.mxu0 0
      %1152 = vmatmul.mubr.bf16.gmra.mrb[0].mxu0 %v605
      %v1153 = vpop.f32.mrb[0].mxu0
      %v1154 = vadd.f32 %v385, %v1153
      %v1155 = vpop.f32.mrb[0].mxu0
      %v1156 = vadd.f32 %v389, %v1155
      %v1157 = vpop.f32.mrb[0].mxu0
      %v1158 = vadd.f32 %v385, %v1157
      %v1159 = vpop.f32.mrb[0].mxu0
      %v1160 = vadd.f32 %v389, %v1159
      %1161 = vmatprep.mubr.bf16.mxu0 0
      %1162 = vmatmul.mubr.bf16.gmra.mrb[0].mxu0 %v608
      %v1163 = vpop.f32.mrb[0].mxu0
      %v1164 = vadd.f32 %v385, %v1163
      %v1165 = vpop.f32.mrb[0].mxu0
      %v1166 = vadd.f32 %v389, %v1165
      %v1167 = vpop.f32.mrb[0].mxu0
      %v1168 = vadd.f32 %v385, %v1167
      %v1169 = vpop.f32.mrb[0].mxu0
      %v1170 = vadd.f32 %v389, %v1169
      %1171 = vmatprep.mubr.bf16.mxu0 0
      %1172 = vmatmul.mubr.bf16.gmra.mrb[0].mxu0 %v611
      %v1173 = vpop.f32.mrb[0].mxu0
      %v1174 = vadd.f32 %v385, %v1173
      %v1175 = vpop.f32.mrb[0].mxu0
      %v1176 = vadd.f32 %v389, %v1175
      %v1177 = vpop.f32.mrb[0].mxu0
      %v1178 = vpop.f32.mrb[0].mxu0
      %1179 = vdwg.mxu0
      %1180 = vmatprep.subr.bf16.mxu0 %v548
      %1181 = vmatpush1.bf16.msra.mxu0 %v547
      %1182 = vmatprep.subr.bf16.mxu0 %v564
      %1183 = vmatpush1.bf16.msra.mxu0 %v563
      %1184 = vmatprep.subr.bf16.mxu0 0
      %1185 = vmatpush1.bf16.msra.mxu0 0
      %1186 = vmatprep.subr.bf16.mxu0 0
      %1187 = vmatpush1.bf16.msra.mxu0 0
      %1188 = vmatprep.subr.bf16.mxu0 0
      %1189 = vmatpush1.bf16.msra.mxu0 0
      %1190 = vmatprep.subr.bf16.mxu0 0
      %1191 = vmatpush1.bf16.msra.mxu0 0
      %1192 = vmatprep.subr.bf16.mxu0 0
      %1193 = vmatpush1.bf16.msra.mxu0 0
      %1194 = vmatprep.subr.bf16.mxu0 0
      %1195 = vmatpush1.bf16.msra.mxu0 0
      %1196 = vmatprep.subr.bf16.mxu0 0
      %1197 = vmatpush1.bf16.msra.mxu0 0
      %1198 = vmatprep.subr.bf16.mxu0 0
      %1199 = vmatpush1.bf16.msra.mxu0 0
      %1200 = vmatprep.subr.bf16.mxu0 0
      %1201 = vmatpush1.bf16.msra.mxu0 0
      %1202 = vmatprep.subr.bf16.mxu0 0
      %1203 = vmatpush1.bf16.msra.mxu0 0
      %1204 = vmatprep.subr.bf16.mxu0 0
      %1205 = vmatpush1.bf16.msra.mxu0 0
      %1206 = vmatprep.subr.bf16.mxu0 0
      %1207 = vmatpush1.bf16.msra.mxu0 0
      %1208 = vmatprep.subr.bf16.mxu0 0
      %1209 = vmatpush1.bf16.msra.mxu0 0
      %1210 = vmatprep.subr.bf16.mxu0 0
      %1211 = vmatpush1.bf16.msra.mxu0 0
      %1212 = vmatprep.mubr.bf16.mxu0 0
      %1213 = vmatmul.mubr.bf16.gmra.mrb[0].mxu0 %v599
      %v1214 = vpop.f32.mrb[0].mxu0
      %v1215 = vadd.f32 %v393, %v1214
      %v1216 = vpop.f32.mrb[0].mxu0
      %v1217 = vadd.f32 %v397, %v1216
      %v1218 = vpop.f32.mrb[0].mxu0
      %v1219 = vadd.f32 %v393, %v1218
      %v1220 = vpop.f32.mrb[0].mxu0
      %v1221 = vadd.f32 %v397, %v1220
      %1222 = vmatprep.mubr.bf16.mxu0 0
      %1223 = vmatmul.mubr.bf16.gmra.mrb[0].mxu0 %v602
      %v1224 = vpop.f32.mrb[0].mxu0
      %v1225 = vadd.f32 %v393, %v1224
      %v1226 = vpop.f32.mrb[0].mxu0
      %v1227 = vadd.f32 %v397, %v1226
      %v1228 = vpop.f32.mrb[0].mxu0
      %v1229 = vadd.f32 %v393, %v1228
      %v1230 = vpop.f32.mrb[0].mxu0
      %v1231 = vadd.f32 %v397, %v1230
      %1232 = vmatprep.mubr.bf16.mxu0 0
      %1233 = vmatmul.mubr.bf16.gmra.mrb[0].mxu0 %v605
      %v1234 = vpop.f32.mrb[0].mxu0
      %v1235 = vadd.f32 %v393, %v1234
      %v1236 = vpop.f32.mrb[0].mxu0
      %v1237 = vadd.f32 %v397, %v1236
      %v1238 = vpop.f32.mrb[0].mxu0
      %v1239 = vadd.f32 %v393, %v1238
      %v1240 = vpop.f32.mrb[0].mxu0
      %v1241 = vadd.f32 %v397, %v1240
      %1242 = vmatprep.mubr.bf16.mxu0 0
      %1243 = vmatmul.mubr.bf16.gmra.mrb[0].mxu0 %v608
      %v1244 = vpop.f32.mrb[0].mxu0
      %v1245 = vadd.f32 %v393, %v1244
      %v1246 = vpop.f32.mrb[0].mxu0
      %v1247 = vadd.f32 %v397, %v1246
      %v1248 = vpop.f32.mrb[0].mxu0
      %v1249 = vadd.f32 %v393, %v1248
      %v1250 = vpop.f32.mrb[0].mxu0
      %v1251 = vadd.f32 %v397, %v1250
      %1252 = vmatprep.mubr.bf16.mxu0 0
      %1253 = vmatmul.mubr.bf16.gmra.mrb[0].mxu0 %v611
      %v1254 = vpop.f32.mrb[0].mxu0
      %v1255 = vadd.f32 %v393, %v1254
      %v1256 = vpop.f32.mrb[0].mxu0
      %v1257 = vadd.f32 %v397, %v1256
      %v1258 = vpop.f32.mrb[0].mxu0
      %v1259 = vpop.f32.mrb[0].mxu0
      %1260 = vdwg.mxu0
      %v1261 = vmax.f32 %v648, 0.0
      %v1262 = vmax.f32 %v650, 0.0
      %v1263 = vmax.f32 %v729, 0.0
      %v1264 = vmax.f32 %v731, 0.0
      %v1265 = vmax.f32 %v810, 0.0
      %v1266 = vmax.f32 %v812, 0.0
      %v1267 = vmax.f32 %v891, 0.0
      %v1268 = vmax.f32 %v893, 0.0
      %v1269 = vmax.f32 %v972, 0.0
      %v1270 = vmax.f32 %v974, 0.0
      %v1271 = vmax.f32 %v1053, 0.0
      %v1272 = vmax.f32 %v1055, 0.0
      %v1273 = vmax.f32 %v1134, 0.0
      %v1274 = vmax.f32 %v1136, 0.0
      %v1275 = vmax.f32 %v1215, 0.0
      %v1276 = vmax.f32 %v1217, 0.0
      %v1277 = vmax.f32 %v652, 0.0
      %v1278 = vmax.f32 %v654, 0.0
      %v1279 = vmax.f32 %v733, 0.0
      %v1280 = vmax.f32 %v735, 0.0
      %v1281 = vmax.f32 %v814, 0.0
      %v1282 = vmax.f32 %v816, 0.0
      %v1283 = vmax.f32 %v895, 0.0
      %v1284 = vmax.f32 %v897, 0.0
      %v1285 = vmax.f32 %v976, 0.0
      %v1286 = vmax.f32 %v978, 0.0
      %v1287 = vmax.f32 %v1057, 0.0
      %v1288 = vmax.f32 %v1059, 0.0
      %v1289 = vmax.f32 %v1138, 0.0
      %v1290 = vmax.f32 %v1140, 0.0
      %v1291 = vmax.f32 %v1219, 0.0
      %v1292 = vmax.f32 %v1221, 0.0
      %v1293 = vmax.f32 %v658, 0.0
      %v1294 = vmax.f32 %v660, 0.0
      %v1295 = vmax.f32 %v739, 0.0
      %v1296 = vmax.f32 %v741, 0.0
      %v1297 = vmax.f32 %v820, 0.0
      %v1298 = vmax.f32 %v822, 0.0
      %v1299 = vmax.f32 %v901, 0.0
      %v1300 = vmax.f32 %v903, 0.0
      %v1301 = vmax.f32 %v982, 0.0
      %v1302 = vmax.f32 %v984, 0.0
      %v1303 = vmax.f32 %v1063, 0.0
      %v1304 = vmax.f32 %v1065, 0.0
      %v1305 = vmax.f32 %v1144, 0.0
      %v1306 = vmax.f32 %v1146, 0.0
      %v1307 = vmax.f32 %v1225, 0.0
      %v1308 = vmax.f32 %v1227, 0.0
      %v1309 = vmax.f32 %v662, 0.0
      %v1310 = vmax.f32 %v664, 0.0
      %v1311 = vmax.f32 %v743, 0.0
      %v1312 = vmax.f32 %v745, 0.0
      %v1313 = vmax.f32 %v824, 0.0
      %v1314 = vmax.f32 %v826, 0.0
      %v1315 = vmax.f32 %v905, 0.0
      %v1316 = vmax.f32 %v907, 0.0
      %v1317 = vmax.f32 %v986, 0.0
      %v1318 = vmax.f32 %v988, 0.0
      %v1319 = vmax.f32 %v1067, 0.0
      %v1320 = vmax.f32 %v1069, 0.0
      %v1321 = vmax.f32 %v1148, 0.0
      %v1322 = vmax.f32 %v1150, 0.0
      %v1323 = vmax.f32 %v1229, 0.0
      %v1324 = vmax.f32 %v1231, 0.0
      %v1325 = vmax.f32 %v668, 0.0
      %v1326 = vmax.f32 %v670, 0.0
      %v1327 = vmax.f32 %v749, 0.0
      %v1328 = vmax.f32 %v751, 0.0
      %v1329 = vmax.f32 %v830, 0.0
      %v1330 = vmax.f32 %v832, 0.0
      %v1331 = vmax.f32 %v911, 0.0
      %v1332 = vmax.f32 %v913, 0.0
      %v1333 = vmax.f32 %v992, 0.0
      %v1334 = vmax.f32 %v994, 0.0
      %v1335 = vmax.f32 %v1073, 0.0
      %v1336 = vmax.f32 %v1075, 0.0
      %v1337 = vmax.f32 %v1154, 0.0
      %v1338 = vmax.f32 %v1156, 0.0
      %v1339 = vmax.f32 %v1235, 0.0
      %v1340 = vmax.f32 %v1237, 0.0
      %v1341 = vmax.f32 %v672, 0.0
      %v1342 = vmax.f32 %v674, 0.0
      %v1343 = vmax.f32 %v753, 0.0
      %v1344 = vmax.f32 %v755, 0.0
      %v1345 = vmax.f32 %v834, 0.0
      %v1346 = vmax.f32 %v836, 0.0
      %v1347 = vmax.f32 %v915, 0.0
      %v1348 = vmax.f32 %v917, 0.0
      %v1349 = vmax.f32 %v996, 0.0
      %v1350 = vmax.f32 %v998, 0.0
      %v1351 = vmax.f32 %v1077, 0.0
      %v1352 = vmax.f32 %v1079, 0.0
      %v1353 = vmax.f32 %v1158, 0.0
      %v1354 = vmax.f32 %v1160, 0.0
      %v1355 = vmax.f32 %v1239, 0.0
      %v1356 = vmax.f32 %v1241, 0.0
      %v1357 = vmax.f32 %v678, 0.0
      %v1358 = vmax.f32 %v680, 0.0
      %v1359 = vmax.f32 %v759, 0.0
      %v1360 = vmax.f32 %v761, 0.0
      %v1361 = vmax.f32 %v840, 0.0
      %v1362 = vmax.f32 %v842, 0.0
      %v1363 = vmax.f32 %v921, 0.0
      %v1364 = vmax.f32 %v923, 0.0
      %v1365 = vmax.f32 %v1002, 0.0
      %v1366 = vmax.f32 %v1004, 0.0
      %v1367 = vmax.f32 %v1083, 0.0
      %v1368 = vmax.f32 %v1085, 0.0
      %v1369 = vmax.f32 %v1164, 0.0
      %v1370 = vmax.f32 %v1166, 0.0
      %v1371 = vmax.f32 %v1245, 0.0
      %v1372 = vmax.f32 %v1247, 0.0
      %v1373 = vmax.f32 %v682, 0.0
      %v1374 = vmax.f32 %v684, 0.0
      %v1375 = vmax.f32 %v763, 0.0
      %v1376 = vmax.f32 %v765, 0.0
      %v1377 = vmax.f32 %v844, 0.0
      %v1378 = vmax.f32 %v846, 0.0
      %v1379 = vmax.f32 %v925, 0.0
      %v1380 = vmax.f32 %v927, 0.0
      %v1381 = vmax.f32 %v1006, 0.0
      %v1382 = vmax.f32 %v1008, 0.0
      %v1383 = vmax.f32 %v1087, 0.0
      %v1384 = vmax.f32 %v1089, 0.0
      %v1385 = vmax.f32 %v1168, 0.0
      %v1386 = vmax.f32 %v1170, 0.0
      %v1387 = vmax.f32 %v1249, 0.0
      %v1388 = vmax.f32 %v1251, 0.0
      %v1389 = vmax.f32 %v688, 0.0
      %v1390 = vmax.f32 %v690, 0.0
      %v1391 = vmax.f32 %v769, 0.0
      %v1392 = vmax.f32 %v771, 0.0
      %v1393 = vmax.f32 %v850, 0.0
      %v1394 = vmax.f32 %v852, 0.0
      %v1395 = vmax.f32 %v931, 0.0
      %v1396 = vmax.f32 %v933, 0.0
      %v1397 = vmax.f32 %v1012, 0.0
      %v1398 = vmax.f32 %v1014, 0.0
      %v1399 = vmax.f32 %v1093, 0.0
      %v1400 = vmax.f32 %v1095, 0.0
      %v1401 = vmax.f32 %v1174, 0.0
      %v1402 = vmax.f32 %v1176, 0.0
      %v1403 = vmax.f32 %v1255, 0.0
      %v1404 = vmax.f32 %v1257, 0.0
      %v1405 = vpack.c.bf16 %v1277, %v1261
      %v1406 = vpack.c.bf16 %v1278, %v1262
      %v1407 = vpack.c.bf16 %v1279, %v1263
      %v1408 = vpack.c.bf16 %v1280, %v1264
      %v1409 = vpack.c.bf16 %v1281, %v1265
      %v1410 = vpack.c.bf16 %v1282, %v1266
      %v1411 = vpack.c.bf16 %v1283, %v1267
      %v1412 = vpack.c.bf16 %v1284, %v1268
      %v1413 = vpack.c.bf16 %v1285, %v1269
      %v1414 = vpack.c.bf16 %v1286, %v1270
      %v1415 = vpack.c.bf16 %v1287, %v1271
      %v1416 = vpack.c.bf16 %v1288, %v1272
      %v1417 = vpack.c.bf16 %v1289, %v1273
      %v1418 = vpack.c.bf16 %v1290, %v1274
      %v1419 = vpack.c.bf16 %v1291, %v1275
      %v1420 = vpack.c.bf16 %v1292, %v1276
      %v1421 = vpack.c.bf16 %v1309, %v1293
      %v1422 = vpack.c.bf16 %v1310, %v1294
      %v1423 = vpack.c.bf16 %v1311, %v1295
      %v1424 = vpack.c.bf16 %v1312, %v1296
      %v1425 = vpack.c.bf16 %v1313, %v1297
      %v1426 = vpack.c.bf16 %v1314, %v1298
      %v1427 = vpack.c.bf16 %v1315, %v1299
      %v1428 = vpack.c.bf16 %v1316, %v1300
      %v1429 = vpack.c.bf16 %v1317, %v1301
      %v1430 = vpack.c.bf16 %v1318, %v1302
      %v1431 = vpack.c.bf16 %v1319, %v1303
      %v1432 = vpack.c.bf16 %v1320, %v1304
      %v1433 = vpack.c.bf16 %v1321, %v1305
      %v1434 = vpack.c.bf16 %v1322, %v1306
      %v1435 = vpack.c.bf16 %v1323, %v1307
      %v1436 = vpack.c.bf16 %v1324, %v1308
      %v1437 = vpack.c.bf16 %v1341, %v1325
      %v1438 = vpack.c.bf16 %v1342, %v1326
      %v1439 = vpack.c.bf16 %v1343, %v1327
      %v1440 = vpack.c.bf16 %v1344, %v1328
      %v1441 = vpack.c.bf16 %v1345, %v1329
      %v1442 = vpack.c.bf16 %v1346, %v1330
      %v1443 = vpack.c.bf16 %v1347, %v1331
      %v1444 = vpack.c.bf16 %v1348, %v1332
      %v1445 = vpack.c.bf16 %v1349, %v1333
      %v1446 = vpack.c.bf16 %v1350, %v1334
      %v1447 = vpack.c.bf16 %v1351, %v1335
      %v1448 = vpack.c.bf16 %v1352, %v1336
      %v1449 = vpack.c.bf16 %v1353, %v1337
      %v1450 = vpack.c.bf16 %v1354, %v1338
      %v1451 = vpack.c.bf16 %v1355, %v1339
      %v1452 = vpack.c.bf16 %v1356, %v1340
      %v1453 = vpack.c.bf16 %v1373, %v1357
      %v1454 = vpack.c.bf16 %v1374, %v1358
      %v1455 = vpack.c.bf16 %v1375, %v1359
      %v1456 = vpack.c.bf16 %v1376, %v1360
      %v1457 = vpack.c.bf16 %v1377, %v1361
      %v1458 = vpack.c.bf16 %v1378, %v1362
      %v1459 = vpack.c.bf16 %v1379, %v1363
      %v1460 = vpack.c.bf16 %v1380, %v1364
      %v1461 = vpack.c.bf16 %v1381, %v1365
      %v1462 = vpack.c.bf16 %v1382, %v1366
      %v1463 = vpack.c.bf16 %v1383, %v1367
      %v1464 = vpack.c.bf16 %v1384, %v1368
      %v1465 = vpack.c.bf16 %v1385, %v1369
      %v1466 = vpack.c.bf16 %v1386, %v1370
      %v1467 = vpack.c.bf16 %v1387, %v1371
      %v1468 = vpack.c.bf16 %v1388, %v1372
      %v1469 = vpack.c.bf16 %v1389, %v1389
      %v1470 = vpack.c.bf16 %v1390, %v1390
      %v1471 = vpack.c.bf16 %v1391, %v1391
      %v1472 = vpack.c.bf16 %v1392, %v1392
      %v1473 = vpack.c.bf16 %v1393, %v1393
      %v1474 = vpack.c.bf16 %v1394, %v1394
      %v1475 = vpack.c.bf16 %v1395, %v1395
      %v1476 = vpack.c.bf16 %v1396, %v1396
      %v1477 = vpack.c.bf16 %v1397, %v1397
      %v1478 = vpack.c.bf16 %v1398, %v1398
      %v1479 = vpack.c.bf16 %v1399, %v1399
      %v1480 = vpack.c.bf16 %v1400, %v1400
      %v1481 = vpack.c.bf16 %v1401, %v1401
      %v1482 = vpack.c.bf16 %v1402, %v1402
      %v1483 = vpack.c.bf16 %v1403, %v1403
      %v1484 = vpack.c.bf16 %v1404, %v1404
      %v1485 = vld [vmem:[%s3] sm:$0xf]
      %v1486 = vld [vmem:[%s3 + $0x4] sm:$0xf]
      %v1487 = vld [vmem:[%s3 + $0x8] sm:$0xf]
      %v1488 = vld [vmem:[%s3 + $0xc] sm:$0xf]
      %v1489 = vld [vmem:[%s3 + $0x10] sm:$0xf]
      %v1490 = vld [vmem:[%s3 + $0x14] sm:$0xf]
      %v1491 = vld [vmem:[%s3 + $0x18] sm:$0xf]
      %v1492 = vld [vmem:[%s3 + $0x1c] sm:$0xf]
      %v1493 = vld [vmem:[%s3 + $0x20] sm:$0xf]
      %v1494 = vld [vmem:[%s3 + $0x24] sm:$0xf]
      %v1495 = vld [vmem:[%s3 + $0x28] sm:$0xf]
      %v1496 = vld [vmem:[%s3 + $0x2c] sm:$0xf]
      %v1497 = vld [vmem:[%s3 + $0x30] sm:$0xf]
      %v1498 = vld [vmem:[%s3 + $0x34] sm:$0xf]
      %v1499 = vld [vmem:[%s3 + $0x38] sm:$0xf]
      %v1500 = vld [vmem:[%s3 + $0x3c] sm:$0xf]
      %v1501 = vld [vmem:[%s3 + $0x40] sm:$0xf]
      %v1502 = vld [vmem:[%s3 + $0x44] sm:$0xf]
      %v1503 = vld [vmem:[%s3 + $0x48] sm:$0xf]
      %v1504 = vld [vmem:[%s3 + $0x4c] sm:$0xf]
      %v1505 = vld [vmem:[%s3 + $0x50] sm:$0xf]
      %v1506 = vld [vmem:[%s3 + $0x54] sm:$0xf]
      %v1507 = vld [vmem:[%s3 + $0x58] sm:$0xf]
      %v1508 = vld [vmem:[%s3 + $0x5c] sm:$0xf]
      %v1509 = vld [vmem:[%s3 + $0x60] sm:$0xf]
      %v1510 = vld [vmem:[%s3 + $0x64] sm:$0xf]
      %v1511 = vld [vmem:[%s3 + $0x68] sm:$0xf]
      %v1512 = vld [vmem:[%s3 + $0x6c] sm:$0xf]
      %v1513 = vld [vmem:[%s3 + $0x70] sm:$0xf]
      %v1514 = vld [vmem:[%s3 + $0x74] sm:$0xf]
      %v1515 = vld [vmem:[%s3 + $0x78] sm:$0xf]
      %v1516 = vld [vmem:[%s3 + $0x7c] sm:$0xf]
      %v1517 = vld [vmem:[%s3 + $0x80] sm:$0xf]
      %v1518 = vld [vmem:[%s3 + $0x84] sm:$0xf]
      %v1519 = vld [vmem:[%s3 + $0x88] sm:$0xf]
      %v1520 = vld [vmem:[%s3 + $0x8c] sm:$0xf]
      %v1521 = vld [vmem:[%s3 + $0x90] sm:$0xf]
      %v1522 = vld [vmem:[%s3 + $0x94] sm:$0xf]
      %v1523 = vld [vmem:[%s3 + $0x98] sm:$0xf]
      %v1524 = vld [vmem:[%s3 + $0x9c] sm:$0xf]
      %v1525 = vld [vmem:[%s3 + $0xa0] sm:$0xf]
      %v1526 = vld [vmem:[%s3 + $0xa4] sm:$0xf]
      %v1527 = vld [vmem:[%s3 + $0xa8] sm:$0xf]
      %v1528 = vld [vmem:[%s3 + $0xac] sm:$0xf]
      %v1529 = vld [vmem:[%s3 + $0xb0] sm:$0xf]
      %v1530 = vld [vmem:[%s3 + $0xb4] sm:$0xf]
      %v1531 = vld [vmem:[%s3 + $0xb8] sm:$0xf]
      %v1532 = vld [vmem:[%s3 + $0xbc] sm:$0xf]
      %v1533 = vld [vmem:[%s3 + $0xc0] sm:$0xf]
      %v1534 = vld [vmem:[%s3 + $0xc4] sm:$0xf]
      %v1535 = vld [vmem:[%s3 + $0xc8] sm:$0xf]
      %v1536 = vld [vmem:[%s3 + $0xcc] sm:$0xf]
      %v1537 = vld [vmem:[%s3 + $0xd0] sm:$0xf]
      %v1538 = vld [vmem:[%s3 + $0xd4] sm:$0xf]
      %v1539 = vld [vmem:[%s3 + $0xd8] sm:$0xf]
      %v1540 = vld [vmem:[%s3 + $0xdc] sm:$0xf]
      %v1541 = vld [vmem:[%s3 + $0xe0] sm:$0xf]
      %v1542 = vld [vmem:[%s3 + $0xe4] sm:$0xf]
      %v1543 = vld [vmem:[%s3 + $0xe8] sm:$0xf]
      %v1544 = vld [vmem:[%s3 + $0xec] sm:$0xf]
      %v1545 = vld [vmem:[%s3 + $0xf0] sm:$0xf]
      %v1546 = vld [vmem:[%s3 + $0xf4] sm:$0xf]
      %v1547 = vld [vmem:[%s3 + $0xf8] sm:$0xf]
      %v1548 = vld [vmem:[%s3 + $0xfc] sm:$0xf]
      %v1549 = vld [vmem:[%s3 + $0x100] sm:$0xf]
      %v1550 = vld [vmem:[%s3 + $0x104] sm:$0xf]
      %v1551 = vld [vmem:[%s3 + $0x108] sm:$0xf]
      %v1552 = vld [vmem:[%s3 + $0x10c] sm:$0xf]
      %v1553 = vld [vmem:[%s3 + $0x110] sm:$0xf]
      %v1554 = vld [vmem:[%s3 + $0x114] sm:$0xf]
      %v1555 = vld [vmem:[%s3 + $0x118] sm:$0xf]
      %v1556 = vld [vmem:[%s3 + $0x11c] sm:$0xf]
      %v1557 = vld [vmem:[%s3 + $0x120] sm:$0xf]
      %v1558 = vld [vmem:[%s3 + $0x124] sm:$0xf]
      %v1559 = vld [vmem:[%s3 + $0x128] sm:$0xf]
      %v1560 = vld [vmem:[%s3 + $0x12c] sm:$0xf]
      %v1561 = vld [vmem:[%s3 + $0x130] sm:$0xf]
      %v1562 = vld [vmem:[%s3 + $0x134] sm:$0xf]
      %v1563 = vld [vmem:[%s3 + $0x138] sm:$0xf]
      %v1564 = vld [vmem:[%s3 + $0x13c] sm:$0xf]
      %v1565 = vld [vmem:[%s3 + $0x140] sm:$0xf]
      %v1566 = vld [vmem:[%s3 + $0x144] sm:$0xf]
      %v1567 = vld [vmem:[%s3 + $0x148] sm:$0xf]
      %v1568 = vld [vmem:[%s3 + $0x14c] sm:$0xf]
      %v1569 = vld [vmem:[%s3 + $0x150] sm:$0xf]
      %v1570 = vld [vmem:[%s3 + $0x154] sm:$0xf]
      %v1571 = vld [vmem:[%s3 + $0x158] sm:$0xf]
      %v1572 = vld [vmem:[%s3 + $0x15c] sm:$0xf]
      %v1573 = vld [vmem:[%s3 + $0x160] sm:$0xf]
      %v1574 = vld [vmem:[%s3 + $0x164] sm:$0xf]
      %v1575 = vld [vmem:[%s3 + $0x168] sm:$0xf]
      %v1576 = vld [vmem:[%s3 + $0x16c] sm:$0xf]
      %v1577 = vld [vmem:[%s3 + $0x170] sm:$0xf]
      %v1578 = vld [vmem:[%s3 + $0x174] sm:$0xf]
      %v1579 = vld [vmem:[%s3 + $0x178] sm:$0xf]
      %v1580 = vld [vmem:[%s3 + $0x17c] sm:$0xf]
      %v1581 = vld [vmem:[%s3 + $0x180] sm:$0xf]
      %v1582 = vld [vmem:[%s3 + $0x184] sm:$0xf]
      %v1583 = vld [vmem:[%s3 + $0x188] sm:$0xf]
      %v1584 = vld [vmem:[%s3 + $0x18c] sm:$0xf]
      %v1585 = vld [vmem:[%s3 + $0x190] sm:$0xf]
      %v1586 = vld [vmem:[%s3 + $0x194] sm:$0xf]
      %v1587 = vld [vmem:[%s3 + $0x198] sm:$0xf]
      %v1588 = vld [vmem:[%s3 + $0x19c] sm:$0xf]
      %v1589 = vld [vmem:[%s3 + $0x1a0] sm:$0xf]
      %v1590 = vld [vmem:[%s3 + $0x1a4] sm:$0xf]
      %v1591 = vld [vmem:[%s3 + $0x1a8] sm:$0xf]
      %v1592 = vld [vmem:[%s3 + $0x1ac] sm:$0xf]
      %v1593 = vld [vmem:[%s3 + $0x1b0] sm:$0xf]
      %v1594 = vld [vmem:[%s3 + $0x1b4] sm:$0xf]
      %v1595 = vld [vmem:[%s3 + $0x1b8] sm:$0xf]
      %v1596 = vld [vmem:[%s3 + $0x1bc] sm:$0xf]
      %v1597 = vld [vmem:[%s3 + $0x1c0] sm:$0xf]
      %v1598 = vld [vmem:[%s3 + $0x1c4] sm:$0xf]
      %v1599 = vld [vmem:[%s3 + $0x1c8] sm:$0xf]
      %v1600 = vld [vmem:[%s3 + $0x1cc] sm:$0xf]
      %v1601 = vld [vmem:[%s3 + $0x1d0] sm:$0xf]
      %v1602 = vld [vmem:[%s3 + $0x1d4] sm:$0xf]
      %v1603 = vld [vmem:[%s3 + $0x1d8] sm:$0xf]
      %v1604 = vld [vmem:[%s3 + $0x1dc] sm:$0xf]
      %v1605 = vld [vmem:[%s3 + $0x1e0] sm:$0xf]
      %v1606 = vld [vmem:[%s3 + $0x1e4] sm:$0xf]
      %v1607 = vld [vmem:[%s3 + $0x1e8] sm:$0xf]
      %v1608 = vld [vmem:[%s3 + $0x1ec] sm:$0xf]
      %v1609 = vld [vmem:[%s3 + $0x1f0] sm:$0xf]
      %v1610 = vld [vmem:[%s3 + $0x1f4] sm:$0xf]
      %v1611 = vld [vmem:[%s3 + $0x1f8] sm:$0xf]
      %v1612 = vld [vmem:[%s3 + $0x1fc] sm:$0xf]
      %v1613 = vld [vmem:[%s3 + $0x200] sm:$0xf]
      %v1614 = vld [vmem:[%s3 + $0x204] sm:$0xf]
      %v1615 = vld [vmem:[%s3 + $0x208] sm:$0xf]
      %v1616 = vld [vmem:[%s3 + $0x20c] sm:$0xf]
      %v1617 = vld [vmem:[%s3 + $0x210] sm:$0xf]
      %v1618 = vld [vmem:[%s3 + $0x214] sm:$0xf]
      %v1619 = vld [vmem:[%s3 + $0x218] sm:$0xf]
      %v1620 = vld [vmem:[%s3 + $0x21c] sm:$0xf]
      %v1621 = vld [vmem:[%s3 + $0x220] sm:$0xf]
      %v1622 = vld [vmem:[%s3 + $0x224] sm:$0xf]
      %v1623 = vld [vmem:[%s3 + $0x228] sm:$0xf]
      %v1624 = vld [vmem:[%s3 + $0x22c] sm:$0xf]
      %v1625 = vld [vmem:[%s3 + $0x230] sm:$0xf]
      %v1626 = vld [vmem:[%s3 + $0x234] sm:$0xf]
      %v1627 = vld [vmem:[%s3 + $0x238] sm:$0xf]
      %v1628 = vld [vmem:[%s3 + $0x23c] sm:$0xf]
      %v1629 = vld [vmem:[%s3 + $0x240] sm:$0xf]
      %v1630 = vld [vmem:[%s3 + $0x244] sm:$0xf]
      %v1631 = vld [vmem:[%s3 + $0x248] sm:$0xf]
      %v1632 = vld [vmem:[%s3 + $0x24c] sm:$0xf]
      %v1633 = vld [vmem:[%s3 + $0x250] sm:$0xf]
      %v1634 = vld [vmem:[%s3 + $0x254] sm:$0xf]
      %v1635 = vld [vmem:[%s3 + $0x258] sm:$0xf]
      %v1636 = vld [vmem:[%s3 + $0x25c] sm:$0xf]
      %v1637 = vld [vmem:[%s3 + $0x260] sm:$0xf]
      %v1638 = vld [vmem:[%s3 + $0x264] sm:$0xf]
      %v1639 = vld [vmem:[%s3 + $0x268] sm:$0xf]
      %v1640 = vld [vmem:[%s3 + $0x26c] sm:$0xf]
      %v1641 = vld [vmem:[%s3 + $0x270] sm:$0xf]
      %v1642 = vld [vmem:[%s3 + $0x274] sm:$0xf]
      %v1643 = vld [vmem:[%s3 + $0x278] sm:$0xf]
      %v1644 = vld [vmem:[%s3 + $0x27c] sm:$0xf]
      %v1645 = vld [vmem:[%s3 + $0x280] sm:$0xf]
      %v1646 = vld [vmem:[%s3 + $0x284] sm:$0xf]
      %v1647 = vld [vmem:[%s3 + $0x288] sm:$0xf]
      %v1648 = vld [vmem:[%s3 + $0x28c] sm:$0xf]
      %v1649 = vld [vmem:[%s3 + $0x290] sm:$0xf]
      %v1650 = vld [vmem:[%s3 + $0x294] sm:$0xf]
      %v1651 = vld [vmem:[%s3 + $0x298] sm:$0xf]
      %v1652 = vld [vmem:[%s3 + $0x29c] sm:$0xf]
      %v1653 = vld [vmem:[%s3 + $0x2a0] sm:$0xf]
      %v1654 = vld [vmem:[%s3 + $0x2a4] sm:$0xf]
      %v1655 = vld [vmem:[%s3 + $0x2a8] sm:$0xf]
      %v1656 = vld [vmem:[%s3 + $0x2ac] sm:$0xf]
      %v1657 = vld [vmem:[%s3 + $0x2b0] sm:$0xf]
      %v1658 = vld [vmem:[%s3 + $0x2b4] sm:$0xf]
      %v1659 = vld [vmem:[%s3 + $0x2b8] sm:$0xf]
      %v1660 = vld [vmem:[%s3 + $0x2bc] sm:$0xf]
      %v1661 = vld [vmem:[%s3 + $0x2c0] sm:$0xf]
      %v1662 = vld [vmem:[%s3 + $0x2c4] sm:$0xf]
      %v1663 = vld [vmem:[%s3 + $0x2c8] sm:$0xf]
      %v1664 = vld [vmem:[%s3 + $0x2cc] sm:$0xf]
      %v1665 = vld [vmem:[%s3 + $0x2d0] sm:$0xf]
      %v1666 = vld [vmem:[%s3 + $0x2d4] sm:$0xf]
      %v1667 = vld [vmem:[%s3 + $0x2d8] sm:$0xf]
      %v1668 = vld [vmem:[%s3 + $0x2dc] sm:$0xf]
      %v1669 = vld [vmem:[%s3 + $0x2e0] sm:$0xf]
      %v1670 = vld [vmem:[%s3 + $0x2e4] sm:$0xf]
      %v1671 = vld [vmem:[%s3 + $0x2e8] sm:$0xf]
      %v1672 = vld [vmem:[%s3 + $0x2ec] sm:$0xf]
      %v1673 = vld [vmem:[%s3 + $0x2f0] sm:$0xf]
      %v1674 = vld [vmem:[%s3 + $0x2f4] sm:$0xf]
      %v1675 = vld [vmem:[%s3 + $0x2f8] sm:$0xf]
      %v1676 = vld [vmem:[%s3 + $0x2fc] sm:$0xf]
      %v1677 = vld [vmem:[%s3 + $0x300] sm:$0xf]
      %v1678 = vld [vmem:[%s3 + $0x304] sm:$0xf]
      %v1679 = vld [vmem:[%s3 + $0x308] sm:$0xf]
      %v1680 = vld [vmem:[%s3 + $0x30c] sm:$0xf]
      %v1681 = vld [vmem:[%s3 + $0x310] sm:$0xf]
      %v1682 = vld [vmem:[%s3 + $0x314] sm:$0xf]
      %v1683 = vld [vmem:[%s3 + $0x318] sm:$0xf]
      %v1684 = vld [vmem:[%s3 + $0x31c] sm:$0xf]
      %v1685 = vld [vmem:[%s3 + $0x320] sm:$0xf]
      %v1686 = vld [vmem:[%s3 + $0x324] sm:$0xf]
      %v1687 = vld [vmem:[%s3 + $0x328] sm:$0xf]
      %v1688 = vld [vmem:[%s3 + $0x32c] sm:$0xf]
      %v1689 = vld [vmem:[%s3 + $0x330] sm:$0xf]
      %v1690 = vld [vmem:[%s3 + $0x334] sm:$0xf]
      %v1691 = vld [vmem:[%s3 + $0x338] sm:$0xf]
      %v1692 = vld [vmem:[%s3 + $0x33c] sm:$0xf]
      %v1693 = vld [vmem:[%s3 + $0x340] sm:$0xf]
      %v1694 = vld [vmem:[%s3 + $0x344] sm:$0xf]
      %v1695 = vld [vmem:[%s3 + $0x348] sm:$0xf]
      %v1696 = vld [vmem:[%s3 + $0x34c] sm:$0xf]
      %v1697 = vld [vmem:[%s3 + $0x350] sm:$0xf]
      %v1698 = vld [vmem:[%s3 + $0x354] sm:$0xf]
      %v1699 = vld [vmem:[%s3 + $0x358] sm:$0xf]
      %v1700 = vld [vmem:[%s3 + $0x35c] sm:$0xf]
      %v1701 = vld [vmem:[%s3 + $0x360] sm:$0xf]
      %v1702 = vld [vmem:[%s3 + $0x364] sm:$0xf]
      %v1703 = vld [vmem:[%s3 + $0x368] sm:$0xf]
      %v1704 = vld [vmem:[%s3 + $0x36c] sm:$0xf]
      %v1705 = vld [vmem:[%s3 + $0x370] sm:$0xf]
      %v1706 = vld [vmem:[%s3 + $0x374] sm:$0xf]
      %v1707 = vld [vmem:[%s3 + $0x378] sm:$0xf]
      %v1708 = vld [vmem:[%s3 + $0x37c] sm:$0xf]
      %v1709 = vld [vmem:[%s3 + $0x380] sm:$0xf]
      %v1710 = vld [vmem:[%s3 + $0x384] sm:$0xf]
      %v1711 = vld [vmem:[%s3 + $0x388] sm:$0xf]
      %v1712 = vld [vmem:[%s3 + $0x38c] sm:$0xf]
      %v1713 = vld [vmem:[%s3 + $0x390] sm:$0xf]
      %v1714 = vld [vmem:[%s3 + $0x394] sm:$0xf]
      %v1715 = vld [vmem:[%s3 + $0x398] sm:$0xf]
      %v1716 = vld [vmem:[%s3 + $0x39c] sm:$0xf]
      %v1717 = vld [vmem:[%s3 + $0x3a0] sm:$0xf]
      %v1718 = vld [vmem:[%s3 + $0x3a4] sm:$0xf]
      %v1719 = vld [vmem:[%s3 + $0x3a8] sm:$0xf]
      %v1720 = vld [vmem:[%s3 + $0x3ac] sm:$0xf]
      %v1721 = vld [vmem:[%s3 + $0x3b0] sm:$0xf]
      %v1722 = vld [vmem:[%s3 + $0x3b4] sm:$0xf]
      %v1723 = vld [vmem:[%s3 + $0x3b8] sm:$0xf]
      %v1724 = vld [vmem:[%s3 + $0x3bc] sm:$0xf]
      %v1725 = vld [vmem:[%s3 + $0x3c0] sm:$0xf]
      %v1726 = vld [vmem:[%s3 + $0x3c4] sm:$0xf]
      %v1727 = vld [vmem:[%s3 + $0x3c8] sm:$0xf]
      %v1728 = vld [vmem:[%s3 + $0x3cc] sm:$0xf]
      %v1729 = vld [vmem:[%s3 + $0x3d0] sm:$0xf]
      %v1730 = vld [vmem:[%s3 + $0x3d4] sm:$0xf]
      %v1731 = vld [vmem:[%s3 + $0x3d8] sm:$0xf]
      %v1732 = vld [vmem:[%s3 + $0x3dc] sm:$0xf]
      %v1733 = vld [vmem:[%s3 + $0x3e0] sm:$0xf]
      %v1734 = vld [vmem:[%s3 + $0x3e4] sm:$0xf]
      %v1735 = vld [vmem:[%s3 + $0x3e8] sm:$0xf]
      %v1736 = vld [vmem:[%s3 + $0x3ec] sm:$0xf]
      %v1737 = vld [vmem:[%s3 + $0x3f0] sm:$0xf]
      %v1738 = vld [vmem:[%s3 + $0x3f4] sm:$0xf]
      %v1739 = vld [vmem:[%s3 + $0x3f8] sm:$0xf]
      %v1740 = vld [vmem:[%s3 + $0x3fc] sm:$0xf]
      %v1997 = vunpack.c.l.b16 %v1485
      %v1998 = vunpack.c.l.b16 %v1486
      %v1999 = vunpack.c.l.b16 %v1487
      %v2000 = vunpack.c.l.b16 %v1488
      %v2001 = vunpack.c.l.b16 %v1489
      %v2002 = vunpack.c.l.b16 %v1490
      %v2003 = vunpack.c.l.b16 %v1491
      %v2004 = vunpack.c.l.b16 %v1492
      %v2005 = vunpack.c.l.b16 %v1493
      %v2006 = vunpack.c.l.b16 %v1494
      %v2007 = vunpack.c.l.b16 %v1495
      %v2008 = vunpack.c.l.b16 %v1496
      %v2009 = vunpack.c.l.b16 %v1497
      %v2010 = vunpack.c.l.b16 %v1498
      %v2011 = vunpack.c.l.b16 %v1499
      %v2012 = vunpack.c.l.b16 %v1500
      %v2013 = vunpack.c.l.b16 %v1501
      %v2014 = vunpack.c.l.b16 %v1502
      %v2015 = vunpack.c.l.b16 %v1503
      %v2016 = vunpack.c.l.b16 %v1504
      %v2017 = vunpack.c.l.b16 %v1505
      %v2018 = vunpack.c.l.b16 %v1506
      %v2019 = vunpack.c.l.b16 %v1507
      %v2020 = vunpack.c.l.b16 %v1508
      %v2021 = vunpack.c.l.b16 %v1509
      %v2022 = vunpack.c.l.b16 %v1510
      %v2023 = vunpack.c.l.b16 %v1511
      %v2024 = vunpack.c.l.b16 %v1512
      %v2025 = vunpack.c.l.b16 %v1513
      %v2026 = vunpack.c.l.b16 %v1514
      %v2027 = vunpack.c.l.b16 %v1515
      %v2028 = vunpack.c.l.b16 %v1516
      %v2029 = vunpack.c.l.b16 %v1517
      %v2030 = vunpack.c.l.b16 %v1518
      %v2031 = vunpack.c.l.b16 %v1519
      %v2032 = vunpack.c.l.b16 %v1520
      %v2033 = vunpack.c.l.b16 %v1521
      %v2034 = vunpack.c.l.b16 %v1522
      %v2035 = vunpack.c.l.b16 %v1523
      %v2036 = vunpack.c.l.b16 %v1524
      %v2037 = vunpack.c.l.b16 %v1525
      %v2038 = vunpack.c.l.b16 %v1526
      %v2039 = vunpack.c.l.b16 %v1527
      %v2040 = vunpack.c.l.b16 %v1528
      %v2041 = vunpack.c.l.b16 %v1529
      %v2042 = vunpack.c.l.b16 %v1530
      %v2043 = vunpack.c.l.b16 %v1531
      %v2044 = vunpack.c.l.b16 %v1532
      %v2045 = vunpack.c.l.b16 %v1533
      %v2046 = vunpack.c.l.b16 %v1534
      %v2047 = vunpack.c.l.b16 %v1535
      %v2048 = vunpack.c.l.b16 %v1536
      %v2049 = vunpack.c.l.b16 %v1537
      %v2050 = vunpack.c.l.b16 %v1538
      %v2051 = vunpack.c.l.b16 %v1539
      %v2052 = vunpack.c.l.b16 %v1540
      %v2053 = vunpack.c.l.b16 %v1541
      %v2054 = vunpack.c.l.b16 %v1542
      %v2055 = vunpack.c.l.b16 %v1543
      %v2056 = vunpack.c.l.b16 %v1544
      %v2057 = vunpack.c.l.b16 %v1545
      %v2058 = vunpack.c.l.b16 %v1546
      %v2059 = vunpack.c.l.b16 %v1547
      %v2060 = vunpack.c.l.b16 %v1548
      %v2061 = vunpack.c.l.b16 %v1549
      %v2062 = vunpack.c.l.b16 %v1550
      %v2063 = vunpack.c.l.b16 %v1551
      %v2064 = vunpack.c.l.b16 %v1552
      %v2065 = vunpack.c.l.b16 %v1553
      %v2066 = vunpack.c.l.b16 %v1554
      %v2067 = vunpack.c.l.b16 %v1555
      %v2068 = vunpack.c.l.b16 %v1556
      %v2069 = vunpack.c.l.b16 %v1557
      %v2070 = vunpack.c.l.b16 %v1558
      %v2071 = vunpack.c.l.b16 %v1559
      %v2072 = vunpack.c.l.b16 %v1560
      %v2073 = vunpack.c.l.b16 %v1561
      %v2074 = vunpack.c.l.b16 %v1562
      %v2075 = vunpack.c.l.b16 %v1563
      %v2076 = vunpack.c.l.b16 %v1564
      %v2077 = vunpack.c.l.b16 %v1565
      %v2078 = vunpack.c.l.b16 %v1566
      %v2079 = vunpack.c.l.b16 %v1567
      %v2080 = vunpack.c.l.b16 %v1568
      %v2081 = vunpack.c.l.b16 %v1569
      %v2082 = vunpack.c.l.b16 %v1570
      %v2083 = vunpack.c.l.b16 %v1571
      %v2084 = vunpack.c.l.b16 %v1572
      %v2085 = vunpack.c.l.b16 %v1573
      %v2086 = vunpack.c.l.b16 %v1574
      %v2087 = vunpack.c.l.b16 %v1575
      %v2088 = vunpack.c.l.b16 %v1576
      %v2089 = vunpack.c.l.b16 %v1577
      %v2090 = vunpack.c.l.b16 %v1578
      %v2091 = vunpack.c.l.b16 %v1579
      %v2092 = vunpack.c.l.b16 %v1580
      %v2093 = vunpack.c.l.b16 %v1581
      %v2094 = vunpack.c.l.b16 %v1582
      %v2095 = vunpack.c.l.b16 %v1583
      %v2096 = vunpack.c.l.b16 %v1584
      %v2097 = vunpack.c.l.b16 %v1585
      %v2098 = vunpack.c.l.b16 %v1586
      %v2099 = vunpack.c.l.b16 %v1587
      %v2100 = vunpack.c.l.b16 %v1588
      %v2101 = vunpack.c.l.b16 %v1589
      %v2102 = vunpack.c.l.b16 %v1590
      %v2103 = vunpack.c.l.b16 %v1591
      %v2104 = vunpack.c.l.b16 %v1592
      %v2105 = vunpack.c.l.b16 %v1593
      %v2106 = vunpack.c.l.b16 %v1594
      %v2107 = vunpack.c.l.b16 %v1595
      %v2108 = vunpack.c.l.b16 %v1596
      %v2109 = vunpack.c.l.b16 %v1597
      %v2110 = vunpack.c.l.b16 %v1598
      %v2111 = vunpack.c.l.b16 %v1599
      %v2112 = vunpack.c.l.b16 %v1600
      %v2113 = vunpack.c.l.b16 %v1601
      %v2114 = vunpack.c.l.b16 %v1602
      %v2115 = vunpack.c.l.b16 %v1603
      %v2116 = vunpack.c.l.b16 %v1604
      %v2117 = vunpack.c.l.b16 %v1605
      %v2118 = vunpack.c.l.b16 %v1606
      %v2119 = vunpack.c.l.b16 %v1607
      %v2120 = vunpack.c.l.b16 %v1608
      %v2121 = vunpack.c.l.b16 %v1609
      %v2122 = vunpack.c.l.b16 %v1610
      %v2123 = vunpack.c.l.b16 %v1611
      %v2124 = vunpack.c.l.b16 %v1612
      %v2125 = vunpack.c.l.b16 %v1613
      %v2126 = vunpack.c.l.b16 %v1614
      %v2127 = vunpack.c.l.b16 %v1615
      %v2128 = vunpack.c.l.b16 %v1616
      %v2129 = vunpack.c.l.b16 %v1617
      %v2130 = vunpack.c.l.b16 %v1618
      %v2131 = vunpack.c.l.b16 %v1619
      %v2132 = vunpack.c.l.b16 %v1620
      %v2133 = vunpack.c.l.b16 %v1621
      %v2134 = vunpack.c.l.b16 %v1622
      %v2135 = vunpack.c.l.b16 %v1623
      %v2136 = vunpack.c.l.b16 %v1624
      %v2137 = vunpack.c.l.b16 %v1625
      %v2138 = vunpack.c.l.b16 %v1626
      %v2139 = vunpack.c.l.b16 %v1627
      %v2140 = vunpack.c.l.b16 %v1628
      %v2141 = vunpack.c.l.b16 %v1629
      %v2142 = vunpack.c.l.b16 %v1630
      %v2143 = vunpack.c.l.b16 %v1631
      %v2144 = vunpack.c.l.b16 %v1632
      %v2145 = vunpack.c.l.b16 %v1633
      %v2146 = vunpack.c.l.b16 %v1634
      %v2147 = vunpack.c.l.b16 %v1635
      %v2148 = vunpack.c.l.b16 %v1636
      %v2149 = vunpack.c.l.b16 %v1637
      %v2150 = vunpack.c.l.b16 %v1638
      %v2151 = vunpack.c.l.b16 %v1639
      %v2152 = vunpack.c.l.b16 %v1640
      %v2153 = vunpack.c.l.b16 %v1641
      %v2154 = vunpack.c.l.b16 %v1642
      %v2155 = vunpack.c.l.b16 %v1643
      %v2156 = vunpack.c.l.b16 %v1644
      %v2157 = vunpack.c.l.b16 %v1645
      %v2158 = vunpack.c.l.b16 %v1646
      %v2159 = vunpack.c.l.b16 %v1647
      %v2160 = vunpack.c.l.b16 %v1648
      %v2161 = vunpack.c.l.b16 %v1649
      %v2162 = vunpack.c.l.b16 %v1650
      %v2163 = vunpack.c.l.b16 %v1651
      %v2164 = vunpack.c.l.b16 %v1652
      %v2165 = vunpack.c.l.b16 %v1653
      %v2166 = vunpack.c.l.b16 %v1654
      %v2167 = vunpack.c.l.b16 %v1655
      %v2168 = vunpack.c.l.b16 %v1656
      %v2169 = vunpack.c.l.b16 %v1657
      %v2170 = vunpack.c.l.b16 %v1658
      %v2171 = vunpack.c.l.b16 %v1659
      %v2172 = vunpack.c.l.b16 %v1660
      %v2173 = vunpack.c.l.b16 %v1661
      %v2174 = vunpack.c.l.b16 %v1662
      %v2175 = vunpack.c.l.b16 %v1663
      %v2176 = vunpack.c.l.b16 %v1664
      %v2177 = vunpack.c.l.b16 %v1665
      %v2178 = vunpack.c.l.b16 %v1666
      %v2179 = vunpack.c.l.b16 %v1667
      %v2180 = vunpack.c.l.b16 %v1668
      %v2181 = vunpack.c.l.b16 %v1669
      %v2182 = vunpack.c.l.b16 %v1670
      %v2183 = vunpack.c.l.b16 %v1671
      %v2184 = vunpack.c.l.b16 %v1672
      %v2185 = vunpack.c.l.b16 %v1673
      %v2186 = vunpack.c.l.b16 %v1674
      %v2187 = vunpack.c.l.b16 %v1675
      %v2188 = vunpack.c.l.b16 %v1676
      %v2189 = vunpack.c.l.b16 %v1677
      %v2190 = vunpack.c.l.b16 %v1678
      %v2191 = vunpack.c.l.b16 %v1679
      %v2192 = vunpack.c.l.b16 %v1680
      %v2193 = vunpack.c.l.b16 %v1681
      %v2194 = vunpack.c.l.b16 %v1682
      %v2195 = vunpack.c.l.b16 %v1683
      %v2196 = vunpack.c.l.b16 %v1684
      %v2197 = vunpack.c.l.b16 %v1685
      %v2198 = vunpack.c.l.b16 %v1686
      %v2199 = vunpack.c.l.b16 %v1687
      %v2200 = vunpack.c.l.b16 %v1688
      %v2201 = vunpack.c.l.b16 %v1689
      %v2202 = vunpack.c.l.b16 %v1690
      %v2203 = vunpack.c.l.b16 %v1691
      %v2204 = vunpack.c.l.b16 %v1692
      %v2205 = vunpack.c.l.b16 %v1693
      %v2206 = vunpack.c.l.b16 %v1694
      %v2207 = vunpack.c.l.b16 %v1695
      %v2208 = vunpack.c.l.b16 %v1696
      %v2209 = vunpack.c.l.b16 %v1697
      %v2210 = vunpack.c.l.b16 %v1698
      %v2211 = vunpack.c.l.b16 %v1699
      %v2212 = vunpack.c.l.b16 %v1700
      %v2213 = vunpack.c.l.b16 %v1701
      %v2214 = vunpack.c.l.b16 %v1702
      %v2215 = vunpack.c.l.b16 %v1703
      %v2216 = vunpack.c.l.b16 %v1704
      %v2217 = vunpack.c.l.b16 %v1705
      %v2218 = vunpack.c.l.b16 %v1706
      %v2219 = vunpack.c.l.b16 %v1707
      %v2220 = vunpack.c.l.b16 %v1708
      %v2221 = vunpack.c.l.b16 %v1709
      %v2222 = vunpack.c.l.b16 %v1710
      %v2223 = vunpack.c.l.b16 %v1711
      %v2224 = vunpack.c.l.b16 %v1712
      %v2225 = vunpack.c.l.b16 %v1713
      %v2226 = vunpack.c.l.b16 %v1714
      %v2227 = vunpack.c.l.b16 %v1715
      %v2228 = vunpack.c.l.b16 %v1716
      %v2229 = vunpack.c.l.b16 %v1717
      %v2230 = vunpack.c.l.b16 %v1718
      %v2231 = vunpack.c.l.b16 %v1719
      %v2232 = vunpack.c.l.b16 %v1720
      %v2233 = vunpack.c.l.b16 %v1721
      %v2234 = vunpack.c.l.b16 %v1722
      %v2235 = vunpack.c.l.b16 %v1723
      %v2236 = vunpack.c.l.b16 %v1724
      %v2237 = vunpack.c.l.b16 %v1725
      %v2238 = vunpack.c.l.b16 %v1726
      %v2239 = vunpack.c.l.b16 %v1727
      %v2240 = vunpack.c.l.b16 %v1728
      %v2241 = vunpack.c.l.b16 %v1729
      %v2242 = vunpack.c.l.b16 %v1730
      %v2243 = vunpack.c.l.b16 %v1731
      %v2244 = vunpack.c.l.b16 %v1732
      %v2245 = vunpack.c.l.b16 %v1733
      %v2246 = vunpack.c.l.b16 %v1734
      %v2247 = vunpack.c.l.b16 %v1735
      %v2248 = vunpack.c.l.b16 %v1736
      %v2249 = vunpack.c.l.b16 %v1737
      %v2250 = vunpack.c.l.b16 %v1738
      %v2251 = vunpack.c.l.b16 %v1739
      %v2252 = vunpack.c.l.b16 %v1740
      %v2253 = vpack.c.b16 %v1998, %v1997
      %v2254 = vpack.c.b16 %v2000, %v1999
      %v2255 = vpack.c.b16 %v2002, %v2001
      %v2256 = vpack.c.b16 %v2004, %v2003
      %v2257 = vpack.c.b16 %v2006, %v2005
      %v2258 = vpack.c.b16 %v2008, %v2007
      %v2259 = vpack.c.b16 %v2010, %v2009
      %v2260 = vpack.c.b16 %v2012, %v2011
      %v2261 = vpack.c.b16 %v2014, %v2013
      %v2262 = vpack.c.b16 %v2016, %v2015
      %v2263 = vpack.c.b16 %v2018, %v2017
      %v2264 = vpack.c.b16 %v2020, %v2019
      %v2265 = vpack.c.b16 %v2022, %v2021
      %v2266 = vpack.c.b16 %v2024, %v2023
      %v2267 = vpack.c.b16 %v2026, %v2025
      %v2268 = vpack.c.b16 %v2028, %v2027
      %v2269 = vpack.c.b16 %v2030, %v2029
      %v2270 = vpack.c.b16 %v2032, %v2031
      %v2271 = vpack.c.b16 %v2034, %v2033
      %v2272 = vpack.c.b16 %v2036, %v2035
      %v2273 = vpack.c.b16 %v2038, %v2037
      %v2274 = vpack.c.b16 %v2040, %v2039
      %v2275 = vpack.c.b16 %v2042, %v2041
      %v2276 = vpack.c.b16 %v2044, %v2043
      %v2277 = vpack.c.b16 %v2046, %v2045
      %v2278 = vpack.c.b16 %v2048, %v2047
      %v2279 = vpack.c.b16 %v2050, %v2049
      %v2280 = vpack.c.b16 %v2052, %v2051
      %v2281 = vpack.c.b16 %v2054, %v2053
      %v2282 = vpack.c.b16 %v2056, %v2055
      %v2283 = vpack.c.b16 %v2058, %v2057
      %v2284 = vpack.c.b16 %v2060, %v2059
      %v2285 = vpack.c.b16 %v2062, %v2061
      %v2286 = vpack.c.b16 %v2064, %v2063
      %v2287 = vpack.c.b16 %v2066, %v2065
      %v2288 = vpack.c.b16 %v2068, %v2067
      %v2289 = vpack.c.b16 %v2070, %v2069
      %v2290 = vpack.c.b16 %v2072, %v2071
      %v2291 = vpack.c.b16 %v2074, %v2073
      %v2292 = vpack.c.b16 %v2076, %v2075
      %v2293 = vpack.c.b16 %v2078, %v2077
      %v2294 = vpack.c.b16 %v2080, %v2079
      %v2295 = vpack.c.b16 %v2082, %v2081
      %v2296 = vpack.c.b16 %v2084, %v2083
      %v2297 = vpack.c.b16 %v2086, %v2085
      %v2298 = vpack.c.b16 %v2088, %v2087
      %v2299 = vpack.c.b16 %v2090, %v2089
      %v2300 = vpack.c.b16 %v2092, %v2091
      %v2301 = vpack.c.b16 %v2094, %v2093
      %v2302 = vpack.c.b16 %v2096, %v2095
      %v2303 = vpack.c.b16 %v2098, %v2097
      %v2304 = vpack.c.b16 %v2100, %v2099
      %v2305 = vpack.c.b16 %v2102, %v2101
      %v2306 = vpack.c.b16 %v2104, %v2103
      %v2307 = vpack.c.b16 %v2106, %v2105
      %v2308 = vpack.c.b16 %v2108, %v2107
      %v2309 = vpack.c.b16 %v2110, %v2109
      %v2310 = vpack.c.b16 %v2112, %v2111
      %v2311 = vpack.c.b16 %v2114, %v2113
      %v2312 = vpack.c.b16 %v2116, %v2115
      %v2313 = vpack.c.b16 %v2118, %v2117
      %v2314 = vpack.c.b16 %v2120, %v2119
      %v2315 = vpack.c.b16 %v2122, %v2121
      %v2316 = vpack.c.b16 %v2124, %v2123
      %v2317 = vpack.c.b16 %v2126, %v2125
      %v2318 = vpack.c.b16 %v2128, %v2127
      %v2319 = vpack.c.b16 %v2130, %v2129
      %v2320 = vpack.c.b16 %v2132, %v2131
      %v2321 = vpack.c.b16 %v2134, %v2133
      %v2322 = vpack.c.b16 %v2136, %v2135
      %v2323 = vpack.c.b16 %v2138, %v2137
      %v2324 = vpack.c.b16 %v2140, %v2139
      %v2325 = vpack.c.b16 %v2142, %v2141
      %v2326 = vpack.c.b16 %v2144, %v2143
      %v2327 = vpack.c.b16 %v2146, %v2145
      %v2328 = vpack.c.b16 %v2148, %v2147
      %v2329 = vpack.c.b16 %v2150, %v2149
      %v2330 = vpack.c.b16 %v2152, %v2151
      %v2331 = vpack.c.b16 %v2154, %v2153
      %v2332 = vpack.c.b16 %v2156, %v2155
      %v2333 = vpack.c.b16 %v2158, %v2157
      %v2334 = vpack.c.b16 %v2160, %v2159
      %v2335 = vpack.c.b16 %v2162, %v2161
      %v2336 = vpack.c.b16 %v2164, %v2163
      %v2337 = vpack.c.b16 %v2166, %v2165
      %v2338 = vpack.c.b16 %v2168, %v2167
      %v2339 = vpack.c.b16 %v2170, %v2169
      %v2340 = vpack.c.b16 %v2172, %v2171
      %v2341 = vpack.c.b16 %v2174, %v2173
      %v2342 = vpack.c.b16 %v2176, %v2175
      %v2343 = vpack.c.b16 %v2178, %v2177
      %v2344 = vpack.c.b16 %v2180, %v2179
      %v2345 = vpack.c.b16 %v2182, %v2181
      %v2346 = vpack.c.b16 %v2184, %v2183
      %v2347 = vpack.c.b16 %v2186, %v2185
      %v2348 = vpack.c.b16 %v2188, %v2187
      %v2349 = vpack.c.b16 %v2190, %v2189
      %v2350 = vpack.c.b16 %v2192, %v2191
      %v2351 = vpack.c.b16 %v2194, %v2193
      %v2352 = vpack.c.b16 %v2196, %v2195
      %v2353 = vpack.c.b16 %v2198, %v2197
      %v2354 = vpack.c.b16 %v2200, %v2199
      %v2355 = vpack.c.b16 %v2202, %v2201
      %v2356 = vpack.c.b16 %v2204, %v2203
      %v2357 = vpack.c.b16 %v2206, %v2205
      %v2358 = vpack.c.b16 %v2208, %v2207
      %v2359 = vpack.c.b16 %v2210, %v2209
      %v2360 = vpack.c.b16 %v2212, %v2211
      %v2361 = vpack.c.b16 %v2214, %v2213
      %v2362 = vpack.c.b16 %v2216, %v2215
      %v2363 = vpack.c.b16 %v2218, %v2217
      %v2364 = vpack.c.b16 %v2220, %v2219
      %v2365 = vpack.c.b16 %v2222, %v2221
      %v2366 = vpack.c.b16 %v2224, %v2223
      %v2367 = vpack.c.b16 %v2226, %v2225
      %v2368 = vpack.c.b16 %v2228, %v2227
      %v2369 = vpack.c.b16 %v2230, %v2229
      %v2370 = vpack.c.b16 %v2232, %v2231
      %v2371 = vpack.c.b16 %v2234, %v2233
      %v2372 = vpack.c.b16 %v2236, %v2235
      %v2373 = vpack.c.b16 %v2238, %v2237
      %v2374 = vpack.c.b16 %v2240, %v2239
      %v2375 = vpack.c.b16 %v2242, %v2241
      %v2376 = vpack.c.b16 %v2244, %v2243
      %v2377 = vpack.c.b16 %v2246, %v2245
      %v2378 = vpack.c.b16 %v2248, %v2247
      %v2379 = vpack.c.b16 %v2250, %v2249
      %v2380 = vpack.c.b16 %v2252, %v2251
      %2509 = vmatprep.subr.bf16.mxu0 0
      %2510 = vmatpush1.bf16.msra.mxu0 %v2253
      %2511 = vmatprep.subr.bf16.mxu0 0
      %2512 = vmatpush1.bf16.msra.mxu0 %v2254
      %2513 = vmatprep.subr.bf16.mxu0 0
      %2514 = vmatpush1.bf16.msra.mxu0 %v2255
      %2515 = vmatprep.subr.bf16.mxu0 0
      %2516 = vmatpush1.bf16.msra.mxu0 %v2256
      %2517 = vmatprep.subr.bf16.mxu0 0
      %2518 = vmatpush1.bf16.msra.mxu0 %v2257
      %2519 = vmatprep.subr.bf16.mxu0 0
      %2520 = vmatpush1.bf16.msra.mxu0 %v2258
      %2521 = vmatprep.subr.bf16.mxu0 0
      %2522 = vmatpush1.bf16.msra.mxu0 %v2259
      %2523 = vmatprep.subr.bf16.mxu0 0
      %2524 = vmatpush1.bf16.msra.mxu0 %v2260
      %2525 = vmatprep.subr.bf16.mxu0 0
      %2526 = vmatpush1.bf16.msra.mxu0 %v2261
      %2527 = vmatprep.subr.bf16.mxu0 0
      %2528 = vmatpush1.bf16.msra.mxu0 %v2262
      %2529 = vmatprep.subr.bf16.mxu0 0
      %2530 = vmatpush1.bf16.msra.mxu0 %v2263
      %2531 = vmatprep.subr.bf16.mxu0 0
      %2532 = vmatpush1.bf16.msra.mxu0 %v2264
      %2533 = vmatprep.subr.bf16.mxu0 0
      %2534 = vmatpush1.bf16.msra.mxu0 %v2265
      %2535 = vmatprep.subr.bf16.mxu0 0
      %2536 = vmatpush1.bf16.msra.mxu0 %v2266
      %2537 = vmatprep.subr.bf16.mxu0 0
      %2538 = vmatpush1.bf16.msra.mxu0 %v2267
      %2539 = vmatprep.subr.bf16.mxu0 0
      %2540 = vmatpush1.bf16.msra.mxu0 %v2268
      %2541 = vmatprep.mubr.bf16.mxu0 %v1406
      %2542 = vmatmul.mubr.bf16.gmra.mrb[0].mxu0 %v1405
      %v2543 = vpop.f32.mrb[0].mxu0
      %v2544 = vadd.f32 0.0, %v2543
      %v2545 = vpop.f32.mrb[0].mxu0
      %v2546 = vpop.f32.mrb[0].mxu0
      %v2547 = vadd.f32 0.0, %v2546
      %v2548 = vpop.f32.mrb[0].mxu0
      %2549 = vmatprep.mubr.bf16.mxu0 %v1422
      %2550 = vmatmul.mubr.bf16.gmra.mrb[0].mxu0 %v1421
      %v2551 = vpop.f32.mrb[0].mxu0
      %v2552 = vadd.f32 0.0, %v2551
      %v2553 = vpop.f32.mrb[0].mxu0
      %v2554 = vpop.f32.mrb[0].mxu0
      %v2555 = vadd.f32 0.0, %v2554
      %v2556 = vpop.f32.mrb[0].mxu0
      %2557 = vmatprep.mubr.bf16.mxu0 %v1438
      %2558 = vmatmul.mubr.bf16.gmra.mrb[0].mxu0 %v1437
      %v2559 = vpop.f32.mrb[0].mxu0
      %v2560 = vadd.f32 0.0, %v2559
      %v2561 = vpop.f32.mrb[0].mxu0
      %v2562 = vpop.f32.mrb[0].mxu0
      %v2563 = vadd.f32 0.0, %v2562
      %v2564 = vpop.f32.mrb[0].mxu0
      %2565 = vmatprep.mubr.bf16.mxu0 %v1454
      %2566 = vmatmul.mubr.bf16.gmra.mrb[0].mxu0 %v1453
      %v2567 = vpop.f32.mrb[0].mxu0
      %v2568 = vadd.f32 0.0, %v2567
      %v2569 = vpop.f32.mrb[0].mxu0
      %v2570 = vpop.f32.mrb[0].mxu0
      %v2571 = vadd.f32 0.0, %v2570
      %v2572 = vpop.f32.mrb[0].mxu0
      %2573 = vmatprep.mubr.bf16.mxu0 %v1470
      %2574 = vmatmul.mubr.bf16.gmra.mrb[0].mxu0 %v1469
      %v2575 = vpop.f32.mrb[0].mxu0
      %v2576 = vadd.f32 0.0, %v2575
      %v2577 = vpop.f32.mrb[0].mxu0
      %v2578 = vpop.f32.mrb[0].mxu0
      %v2579 = vpop.f32.mrb[0].mxu0
      %2580 = vdwg.mxu0
      %2581 = vmatprep.subr.bf16.mxu0 0
      %2582 = vmatpush1.bf16.msra.mxu0 %v2269
      %2583 = vmatprep.subr.bf16.mxu0 0
      %2584 = vmatpush1.bf16.msra.mxu0 %v2270
      %2585 = vmatprep.subr.bf16.mxu0 0
      %2586 = vmatpush1.bf16.msra.mxu0 %v2271
      %2587 = vmatprep.subr.bf16.mxu0 0
      %2588 = vmatpush1.bf16.msra.mxu0 %v2272
      %2589 = vmatprep.subr.bf16.mxu0 0
      %2590 = vmatpush1.bf16.msra.mxu0 %v2273
      %2591 = vmatprep.subr.bf16.mxu0 0
      %2592 = vmatpush1.bf16.msra.mxu0 %v2274
      %2593 = vmatprep.subr.bf16.mxu0 0
      %2594 = vmatpush1.bf16.msra.mxu0 %v2275
      %2595 = vmatprep.subr.bf16.mxu0 0
      %2596 = vmatpush1.bf16.msra.mxu0 %v2276
      %2597 = vmatprep.subr.bf16.mxu0 0
      %2598 = vmatpush1.bf16.msra.mxu0 %v2277
      %2599 = vmatprep.subr.bf16.mxu0 0
      %2600 = vmatpush1.bf16.msra.mxu0 %v2278
      %2601 = vmatprep.subr.bf16.mxu0 0
      %2602 = vmatpush1.bf16.msra.mxu0 %v2279
      %2603 = vmatprep.subr.bf16.mxu0 0
      %2604 = vmatpush1.bf16.msra.mxu0 %v2280
      %2605 = vmatprep.subr.bf16.mxu0 0
      %2606 = vmatpush1.bf16.msra.mxu0 %v2281
      %2607 = vmatprep.subr.bf16.mxu0 0
      %2608 = vmatpush1.bf16.msra.mxu0 %v2282
      %2609 = vmatprep.subr.bf16.mxu0 0
      %2610 = vmatpush1.bf16.msra.mxu0 %v2283
      %2611 = vmatprep.subr.bf16.mxu0 0
      %2612 = vmatpush1.bf16.msra.mxu0 %v2284
      %2613 = vmatprep.mubr.bf16.mxu0 %v1408
      %2614 = vmatmul.mubr.bf16.gmra.mrb[0].mxu0 %v1407
      %v2615 = vpop.f32.mrb[0].mxu0
      %v2616 = vadd.f32 %v2544, %v2615
      %v2617 = vpop.f32.mrb[0].mxu0
      %v2618 = vpop.f32.mrb[0].mxu0
      %v2619 = vadd.f32 %v2547, %v2618
      %v2620 = vpop.f32.mrb[0].mxu0
      %2621 = vmatprep.mubr.bf16.mxu0 %v1424
      %2622 = vmatmul.mubr.bf16.gmra.mrb[0].mxu0 %v1423
      %v2623 = vpop.f32.mrb[0].mxu0
      %v2624 = vadd.f32 %v2552, %v2623
      %v2625 = vpop.f32.mrb[0].mxu0
      %v2626 = vpop.f32.mrb[0].mxu0
      %v2627 = vadd.f32 %v2555, %v2626
      %v2628 = vpop.f32.mrb[0].mxu0
      %2629 = vmatprep.mubr.bf16.mxu0 %v1440
      %2630 = vmatmul.mubr.bf16.gmra.mrb[0].mxu0 %v1439
      %v2631 = vpop.f32.mrb[0].mxu0
      %v2632 = vadd.f32 %v2560, %v2631
      %v2633 = vpop.f32.mrb[0].mxu0
      %v2634 = vpop.f32.mrb[0].mxu0
      %v2635 = vadd.f32 %v2563, %v2634
      %v2636 = vpop.f32.mrb[0].mxu0
      %2637 = vmatprep.mubr.bf16.mxu0 %v1456
      %2638 = vmatmul.mubr.bf16.gmra.mrb[0].mxu0 %v1455
      %v2639 = vpop.f32.mrb[0].mxu0
      %v2640 = vadd.f32 %v2568, %v2639
      %v2641 = vpop.f32.mrb[0].mxu0
      %v2642 = vpop.f32.mrb[0].mxu0
      %v2643 = vadd.f32 %v2571, %v2642
      %v2644 = vpop.f32.mrb[0].mxu0
      %2645 = vmatprep.mubr.bf16.mxu0 %v1472
      %2646 = vmatmul.mubr.bf16.gmra.mrb[0].mxu0 %v1471
      %v2647 = vpop.f32.mrb[0].mxu0
      %v2648 = vadd.f32 %v2576, %v2647
      %v2649 = vpop.f32.mrb[0].mxu0
      %v2650 = vpop.f32.mrb[0].mxu0
      %v2651 = vpop.f32.mrb[0].mxu0
      %2652 = vdwg.mxu0
      %2653 = vmatprep.subr.bf16.mxu0 0
      %2654 = vmatpush1.bf16.msra.mxu0 %v2285
      %2655 = vmatprep.subr.bf16.mxu0 0
      %2656 = vmatpush1.bf16.msra.mxu0 %v2286
      %2657 = vmatprep.subr.bf16.mxu0 0
      %2658 = vmatpush1.bf16.msra.mxu0 %v2287
      %2659 = vmatprep.subr.bf16.mxu0 0
      %2660 = vmatpush1.bf16.msra.mxu0 %v2288
      %2661 = vmatprep.subr.bf16.mxu0 0
      %2662 = vmatpush1.bf16.msra.mxu0 %v2289
      %2663 = vmatprep.subr.bf16.mxu0 0
      %2664 = vmatpush1.bf16.msra.mxu0 %v2290
      %2665 = vmatprep.subr.bf16.mxu0 0
      %2666 = vmatpush1.bf16.msra.mxu0 %v2291
      %2667 = vmatprep.subr.bf16.mxu0 0
      %2668 = vmatpush1.bf16.msra.mxu0 %v2292
      %2669 = vmatprep.subr.bf16.mxu0 0
      %2670 = vmatpush1.bf16.msra.mxu0 %v2293
      %2671 = vmatprep.subr.bf16.mxu0 0
      %2672 = vmatpush1.bf16.msra.mxu0 %v2294
      %2673 = vmatprep.subr.bf16.mxu0 0
      %2674 = vmatpush1.bf16.msra.mxu0 %v2295
      %2675 = vmatprep.subr.bf16.mxu0 0
      %2676 = vmatpush1.bf16.msra.mxu0 %v2296
      %2677 = vmatprep.subr.bf16.mxu0 0
      %2678 = vmatpush1.bf16.msra.mxu0 %v2297
      %2679 = vmatprep.subr.bf16.mxu0 0
      %2680 = vmatpush1.bf16.msra.mxu0 %v2298
      %2681 = vmatprep.subr.bf16.mxu0 0
      %2682 = vmatpush1.bf16.msra.mxu0 %v2299
      %2683 = vmatprep.subr.bf16.mxu0 0
      %2684 = vmatpush1.bf16.msra.mxu0 %v2300
      %2685 = vmatprep.mubr.bf16.mxu0 %v1410
      %2686 = vmatmul.mubr.bf16.gmra.mrb[0].mxu0 %v1409
      %v2687 = vpop.f32.mrb[0].mxu0
      %v2688 = vadd.f32 %v2616, %v2687
      %v2689 = vpop.f32.mrb[0].mxu0
      %v2690 = vpop.f32.mrb[0].mxu0
      %v2691 = vadd.f32 %v2619, %v2690
      %v2692 = vpop.f32.mrb[0].mxu0
      %2693 = vmatprep.mubr.bf16.mxu0 %v1426
      %2694 = vmatmul.mubr.bf16.gmra.mrb[0].mxu0 %v1425
      %v2695 = vpop.f32.mrb[0].mxu0
      %v2696 = vadd.f32 %v2624, %v2695
      %v2697 = vpop.f32.mrb[0].mxu0
      %v2698 = vpop.f32.mrb[0].mxu0
      %v2699 = vadd.f32 %v2627, %v2698
      %v2700 = vpop.f32.mrb[0].mxu0
      %2701 = vmatprep.mubr.bf16.mxu0 %v1442
      %2702 = vmatmul.mubr.bf16.gmra.mrb[0].mxu0 %v1441
      %v2703 = vpop.f32.mrb[0].mxu0
      %v2704 = vadd.f32 %v2632, %v2703
      %v2705 = vpop.f32.mrb[0].mxu0
      %v2706 = vpop.f32.mrb[0].mxu0
      %v2707 = vadd.f32 %v2635, %v2706
      %v2708 = vpop.f32.mrb[0].mxu0
      %2709 = vmatprep.mubr.bf16.mxu0 %v1458
      %2710 = vmatmul.mubr.bf16.gmra.mrb[0].mxu0 %v1457
      %v2711 = vpop.f32.mrb[0].mxu0
      %v2712 = vadd.f32 %v2640, %v2711
      %v2713 = vpop.f32.mrb[0].mxu0
      %v2714 = vpop.f32.mrb[0].mxu0
      %v2715 = vadd.f32 %v2643, %v2714
      %v2716 = vpop.f32.mrb[0].mxu0
      %2717 = vmatprep.mubr.bf16.mxu0 %v1474
      %2718 = vmatmul.mubr.bf16.gmra.mrb[0].mxu0 %v1473
      %v2719 = vpop.f32.mrb[0].mxu0
      %v2720 = vadd.f32 %v2648, %v2719
      %v2721 = vpop.f32.mrb[0].mxu0
      %v2722 = vpop.f32.mrb[0].mxu0
      %v2723 = vpop.f32.mrb[0].mxu0
      %2724 = vdwg.mxu0
      %2725 = vmatprep.subr.bf16.mxu0 0
      %2726 = vmatpush1.bf16.msra.mxu0 %v2301
      %2727 = vmatprep.subr.bf16.mxu0 0
      %2728 = vmatpush1.bf16.msra.mxu0 %v2302
      %2729 = vmatprep.subr.bf16.mxu0 0
      %2730 = vmatpush1.bf16.msra.mxu0 %v2303
      %2731 = vmatprep.subr.bf16.mxu0 0
      %2732 = vmatpush1.bf16.msra.mxu0 %v2304
      %2733 = vmatprep.subr.bf16.mxu0 0
      %2734 = vmatpush1.bf16.msra.mxu0 %v2305
      %2735 = vmatprep.subr.bf16.mxu0 0
      %2736 = vmatpush1.bf16.msra.mxu0 %v2306
      %2737 = vmatprep.subr.bf16.mxu0 0
      %2738 = vmatpush1.bf16.msra.mxu0 %v2307
      %2739 = vmatprep.subr.bf16.mxu0 0
      %2740 = vmatpush1.bf16.msra.mxu0 %v2308
      %2741 = vmatprep.subr.bf16.mxu0 0
      %2742 = vmatpush1.bf16.msra.mxu0 %v2309
      %2743 = vmatprep.subr.bf16.mxu0 0
      %2744 = vmatpush1.bf16.msra.mxu0 %v2310
      %2745 = vmatprep.subr.bf16.mxu0 0
      %2746 = vmatpush1.bf16.msra.mxu0 %v2311
      %2747 = vmatprep.subr.bf16.mxu0 0
      %2748 = vmatpush1.bf16.msra.mxu0 %v2312
      %2749 = vmatprep.subr.bf16.mxu0 0
      %2750 = vmatpush1.bf16.msra.mxu0 %v2313
      %2751 = vmatprep.subr.bf16.mxu0 0
      %2752 = vmatpush1.bf16.msra.mxu0 %v2314
      %2753 = vmatprep.subr.bf16.mxu0 0
      %2754 = vmatpush1.bf16.msra.mxu0 %v2315
      %2755 = vmatprep.subr.bf16.mxu0 0
      %2756 = vmatpush1.bf16.msra.mxu0 %v2316
      %2757 = vmatprep.mubr.bf16.mxu0 %v1412
      %2758 = vmatmul.mubr.bf16.gmra.mrb[0].mxu0 %v1411
      %v2759 = vpop.f32.mrb[0].mxu0
      %v2760 = vadd.f32 %v2688, %v2759
      %v2761 = vpop.f32.mrb[0].mxu0
      %v2762 = vpop.f32.mrb[0].mxu0
      %v2763 = vadd.f32 %v2691, %v2762
      %v2764 = vpop.f32.mrb[0].mxu0
      %2765 = vmatprep.mubr.bf16.mxu0 %v1428
      %2766 = vmatmul.mubr.bf16.gmra.mrb[0].mxu0 %v1427
      %v2767 = vpop.f32.mrb[0].mxu0
      %v2768 = vadd.f32 %v2696, %v2767
      %v2769 = vpop.f32.mrb[0].mxu0
      %v2770 = vpop.f32.mrb[0].mxu0
      %v2771 = vadd.f32 %v2699, %v2770
      %v2772 = vpop.f32.mrb[0].mxu0
      %2773 = vmatprep.mubr.bf16.mxu0 %v1444
      %2774 = vmatmul.mubr.bf16.gmra.mrb[0].mxu0 %v1443
      %v2775 = vpop.f32.mrb[0].mxu0
      %v2776 = vadd.f32 %v2704, %v2775
      %v2777 = vpop.f32.mrb[0].mxu0
      %v2778 = vpop.f32.mrb[0].mxu0
      %v2779 = vadd.f32 %v2707, %v2778
      %v2780 = vpop.f32.mrb[0].mxu0
      %2781 = vmatprep.mubr.bf16.mxu0 %v1460
      %2782 = vmatmul.mubr.bf16.gmra.mrb[0].mxu0 %v1459
      %v2783 = vpop.f32.mrb[0].mxu0
      %v2784 = vadd.f32 %v2712, %v2783
      %v2785 = vpop.f32.mrb[0].mxu0
      %v2786 = vpop.f32.mrb[0].mxu0
      %v2787 = vadd.f32 %v2715, %v2786
      %v2788 = vpop.f32.mrb[0].mxu0
      %2789 = vmatprep.mubr.bf16.mxu0 %v1476
      %2790 = vmatmul.mubr.bf16.gmra.mrb[0].mxu0 %v1475
      %v2791 = vpop.f32.mrb[0].mxu0
      %v2792 = vadd.f32 %v2720, %v2791
      %v2793 = vpop.f32.mrb[0].mxu0
      %v2794 = vpop.f32.mrb[0].mxu0
      %v2795 = vpop.f32.mrb[0].mxu0
      %2796 = vdwg.mxu0
      %2797 = vmatprep.subr.bf16.mxu0 0
      %2798 = vmatpush1.bf16.msra.mxu0 %v2317
      %2799 = vmatprep.subr.bf16.mxu0 0
      %2800 = vmatpush1.bf16.msra.mxu0 %v2318
      %2801 = vmatprep.subr.bf16.mxu0 0
      %2802 = vmatpush1.bf16.msra.mxu0 %v2319
      %2803 = vmatprep.subr.bf16.mxu0 0
      %2804 = vmatpush1.bf16.msra.mxu0 %v2320
      %2805 = vmatprep.subr.bf16.mxu0 0
      %2806 = vmatpush1.bf16.msra.mxu0 %v2321
      %2807 = vmatprep.subr.bf16.mxu0 0
      %2808 = vmatpush1.bf16.msra.mxu0 %v2322
      %2809 = vmatprep.subr.bf16.mxu0 0
      %2810 = vmatpush1.bf16.msra.mxu0 %v2323
      %2811 = vmatprep.subr.bf16.mxu0 0
      %2812 = vmatpush1.bf16.msra.mxu0 %v2324
      %2813 = vmatprep.subr.bf16.mxu0 0
      %2814 = vmatpush1.bf16.msra.mxu0 %v2325
      %2815 = vmatprep.subr.bf16.mxu0 0
      %2816 = vmatpush1.bf16.msra.mxu0 %v2326
      %2817 = vmatprep.subr.bf16.mxu0 0
      %2818 = vmatpush1.bf16.msra.mxu0 %v2327
      %2819 = vmatprep.subr.bf16.mxu0 0
      %2820 = vmatpush1.bf16.msra.mxu0 %v2328
      %2821 = vmatprep.subr.bf16.mxu0 0
      %2822 = vmatpush1.bf16.msra.mxu0 %v2329
      %2823 = vmatprep.subr.bf16.mxu0 0
      %2824 = vmatpush1.bf16.msra.mxu0 %v2330
      %2825 = vmatprep.subr.bf16.mxu0 0
      %2826 = vmatpush1.bf16.msra.mxu0 %v2331
      %2827 = vmatprep.subr.bf16.mxu0 0
      %2828 = vmatpush1.bf16.msra.mxu0 %v2332
      %2829 = vmatprep.mubr.bf16.mxu0 %v1414
      %2830 = vmatmul.mubr.bf16.gmra.mrb[0].mxu0 %v1413
      %v2831 = vpop.f32.mrb[0].mxu0
      %v2832 = vadd.f32 %v2760, %v2831
      %v2833 = vpop.f32.mrb[0].mxu0
      %v2834 = vpop.f32.mrb[0].mxu0
      %v2835 = vadd.f32 %v2763, %v2834
      %v2836 = vpop.f32.mrb[0].mxu0
      %2837 = vmatprep.mubr.bf16.mxu0 %v1430
      %2838 = vmatmul.mubr.bf16.gmra.mrb[0].mxu0 %v1429
      %v2839 = vpop.f32.mrb[0].mxu0
      %v2840 = vadd.f32 %v2768, %v2839
      %v2841 = vpop.f32.mrb[0].mxu0
      %v2842 = vpop.f32.mrb[0].mxu0
      %v2843 = vadd.f32 %v2771, %v2842
      %v2844 = vpop.f32.mrb[0].mxu0
      %2845 = vmatprep.mubr.bf16.mxu0 %v1446
      %2846 = vmatmul.mubr.bf16.gmra.mrb[0].mxu0 %v1445
      %v2847 = vpop.f32.mrb[0].mxu0
      %v2848 = vadd.f32 %v2776, %v2847
      %v2849 = vpop.f32.mrb[0].mxu0
      %v2850 = vpop.f32.mrb[0].mxu0
      %v2851 = vadd.f32 %v2779, %v2850
      %v2852 = vpop.f32.mrb[0].mxu0
      %2853 = vmatprep.mubr.bf16.mxu0 %v1462
      %2854 = vmatmul.mubr.bf16.gmra.mrb[0].mxu0 %v1461
      %v2855 = vpop.f32.mrb[0].mxu0
      %v2856 = vadd.f32 %v2784, %v2855
      %v2857 = vpop.f32.mrb[0].mxu0
      %v2858 = vpop.f32.mrb[0].mxu0
      %v2859 = vadd.f32 %v2787, %v2858
      %v2860 = vpop.f32.mrb[0].mxu0
      %2861 = vmatprep.mubr.bf16.mxu0 %v1478
      %2862 = vmatmul.mubr.bf16.gmra.mrb[0].mxu0 %v1477
      %v2863 = vpop.f32.mrb[0].mxu0
      %v2864 = vadd.f32 %v2792, %v2863
      %v2865 = vpop.f32.mrb[0].mxu0
      %v2866 = vpop.f32.mrb[0].mxu0
      %v2867 = vpop.f32.mrb[0].mxu0
      %2868 = vdwg.mxu0
      %2869 = vmatprep.subr.bf16.mxu0 0
      %2870 = vmatpush1.bf16.msra.mxu0 %v2333
      %2871 = vmatprep.subr.bf16.mxu0 0
      %2872 = vmatpush1.bf16.msra.mxu0 %v2334
      %2873 = vmatprep.subr.bf16.mxu0 0
      %2874 = vmatpush1.bf16.msra.mxu0 %v2335
      %2875 = vmatprep.subr.bf16.mxu0 0
      %2876 = vmatpush1.bf16.msra.mxu0 %v2336
      %2877 = vmatprep.subr.bf16.mxu0 0
      %2878 = vmatpush1.bf16.msra.mxu0 %v2337
      %2879 = vmatprep.subr.bf16.mxu0 0
      %2880 = vmatpush1.bf16.msra.mxu0 %v2338
      %2881 = vmatprep.subr.bf16.mxu0 0
      %2882 = vmatpush1.bf16.msra.mxu0 %v2339
      %2883 = vmatprep.subr.bf16.mxu0 0
      %2884 = vmatpush1.bf16.msra.mxu0 %v2340
      %2885 = vmatprep.subr.bf16.mxu0 0
      %2886 = vmatpush1.bf16.msra.mxu0 %v2341
      %2887 = vmatprep.subr.bf16.mxu0 0
      %2888 = vmatpush1.bf16.msra.mxu0 %v2342
      %2889 = vmatprep.subr.bf16.mxu0 0
      %2890 = vmatpush1.bf16.msra.mxu0 %v2343
      %2891 = vmatprep.subr.bf16.mxu0 0
      %2892 = vmatpush1.bf16.msra.mxu0 %v2344
      %2893 = vmatprep.subr.bf16.mxu0 0
      %2894 = vmatpush1.bf16.msra.mxu0 %v2345
      %2895 = vmatprep.subr.bf16.mxu0 0
      %2896 = vmatpush1.bf16.msra.mxu0 %v2346
      %2897 = vmatprep.subr.bf16.mxu0 0
      %2898 = vmatpush1.bf16.msra.mxu0 %v2347
      %2899 = vmatprep.subr.bf16.mxu0 0
      %2900 = vmatpush1.bf16.msra.mxu0 %v2348
      %2901 = vmatprep.mubr.bf16.mxu0 %v1416
      %2902 = vmatmul.mubr.bf16.gmra.mrb[0].mxu0 %v1415
      %v2903 = vpop.f32.mrb[0].mxu0
      %v2904 = vadd.f32 %v2832, %v2903
      %v2905 = vpop.f32.mrb[0].mxu0
      %v2906 = vpop.f32.mrb[0].mxu0
      %v2907 = vadd.f32 %v2835, %v2906
      %v2908 = vpop.f32.mrb[0].mxu0
      %2909 = vmatprep.mubr.bf16.mxu0 %v1432
      %2910 = vmatmul.mubr.bf16.gmra.mrb[0].mxu0 %v1431
      %v2911 = vpop.f32.mrb[0].mxu0
      %v2912 = vadd.f32 %v2840, %v2911
      %v2913 = vpop.f32.mrb[0].mxu0
      %v2914 = vpop.f32.mrb[0].mxu0
      %v2915 = vadd.f32 %v2843, %v2914
      %v2916 = vpop.f32.mrb[0].mxu0
      %2917 = vmatprep.mubr.bf16.mxu0 %v1448
      %2918 = vmatmul.mubr.bf16.gmra.mrb[0].mxu0 %v1447
      %v2919 = vpop.f32.mrb[0].mxu0
      %v2920 = vadd.f32 %v2848, %v2919
      %v2921 = vpop.f32.mrb[0].mxu0
      %v2922 = vpop.f32.mrb[0].mxu0
      %v2923 = vadd.f32 %v2851, %v2922
      %v2924 = vpop.f32.mrb[0].mxu0
      %2925 = vmatprep.mubr.bf16.mxu0 %v1464
      %2926 = vmatmul.mubr.bf16.gmra.mrb[0].mxu0 %v1463
      %v2927 = vpop.f32.mrb[0].mxu0
      %v2928 = vadd.f32 %v2856, %v2927
      %v2929 = vpop.f32.mrb[0].mxu0
      %v2930 = vpop.f32.mrb[0].mxu0
      %v2931 = vadd.f32 %v2859, %v2930
      %v2932 = vpop.f32.mrb[0].mxu0
      %2933 = vmatprep.mubr.bf16.mxu0 %v1480
      %2934 = vmatmul.mubr.bf16.gmra.mrb[0].mxu0 %v1479
      %v2935 = vpop.f32.mrb[0].mxu0
      %v2936 = vadd.f32 %v2864, %v2935
      %v2937 = vpop.f32.mrb[0].mxu0
      %v2938 = vpop.f32.mrb[0].mxu0
      %v2939 = vpop.f32.mrb[0].mxu0
      %2940 = vdwg.mxu0
      %2941 = vmatprep.subr.bf16.mxu0 0
      %2942 = vmatpush1.bf16.msra.mxu0 %v2349
      %2943 = vmatprep.subr.bf16.mxu0 0
      %2944 = vmatpush1.bf16.msra.mxu0 %v2350
      %2945 = vmatprep.subr.bf16.mxu0 0
      %2946 = vmatpush1.bf16.msra.mxu0 %v2351
      %2947 = vmatprep.subr.bf16.mxu0 0
      %2948 = vmatpush1.bf16.msra.mxu0 %v2352
      %2949 = vmatprep.subr.bf16.mxu0 0
      %2950 = vmatpush1.bf16.msra.mxu0 %v2353
      %2951 = vmatprep.subr.bf16.mxu0 0
      %2952 = vmatpush1.bf16.msra.mxu0 %v2354
      %2953 = vmatprep.subr.bf16.mxu0 0
      %2954 = vmatpush1.bf16.msra.mxu0 %v2355
      %2955 = vmatprep.subr.bf16.mxu0 0
      %2956 = vmatpush1.bf16.msra.mxu0 %v2356
      %2957 = vmatprep.subr.bf16.mxu0 0
      %2958 = vmatpush1.bf16.msra.mxu0 %v2357
      %2959 = vmatprep.subr.bf16.mxu0 0
      %2960 = vmatpush1.bf16.msra.mxu0 %v2358
      %2961 = vmatprep.subr.bf16.mxu0 0
      %2962 = vmatpush1.bf16.msra.mxu0 %v2359
      %2963 = vmatprep.subr.bf16.mxu0 0
      %2964 = vmatpush1.bf16.msra.mxu0 %v2360
      %2965 = vmatprep.subr.bf16.mxu0 0
      %2966 = vmatpush1.bf16.msra.mxu0 %v2361
      %2967 = vmatprep.subr.bf16.mxu0 0
      %2968 = vmatpush1.bf16.msra.mxu0 %v2362
      %2969 = vmatprep.subr.bf16.mxu0 0
      %2970 = vmatpush1.bf16.msra.mxu0 %v2363
      %2971 = vmatprep.subr.bf16.mxu0 0
      %2972 = vmatpush1.bf16.msra.mxu0 %v2364
      %2973 = vmatprep.mubr.bf16.mxu0 %v1418
      %2974 = vmatmul.mubr.bf16.gmra.mrb[0].mxu0 %v1417
      %v2975 = vpop.f32.mrb[0].mxu0
      %v2976 = vadd.f32 %v2904, %v2975
      %v2977 = vpop.f32.mrb[0].mxu0
      %v2978 = vpop.f32.mrb[0].mxu0
      %v2979 = vadd.f32 %v2907, %v2978
      %v2980 = vpop.f32.mrb[0].mxu0
      %2981 = vmatprep.mubr.bf16.mxu0 %v1434
      %2982 = vmatmul.mubr.bf16.gmra.mrb[0].mxu0 %v1433
      %v2983 = vpop.f32.mrb[0].mxu0
      %v2984 = vadd.f32 %v2912, %v2983
      %v2985 = vpop.f32.mrb[0].mxu0
      %v2986 = vpop.f32.mrb[0].mxu0
      %v2987 = vadd.f32 %v2915, %v2986
      %v2988 = vpop.f32.mrb[0].mxu0
      %2989 = vmatprep.mubr.bf16.mxu0 %v1450
      %2990 = vmatmul.mubr.bf16.gmra.mrb[0].mxu0 %v1449
      %v2991 = vpop.f32.mrb[0].mxu0
      %v2992 = vadd.f32 %v2920, %v2991
      %v2993 = vpop.f32.mrb[0].mxu0
      %v2994 = vpop.f32.mrb[0].mxu0
      %v2995 = vadd.f32 %v2923, %v2994
      %v2996 = vpop.f32.mrb[0].mxu0
      %2997 = vmatprep.mubr.bf16.mxu0 %v1466
      %2998 = vmatmul.mubr.bf16.gmra.mrb[0].mxu0 %v1465
      %v2999 = vpop.f32.mrb[0].mxu0
      %v3000 = vadd.f32 %v2928, %v2999
      %v3001 = vpop.f32.mrb[0].mxu0
      %v3002 = vpop.f32.mrb[0].mxu0
      %v3003 = vadd.f32 %v2931, %v3002
      %v3004 = vpop.f32.mrb[0].mxu0
      %3005 = vmatprep.mubr.bf16.mxu0 %v1482
      %3006 = vmatmul.mubr.bf16.gmra.mrb[0].mxu0 %v1481
      %v3007 = vpop.f32.mrb[0].mxu0
      %v3008 = vadd.f32 %v2936, %v3007
      %v3009 = vpop.f32.mrb[0].mxu0
      %v3010 = vpop.f32.mrb[0].mxu0
      %v3011 = vpop.f32.mrb[0].mxu0
      %3012 = vdwg.mxu0
      %3013 = vmatprep.subr.bf16.mxu0 0
      %3014 = vmatpush1.bf16.msra.mxu0 %v2365
      %3015 = vmatprep.subr.bf16.mxu0 0
      %3016 = vmatpush1.bf16.msra.mxu0 %v2366
      %3017 = vmatprep.subr.bf16.mxu0 0
      %3018 = vmatpush1.bf16.msra.mxu0 %v2367
      %3019 = vmatprep.subr.bf16.mxu0 0
      %3020 = vmatpush1.bf16.msra.mxu0 %v2368
      %3021 = vmatprep.subr.bf16.mxu0 0
      %3022 = vmatpush1.bf16.msra.mxu0 %v2369
      %3023 = vmatprep.subr.bf16.mxu0 0
      %3024 = vmatpush1.bf16.msra.mxu0 %v2370
      %3025 = vmatprep.subr.bf16.mxu0 0
      %3026 = vmatpush1.bf16.msra.mxu0 %v2371
      %3027 = vmatprep.subr.bf16.mxu0 0
      %3028 = vmatpush1.bf16.msra.mxu0 %v2372
      %3029 = vmatprep.subr.bf16.mxu0 0
      %3030 = vmatpush1.bf16.msra.mxu0 %v2373
      %3031 = vmatprep.subr.bf16.mxu0 0
      %3032 = vmatpush1.bf16.msra.mxu0 %v2374
      %3033 = vmatprep.subr.bf16.mxu0 0
      %3034 = vmatpush1.bf16.msra.mxu0 %v2375
      %3035 = vmatprep.subr.bf16.mxu0 0
      %3036 = vmatpush1.bf16.msra.mxu0 %v2376
      %3037 = vmatprep.subr.bf16.mxu0 0
      %3038 = vmatpush1.bf16.msra.mxu0 %v2377
      %3039 = vmatprep.subr.bf16.mxu0 0
      %3040 = vmatpush1.bf16.msra.mxu0 %v2378
      %3041 = vmatprep.subr.bf16.mxu0 0
      %3042 = vmatpush1.bf16.msra.mxu0 %v2379
      %3043 = vmatprep.subr.bf16.mxu0 0
      %3044 = vmatpush1.bf16.msra.mxu0 %v2380
      %3045 = vmatprep.mubr.bf16.mxu0 %v1420
      %3046 = vmatmul.mubr.bf16.gmra.mrb[0].mxu0 %v1419
      %v3047 = vpop.f32.mrb[0].mxu0
      %v3048 = vadd.f32 %v2976, %v3047
      %v3049 = vpop.f32.mrb[0].mxu0
      %v3050 = vpop.f32.mrb[0].mxu0
      %v3051 = vadd.f32 %v2979, %v3050
      %v3052 = vpop.f32.mrb[0].mxu0
      %3053 = vmatprep.mubr.bf16.mxu0 %v1436
      %3054 = vmatmul.mubr.bf16.gmra.mrb[0].mxu0 %v1435
      %v3055 = vpop.f32.mrb[0].mxu0
      %v3056 = vadd.f32 %v2984, %v3055
      %v3057 = vpop.f32.mrb[0].mxu0
      %v3058 = vpop.f32.mrb[0].mxu0
      %v3059 = vadd.f32 %v2987, %v3058
      %v3060 = vpop.f32.mrb[0].mxu0
      %3061 = vmatprep.mubr.bf16.mxu0 %v1452
      %3062 = vmatmul.mubr.bf16.gmra.mrb[0].mxu0 %v1451
      %v3063 = vpop.f32.mrb[0].mxu0
      %v3064 = vadd.f32 %v2992, %v3063
      %v3065 = vpop.f32.mrb[0].mxu0
      %v3066 = vpop.f32.mrb[0].mxu0
      %v3067 = vadd.f32 %v2995, %v3066
      %v3068 = vpop.f32.mrb[0].mxu0
      %3069 = vmatprep.mubr.bf16.mxu0 %v1468
      %3070 = vmatmul.mubr.bf16.gmra.mrb[0].mxu0 %v1467
      %v3071 = vpop.f32.mrb[0].mxu0
      %v3072 = vadd.f32 %v3000, %v3071
      %v3073 = vpop.f32.mrb[0].mxu0
      %v3074 = vpop.f32.mrb[0].mxu0
      %v3075 = vadd.f32 %v3003, %v3074
      %v3076 = vpop.f32.mrb[0].mxu0
      %3077 = vmatprep.mubr.bf16.mxu0 %v1484
      %3078 = vmatmul.mubr.bf16.gmra.mrb[0].mxu0 %v1483
      %v3079 = vpop.f32.mrb[0].mxu0
      %v3080 = vadd.f32 %v3008, %v3079
      %v3081 = vpop.f32.mrb[0].mxu0
      %v3082 = vpop.f32.mrb[0].mxu0
      %v3083 = vpop.f32.mrb[0].mxu0
      %3084 = vdwg.mxu0
      %v3085 = vadd.f32 %v289, %v3048
      %v3086 = vadd.f32 %v290, %v3051
      %v3087 = vadd.f32 %v291, %v3056
      %v3088 = vadd.f32 %v292, %v3059
      %v3089 = vadd.f32 %v293, %v3064
      %v3090 = vadd.f32 %v294, %v3067
      %v3091 = vadd.f32 %v295, %v3072
      %v3092 = vadd.f32 %v296, %v3075
      %v3093 = vadd.f32 %v297, %v3080
      %v3094 = vld [vmem:[%s4] sm:$0x1]
      %v3096 = vlaneseq
      %v3097 = vshrl.u32 %v3096, 7
      %v3098 = vsub.s32 0, %v3097
      %v3099 = vrot.slane %v3094, %v3098
      %v3101 = vadd.f32 %v3085, %v3099
      %v3102 = vadd.f32 %v3086, %v3099
      %v3103 = vadd.f32 %v3087, %v3099
      %v3104 = vadd.f32 %v3088, %v3099
      %v3105 = vadd.f32 %v3089, %v3099
      %v3106 = vadd.f32 %v3090, %v3099
      %v3107 = vadd.f32 %v3091, %v3099
      %v3108 = vadd.f32 %v3092, %v3099
      %v3109 = vadd.f32 %v3093, %v3099
      %v3110 = vsel %vm597, %v3101, 0.0
      %3111 = vadd.xlane.f32.xlu0 %v3110
      %v3112 = vpop.xlane.xlu0 %3111
      %v3113 = vsel %vm597, %v3102, 0.0
      %3114 = vadd.xlane.f32.xlu0 %v3113
      %v3115 = vpop.xlane.xlu0 %3114
      %v3116 = vsel %vm597, %v3103, 0.0
      %3117 = vadd.xlane.f32.xlu0 %v3116
      %v3118 = vpop.xlane.xlu0 %3117
      %v3119 = vsel %vm597, %v3104, 0.0
      %3120 = vadd.xlane.f32.xlu0 %v3119
      %v3121 = vpop.xlane.xlu0 %3120
      %v3122 = vsel %vm597, %v3105, 0.0
      %3123 = vadd.xlane.f32.xlu0 %v3122
      %v3124 = vpop.xlane.xlu0 %3123
      %v3125 = vsel %vm597, %v3106, 0.0
      %3126 = vadd.xlane.f32.xlu0 %v3125
      %v3127 = vpop.xlane.xlu0 %3126
      %v3128 = vsel %vm597, %v3107, 0.0
      %3129 = vadd.xlane.f32.xlu0 %v3128
      %v3130 = vpop.xlane.xlu0 %3129
      %v3131 = vsel %vm597, %v3108, 0.0
      %3132 = vadd.xlane.f32.xlu0 %v3131
      %v3133 = vpop.xlane.xlu0 %3132
      %vm3134 = vcmask 253952
      %v3135 = vsel %vm3134, %v3109, 0.0
      %3136 = vadd.xlane.f32.xlu0 %v3135
      %v3137 = vpop.xlane.xlu0 %3136
      %v3138 = vrcp.pop 32.0
      %v3139 = vmul.f32 %v3112, %v3138
      %v3140 = vmul.f32 %v3115, %v3138
      %v3141 = vmul.f32 %v3118, %v3138
      %v3142 = vmul.f32 %v3121, %v3138
      %v3143 = vmul.f32 %v3124, %v3138
      %v3144 = vmul.f32 %v3127, %v3138
      %v3145 = vmul.f32 %v3130, %v3138
      %v3146 = vmul.f32 %v3133, %v3138
      %v3147 = vmul.f32 %v3137, %v3138
      %v3148 = vsub.f32 %v3101, %v3139
      %v3149 = vsub.f32 %v3102, %v3140
      %v3150 = vsub.f32 %v3103, %v3141
      %v3151 = vsub.f32 %v3104, %v3142
      %v3152 = vsub.f32 %v3105, %v3143
      %v3153 = vsub.f32 %v3106, %v3144
      %v3154 = vsub.f32 %v3107, %v3145
      %v3155 = vsub.f32 %v3108, %v3146
      %v3156 = vsub.f32 %v3109, %v3147
      %v3157 = vmul.f32 %v3148, %v3148
      %v3158 = vmul.f32 %v3149, %v3149
      %v3159 = vmul.f32 %v3150, %v3150
      %v3160 = vmul.f32 %v3151, %v3151
      %v3161 = vmul.f32 %v3152, %v3152
      %v3162 = vmul.f32 %v3153, %v3153
      %v3163 = vmul.f32 %v3154, %v3154
      %v3164 = vmul.f32 %v3155, %v3155
      %v3165 = vmul.f32 %v3156, %v3156
      %v3166 = vsel %vm597, %v3157, 0.0
      %3167 = vadd.xlane.f32.xlu0 %v3166
      %v3168 = vpop.xlane.xlu0 %3167
      %v3169 = vsel %vm597, %v3158, 0.0
      %3170 = vadd.xlane.f32.xlu0 %v3169
      %v3171 = vpop.xlane.xlu0 %3170
      %v3172 = vsel %vm597, %v3159, 0.0
      %3173 = vadd.xlane.f32.xlu0 %v3172
      %v3174 = vpop.xlane.xlu0 %3173
      %v3175 = vsel %vm597, %v3160, 0.0
      %3176 = vadd.xlane.f32.xlu0 %v3175
      %v3177 = vpop.xlane.xlu0 %3176
      %v3178 = vsel %vm597, %v3161, 0.0
      %3179 = vadd.xlane.f32.xlu0 %v3178
      %v3180 = vpop.xlane.xlu0 %3179
      %v3181 = vsel %vm597, %v3162, 0.0
      %3182 = vadd.xlane.f32.xlu0 %v3181
      %v3183 = vpop.xlane.xlu0 %3182
      %v3184 = vsel %vm597, %v3163, 0.0
      %3185 = vadd.xlane.f32.xlu0 %v3184
      %v3186 = vpop.xlane.xlu0 %3185
      %v3187 = vsel %vm597, %v3164, 0.0
      %3188 = vadd.xlane.f32.xlu0 %v3187
      %v3189 = vpop.xlane.xlu0 %3188
      %v3190 = vsel %vm3134, %v3165, 0.0
      %3191 = vadd.xlane.f32.xlu0 %v3190
      %v3192 = vpop.xlane.xlu0 %3191
      %v3193 = vmul.f32 %v3168, %v3138
      %v3194 = vmul.f32 %v3171, %v3138
      %v3195 = vmul.f32 %v3174, %v3138
      %v3196 = vmul.f32 %v3177, %v3138
      %v3197 = vmul.f32 %v3180, %v3138
      %v3198 = vmul.f32 %v3183, %v3138
      %v3199 = vmul.f32 %v3186, %v3138
      %v3200 = vmul.f32 %v3189, %v3138
      %v3201 = vmul.f32 %v3192, %v3138
      %v3202 = vadd.f32 %v3193, 1e-05
      %v3203 = vadd.f32 %v3194, 1e-05
      %v3204 = vadd.f32 %v3195, 1e-05
      %v3205 = vadd.f32 %v3196, 1e-05
      %v3206 = vadd.f32 %v3197, 1e-05
      %v3207 = vadd.f32 %v3198, 1e-05
      %v3208 = vadd.f32 %v3199, 1e-05
      %v3209 = vadd.f32 %v3200, 1e-05
      %v3210 = vadd.f32 %v3201, 1e-05
      %v3211 = vrsqrt.pop %v3202
      %v3212 = vrsqrt.pop %v3203
      %v3213 = vrsqrt.pop %v3204
      %v3214 = vrsqrt.pop %v3205
      %v3215 = vrsqrt.pop %v3206
      %v3216 = vrsqrt.pop %v3207
      %v3217 = vrsqrt.pop %v3208
      %v3218 = vrsqrt.pop %v3209
      %v3219 = vrsqrt.pop %v3210
      %v3220 = vmul.f32 %v3148, %v3211
      %v3221 = vmul.f32 %v3149, %v3212
      %v3222 = vmul.f32 %v3150, %v3213
      %v3223 = vmul.f32 %v3151, %v3214
      %v3224 = vmul.f32 %v3152, %v3215
      %v3225 = vmul.f32 %v3153, %v3216
      %v3226 = vmul.f32 %v3154, %v3217
      %v3227 = vmul.f32 %v3155, %v3218
      %v3228 = vmul.f32 %v3156, %v3219
      %v3229 = vld [vmem:[%s5] sm:$0x1]
      %v3231 = vlaneseq
      %v3232 = vshrl.u32 %v3231, 7
      %v3233 = vsub.s32 0, %v3232
      %v3234 = vrot.slane %v3229, %v3233
      %v3236 = vmul.f32 %v3220, %v3234
      %v3237 = vmul.f32 %v3221, %v3234
      %v3238 = vmul.f32 %v3222, %v3234
      %v3239 = vmul.f32 %v3223, %v3234
      %v3240 = vmul.f32 %v3224, %v3234
      %v3241 = vmul.f32 %v3225, %v3234
      %v3242 = vmul.f32 %v3226, %v3234
      %v3243 = vmul.f32 %v3227, %v3234
      %v3244 = vmul.f32 %v3228, %v3234
      %v3245 = vld [vmem:[%s6] sm:$0x1]
      %v3247 = vlaneseq
      %v3248 = vshrl.u32 %v3247, 7
      %v3249 = vsub.s32 0, %v3248
      %v3250 = vrot.slane %v3245, %v3249
      %v3252 = vadd.f32 %v3236, %v3250
      %v3253 = vadd.f32 %v3237, %v3250
      %v3254 = vadd.f32 %v3238, %v3250
      %v3255 = vadd.f32 %v3239, %v3250
      %v3256 = vadd.f32 %v3240, %v3250
      %v3257 = vadd.f32 %v3241, %v3250
      %v3258 = vadd.f32 %v3242, %v3250
      %v3259 = vadd.f32 %v3243, %v3250
      %v3260 = vadd.f32 %v3244, %v3250
      %v3261 = vpack.c.bf16 %v3253, %v3252
      %v3262 = vpack.c.bf16 %v3255, %v3254
      %v3263 = vpack.c.bf16 %v3257, %v3256
      %v3264 = vpack.c.bf16 %v3259, %v3258
      %v3265 = vpack.c.bf16 %v3260, %v3260
      %v3271 = vunpack.c.l.b16 %v3261
      %v3272 = vunpack.c.h.b16 %v3261
      %v3273 = vunpack.c.l.b16 %v3262
      %v3274 = vunpack.c.h.b16 %v3262
      %v3275 = vunpack.c.l.b16 %v3263
      %v3276 = vunpack.c.h.b16 %v3263
      %v3277 = vunpack.c.l.b16 %v3264
      %v3278 = vunpack.c.h.b16 %v3264
      %v3279 = vunpack.c.l.b16 %v3265
      %v3280 = vpack.c.b16 %v3271, %v3271
      %v3281 = vpack.c.b16 %v3272, %v3272
      %v3282 = vpack.c.b16 %v3273, %v3273
      %v3283 = vpack.c.b16 %v3274, %v3274
      %v3284 = vpack.c.b16 %v3275, %v3275
      %v3285 = vpack.c.b16 %v3276, %v3276
      %v3286 = vpack.c.b16 %v3277, %v3277
      %v3287 = vpack.c.b16 %v3278, %v3278
      %v3288 = vpack.c.b16 %v3279, %v3279
      %vm3298 = vcmask 257024
      %3299 = vst.msk [vmem:[%s278] sm:$0xf] %vm3298, %v3280
      %3300 = vst.msk [vmem:[%s278 + $0x4] sm:$0xf] %vm3298, %v3281
      %3301 = vst.msk [vmem:[%s278 + $0x8] sm:$0xf] %vm3298, %v3282
      %3302 = vst.msk [vmem:[%s278 + $0xc] sm:$0xf] %vm3298, %v3283
      %3303 = vst.msk [vmem:[%s278 + $0x10] sm:$0xf] %vm3298, %v3284
      %3304 = vst.msk [vmem:[%s278 + $0x14] sm:$0xf] %vm3298, %v3285
      %3305 = vst.msk [vmem:[%s278 + $0x18] sm:$0xf] %vm3298, %v3286
      %3306 = vst.msk [vmem:[%s278 + $0x1c] sm:$0xf] %vm3298, %v3287
      %vm3307 = vcmask 253952
      %vm3308 = vsmask.f32 256
      %vm3309 = vmand %vm3307, %vm3308
      %v3310 = vld [vmem:[%s278 + $0x20] sm:$0x1]
      %v3311 = vsel %vm3309, %v3288, %v3310
      %3312 = vst [vmem:[%s278 + $0x20] sm:$0x1] %v3311
      %p3313 = scmp.lt.s32.totalorder %s18, 1
      %s3314 = scalar_select %p3313, %s18, 1
      %s3315 = smul.addr %s3314, 9
      %s3316 = smul.addr %s3315, 4
      %s3317 = scalar_lea.vmem %s7, %s3316
      // Predicated region
      $region49: #{masked_autoencoder_forward.15} parent=47 // pred_check
        %p3318 = pneg %p188
      $region50: #{masked_autoencoder_forward.15} parent=47 // pred_check_branch
        %3320 = sbr.rel (%p3318) target = $region52
      $region51: #{masked_autoencoder_forward.15} parent=47 // pred_region
        _
      $region52: #{masked_autoencoder_forward.15} parent=47 // pred_fallthru
        _
    $region48: #{masked_autoencoder_forward.15} parent=5 // pred_fallthru
      _
    %p3321 = scmp.le.s32.totalorder 2, %s13
    // Predicated region
    $region53: #{masked_autoencoder_forward.15} parent=5 // pred_check
      %p3322 = pneg %p3321
    $region54: #{masked_autoencoder_forward.15} parent=5 // pred_check_branch
      %3324 = sbr.rel (%p3322) target = $region56
    $region55: #{masked_autoencoder_forward.15} parent=5 // pred_region
      %s3325 = ssub.s32 %s13, 2
      // Predicated region
      $region57: #{masked_autoencoder_forward.15} parent=55 // pred_check
        %p3326 = pneg %p194
      $region58: #{masked_autoencoder_forward.15} parent=55 // pred_check_branch
        %3328 = sbr.rel (%p3326) target = $region60
      $region59: #{masked_autoencoder_forward.15} parent=55 // pred_region
        %p3329 = scmp.lt.s32.totalorder %s19, 1
        %s3330 = scalar_select %p3329, %s19, 1
        %s3331 = smul.addr %s3330, 9
        %s3332 = smul.addr %s3331, 4
        %s3333 = scalar_lea.vmem %s7, %s3332
      $region60: #{masked_autoencoder_forward.15} parent=55 // pred_fallthru
        _
    $region56: #{masked_autoencoder_forward.15} parent=5 // pred_fallthru
      _
  $region6: #{masked_autoencoder_forward.15} parent=0 // loop_footer
    %s17 = sadd.s32 1, %s13
  $region7: #{masked_autoencoder_forward.15} parent=0 // loop_footer_branch
    %12 = sbr.rel target = $region3
  $region8: #{masked_autoencoder_forward.15} parent=0 // loop_exit
    _

</llo_original>
